<compile_context>
chip_gen: v7x
topology: tpu7x:2x2x1
jax: 0.10.0
libtpu: 0.0.40
codegen_flags: <defaults>
</compile_context>

<pallas_src>
import jax
import jax.numpy as jnp
from jax.experimental import pallas as pl
from jax.experimental.pallas import tpu as pltpu

EPS = 1e-5
VMEM_LIMIT = 32 * 1024 * 1024


# ----------------------------- Pallas kernels ------------------------------ #

def _conv_pool_kernel(p_ref, w_ref, aux_ref, o_ref):
    """Fused Conv(matmul) + bias + ReLU + BatchNorm + MaxPool2d(2), one image.

    p_ref:   (4, P, K)  im2col patches; leading axis = 2x2 pool-window slot.
    w_ref:   (K, Cout)  conv weights flattened as (kh, kw, Cin) -> K.
    aux_ref: (3, Cout)  rows = [bias, bn_scale, bn_shift].
    o_ref:   (P, Cout)  pooled output, P = pooled_H * pooled_W.
    """
    w = w_ref[...]
    bias = aux_ref[0:1, :]
    scale = aux_ref[1:2, :]
    shift = aux_ref[2:3, :]
    out = None
    for q in range(4):                       # static unroll over window slots
        z = jnp.dot(p_ref[q], w, preferred_element_type=jnp.float32)
        z = jnp.maximum(z + bias, 0.0) * scale + shift     # ReLU then BN
        out = z if out is None else jnp.maximum(out, z)    # 2x2 max-pool
    o_ref[...] = out


def _linear_kernel(x_ref, w_ref, b_ref, o_ref):
    o_ref[...] = (
        jnp.dot(x_ref[...], w_ref[...], preferred_element_type=jnp.float32)
        + b_ref[...]
    )


# ------------------------------- wrappers ---------------------------------- #

def _pool_grouped_patches(x, k):
    """x: (B, Hin, Win, Cin) already spatially padded; stride-1 conv.

    Returns patches of shape (B, 4, P, K) where the leading 4 indexes the
    (dy, dx) slot of the 2x2 pool window and P = (Ho//2)*(Wo//2), plus the
    pooled spatial dims. Conv rows/cols dropped by floor-mode pooling are
    never materialized.
    """
    B, Hin, Win, Cin = x.shape
    Ho, Wo = Hin - k + 1, Win - k + 1
    HP, WP = Ho // 2, Wo // 2                 # MaxPool2d(2) floor semantics
    Ho2, Wo2 = 2 * HP, 2 * WP
    cols = [x[:, i:i + Ho2, j:j + Wo2, :] for i in range(k) for j in range(k)]
    p = jnp.concatenate(cols, axis=-1)        # (B, Ho2, Wo2, k*k*Cin)
    K = k * k * Cin
    p = p.reshape(B, HP, 2, WP, 2, K)
    p = p.transpose(0, 2, 4, 1, 3, 5)         # (B, dy, dx, HP, WP, K)
    return p.reshape(B, 4, HP * WP, K), (HP, WP)


def conv_pool_block(x, layer_params, k, padding=0):
    """Conv2d(k, stride=1, bias) -> ReLU -> BatchNorm2d -> MaxPool2d(2)."""
    # TODO(synk): BatchNorm2d uses inference-mode running stats folded into a
    # per-channel scale/shift; training-mode batch statistics not implemented.
    w2, aux = layer_params                                # (K, Cout), (3, Cout)
    if padding:
        x = jnp.pad(x, ((0, 0), (padding, padding), (padding, padding), (0, 0)))
    patches, (HP, WP) = _pool_grouped_patches(x, k)       # (B, 4, P, K)
    B, _, P, K = patches.shape
    Cout = w2.shape[1]
    out = pl.pallas_call(
        _conv_pool_kernel,
        out_shape=jax.ShapeDtypeStruct((B, P, Cout), jnp.float32),
        grid=(B,),
        in_specs=[
            pl.BlockSpec((None, 4, P, K), lambda b: (b, 0, 0, 0)),
            pl.BlockSpec((K, Cout), lambda b: (0, 0)),
            pl.BlockSpec((3, Cout), lambda b: (0, 0)),
        ],
        out_specs=pl.BlockSpec((None, P, Cout), lambda b: (b, 0, 0)),
        compiler_params=pltpu.CompilerParams(
            dimension_semantics=("parallel",),
            vmem_limit_bytes=VMEM_LIMIT),
    )(patches, w2, aux)
    return out.reshape(B, HP, WP, Cout)


def linear(x, w, b):
    """x: (M, K); w: (K, N); b: (N,)."""
    M, K = x.shape
    N = w.shape[1]
    Mp = ((M + 7) // 8) * 8
    if Mp != M:
        x = jnp.pad(x, ((0, Mp - M), (0, 0)))
    out = pl.pallas_call(
        _linear_kernel,
        out_shape=jax.ShapeDtypeStruct((Mp, N), jnp.float32),
        compiler_params=pltpu.CompilerParams(vmem_limit_bytes=VMEM_LIMIT),
    )(x, w, b.reshape(1, N))
    return out[:M]


# --------------------------- model / parameters ----------------------------- #

def init_raw_params(key):
    """Parameters in PyTorch-native layouts (Conv2d: (Cout, Cin, kh, kw),
    Linear: (out, in))."""
    def conv_bn(key, cin, cout, k):
        kw, kb, kg, kbe, km, kv = jax.random.split(key, 6)
        fan_in = cin * k * k
        bound = 1.0 / (fan_in ** 0.5)
        w = jax.random.uniform(kw, (cout, cin, k, k), jnp.float32, -bound, bound)
        b = jax.random.uniform(kb, (cout,), jnp.float32, -bound, bound)
        gamma = jax.random.uniform(kg, (cout,), jnp.float32, 0.5, 1.5)
        beta = jax.random.uniform(kbe, (cout,), jnp.float32, -0.1, 0.1)
        rmean = jax.random.uniform(km, (cout,), jnp.float32, -0.1, 0.1)
        rvar = jax.random.uniform(kv, (cout,), jnp.float32, 0.5, 1.5)
        return w, b, gamma, beta, rmean, rvar

    k1, k2, k3, kfw, kfb = jax.random.split(key, 5)
    fan_in = 48 * 6 * 6
    bound = 1.0 / (fan_in ** 0.5)
    return {
        "conv1": conv_bn(k1, 1, 24, 5),
        "conv2": conv_bn(k2, 24, 32, 3),
        "conv3": conv_bn(k3, 32, 48, 3),
        "fc1_w": jax.random.uniform(kfw, (16, fan_in), jnp.float32, -bound, bound),
        "fc1_b": jax.random.uniform(kfb, (16,), jnp.float32, -bound, bound),
    }


def prepare_params(raw):
    """One-time conversion (outside the hot path) to kernel-friendly layouts."""
    prepared = {}
    for name in ("conv1", "conv2", "conv3"):
        w, b, gamma, beta, rmean, rvar = raw[name]
        cout, cin, k, _ = w.shape
        # PyTorch (Cout, Cin, kh, kw) -> (kh*kw*Cin, Cout), matching the
        # (ki, kj, ci) patch-column order produced by _pool_grouped_patches.
        w2 = jnp.transpose(w, (2, 3, 1, 0)).reshape(k * k * cin, cout)
        scale = gamma / jnp.sqrt(rvar + EPS)
        shift = beta - rmean * scale
        aux = jnp.stack([b, scale, shift], axis=0)        # (3, Cout)
        prepared[name] = (w2, aux)
    # fc1: PyTorch flattens NCHW (B, 48, 6, 6) -> index c*36 + (y*6 + x).
    # Our activations flatten NHWC -> index (y*6 + x)*48 + c; permute the
    # weight rows once here so no runtime transpose is needed.
    wk = jnp.transpose(raw["fc1_w"])                      # (1728, 16), rows c*36+p
    wk = wk.reshape(48, 36, 16).transpose(1, 0, 2).reshape(48 * 36, 16)
    prepared["fc1_w"] = wk
    prepared["fc1_b"] = raw["fc1_b"]
    return prepared


def cnn2d_forward(x_nchw, params):
    """x_nchw: (B, 1, 64, 64) — fc1 = Linear(48*6*6, 16) implies 64x64 input."""
    x = jnp.transpose(x_nchw, (0, 2, 3, 1)).astype(jnp.float32)   # -> NHWC
    x = conv_pool_block(x, params["conv1"], k=5, padding=2)       # (B,32,32,24)
    x = conv_pool_block(x, params["conv2"], k=3, padding=0)       # (B,15,15,32)
    x = conv_pool_block(x, params["conv3"], k=3, padding=0)       # (B, 6, 6,48)
    B = x.shape[0]
    x_flat = x.reshape(B, -1)          # NHWC flatten; fc1_w rows pre-permuted
    return linear(x_flat, params["fc1_w"], params["fc1_b"])       # (B, 16)


if __name__ == "__main__":
    key = jax.random.PRNGKey(0)
    k_in, k_params = jax.random.split(key)
    params = prepare_params(init_raw_params(k_params))
    x = jax.random.normal(k_in, (2, 1, 64, 64), jnp.float32)
    out = jax.jit(cnn2d_forward)(x, params)
    out = jax.block_until_ready(out)
    assert out.shape == (2, 16) and out.dtype == jnp.float32
    print("KERNEL_OK")
</pallas_src>

<mosaic_0001>
module attributes {stable_mosaic.version = 11 : i64} {
  func.func @_conv_pool_kernel(%arg0: i32, %arg1: memref<1x4x1024x25xf32, #tpu.memory_space<vmem>>, %arg2: memref<25x24xf32, #tpu.memory_space<vmem>>, %arg3: memref<3x24xf32, #tpu.memory_space<vmem>>, %arg4: memref<1x1024x24xf32, #tpu.memory_space<vmem>>) attributes {dimension_semantics = [#tpu.dimension_semantics<parallel>], iteration_bounds = array<i64: 2>, scalar_prefetch = 0 : i64, scratch_operands = 0 : i64, tpu.core_type = #tpu.core_type<tc>, window_params = [{transform_indices = @transform_0, window_bounds = array<i64: 1, 4, 1024, 25>}, {pipeline_mode = #tpu.pipeline_mode<synchronous>, transform_indices = @transform_1, window_bounds = array<i64: 25, 24>}, {pipeline_mode = #tpu.pipeline_mode<synchronous>, transform_indices = @transform_2, window_bounds = array<i64: 3, 24>}, {transform_indices = @transform_3, window_bounds = array<i64: 1, 1024, 24>}]} {
    %c0 = arith.constant 0 : index
    %c0_0 = arith.constant 0 : index
    %0 = vector.load %arg2[%c0, %c0_0] : memref<25x24xf32, #tpu.memory_space<vmem>>, vector<25x24xf32>
    %c0_1 = arith.constant 0 : index
    %c0_2 = arith.constant 0 : index
    %1 = vector.load %arg3[%c0_1, %c0_2] : memref<3x24xf32, #tpu.memory_space<vmem>>, vector<1x24xf32>
    %c1 = arith.constant 1 : index
    %c0_3 = arith.constant 0 : index
    %2 = vector.load %arg3[%c1, %c0_3] : memref<3x24xf32, #tpu.memory_space<vmem>>, vector<1x24xf32>
    %c2 = arith.constant 2 : index
    %c0_4 = arith.constant 0 : index
    %3 = vector.load %arg3[%c2, %c0_4] : memref<3x24xf32, #tpu.memory_space<vmem>>, vector<1x24xf32>
    %c0_5 = arith.constant 0 : index
    %c0_6 = arith.constant 0 : index
    %c0_7 = arith.constant 0 : index
    %c0_8 = arith.constant 0 : index
    %4 = vector.load %arg1[%c0_5, %c0_6, %c0_7, %c0_8] : memref<1x4x1024x25xf32, #tpu.memory_space<vmem>>, vector<1x1x1024x25xf32>
    %5 = vector.shape_cast %4 : vector<1x1x1024x25xf32> to vector<1024x25xf32>
    %cst = arith.constant dense<0.000000e+00> : vector<1024x24xf32>
    %6 = tpu.matmul %5, %0, %cst {dimension_numbers = #tpu.dot_dimension_numbers<[1], [0], [0], [1], [0, 0, 1, 1], [], []>} : vector<1024x25xf32>, vector<25x24xf32>, vector<1024x24xf32> -> vector<1024x24xf32>
    %7 = vector.broadcast %1 : vector<1x24xf32> to vector<1024x24xf32>
    %8 = arith.addf %6, %7 : vector<1024x24xf32>
    %cst_9 = arith.constant 0.000000e+00 : f32
    %9 = vector.broadcast %cst_9 : f32 to vector<1024x24xf32>
    %10 = arith.maximumf %8, %9 : vector<1024x24xf32>
    %11 = vector.broadcast %2 : vector<1x24xf32> to vector<1024x24xf32>
    %12 = arith.mulf %10, %11 : vector<1024x24xf32>
    %13 = vector.broadcast %3 : vector<1x24xf32> to vector<1024x24xf32>
    %14 = arith.addf %12, %13 : vector<1024x24xf32>
    %c0_10 = arith.constant 0 : index
    %c1_11 = arith.constant 1 : index
    %c0_12 = arith.constant 0 : index
    %c0_13 = arith.constant 0 : index
    %15 = vector.load %arg1[%c0_10, %c1_11, %c0_12, %c0_13] : memref<1x4x1024x25xf32, #tpu.memory_space<vmem>>, vector<1x1x1024x25xf32>
    %16 = vector.shape_cast %15 : vector<1x1x1024x25xf32> to vector<1024x25xf32>
    %cst_14 = arith.constant dense<0.000000e+00> : vector<1024x24xf32>
    %17 = tpu.matmul %16, %0, %cst_14 {dimension_numbers = #tpu.dot_dimension_numbers<[1], [0], [0], [1], [0, 0, 1, 1], [], []>} : vector<1024x25xf32>, vector<25x24xf32>, vector<1024x24xf32> -> vector<1024x24xf32>
    %18 = vector.broadcast %1 : vector<1x24xf32> to vector<1024x24xf32>
    %19 = arith.addf %17, %18 : vector<1024x24xf32>
    %cst_15 = arith.constant 0.000000e+00 : f32
    %20 = vector.broadcast %cst_15 : f32 to vector<1024x24xf32>
    %21 = arith.maximumf %19, %20 : vector<1024x24xf32>
    %22 = vector.broadcast %2 : vector<1x24xf32> to vector<1024x24xf32>
    %23 = arith.mulf %21, %22 : vector<1024x24xf32>
    %24 = vector.broadcast %3 : vector<1x24xf32> to vector<1024x24xf32>
    %25 = arith.addf %23, %24 : vector<1024x24xf32>
    %26 = arith.maximumf %14, %25 : vector<1024x24xf32>
    %c0_16 = arith.constant 0 : index
    %c2_17 = arith.constant 2 : index
    %c0_18 = arith.constant 0 : index
    %c0_19 = arith.constant 0 : index
    %27 = vector.load %arg1[%c0_16, %c2_17, %c0_18, %c0_19] : memref<1x4x1024x25xf32, #tpu.memory_space<vmem>>, vector<1x1x1024x25xf32>
    %28 = vector.shape_cast %27 : vector<1x1x1024x25xf32> to vector<1024x25xf32>
    %cst_20 = arith.constant dense<0.000000e+00> : vector<1024x24xf32>
    %29 = tpu.matmul %28, %0, %cst_20 {dimension_numbers = #tpu.dot_dimension_numbers<[1], [0], [0], [1], [0, 0, 1, 1], [], []>} : vector<1024x25xf32>, vector<25x24xf32>, vector<1024x24xf32> -> vector<1024x24xf32>
    %30 = vector.broadcast %1 : vector<1x24xf32> to vector<1024x24xf32>
    %31 = arith.addf %29, %30 : vector<1024x24xf32>
    %cst_21 = arith.constant 0.000000e+00 : f32
    %32 = vector.broadcast %cst_21 : f32 to vector<1024x24xf32>
    %33 = arith.maximumf %31, %32 : vector<1024x24xf32>
    %34 = vector.broadcast %2 : vector<1x24xf32> to vector<1024x24xf32>
    %35 = arith.mulf %33, %34 : vector<1024x24xf32>
    %36 = vector.broadcast %3 : vector<1x24xf32> to vector<1024x24xf32>
    %37 = arith.addf %35, %36 : vector<1024x24xf32>
    %38 = arith.maximumf %26, %37 : vector<1024x24xf32>
    %c0_22 = arith.constant 0 : index
    %c3 = arith.constant 3 : index
    %c0_23 = arith.constant 0 : index
    %c0_24 = arith.constant 0 : index
    %39 = vector.load %arg1[%c0_22, %c3, %c0_23, %c0_24] : memref<1x4x1024x25xf32, #tpu.memory_space<vmem>>, vector<1x1x1024x25xf32>
    %40 = vector.shape_cast %39 : vector<1x1x1024x25xf32> to vector<1024x25xf32>
    %cst_25 = arith.constant dense<0.000000e+00> : vector<1024x24xf32>
    %41 = tpu.matmul %40, %0, %cst_25 {dimension_numbers = #tpu.dot_dimension_numbers<[1], [0], [0], [1], [0, 0, 1, 1], [], []>} : vector<1024x25xf32>, vector<25x24xf32>, vector<1024x24xf32> -> vector<1024x24xf32>
    %42 = vector.broadcast %1 : vector<1x24xf32> to vector<1024x24xf32>
    %43 = arith.addf %41, %42 : vector<1024x24xf32>
    %cst_26 = arith.constant 0.000000e+00 : f32
    %44 = vector.broadcast %cst_26 : f32 to vector<1024x24xf32>
    %45 = arith.maximumf %43, %44 : vector<1024x24xf32>
    %46 = vector.broadcast %2 : vector<1x24xf32> to vector<1024x24xf32>
    %47 = arith.mulf %45, %46 : vector<1024x24xf32>
    %48 = vector.broadcast %3 : vector<1x24xf32> to vector<1024x24xf32>
    %49 = arith.addf %47, %48 : vector<1024x24xf32>
    %50 = arith.maximumf %38, %49 : vector<1024x24xf32>
    %c0_27 = arith.constant 0 : index
    %c0_28 = arith.constant 0 : index
    %c0_29 = arith.constant 0 : index
    %51 = vector.load %arg4[%c0_27, %c0_28, %c0_29] : memref<1x1024x24xf32, #tpu.memory_space<vmem>>, vector<1x1024x24xf32>
    %52 = vector.shape_cast %51 : vector<1x1024x24xf32> to vector<1024x24xf32>
    %53 = vector.shape_cast %50 : vector<1024x24xf32> to vector<1x1024x24xf32>
    tpu.vector_store %arg4[%c0_27, %c0_28, %c0_29], %53 {strides = array<i32>} : memref<1x1024x24xf32, #tpu.memory_space<vmem>>, vector<1x1024x24xf32>,
    return
  }
  func.func @transform_0(%arg0: i32) -> (i32, i32, i32, i32) {
    %c0_i32 = arith.constant 0 : i32
    %c0_i32_0 = arith.constant 0 : i32
    %c0_i32_1 = arith.constant 0 : i32
    %c0_i32_2 = arith.constant 0 : i32
    return %arg0, %c0_i32, %c0_i32_0, %c0_i32_1 : i32, i32, i32, i32
  }
  func.func @transform_1(%arg0: i32) -> (i32, i32) {
    %c0_i32 = arith.constant 0 : i32
    %c0_i32_0 = arith.constant 0 : i32
    %c0_i32_1 = arith.constant 0 : i32
    return %c0_i32, %c0_i32_0 : i32, i32
  }
  func.func @transform_2(%arg0: i32) -> (i32, i32) {
    %c0_i32 = arith.constant 0 : i32
    %c0_i32_0 = arith.constant 0 : i32
    %c0_i32_1 = arith.constant 0 : i32
    return %c0_i32, %c0_i32_0 : i32, i32
  }
  func.func @transform_3(%arg0: i32) -> (i32, i32, i32) {
    %c0_i32 = arith.constant 0 : i32
    %c0_i32_0 = arith.constant 0 : i32
    %c0_i32_1 = arith.constant 0 : i32
    return %arg0, %c0_i32, %c0_i32_0 : i32, i32, i32
  }
}

module attributes {stable_mosaic.version = 11 : i64} {
  func.func @_conv_pool_kernel(%arg0: i32, %arg1: memref<1x4x225x216xf32, #tpu.memory_space<vmem>>, %arg2: memref<216x32xf32, #tpu.memory_space<vmem>>, %arg3: memref<3x32xf32, #tpu.memory_space<vmem>>, %arg4: memref<1x225x32xf32, #tpu.memory_space<vmem>>) attributes {dimension_semantics = [#tpu.dimension_semantics<parallel>], iteration_bounds = array<i64: 2>, scalar_prefetch = 0 : i64, scratch_operands = 0 : i64, tpu.core_type = #tpu.core_type<tc>, window_params = [{transform_indices = @transform_0, window_bounds = array<i64: 1, 4, 225, 216>}, {pipeline_mode = #tpu.pipeline_mode<synchronous>, transform_indices = @transform_1, window_bounds = array<i64: 216, 32>}, {pipeline_mode = #tpu.pipeline_mode<synchronous>, transform_indices = @transform_2, window_bounds = array<i64: 3, 32>}, {transform_indices = @transform_3, window_bounds = array<i64: 1, 225, 32>}]} {
    %c0 = arith.constant 0 : index
    %c0_0 = arith.constant 0 : index
    %0 = vector.load %arg2[%c0, %c0_0] : memref<216x32xf32, #tpu.memory_space<vmem>>, vector<216x32xf32>
    %c0_1 = arith.constant 0 : index
    %c0_2 = arith.constant 0 : index
    %1 = vector.load %arg3[%c0_1, %c0_2] : memref<3x32xf32, #tpu.memory_space<vmem>>, vector<1x32xf32>
    %c1 = arith.constant 1 : index
    %c0_3 = arith.constant 0 : index
    %2 = vector.load %arg3[%c1, %c0_3] : memref<3x32xf32, #tpu.memory_space<vmem>>, vector<1x32xf32>
    %c2 = arith.constant 2 : index
    %c0_4 = arith.constant 0 : index
    %3 = vector.load %arg3[%c2, %c0_4] : memref<3x32xf32, #tpu.memory_space<vmem>>, vector<1x32xf32>
    %c0_5 = arith.constant 0 : index
    %c0_6 = arith.constant 0 : index
    %c0_7 = arith.constant 0 : index
    %c0_8 = arith.constant 0 : index
    %4 = vector.load %arg1[%c0_5, %c0_6, %c0_7, %c0_8] : memref<1x4x225x216xf32, #tpu.memory_space<vmem>>, vector<1x1x225x216xf32>
    %5 = vector.shape_cast %4 : vector<1x1x225x216xf32> to vector<225x216xf32>
    %cst = arith.constant dense<0.000000e+00> : vector<225x32xf32>
    %6 = tpu.matmul %5, %0, %cst {dimension_numbers = #tpu.dot_dimension_numbers<[1], [0], [0], [1], [0, 0, 1, 1], [], []>} : vector<225x216xf32>, vector<216x32xf32>, vector<225x32xf32> -> vector<225x32xf32>
    %7 = vector.broadcast %1 : vector<1x32xf32> to vector<225x32xf32>
    %8 = arith.addf %6, %7 : vector<225x32xf32>
    %cst_9 = arith.constant 0.000000e+00 : f32
    %9 = vector.broadcast %cst_9 : f32 to vector<225x32xf32>
    %10 = arith.maximumf %8, %9 : vector<225x32xf32>
    %11 = vector.broadcast %2 : vector<1x32xf32> to vector<225x32xf32>
    %12 = arith.mulf %10, %11 : vector<225x32xf32>
    %13 = vector.broadcast %3 : vector<1x32xf32> to vector<225x32xf32>
    %14 = arith.addf %12, %13 : vector<225x32xf32>
    %c0_10 = arith.constant 0 : index
    %c1_11 = arith.constant 1 : index
    %c0_12 = arith.constant 0 : index
    %c0_13 = arith.constant 0 : index
    %15 = vector.load %arg1[%c0_10, %c1_11, %c0_12, %c0_13] : memref<1x4x225x216xf32, #tpu.memory_space<vmem>>, vector<1x1x225x216xf32>
    %16 = vector.shape_cast %15 : vector<1x1x225x216xf32> to vector<225x216xf32>
    %cst_14 = arith.constant dense<0.000000e+00> : vector<225x32xf32>
    %17 = tpu.matmul %16, %0, %cst_14 {dimension_numbers = #tpu.dot_dimension_numbers<[1], [0], [0], [1], [0, 0, 1, 1], [], []>} : vector<225x216xf32>, vector<216x32xf32>, vector<225x32xf32> -> vector<225x32xf32>
    %18 = vector.broadcast %1 : vector<1x32xf32> to vector<225x32xf32>
    %19 = arith.addf %17, %18 : vector<225x32xf32>
    %cst_15 = arith.constant 0.000000e+00 : f32
    %20 = vector.broadcast %cst_15 : f32 to vector<225x32xf32>
    %21 = arith.maximumf %19, %20 : vector<225x32xf32>
    %22 = vector.broadcast %2 : vector<1x32xf32> to vector<225x32xf32>
    %23 = arith.mulf %21, %22 : vector<225x32xf32>
    %24 = vector.broadcast %3 : vector<1x32xf32> to vector<225x32xf32>
    %25 = arith.addf %23, %24 : vector<225x32xf32>
    %26 = arith.maximumf %14, %25 : vector<225x32xf32>
    %c0_16 = arith.constant 0 : index
    %c2_17 = arith.constant 2 : index
    %c0_18 = arith.constant 0 : index
    %c0_19 = arith.constant 0 : index
    %27 = vector.load %arg1[%c0_16, %c2_17, %c0_18, %c0_19] : memref<1x4x225x216xf32, #tpu.memory_space<vmem>>, vector<1x1x225x216xf32>
    %28 = vector.shape_cast %27 : vector<1x1x225x216xf32> to vector<225x216xf32>
    %cst_20 = arith.constant dense<0.000000e+00> : vector<225x32xf32>
    %29 = tpu.matmul %28, %0, %cst_20 {dimension_numbers = #tpu.dot_dimension_numbers<[1], [0], [0], [1], [0, 0, 1, 1], [], []>} : vector<225x216xf32>, vector<216x32xf32>, vector<225x32xf32> -> vector<225x32xf32>
    %30 = vector.broadcast %1 : vector<1x32xf32> to vector<225x32xf32>
    %31 = arith.addf %29, %30 : vector<225x32xf32>
    %cst_21 = arith.constant 0.000000e+00 : f32
    %32 = vector.broadcast %cst_21 : f32 to vector<225x32xf32>
    %33 = arith.maximumf %31, %32 : vector<225x32xf32>
    %34 = vector.broadcast %2 : vector<1x32xf32> to vector<225x32xf32>
    %35 = arith.mulf %33, %34 : vector<225x32xf32>
    %36 = vector.broadcast %3 : vector<1x32xf32> to vector<225x32xf32>
    %37 = arith.addf %35, %36 : vector<225x32xf32>
    %38 = arith.maximumf %26, %37 : vector<225x32xf32>
    %c0_22 = arith.constant 0 : index
    %c3 = arith.constant 3 : index
    %c0_23 = arith.constant 0 : index
    %c0_24 = arith.constant 0 : index
    %39 = vector.load %arg1[%c0_22, %c3, %c0_23, %c0_24] : memref<1x4x225x216xf32, #tpu.memory_space<vmem>>, vector<1x1x225x216xf32>
    %40 = vector.shape_cast %39 : vector<1x1x225x216xf32> to vector<225x216xf32>
    %cst_25 = arith.constant dense<0.000000e+00> : vector<225x32xf32>
    %41 = tpu.matmul %40, %0, %cst_25 {dimension_numbers = #tpu.dot_dimension_numbers<[1], [0], [0], [1], [0, 0, 1, 1], [], []>} : vector<225x216xf32>, vector<216x32xf32>, vector<225x32xf32> -> vector<225x32xf32>
    %42 = vector.broadcast %1 : vector<1x32xf32> to vector<225x32xf32>
    %43 = arith.addf %41, %42 : vector<225x32xf32>
    %cst_26 = arith.constant 0.000000e+00 : f32
    %44 = vector.broadcast %cst_26 : f32 to vector<225x32xf32>
    %45 = arith.maximumf %43, %44 : vector<225x32xf32>
    %46 = vector.broadcast %2 : vector<1x32xf32> to vector<225x32xf32>
    %47 = arith.mulf %45, %46 : vector<225x32xf32>
    %48 = vector.broadcast %3 : vector<1x32xf32> to vector<225x32xf32>
    %49 = arith.addf %47, %48 : vector<225x32xf32>
    %50 = arith.maximumf %38, %49 : vector<225x32xf32>
    %c0_27 = arith.constant 0 : index
    %c0_28 = arith.constant 0 : index
    %c0_29 = arith.constant 0 : index
    %51 = vector.load %arg4[%c0_27, %c0_28, %c0_29] : memref<1x225x32xf32, #tpu.memory_space<vmem>>, vector<1x225x32xf32>
    %52 = vector.shape_cast %51 : vector<1x225x32xf32> to vector<225x32xf32>
    %53 = vector.shape_cast %50 : vector<225x32xf32> to vector<1x225x32xf32>
    tpu.vector_store %arg4[%c0_27, %c0_28, %c0_29], %53 {strides = array<i32>} : memref<1x225x32xf32, #tpu.memory_space<vmem>>, vector<1x225x32xf32>,
    return
  }
  func.func @transform_0(%arg0: i32) -> (i32, i32, i32, i32) {
    %c0_i32 = arith.constant 0 : i32
    %c0_i32_0 = arith.constant 0 : i32
    %c0_i32_1 = arith.constant 0 : i32
    %c0_i32_2 = arith.constant 0 : i32
    return %arg0, %c0_i32, %c0_i32_0, %c0_i32_1 : i32, i32, i32, i32
  }
  func.func @transform_1(%arg0: i32) -> (i32, i32) {
    %c0_i32 = arith.constant 0 : i32
    %c0_i32_0 = arith.constant 0 : i32
    %c0_i32_1 = arith.constant 0 : i32
    return %c0_i32, %c0_i32_0 : i32, i32
  }
  func.func @transform_2(%arg0: i32) -> (i32, i32) {
    %c0_i32 = arith.constant 0 : i32
    %c0_i32_0 = arith.constant 0 : i32
    %c0_i32_1 = arith.constant 0 : i32
    return %c0_i32, %c0_i32_0 : i32, i32
  }
  func.func @transform_3(%arg0: i32) -> (i32, i32, i32) {
    %c0_i32 = arith.constant 0 : i32
    %c0_i32_0 = arith.constant 0 : i32
    %c0_i32_1 = arith.constant 0 : i32
    return %arg0, %c0_i32, %c0_i32_0 : i32, i32, i32
  }
}

module attributes {stable_mosaic.version = 11 : i64} {
  func.func @_conv_pool_kernel(%arg0: i32, %arg1: memref<1x4x36x288xf32, #tpu.memory_space<vmem>>, %arg2: memref<288x48xf32, #tpu.memory_space<vmem>>, %arg3: memref<3x48xf32, #tpu.memory_space<vmem>>, %arg4: memref<1x36x48xf32, #tpu.memory_space<vmem>>) attributes {dimension_semantics = [#tpu.dimension_semantics<parallel>], iteration_bounds = array<i64: 2>, scalar_prefetch = 0 : i64, scratch_operands = 0 : i64, tpu.core_type = #tpu.core_type<tc>, window_params = [{transform_indices = @transform_0, window_bounds = array<i64: 1, 4, 36, 288>}, {pipeline_mode = #tpu.pipeline_mode<synchronous>, transform_indices = @transform_1, window_bounds = array<i64: 288, 48>}, {pipeline_mode = #tpu.pipeline_mode<synchronous>, transform_indices = @transform_2, window_bounds = array<i64: 3, 48>}, {transform_indices = @transform_3, window_bounds = array<i64: 1, 36, 48>}]} {
    %c0 = arith.constant 0 : index
    %c0_0 = arith.constant 0 : index
    %0 = vector.load %arg2[%c0, %c0_0] : memref<288x48xf32, #tpu.memory_space<vmem>>, vector<288x48xf32>
    %c0_1 = arith.constant 0 : index
    %c0_2 = arith.constant 0 : index
    %1 = vector.load %arg3[%c0_1, %c0_2] : memref<3x48xf32, #tpu.memory_space<vmem>>, vector<1x48xf32>
    %c1 = arith.constant 1 : index
    %c0_3 = arith.constant 0 : index
    %2 = vector.load %arg3[%c1, %c0_3] : memref<3x48xf32, #tpu.memory_space<vmem>>, vector<1x48xf32>
    %c2 = arith.constant 2 : index
    %c0_4 = arith.constant 0 : index
    %3 = vector.load %arg3[%c2, %c0_4] : memref<3x48xf32, #tpu.memory_space<vmem>>, vector<1x48xf32>
    %c0_5 = arith.constant 0 : index
    %c0_6 = arith.constant 0 : index
    %c0_7 = arith.constant 0 : index
    %c0_8 = arith.constant 0 : index
    %4 = vector.load %arg1[%c0_5, %c0_6, %c0_7, %c0_8] : memref<1x4x36x288xf32, #tpu.memory_space<vmem>>, vector<1x1x36x288xf32>
    %5 = vector.shape_cast %4 : vector<1x1x36x288xf32> to vector<36x288xf32>
    %cst = arith.constant dense<0.000000e+00> : vector<36x48xf32>
    %6 = tpu.matmul %5, %0, %cst {dimension_numbers = #tpu.dot_dimension_numbers<[1], [0], [0], [1], [0, 0, 1, 1], [], []>} : vector<36x288xf32>, vector<288x48xf32>, vector<36x48xf32> -> vector<36x48xf32>
    %7 = vector.broadcast %1 : vector<1x48xf32> to vector<36x48xf32>
    %8 = arith.addf %6, %7 : vector<36x48xf32>
    %cst_9 = arith.constant 0.000000e+00 : f32
    %9 = vector.broadcast %cst_9 : f32 to vector<36x48xf32>
    %10 = arith.maximumf %8, %9 : vector<36x48xf32>
    %11 = vector.broadcast %2 : vector<1x48xf32> to vector<36x48xf32>
    %12 = arith.mulf %10, %11 : vector<36x48xf32>
    %13 = vector.broadcast %3 : vector<1x48xf32> to vector<36x48xf32>
    %14 = arith.addf %12, %13 : vector<36x48xf32>
    %c0_10 = arith.constant 0 : index
    %c1_11 = arith.constant 1 : index
    %c0_12 = arith.constant 0 : index
    %c0_13 = arith.constant 0 : index
    %15 = vector.load %arg1[%c0_10, %c1_11, %c0_12, %c0_13] : memref<1x4x36x288xf32, #tpu.memory_space<vmem>>, vector<1x1x36x288xf32>
    %16 = vector.shape_cast %15 : vector<1x1x36x288xf32> to vector<36x288xf32>
    %cst_14 = arith.constant dense<0.000000e+00> : vector<36x48xf32>
    %17 = tpu.matmul %16, %0, %cst_14 {dimension_numbers = #tpu.dot_dimension_numbers<[1], [0], [0], [1], [0, 0, 1, 1], [], []>} : vector<36x288xf32>, vector<288x48xf32>, vector<36x48xf32> -> vector<36x48xf32>
    %18 = vector.broadcast %1 : vector<1x48xf32> to vector<36x48xf32>
    %19 = arith.addf %17, %18 : vector<36x48xf32>
    %cst_15 = arith.constant 0.000000e+00 : f32
    %20 = vector.broadcast %cst_15 : f32 to vector<36x48xf32>
    %21 = arith.maximumf %19, %20 : vector<36x48xf32>
    %22 = vector.broadcast %2 : vector<1x48xf32> to vector<36x48xf32>
    %23 = arith.mulf %21, %22 : vector<36x48xf32>
    %24 = vector.broadcast %3 : vector<1x48xf32> to vector<36x48xf32>
    %25 = arith.addf %23, %24 : vector<36x48xf32>
    %26 = arith.maximumf %14, %25 : vector<36x48xf32>
    %c0_16 = arith.constant 0 : index
    %c2_17 = arith.constant 2 : index
    %c0_18 = arith.constant 0 : index
    %c0_19 = arith.constant 0 : index
    %27 = vector.load %arg1[%c0_16, %c2_17, %c0_18, %c0_19] : memref<1x4x36x288xf32, #tpu.memory_space<vmem>>, vector<1x1x36x288xf32>
    %28 = vector.shape_cast %27 : vector<1x1x36x288xf32> to vector<36x288xf32>
    %cst_20 = arith.constant dense<0.000000e+00> : vector<36x48xf32>
    %29 = tpu.matmul %28, %0, %cst_20 {dimension_numbers = #tpu.dot_dimension_numbers<[1], [0], [0], [1], [0, 0, 1, 1], [], []>} : vector<36x288xf32>, vector<288x48xf32>, vector<36x48xf32> -> vector<36x48xf32>
    %30 = vector.broadcast %1 : vector<1x48xf32> to vector<36x48xf32>
    %31 = arith.addf %29, %30 : vector<36x48xf32>
    %cst_21 = arith.constant 0.000000e+00 : f32
    %32 = vector.broadcast %cst_21 : f32 to vector<36x48xf32>
    %33 = arith.maximumf %31, %32 : vector<36x48xf32>
    %34 = vector.broadcast %2 : vector<1x48xf32> to vector<36x48xf32>
    %35 = arith.mulf %33, %34 : vector<36x48xf32>
    %36 = vector.broadcast %3 : vector<1x48xf32> to vector<36x48xf32>
    %37 = arith.addf %35, %36 : vector<36x48xf32>
    %38 = arith.maximumf %26, %37 : vector<36x48xf32>
    %c0_22 = arith.constant 0 : index
    %c3 = arith.constant 3 : index
    %c0_23 = arith.constant 0 : index
    %c0_24 = arith.constant 0 : index
    %39 = vector.load %arg1[%c0_22, %c3, %c0_23, %c0_24] : memref<1x4x36x288xf32, #tpu.memory_space<vmem>>, vector<1x1x36x288xf32>
    %40 = vector.shape_cast %39 : vector<1x1x36x288xf32> to vector<36x288xf32>
    %cst_25 = arith.constant dense<0.000000e+00> : vector<36x48xf32>
    %41 = tpu.matmul %40, %0, %cst_25 {dimension_numbers = #tpu.dot_dimension_numbers<[1], [0], [0], [1], [0, 0, 1, 1], [], []>} : vector<36x288xf32>, vector<288x48xf32>, vector<36x48xf32> -> vector<36x48xf32>
    %42 = vector.broadcast %1 : vector<1x48xf32> to vector<36x48xf32>
    %43 = arith.addf %41, %42 : vector<36x48xf32>
    %cst_26 = arith.constant 0.000000e+00 : f32
    %44 = vector.broadcast %cst_26 : f32 to vector<36x48xf32>
    %45 = arith.maximumf %43, %44 : vector<36x48xf32>
    %46 = vector.broadcast %2 : vector<1x48xf32> to vector<36x48xf32>
    %47 = arith.mulf %45, %46 : vector<36x48xf32>
    %48 = vector.broadcast %3 : vector<1x48xf32> to vector<36x48xf32>
    %49 = arith.addf %47, %48 : vector<36x48xf32>
    %50 = arith.maximumf %38, %49 : vector<36x48xf32>
    %c0_27 = arith.constant 0 : index
    %c0_28 = arith.constant 0 : index
    %c0_29 = arith.constant 0 : index
    %51 = vector.load %arg4[%c0_27, %c0_28, %c0_29] : memref<1x36x48xf32, #tpu.memory_space<vmem>>, vector<1x36x48xf32>
    %52 = vector.shape_cast %51 : vector<1x36x48xf32> to vector<36x48xf32>
    %53 = vector.shape_cast %50 : vector<36x48xf32> to vector<1x36x48xf32>
    tpu.vector_store %arg4[%c0_27, %c0_28, %c0_29], %53 {strides = array<i32>} : memref<1x36x48xf32, #tpu.memory_space<vmem>>, vector<1x36x48xf32>,
    return
  }
  func.func @transform_0(%arg0: i32) -> (i32, i32, i32, i32) {
    %c0_i32 = arith.constant 0 : i32
    %c0_i32_0 = arith.constant 0 : i32
    %c0_i32_1 = arith.constant 0 : i32
    %c0_i32_2 = arith.constant 0 : i32
    return %arg0, %c0_i32, %c0_i32_0, %c0_i32_1 : i32, i32, i32, i32
  }
  func.func @transform_1(%arg0: i32) -> (i32, i32) {
    %c0_i32 = arith.constant 0 : i32
    %c0_i32_0 = arith.constant 0 : i32
    %c0_i32_1 = arith.constant 0 : i32
    return %c0_i32, %c0_i32_0 : i32, i32
  }
  func.func @transform_2(%arg0: i32) -> (i32, i32) {
    %c0_i32 = arith.constant 0 : i32
    %c0_i32_0 = arith.constant 0 : i32
    %c0_i32_1 = arith.constant 0 : i32
    return %c0_i32, %c0_i32_0 : i32, i32
  }
  func.func @transform_3(%arg0: i32) -> (i32, i32, i32) {
    %c0_i32 = arith.constant 0 : i32
    %c0_i32_0 = arith.constant 0 : i32
    %c0_i32_1 = arith.constant 0 : i32
    return %arg0, %c0_i32, %c0_i32_0 : i32, i32, i32
  }
}

module attributes {stable_mosaic.version = 11 : i64} {
  func.func @_linear_kernel(%arg0: memref<8x1728xf32, #tpu.memory_space<vmem>>, %arg1: memref<1728x16xf32, #tpu.memory_space<vmem>>, %arg2: memref<1x16xf32, #tpu.memory_space<vmem>>, %arg3: memref<8x16xf32, #tpu.memory_space<vmem>>) attributes {dimension_semantics = [], scalar_prefetch = 0 : i64, scratch_operands = 0 : i64, tpu.core_type = #tpu.core_type<tc>} {
    %c0 = arith.constant 0 : index
    %c0_0 = arith.constant 0 : index
    %0 = vector.load %arg0[%c0, %c0_0] : memref<8x1728xf32, #tpu.memory_space<vmem>>, vector<8x1728xf32>
    %c0_1 = arith.constant 0 : index
    %c0_2 = arith.constant 0 : index
    %1 = vector.load %arg1[%c0_1, %c0_2] : memref<1728x16xf32, #tpu.memory_space<vmem>>, vector<1728x16xf32>
    %cst = arith.constant dense<0.000000e+00> : vector<8x16xf32>
    %2 = tpu.matmul %0, %1, %cst {dimension_numbers = #tpu.dot_dimension_numbers<[1], [0], [0], [1], [0, 0, 1, 1], [], []>} : vector<8x1728xf32>, vector<1728x16xf32>, vector<8x16xf32> -> vector<8x16xf32>
    %c0_3 = arith.constant 0 : index
    %c0_4 = arith.constant 0 : index
    %3 = vector.load %arg2[%c0_3, %c0_4] : memref<1x16xf32, #tpu.memory_space<vmem>>, vector<1x16xf32>
    %4 = vector.broadcast %3 : vector<1x16xf32> to vector<8x16xf32>
    %5 = arith.addf %2, %4 : vector<8x16xf32>
    %c0_5 = arith.constant 0 : index
    %c0_6 = arith.constant 0 : index
    %6 = vector.load %arg3[%c0_5, %c0_6] : memref<8x16xf32, #tpu.memory_space<vmem>>, vector<8x16xf32>
    tpu.vector_store %arg3[%c0_5, %c0_6], %5 {strides = array<i32>} : memref<8x16xf32, #tpu.memory_space<vmem>>, vector<8x16xf32>,
    return
  }
}

</mosaic_0001>

<llo_original>
// kernel: cnn2d_forward.4
$region0: #{cnn2d_forward.4}
  #allocation0 [shape = 'u32[]', space=smem, size = 0x4, offset = 0x4, fixed_abs, tag = 'smem constant byte address 0x4 - core index']
  #allocation1 [shape = 'u32[144,128]{1,0:T(1,128)}', space=vmem, size = 0x12000, scoped, tag = 'internal scratch']
  %s0 = inlined_call_operand.vmem [shape: f32[2,4,1024,25], index: 0, kind: input, shape index: {}]
  %s1 = inlined_call_operand.vmem [shape: f32[25,24], index: 1, kind: input, shape index: {}]
  %s2 = inlined_call_operand.vmem [shape: f32[3,24], index: 2, kind: input, shape index: {}]
  %s3 = inlined_call_operand.vmem [shape: f32[2,1024,24], index: 3, kind: output, shape index: {}]
  %s4 = sld [smem:[#allocation0]]
  $region45: #{cnn2d_forward.4} parent=0
    _
  %s6 = ssub.s32 1, %s4
  %s7 = scalar_select 0, %s6, %s4
  loop: start=0, step=1, limit=4
  $region2: #{cnn2d_forward.4} parent=0 // loop_pre_header
    _
  $region3: #{cnn2d_forward.4} parent=0 // loop_header
    %s9 = sphi 0, %s13
    %p10 = scmp.ge.s32.totalorder %s9, 4
    %s19 = sphi 0, %s21
    %s22 = sphi 0, %s19
    %s23 = sphi 0, %s22
    %s39 = sphi 0, %s23
    %s43 = sphi 0, %s43
    %s45 = sphi 0, %s43
    %s46 = sphi 0, %s45
    %s60 = sphi 0, %s46
    %s64 = sphi 0, %s64
    %s66 = sphi 0, %s64
    %s67 = sphi 0, %s66
    %s81 = sphi 0, %s67
    %s87 = sphi 0, %s89
    %s90 = sphi 0, %s87
    %s91 = sphi 0, %s90
    %s107 = sphi 0, %s91
  $region4: #{cnn2d_forward.4} parent=0 // loop_header_branch
    %12 = sbr.rel (%p10) target = $region8
  $region5: #{cnn2d_forward.4} parent=0 // loop_body
    %s14 = ssub.s32 %s9, 1
    %s15 = ssub.s32 %s9, 2
    %s16 = sadd.s32 %s9, 1
    %s17 = ssub.s32 %s9, %s16
    %p18 = scmp.eq.s32.totalorder %s17, 0
    %s20 = sadd.s32 %s19, 1
    %s21 = scalar_select %p18, %s19, %s20
    %p24 = pneg %p18
    %p25 = scmp.eq.s32.totalorder %s9, 1
    %p26 = por %p24, %p25
    %p27 = scmp.ne.s32.totalorder %s19, %s22
    %p28 = scmp.eq.s32.totalorder %s9, 0
    %p29 = por %p27, %p28
    %p30 = scmp.ne.s32.totalorder %s19, %s22
    %p31 = scmp.eq.s32.totalorder %s14, 1
    %p32 = por %p30, %p31
    %p33 = scmp.ne.s32.totalorder %s22, %s23
    %p34 = scmp.eq.s32.totalorder %s14, 0
    %p35 = por %p33, %p34
    %p36 = scmp.ne.s32.totalorder %s22, %s23
    %p37 = scmp.eq.s32.totalorder %s15, 1
    %p38 = por %p36, %p37
    %p40 = scmp.ne.s32.totalorder %s23, %s39
    %p41 = scmp.eq.s32.totalorder %s15, 0
    %p42 = por %p40, %p41
    %s44 = sadd.s32 %s43, 1
    %p47 = scmp.eq.s32.totalorder %s9, 1
    %p48 = scmp.ne.s32.totalorder %s43, %s45
    %p49 = scmp.eq.s32.totalorder %s9, 0
    %p50 = por %p48, %p49
    %p51 = scmp.ne.s32.totalorder %s43, %s45
    %p52 = scmp.eq.s32.totalorder %s14, 1
    %p53 = por %p51, %p52
    %p54 = scmp.ne.s32.totalorder %s45, %s46
    %p55 = scmp.eq.s32.totalorder %s14, 0
    %p56 = por %p54, %p55
    %p57 = scmp.ne.s32.totalorder %s45, %s46
    %p58 = scmp.eq.s32.totalorder %s15, 1
    %p59 = por %p57, %p58
    %p61 = scmp.ne.s32.totalorder %s46, %s60
    %p62 = scmp.eq.s32.totalorder %s15, 0
    %p63 = por %p61, %p62
    %s65 = sadd.s32 %s64, 1
    %p68 = scmp.eq.s32.totalorder %s9, 1
    %p69 = scmp.ne.s32.totalorder %s64, %s66
    %p70 = scmp.eq.s32.totalorder %s9, 0
    %p71 = por %p69, %p70
    %p72 = scmp.ne.s32.totalorder %s64, %s66
    %p73 = scmp.eq.s32.totalorder %s14, 1
    %p74 = por %p72, %p73
    %p75 = scmp.ne.s32.totalorder %s66, %s67
    %p76 = scmp.eq.s32.totalorder %s14, 0
    %p77 = por %p75, %p76
    %p78 = scmp.ne.s32.totalorder %s66, %s67
    %p79 = scmp.eq.s32.totalorder %s15, 1
    %p80 = por %p78, %p79
    %p82 = scmp.ne.s32.totalorder %s67, %s81
    %p83 = scmp.eq.s32.totalorder %s15, 0
    %p84 = por %p82, %p83
    %s85 = ssub.s32 %s9, %s16
    %p86 = scmp.eq.s32.totalorder %s85, 0
    %s88 = sadd.s32 %s87, 1
    %s89 = scalar_select %p86, %s87, %s88
    %p92 = pneg %p86
    %p93 = scmp.eq.s32.totalorder %s9, 1
    %p94 = por %p92, %p93
    %p95 = scmp.ne.s32.totalorder %s87, %s90
    %p96 = scmp.eq.s32.totalorder %s9, 0
    %p97 = por %p95, %p96
    %p98 = scmp.ne.s32.totalorder %s87, %s90
    %p99 = scmp.eq.s32.totalorder %s14, 1
    %p100 = por %p98, %p99
    %p101 = scmp.ne.s32.totalorder %s90, %s91
    %p102 = scmp.eq.s32.totalorder %s14, 0
    %p103 = por %p101, %p102
    %p104 = scmp.ne.s32.totalorder %s90, %s91
    %p105 = scmp.eq.s32.totalorder %s15, 1
    %p106 = por %p104, %p105
    %p108 = scmp.ne.s32.totalorder %s91, %s107
    %p109 = scmp.eq.s32.totalorder %s15, 0
    %p110 = por %p108, %p109
    %p111 = scmp.le.s32.totalorder 1, %s9
    %p112 = scmp.lt.s32.totalorder %s9, 3
    %p113 = pnand %p111, %p112
    %p114 = pneg %p113
    // Predicated region
    $region9: #{cnn2d_forward.4} parent=5 // pred_check
      _
    $region10: #{cnn2d_forward.4} parent=5 // pred_check_branch
      %116 = sbr.rel (%p113) target = $region12
    $region11: #{cnn2d_forward.4} parent=5 // pred_region
      %s117 = ssub.s32 %s9, 1
      // Predicated region
      $region13: #{cnn2d_forward.4} parent=11 // pred_check
        %p118 = pneg %p56
      $region14: #{cnn2d_forward.4} parent=11 // pred_check_branch
        %120 = sbr.rel (%p118) target = $region16
      $region15: #{cnn2d_forward.4} parent=11 // pred_region
        _
      $region16: #{cnn2d_forward.4} parent=11 // pred_fallthru
        _
      // Predicated region
      $region17: #{cnn2d_forward.4} parent=11 // pred_check
        %p121 = pneg %p77
      $region18: #{cnn2d_forward.4} parent=11 // pred_check_branch
        %123 = sbr.rel (%p121) target = $region20
      $region19: #{cnn2d_forward.4} parent=11 // pred_region
        _
      $region20: #{cnn2d_forward.4} parent=11 // pred_fallthru
        _
    $region12: #{cnn2d_forward.4} parent=5 // pred_fallthru
      _
    %p124 = scmp.lt.s32.totalorder %s9, 2
    // Predicated region
    $region21: #{cnn2d_forward.4} parent=5 // pred_check
      %p125 = pneg %p124
    $region22: #{cnn2d_forward.4} parent=5 // pred_check_branch
      %127 = sbr.rel (%p125) target = $region24
    $region23: #{cnn2d_forward.4} parent=5 // pred_region
      // Predicated region
      $region25: #{cnn2d_forward.4} parent=23 // pred_check
        %p128 = pneg %p29
      $region26: #{cnn2d_forward.4} parent=23 // pred_check_branch
        %130 = sbr.rel (%p128) target = $region28
      $region27: #{cnn2d_forward.4} parent=23 // pred_region
        %p131 = scmp.lt.s32.totalorder %s9, 1
        %s132 = scalar_select %p131, %s9, 1
        %s133 = smul.addr %s132, 512
        %s134 = smul.addr %s133, 8
        %s135 = scalar_lea.vmem %s0, %s134
      $region28: #{cnn2d_forward.4} parent=23 // pred_fallthru
        _
    $region24: #{cnn2d_forward.4} parent=5 // pred_fallthru
      _
    %p136 = scmp.le.s32.totalorder 1, %s9
    %p137 = scmp.lt.s32.totalorder %s9, 3
    %p138 = pnand %p136, %p137
    %p139 = pneg %p138
    // Predicated region
    $region29: #{cnn2d_forward.4} parent=5 // pred_check
      _
    $region30: #{cnn2d_forward.4} parent=5 // pred_check_branch
      %141 = sbr.rel (%p138) target = $region32
    $region31: #{cnn2d_forward.4} parent=5 // pred_region
      %s142 = ssub.s32 %s9, 1
      %p143 = scmp.lt.s32.totalorder %s14, 1
      %s144 = scalar_select %p143, %s14, 1
      %s145 = smul.addr %s144, 512
      %s146 = smul.addr %s145, 8
      %s147 = scalar_lea.vmem %s0, %s146
      %p148 = pneg %p35
      %p149 = pneg %p32
      %p150 = pneg %p56
      %p151 = pneg %p53
      %p152 = pneg %p77
      %p153 = pneg %p74
      %p154 = pneg %p103
      %p155 = pneg %p100
      %p156 = scmp.lt.s32.totalorder %s14, 1
      %s157 = scalar_select %p156, %s14, 1
      %s158 = smul.addr %s157, 128
      %s159 = smul.addr %s158, 8
      %s160 = scalar_lea.vmem %s3, %s159
      %p161 = scmp.lt.s32.totalorder %s14, 1
      %s162 = scalar_select %p161, %s14, 1
      %s163 = smul.addr %s162, 512
      %s164 = smul.addr %s163, 8
      %s165 = scalar_lea.vmem %s0, %s164
      %p166 = scmp.lt.s32.totalorder %s14, 1
      %s167 = scalar_select %p166, %s14, 1
      %s168 = smul.addr %s167, 128
      %s169 = smul.addr %s168, 8
      %s170 = scalar_lea.vmem %s3, %s169
      %v171 = vld [vmem:[%s1] sm:$0xff]
      %v172 = vld [vmem:[%s1 + $0x8] sm:$0xff]
      %v173 = vld [vmem:[%s1 + $0x10] sm:$0xff]
      %v174 = vld [vmem:[%s1 + $0x18] sm:$0x1]
      %v175 = vld [vmem:[%s2] sm:$0x1]
      %v176 = vld [vmem:[%s2 + $0x1] sm:$0x1]
      %v177 = vld [vmem:[%s2 + $0x2] sm:$0x1]
      %v178 = vld [vmem:[%s165] sm:$0xff]
      %v179 = vld [vmem:[%s165 + $0x8] sm:$0xff]
      %v180 = vld [vmem:[%s165 + $0x10] sm:$0xff]
      %v181 = vld [vmem:[%s165 + $0x18] sm:$0xff]
      %v182 = vld [vmem:[%s165 + $0x20] sm:$0xff]
      %v183 = vld [vmem:[%s165 + $0x28] sm:$0xff]
      %v184 = vld [vmem:[%s165 + $0x30] sm:$0xff]
      %v185 = vld [vmem:[%s165 + $0x38] sm:$0xff]
      %v186 = vld [vmem:[%s165 + $0x40] sm:$0xff]
      %v187 = vld [vmem:[%s165 + $0x48] sm:$0xff]
      %v188 = vld [vmem:[%s165 + $0x50] sm:$0xff]
      %v189 = vld [vmem:[%s165 + $0x58] sm:$0xff]
      %v190 = vld [vmem:[%s165 + $0x60] sm:$0xff]
      %v191 = vld [vmem:[%s165 + $0x68] sm:$0xff]
      %v192 = vld [vmem:[%s165 + $0x70] sm:$0xff]
      %v193 = vld [vmem:[%s165 + $0x78] sm:$0xff]
      %v194 = vld [vmem:[%s165 + $0x80] sm:$0xff]
      %v195 = vld [vmem:[%s165 + $0x88] sm:$0xff]
      %v196 = vld [vmem:[%s165 + $0x90] sm:$0xff]
      %v197 = vld [vmem:[%s165 + $0x98] sm:$0xff]
      %v198 = vld [vmem:[%s165 + $0xa0] sm:$0xff]
      %v199 = vld [vmem:[%s165 + $0xa8] sm:$0xff]
      %v200 = vld [vmem:[%s165 + $0xb0] sm:$0xff]
      %v201 = vld [vmem:[%s165 + $0xb8] sm:$0xff]
      %v202 = vld [vmem:[%s165 + $0xc0] sm:$0xff]
      %v203 = vld [vmem:[%s165 + $0xc8] sm:$0xff]
      %v204 = vld [vmem:[%s165 + $0xd0] sm:$0xff]
      %v205 = vld [vmem:[%s165 + $0xd8] sm:$0xff]
      %v206 = vld [vmem:[%s165 + $0xe0] sm:$0xff]
      %v207 = vld [vmem:[%s165 + $0xe8] sm:$0xff]
      %v208 = vld [vmem:[%s165 + $0xf0] sm:$0xff]
      %v209 = vld [vmem:[%s165 + $0xf8] sm:$0xff]
      %v210 = vld [vmem:[%s165 + $0x100] sm:$0xff]
      %v211 = vld [vmem:[%s165 + $0x108] sm:$0xff]
      %v212 = vld [vmem:[%s165 + $0x110] sm:$0xff]
      %v213 = vld [vmem:[%s165 + $0x118] sm:$0xff]
      %v214 = vld [vmem:[%s165 + $0x120] sm:$0xff]
      %v215 = vld [vmem:[%s165 + $0x128] sm:$0xff]
      %v216 = vld [vmem:[%s165 + $0x130] sm:$0xff]
      %v217 = vld [vmem:[%s165 + $0x138] sm:$0xff]
      %v218 = vld [vmem:[%s165 + $0x140] sm:$0xff]
      %v219 = vld [vmem:[%s165 + $0x148] sm:$0xff]
      %v220 = vld [vmem:[%s165 + $0x150] sm:$0xff]
      %v221 = vld [vmem:[%s165 + $0x158] sm:$0xff]
      %v222 = vld [vmem:[%s165 + $0x160] sm:$0xff]
      %v223 = vld [vmem:[%s165 + $0x168] sm:$0xff]
      %v224 = vld [vmem:[%s165 + $0x170] sm:$0xff]
      %v225 = vld [vmem:[%s165 + $0x178] sm:$0xff]
      %v226 = vld [vmem:[%s165 + $0x180] sm:$0xff]
      %v227 = vld [vmem:[%s165 + $0x188] sm:$0xff]
      %v228 = vld [vmem:[%s165 + $0x190] sm:$0xff]
      %v229 = vld [vmem:[%s165 + $0x198] sm:$0xff]
      %v230 = vld [vmem:[%s165 + $0x1a0] sm:$0xff]
      %v231 = vld [vmem:[%s165 + $0x1a8] sm:$0xff]
      %v232 = vld [vmem:[%s165 + $0x1b0] sm:$0xff]
      %v233 = vld [vmem:[%s165 + $0x1b8] sm:$0xff]
      %v234 = vld [vmem:[%s165 + $0x1c0] sm:$0xff]
      %v235 = vld [vmem:[%s165 + $0x1c8] sm:$0xff]
      %v236 = vld [vmem:[%s165 + $0x1d0] sm:$0xff]
      %v237 = vld [vmem:[%s165 + $0x1d8] sm:$0xff]
      %v238 = vld [vmem:[%s165 + $0x1e0] sm:$0xff]
      %v239 = vld [vmem:[%s165 + $0x1e8] sm:$0xff]
      %v240 = vld [vmem:[%s165 + $0x1f0] sm:$0xff]
      %v241 = vld [vmem:[%s165 + $0x1f8] sm:$0xff]
      %v242 = vld [vmem:[%s165 + $0x200] sm:$0xff]
      %v243 = vld [vmem:[%s165 + $0x208] sm:$0xff]
      %v244 = vld [vmem:[%s165 + $0x210] sm:$0xff]
      %v245 = vld [vmem:[%s165 + $0x218] sm:$0xff]
      %v246 = vld [vmem:[%s165 + $0x220] sm:$0xff]
      %v247 = vld [vmem:[%s165 + $0x228] sm:$0xff]
      %v248 = vld [vmem:[%s165 + $0x230] sm:$0xff]
      %v249 = vld [vmem:[%s165 + $0x238] sm:$0xff]
      %v250 = vld [vmem:[%s165 + $0x240] sm:$0xff]
      %v251 = vld [vmem:[%s165 + $0x248] sm:$0xff]
      %v252 = vld [vmem:[%s165 + $0x250] sm:$0xff]
      %v253 = vld [vmem:[%s165 + $0x258] sm:$0xff]
      %v254 = vld [vmem:[%s165 + $0x260] sm:$0xff]
      %v255 = vld [vmem:[%s165 + $0x268] sm:$0xff]
      %v256 = vld [vmem:[%s165 + $0x270] sm:$0xff]
      %v257 = vld [vmem:[%s165 + $0x278] sm:$0xff]
      %v258 = vld [vmem:[%s165 + $0x280] sm:$0xff]
      %v259 = vld [vmem:[%s165 + $0x288] sm:$0xff]
      %v260 = vld [vmem:[%s165 + $0x290] sm:$0xff]
      %v261 = vld [vmem:[%s165 + $0x298] sm:$0xff]
      %v262 = vld [vmem:[%s165 + $0x2a0] sm:$0xff]
      %v263 = vld [vmem:[%s165 + $0x2a8] sm:$0xff]
      %v264 = vld [vmem:[%s165 + $0x2b0] sm:$0xff]
      %v265 = vld [vmem:[%s165 + $0x2b8] sm:$0xff]
      %v266 = vld [vmem:[%s165 + $0x2c0] sm:$0xff]
      %v267 = vld [vmem:[%s165 + $0x2c8] sm:$0xff]
      %v268 = vld [vmem:[%s165 + $0x2d0] sm:$0xff]
      %v269 = vld [vmem:[%s165 + $0x2d8] sm:$0xff]
      %v270 = vld [vmem:[%s165 + $0x2e0] sm:$0xff]
      %v271 = vld [vmem:[%s165 + $0x2e8] sm:$0xff]
      %v272 = vld [vmem:[%s165 + $0x2f0] sm:$0xff]
      %v273 = vld [vmem:[%s165 + $0x2f8] sm:$0xff]
      %v274 = vld [vmem:[%s165 + $0x300] sm:$0xff]
      %v275 = vld [vmem:[%s165 + $0x308] sm:$0xff]
      %v276 = vld [vmem:[%s165 + $0x310] sm:$0xff]
      %v277 = vld [vmem:[%s165 + $0x318] sm:$0xff]
      %v278 = vld [vmem:[%s165 + $0x320] sm:$0xff]
      %v279 = vld [vmem:[%s165 + $0x328] sm:$0xff]
      %v280 = vld [vmem:[%s165 + $0x330] sm:$0xff]
      %v281 = vld [vmem:[%s165 + $0x338] sm:$0xff]
      %v282 = vld [vmem:[%s165 + $0x340] sm:$0xff]
      %v283 = vld [vmem:[%s165 + $0x348] sm:$0xff]
      %v284 = vld [vmem:[%s165 + $0x350] sm:$0xff]
      %v285 = vld [vmem:[%s165 + $0x358] sm:$0xff]
      %v286 = vld [vmem:[%s165 + $0x360] sm:$0xff]
      %v287 = vld [vmem:[%s165 + $0x368] sm:$0xff]
      %v288 = vld [vmem:[%s165 + $0x370] sm:$0xff]
      %v289 = vld [vmem:[%s165 + $0x378] sm:$0xff]
      %v290 = vld [vmem:[%s165 + $0x380] sm:$0xff]
      %v291 = vld [vmem:[%s165 + $0x388] sm:$0xff]
      %v292 = vld [vmem:[%s165 + $0x390] sm:$0xff]
      %v293 = vld [vmem:[%s165 + $0x398] sm:$0xff]
      %v294 = vld [vmem:[%s165 + $0x3a0] sm:$0xff]
      %v295 = vld [vmem:[%s165 + $0x3a8] sm:$0xff]
      %v296 = vld [vmem:[%s165 + $0x3b0] sm:$0xff]
      %v297 = vld [vmem:[%s165 + $0x3b8] sm:$0xff]
      %v298 = vld [vmem:[%s165 + $0x3c0] sm:$0xff]
      %v299 = vld [vmem:[%s165 + $0x3c8] sm:$0xff]
      %v300 = vld [vmem:[%s165 + $0x3d0] sm:$0xff]
      %v301 = vld [vmem:[%s165 + $0x3d8] sm:$0xff]
      %v302 = vld [vmem:[%s165 + $0x3e0] sm:$0xff]
      %v303 = vld [vmem:[%s165 + $0x3e8] sm:$0xff]
      %v304 = vld [vmem:[%s165 + $0x3f0] sm:$0xff]
      %v305 = vld [vmem:[%s165 + $0x3f8] sm:$0xff]
      %v306 = vlaneseq
      %v307 = vshrl.u32 %v306, 7
      %v308 = vsub.s32 0, %v307
      %v309 = vrot.slane %v175, %v308
      %vm310 = vcmask 203776
      %v312 = vsel %vm310, %v178, 0
      %v315 = vsel %vm310, %v179, 0
      %v318 = vsel %vm310, %v180, 0
      %v321 = vsel %vm310, %v181, 0
      %v324 = vsel %vm310, %v182, 0
      %v327 = vsel %vm310, %v183, 0
      %v330 = vsel %vm310, %v184, 0
      %v333 = vsel %vm310, %v185, 0
      %v336 = vsel %vm310, %v186, 0
      %v339 = vsel %vm310, %v187, 0
      %v342 = vsel %vm310, %v188, 0
      %v345 = vsel %vm310, %v189, 0
      %v348 = vsel %vm310, %v190, 0
      %v351 = vsel %vm310, %v191, 0
      %v354 = vsel %vm310, %v192, 0
      %v357 = vsel %vm310, %v193, 0
      %v360 = vsel %vm310, %v194, 0
      %v363 = vsel %vm310, %v195, 0
      %v366 = vsel %vm310, %v196, 0
      %v369 = vsel %vm310, %v197, 0
      %v372 = vsel %vm310, %v198, 0
      %v375 = vsel %vm310, %v199, 0
      %v378 = vsel %vm310, %v200, 0
      %v381 = vsel %vm310, %v201, 0
      %v384 = vsel %vm310, %v202, 0
      %v387 = vsel %vm310, %v203, 0
      %v390 = vsel %vm310, %v204, 0
      %v393 = vsel %vm310, %v205, 0
      %v396 = vsel %vm310, %v206, 0
      %v399 = vsel %vm310, %v207, 0
      %v402 = vsel %vm310, %v208, 0
      %v405 = vsel %vm310, %v209, 0
      %v408 = vsel %vm310, %v210, 0
      %v411 = vsel %vm310, %v211, 0
      %v414 = vsel %vm310, %v212, 0
      %v417 = vsel %vm310, %v213, 0
      %v420 = vsel %vm310, %v214, 0
      %v423 = vsel %vm310, %v215, 0
      %v426 = vsel %vm310, %v216, 0
      %v429 = vsel %vm310, %v217, 0
      %v432 = vsel %vm310, %v218, 0
      %v435 = vsel %vm310, %v219, 0
      %v438 = vsel %vm310, %v220, 0
      %v441 = vsel %vm310, %v221, 0
      %v444 = vsel %vm310, %v222, 0
      %v447 = vsel %vm310, %v223, 0
      %v450 = vsel %vm310, %v224, 0
      %v453 = vsel %vm310, %v225, 0
      %v456 = vsel %vm310, %v226, 0
      %v459 = vsel %vm310, %v227, 0
      %v462 = vsel %vm310, %v228, 0
      %v465 = vsel %vm310, %v229, 0
      %v468 = vsel %vm310, %v230, 0
      %v471 = vsel %vm310, %v231, 0
      %v474 = vsel %vm310, %v232, 0
      %v477 = vsel %vm310, %v233, 0
      %v480 = vsel %vm310, %v234, 0
      %v483 = vsel %vm310, %v235, 0
      %v486 = vsel %vm310, %v236, 0
      %v489 = vsel %vm310, %v237, 0
      %v492 = vsel %vm310, %v238, 0
      %v495 = vsel %vm310, %v239, 0
      %v498 = vsel %vm310, %v240, 0
      %v501 = vsel %vm310, %v241, 0
      %v504 = vsel %vm310, %v242, 0
      %v507 = vsel %vm310, %v243, 0
      %v510 = vsel %vm310, %v244, 0
      %v513 = vsel %vm310, %v245, 0
      %v516 = vsel %vm310, %v246, 0
      %v519 = vsel %vm310, %v247, 0
      %v522 = vsel %vm310, %v248, 0
      %v525 = vsel %vm310, %v249, 0
      %v528 = vsel %vm310, %v250, 0
      %v531 = vsel %vm310, %v251, 0
      %v534 = vsel %vm310, %v252, 0
      %v537 = vsel %vm310, %v253, 0
      %v540 = vsel %vm310, %v254, 0
      %v543 = vsel %vm310, %v255, 0
      %v546 = vsel %vm310, %v256, 0
      %v549 = vsel %vm310, %v257, 0
      %v552 = vsel %vm310, %v258, 0
      %v555 = vsel %vm310, %v259, 0
      %v558 = vsel %vm310, %v260, 0
      %v561 = vsel %vm310, %v261, 0
      %v564 = vsel %vm310, %v262, 0
      %v567 = vsel %vm310, %v263, 0
      %v570 = vsel %vm310, %v264, 0
      %v573 = vsel %vm310, %v265, 0
      %v576 = vsel %vm310, %v266, 0
      %v579 = vsel %vm310, %v267, 0
      %v582 = vsel %vm310, %v268, 0
      %v585 = vsel %vm310, %v269, 0
      %v588 = vsel %vm310, %v270, 0
      %v591 = vsel %vm310, %v271, 0
      %v594 = vsel %vm310, %v272, 0
      %v597 = vsel %vm310, %v273, 0
      %v600 = vsel %vm310, %v274, 0
      %v603 = vsel %vm310, %v275, 0
      %v606 = vsel %vm310, %v276, 0
      %v609 = vsel %vm310, %v277, 0
      %v612 = vsel %vm310, %v278, 0
      %v615 = vsel %vm310, %v279, 0
      %v618 = vsel %vm310, %v280, 0
      %v621 = vsel %vm310, %v281, 0
      %v624 = vsel %vm310, %v282, 0
      %v627 = vsel %vm310, %v283, 0
      %v630 = vsel %vm310, %v284, 0
      %v633 = vsel %vm310, %v285, 0
      %v636 = vsel %vm310, %v286, 0
      %v639 = vsel %vm310, %v287, 0
      %v642 = vsel %vm310, %v288, 0
      %v645 = vsel %vm310, %v289, 0
      %v648 = vsel %vm310, %v290, 0
      %v651 = vsel %vm310, %v291, 0
      %v654 = vsel %vm310, %v292, 0
      %v657 = vsel %vm310, %v293, 0
      %v660 = vsel %vm310, %v294, 0
      %v663 = vsel %vm310, %v295, 0
      %v666 = vsel %vm310, %v296, 0
      %v669 = vsel %vm310, %v297, 0
      %v672 = vsel %vm310, %v298, 0
      %v675 = vsel %vm310, %v299, 0
      %v678 = vsel %vm310, %v300, 0
      %v681 = vsel %vm310, %v301, 0
      %v684 = vsel %vm310, %v302, 0
      %v687 = vsel %vm310, %v303, 0
      %v690 = vsel %vm310, %v304, 0
      %v693 = vsel %vm310, %v305, 0
      %vm695 = vcmask 1040384
      %v697 = vsel %vm695, %v174, 0
      %699 = vmatprep.subr.mxu0 0.0
      %700 = vmatpush1.msra.mxu0 %v171
      %701 = vmatprep.subr.mxu0 0.0
      %702 = vmatpush1.msra.mxu0 %v172
      %703 = vmatprep.subr.mxu0 0.0
      %704 = vmatpush1.msra.mxu0 %v173
      %705 = vmatprep.subr.mxu0 0.0
      %706 = vmatpush1.msra.mxu0 %v697
      %707 = vmatprep.subr.mxu0 0.0
      %708 = vmatpush1.msra.mxu0 0.0
      %709 = vmatprep.subr.mxu0 0.0
      %710 = vmatpush1.msra.mxu0 0.0
      %711 = vmatprep.subr.mxu0 0.0
      %712 = vmatpush1.msra.mxu0 0.0
      %713 = vmatprep.subr.mxu0 0.0
      %714 = vmatpush1.msra.mxu0 0.0
      %715 = vmatprep.subr.mxu0 0.0
      %716 = vmatpush1.msra.mxu0 0.0
      %717 = vmatprep.subr.mxu0 0.0
      %718 = vmatpush1.msra.mxu0 0.0
      %719 = vmatprep.subr.mxu0 0.0
      %720 = vmatpush1.msra.mxu0 0.0
      %721 = vmatprep.subr.mxu0 0.0
      %722 = vmatpush1.msra.mxu0 0.0
      %723 = vmatprep.subr.mxu0 0.0
      %724 = vmatpush1.msra.mxu0 0.0
      %725 = vmatprep.subr.mxu0 0.0
      %726 = vmatpush1.msra.mxu0 0.0
      %727 = vmatprep.subr.mxu0 0.0
      %728 = vmatpush1.msra.mxu0 0.0
      %729 = vmatprep.subr.mxu0 0.0
      %730 = vmatpush1.msra.mxu0 0.0
      %731 = vmatprep.subr.mxu0 0.0
      %732 = vmatpush1.msra.mxu0 0.0
      %733 = vmatprep.subr.mxu0 0.0
      %734 = vmatpush1.msra.mxu0 0.0
      %735 = vmatprep.subr.mxu0 0.0
      %736 = vmatpush1.msra.mxu0 0.0
      %737 = vmatprep.subr.mxu0 0.0
      %738 = vmatpush1.msra.mxu0 0.0
      %739 = vmatprep.subr.mxu0 0.0
      %740 = vmatpush1.msra.mxu0 0.0
      %741 = vmatprep.subr.mxu0 0.0
      %742 = vmatpush1.msra.mxu0 0.0
      %743 = vmatprep.subr.mxu0 0.0
      %744 = vmatpush1.msra.mxu0 0.0
      %745 = vmatprep.subr.mxu0 0.0
      %746 = vmatpush1.msra.mxu0 0.0
      %747 = vmatprep.subr.mxu0 0.0
      %748 = vmatpush1.msra.mxu0 0.0
      %749 = vmatprep.subr.mxu0 0.0
      %750 = vmatpush1.msra.mxu0 0.0
      %751 = vmatprep.subr.mxu0 0.0
      %752 = vmatpush1.msra.mxu0 0.0
      %753 = vmatprep.subr.mxu0 0.0
      %754 = vmatpush1.msra.mxu0 0.0
      %755 = vmatprep.subr.mxu0 0.0
      %756 = vmatpush1.msra.mxu0 0.0
      %757 = vmatprep.subr.mxu0 0.0
      %758 = vmatpush1.msra.mxu0 0.0
      %759 = vmatprep.subr.mxu0 0.0
      %760 = vmatpush1.msra.mxu0 0.0
      %761 = vmatprep.subr.mxu0 0.0
      %762 = vmatpush1.msra.mxu0 0.0
      %763 = vmatprep.mubr.f32.mxu0 0.0
      %764 = vmatmul.mubr.f32.gmra.mrb[0].mxu0 %v312
      %v765 = vpop.f32.mrb[0].mxu0
      %v766 = vadd.f32 %v309, %v765
      %v767 = vpop.f32.mrb[0].mxu0
      %768 = vmatprep.mubr.f32.mxu0 0.0
      %769 = vmatmul.mubr.f32.gmra.mrb[0].mxu0 %v315
      %v770 = vpop.f32.mrb[0].mxu0
      %v771 = vadd.f32 %v309, %v770
      %v772 = vpop.f32.mrb[0].mxu0
      %773 = vmatprep.mubr.f32.mxu0 0.0
      %774 = vmatmul.mubr.f32.gmra.mrb[0].mxu0 %v318
      %v775 = vpop.f32.mrb[0].mxu0
      %v776 = vadd.f32 %v309, %v775
      %v777 = vpop.f32.mrb[0].mxu0
      %778 = vmatprep.mubr.f32.mxu0 0.0
      %779 = vmatmul.mubr.f32.gmra.mrb[0].mxu0 %v321
      %v780 = vpop.f32.mrb[0].mxu0
      %v781 = vadd.f32 %v309, %v780
      %v782 = vpop.f32.mrb[0].mxu0
      %783 = vmatprep.mubr.f32.mxu0 0.0
      %784 = vmatmul.mubr.f32.gmra.mrb[0].mxu0 %v324
      %v785 = vpop.f32.mrb[0].mxu0
      %v786 = vadd.f32 %v309, %v785
      %v787 = vpop.f32.mrb[0].mxu0
      %788 = vmatprep.mubr.f32.mxu0 0.0
      %789 = vmatmul.mubr.f32.gmra.mrb[0].mxu0 %v327
      %v790 = vpop.f32.mrb[0].mxu0
      %v791 = vadd.f32 %v309, %v790
      %v792 = vpop.f32.mrb[0].mxu0
      %793 = vmatprep.mubr.f32.mxu0 0.0
      %794 = vmatmul.mubr.f32.gmra.mrb[0].mxu0 %v330
      %v795 = vpop.f32.mrb[0].mxu0
      %v796 = vadd.f32 %v309, %v795
      %v797 = vpop.f32.mrb[0].mxu0
      %798 = vmatprep.mubr.f32.mxu0 0.0
      %799 = vmatmul.mubr.f32.gmra.mrb[0].mxu0 %v333
      %v800 = vpop.f32.mrb[0].mxu0
      %v801 = vadd.f32 %v309, %v800
      %v802 = vpop.f32.mrb[0].mxu0
      %803 = vmatprep.mubr.f32.mxu0 0.0
      %804 = vmatmul.mubr.f32.gmra.mrb[0].mxu0 %v336
      %v805 = vpop.f32.mrb[0].mxu0
      %v806 = vadd.f32 %v309, %v805
      %v807 = vpop.f32.mrb[0].mxu0
      %808 = vmatprep.mubr.f32.mxu0 0.0
      %809 = vmatmul.mubr.f32.gmra.mrb[0].mxu0 %v339
      %v810 = vpop.f32.mrb[0].mxu0
      %v811 = vadd.f32 %v309, %v810
      %v812 = vpop.f32.mrb[0].mxu0
      %813 = vmatprep.mubr.f32.mxu0 0.0
      %814 = vmatmul.mubr.f32.gmra.mrb[0].mxu0 %v342
      %v815 = vpop.f32.mrb[0].mxu0
      %v816 = vadd.f32 %v309, %v815
      %v817 = vpop.f32.mrb[0].mxu0
      %818 = vmatprep.mubr.f32.mxu0 0.0
      %819 = vmatmul.mubr.f32.gmra.mrb[0].mxu0 %v345
      %v820 = vpop.f32.mrb[0].mxu0
      %v821 = vadd.f32 %v309, %v820
      %v822 = vpop.f32.mrb[0].mxu0
      %823 = vmatprep.mubr.f32.mxu0 0.0
      %824 = vmatmul.mubr.f32.gmra.mrb[0].mxu0 %v348
      %v825 = vpop.f32.mrb[0].mxu0
      %v826 = vadd.f32 %v309, %v825
      %v827 = vpop.f32.mrb[0].mxu0
      %828 = vmatprep.mubr.f32.mxu0 0.0
      %829 = vmatmul.mubr.f32.gmra.mrb[0].mxu0 %v351
      %v830 = vpop.f32.mrb[0].mxu0
      %v831 = vadd.f32 %v309, %v830
      %v832 = vpop.f32.mrb[0].mxu0
      %833 = vmatprep.mubr.f32.mxu0 0.0
      %834 = vmatmul.mubr.f32.gmra.mrb[0].mxu0 %v354
      %v835 = vpop.f32.mrb[0].mxu0
      %v836 = vadd.f32 %v309, %v835
      %v837 = vpop.f32.mrb[0].mxu0
      %838 = vmatprep.mubr.f32.mxu0 0.0
      %839 = vmatmul.mubr.f32.gmra.mrb[0].mxu0 %v357
      %v840 = vpop.f32.mrb[0].mxu0
      %v841 = vadd.f32 %v309, %v840
      %v842 = vpop.f32.mrb[0].mxu0
      %843 = vmatprep.mubr.f32.mxu0 0.0
      %844 = vmatmul.mubr.f32.gmra.mrb[0].mxu0 %v360
      %v845 = vpop.f32.mrb[0].mxu0
      %v846 = vadd.f32 %v309, %v845
      %v847 = vpop.f32.mrb[0].mxu0
      %848 = vmatprep.mubr.f32.mxu0 0.0
      %849 = vmatmul.mubr.f32.gmra.mrb[0].mxu0 %v363
      %v850 = vpop.f32.mrb[0].mxu0
      %v851 = vadd.f32 %v309, %v850
      %v852 = vpop.f32.mrb[0].mxu0
      %853 = vmatprep.mubr.f32.mxu0 0.0
      %854 = vmatmul.mubr.f32.gmra.mrb[0].mxu0 %v366
      %v855 = vpop.f32.mrb[0].mxu0
      %v856 = vadd.f32 %v309, %v855
      %v857 = vpop.f32.mrb[0].mxu0
      %858 = vmatprep.mubr.f32.mxu0 0.0
      %859 = vmatmul.mubr.f32.gmra.mrb[0].mxu0 %v369
      %v860 = vpop.f32.mrb[0].mxu0
      %v861 = vadd.f32 %v309, %v860
      %v862 = vpop.f32.mrb[0].mxu0
      %863 = vmatprep.mubr.f32.mxu0 0.0
      %864 = vmatmul.mubr.f32.gmra.mrb[0].mxu0 %v372
      %v865 = vpop.f32.mrb[0].mxu0
      %v866 = vadd.f32 %v309, %v865
      %v867 = vpop.f32.mrb[0].mxu0
      %868 = vmatprep.mubr.f32.mxu0 0.0
      %869 = vmatmul.mubr.f32.gmra.mrb[0].mxu0 %v375
      %v870 = vpop.f32.mrb[0].mxu0
      %v871 = vadd.f32 %v309, %v870
      %v872 = vpop.f32.mrb[0].mxu0
      %873 = vmatprep.mubr.f32.mxu0 0.0
      %874 = vmatmul.mubr.f32.gmra.mrb[0].mxu0 %v378
      %v875 = vpop.f32.mrb[0].mxu0
      %v876 = vadd.f32 %v309, %v875
      %v877 = vpop.f32.mrb[0].mxu0
      %878 = vmatprep.mubr.f32.mxu0 0.0
      %879 = vmatmul.mubr.f32.gmra.mrb[0].mxu0 %v381
      %v880 = vpop.f32.mrb[0].mxu0
      %v881 = vadd.f32 %v309, %v880
      %v882 = vpop.f32.mrb[0].mxu0
      %883 = vmatprep.mubr.f32.mxu0 0.0
      %884 = vmatmul.mubr.f32.gmra.mrb[0].mxu0 %v384
      %v885 = vpop.f32.mrb[0].mxu0
      %v886 = vadd.f32 %v309, %v885
      %v887 = vpop.f32.mrb[0].mxu0
      %888 = vmatprep.mubr.f32.mxu0 0.0
      %889 = vmatmul.mubr.f32.gmra.mrb[0].mxu0 %v387
      %v890 = vpop.f32.mrb[0].mxu0
      %v891 = vadd.f32 %v309, %v890
      %v892 = vpop.f32.mrb[0].mxu0
      %893 = vmatprep.mubr.f32.mxu0 0.0
      %894 = vmatmul.mubr.f32.gmra.mrb[0].mxu0 %v390
      %v895 = vpop.f32.mrb[0].mxu0
      %v896 = vadd.f32 %v309, %v895
      %v897 = vpop.f32.mrb[0].mxu0
      %898 = vmatprep.mubr.f32.mxu0 0.0
      %899 = vmatmul.mubr.f32.gmra.mrb[0].mxu0 %v393
      %v900 = vpop.f32.mrb[0].mxu0
      %v901 = vadd.f32 %v309, %v900
      %v902 = vpop.f32.mrb[0].mxu0
      %903 = vmatprep.mubr.f32.mxu0 0.0
      %904 = vmatmul.mubr.f32.gmra.mrb[0].mxu0 %v396
      %v905 = vpop.f32.mrb[0].mxu0
      %v906 = vadd.f32 %v309, %v905
      %v907 = vpop.f32.mrb[0].mxu0
      %908 = vmatprep.mubr.f32.mxu0 0.0
      %909 = vmatmul.mubr.f32.gmra.mrb[0].mxu0 %v399
      %v910 = vpop.f32.mrb[0].mxu0
      %v911 = vadd.f32 %v309, %v910
      %v912 = vpop.f32.mrb[0].mxu0
      %913 = vmatprep.mubr.f32.mxu0 0.0
      %914 = vmatmul.mubr.f32.gmra.mrb[0].mxu0 %v402
      %v915 = vpop.f32.mrb[0].mxu0
      %v916 = vadd.f32 %v309, %v915
      %v917 = vpop.f32.mrb[0].mxu0
      %918 = vmatprep.mubr.f32.mxu0 0.0
      %919 = vmatmul.mubr.f32.gmra.mrb[0].mxu0 %v405
      %v920 = vpop.f32.mrb[0].mxu0
      %v921 = vadd.f32 %v309, %v920
      %v922 = vpop.f32.mrb[0].mxu0
      %923 = vmatprep.mubr.f32.mxu0 0.0
      %924 = vmatmul.mubr.f32.gmra.mrb[0].mxu0 %v408
      %v925 = vpop.f32.mrb[0].mxu0
      %v926 = vadd.f32 %v309, %v925
      %v927 = vpop.f32.mrb[0].mxu0
      %928 = vmatprep.mubr.f32.mxu0 0.0
      %929 = vmatmul.mubr.f32.gmra.mrb[0].mxu0 %v411
      %v930 = vpop.f32.mrb[0].mxu0
      %v931 = vadd.f32 %v309, %v930
      %v932 = vpop.f32.mrb[0].mxu0
      %933 = vmatprep.mubr.f32.mxu0 0.0
      %934 = vmatmul.mubr.f32.gmra.mrb[0].mxu0 %v414
      %v935 = vpop.f32.mrb[0].mxu0
      %v936 = vadd.f32 %v309, %v935
      %v937 = vpop.f32.mrb[0].mxu0
      %938 = vmatprep.mubr.f32.mxu0 0.0
      %939 = vmatmul.mubr.f32.gmra.mrb[0].mxu0 %v417
      %v940 = vpop.f32.mrb[0].mxu0
      %v941 = vadd.f32 %v309, %v940
      %v942 = vpop.f32.mrb[0].mxu0
      %943 = vmatprep.mubr.f32.mxu0 0.0
      %944 = vmatmul.mubr.f32.gmra.mrb[0].mxu0 %v420
      %v945 = vpop.f32.mrb[0].mxu0
      %v946 = vadd.f32 %v309, %v945
      %v947 = vpop.f32.mrb[0].mxu0
      %948 = vmatprep.mubr.f32.mxu0 0.0
      %949 = vmatmul.mubr.f32.gmra.mrb[0].mxu0 %v423
      %v950 = vpop.f32.mrb[0].mxu0
      %v951 = vadd.f32 %v309, %v950
      %v952 = vpop.f32.mrb[0].mxu0
      %953 = vmatprep.mubr.f32.mxu0 0.0
      %954 = vmatmul.mubr.f32.gmra.mrb[0].mxu0 %v426
      %v955 = vpop.f32.mrb[0].mxu0
      %v956 = vadd.f32 %v309, %v955
      %v957 = vpop.f32.mrb[0].mxu0
      %958 = vmatprep.mubr.f32.mxu0 0.0
      %959 = vmatmul.mubr.f32.gmra.mrb[0].mxu0 %v429
      %v960 = vpop.f32.mrb[0].mxu0
      %v961 = vadd.f32 %v309, %v960
      %v962 = vpop.f32.mrb[0].mxu0
      %963 = vmatprep.mubr.f32.mxu0 0.0
      %964 = vmatmul.mubr.f32.gmra.mrb[0].mxu0 %v432
      %v965 = vpop.f32.mrb[0].mxu0
      %v966 = vadd.f32 %v309, %v965
      %v967 = vpop.f32.mrb[0].mxu0
      %968 = vmatprep.mubr.f32.mxu0 0.0
      %969 = vmatmul.mubr.f32.gmra.mrb[0].mxu0 %v435
      %v970 = vpop.f32.mrb[0].mxu0
      %v971 = vadd.f32 %v309, %v970
      %v972 = vpop.f32.mrb[0].mxu0
      %973 = vmatprep.mubr.f32.mxu0 0.0
      %974 = vmatmul.mubr.f32.gmra.mrb[0].mxu0 %v438
      %v975 = vpop.f32.mrb[0].mxu0
      %v976 = vadd.f32 %v309, %v975
      %v977 = vpop.f32.mrb[0].mxu0
      %978 = vmatprep.mubr.f32.mxu0 0.0
      %979 = vmatmul.mubr.f32.gmra.mrb[0].mxu0 %v441
      %v980 = vpop.f32.mrb[0].mxu0
      %v981 = vadd.f32 %v309, %v980
      %v982 = vpop.f32.mrb[0].mxu0
      %983 = vmatprep.mubr.f32.mxu0 0.0
      %984 = vmatmul.mubr.f32.gmra.mrb[0].mxu0 %v444
      %v985 = vpop.f32.mrb[0].mxu0
      %v986 = vadd.f32 %v309, %v985
      %v987 = vpop.f32.mrb[0].mxu0
      %988 = vmatprep.mubr.f32.mxu0 0.0
      %989 = vmatmul.mubr.f32.gmra.mrb[0].mxu0 %v447
      %v990 = vpop.f32.mrb[0].mxu0
      %v991 = vadd.f32 %v309, %v990
      %v992 = vpop.f32.mrb[0].mxu0
      %993 = vmatprep.mubr.f32.mxu0 0.0
      %994 = vmatmul.mubr.f32.gmra.mrb[0].mxu0 %v450
      %v995 = vpop.f32.mrb[0].mxu0
      %v996 = vadd.f32 %v309, %v995
      %v997 = vpop.f32.mrb[0].mxu0
      %998 = vmatprep.mubr.f32.mxu0 0.0
      %999 = vmatmul.mubr.f32.gmra.mrb[0].mxu0 %v453
      %v1000 = vpop.f32.mrb[0].mxu0
      %v1001 = vadd.f32 %v309, %v1000
      %v1002 = vpop.f32.mrb[0].mxu0
      %1003 = vmatprep.mubr.f32.mxu0 0.0
      %1004 = vmatmul.mubr.f32.gmra.mrb[0].mxu0 %v456
      %v1005 = vpop.f32.mrb[0].mxu0
      %v1006 = vadd.f32 %v309, %v1005
      %v1007 = vpop.f32.mrb[0].mxu0
      %1008 = vmatprep.mubr.f32.mxu0 0.0
      %1009 = vmatmul.mubr.f32.gmra.mrb[0].mxu0 %v459
      %v1010 = vpop.f32.mrb[0].mxu0
      %v1011 = vadd.f32 %v309, %v1010
      %v1012 = vpop.f32.mrb[0].mxu0
      %1013 = vmatprep.mubr.f32.mxu0 0.0
      %1014 = vmatmul.mubr.f32.gmra.mrb[0].mxu0 %v462
      %v1015 = vpop.f32.mrb[0].mxu0
      %v1016 = vadd.f32 %v309, %v1015
      %v1017 = vpop.f32.mrb[0].mxu0
      %1018 = vmatprep.mubr.f32.mxu0 0.0
      %1019 = vmatmul.mubr.f32.gmra.mrb[0].mxu0 %v465
      %v1020 = vpop.f32.mrb[0].mxu0
      %v1021 = vadd.f32 %v309, %v1020
      %v1022 = vpop.f32.mrb[0].mxu0
      %1023 = vmatprep.mubr.f32.mxu0 0.0
      %1024 = vmatmul.mubr.f32.gmra.mrb[0].mxu0 %v468
      %v1025 = vpop.f32.mrb[0].mxu0
      %v1026 = vadd.f32 %v309, %v1025
      %v1027 = vpop.f32.mrb[0].mxu0
      %1028 = vmatprep.mubr.f32.mxu0 0.0
      %1029 = vmatmul.mubr.f32.gmra.mrb[0].mxu0 %v471
      %v1030 = vpop.f32.mrb[0].mxu0
      %v1031 = vadd.f32 %v309, %v1030
      %v1032 = vpop.f32.mrb[0].mxu0
      %1033 = vmatprep.mubr.f32.mxu0 0.0
      %1034 = vmatmul.mubr.f32.gmra.mrb[0].mxu0 %v474
      %v1035 = vpop.f32.mrb[0].mxu0
      %v1036 = vadd.f32 %v309, %v1035
      %v1037 = vpop.f32.mrb[0].mxu0
      %1038 = vmatprep.mubr.f32.mxu0 0.0
      %1039 = vmatmul.mubr.f32.gmra.mrb[0].mxu0 %v477
      %v1040 = vpop.f32.mrb[0].mxu0
      %v1041 = vadd.f32 %v309, %v1040
      %v1042 = vpop.f32.mrb[0].mxu0
      %1043 = vmatprep.mubr.f32.mxu0 0.0
      %1044 = vmatmul.mubr.f32.gmra.mrb[0].mxu0 %v480
      %v1045 = vpop.f32.mrb[0].mxu0
      %v1046 = vadd.f32 %v309, %v1045
      %v1047 = vpop.f32.mrb[0].mxu0
      %1048 = vmatprep.mubr.f32.mxu0 0.0
      %1049 = vmatmul.mubr.f32.gmra.mrb[0].mxu0 %v483
      %v1050 = vpop.f32.mrb[0].mxu0
      %v1051 = vadd.f32 %v309, %v1050
      %v1052 = vpop.f32.mrb[0].mxu0
      %1053 = vmatprep.mubr.f32.mxu0 0.0
      %1054 = vmatmul.mubr.f32.gmra.mrb[0].mxu0 %v486
      %v1055 = vpop.f32.mrb[0].mxu0
      %v1056 = vadd.f32 %v309, %v1055
      %v1057 = vpop.f32.mrb[0].mxu0
      %1058 = vmatprep.mubr.f32.mxu0 0.0
      %1059 = vmatmul.mubr.f32.gmra.mrb[0].mxu0 %v489
      %v1060 = vpop.f32.mrb[0].mxu0
      %v1061 = vadd.f32 %v309, %v1060
      %v1062 = vpop.f32.mrb[0].mxu0
      %1063 = vmatprep.mubr.f32.mxu0 0.0
      %1064 = vmatmul.mubr.f32.gmra.mrb[0].mxu0 %v492
      %v1065 = vpop.f32.mrb[0].mxu0
      %v1066 = vadd.f32 %v309, %v1065
      %v1067 = vpop.f32.mrb[0].mxu0
      %1068 = vmatprep.mubr.f32.mxu0 0.0
      %1069 = vmatmul.mubr.f32.gmra.mrb[0].mxu0 %v495
      %v1070 = vpop.f32.mrb[0].mxu0
      %v1071 = vadd.f32 %v309, %v1070
      %v1072 = vpop.f32.mrb[0].mxu0
      %1073 = vmatprep.mubr.f32.mxu0 0.0
      %1074 = vmatmul.mubr.f32.gmra.mrb[0].mxu0 %v498
      %v1075 = vpop.f32.mrb[0].mxu0
      %v1076 = vadd.f32 %v309, %v1075
      %v1077 = vpop.f32.mrb[0].mxu0
      %1078 = vmatprep.mubr.f32.mxu0 0.0
      %1079 = vmatmul.mubr.f32.gmra.mrb[0].mxu0 %v501
      %v1080 = vpop.f32.mrb[0].mxu0
      %v1081 = vadd.f32 %v309, %v1080
      %v1082 = vpop.f32.mrb[0].mxu0
      %1083 = vmatprep.mubr.f32.mxu0 0.0
      %1084 = vmatmul.mubr.f32.gmra.mrb[0].mxu0 %v504
      %v1085 = vpop.f32.mrb[0].mxu0
      %v1086 = vadd.f32 %v309, %v1085
      %v1087 = vpop.f32.mrb[0].mxu0
      %1088 = vmatprep.mubr.f32.mxu0 0.0
      %1089 = vmatmul.mubr.f32.gmra.mrb[0].mxu0 %v507
      %v1090 = vpop.f32.mrb[0].mxu0
      %v1091 = vadd.f32 %v309, %v1090
      %v1092 = vpop.f32.mrb[0].mxu0
      %1093 = vmatprep.mubr.f32.mxu0 0.0
      %1094 = vmatmul.mubr.f32.gmra.mrb[0].mxu0 %v510
      %v1095 = vpop.f32.mrb[0].mxu0
      %v1096 = vadd.f32 %v309, %v1095
      %v1097 = vpop.f32.mrb[0].mxu0
      %1098 = vmatprep.mubr.f32.mxu0 0.0
      %1099 = vmatmul.mubr.f32.gmra.mrb[0].mxu0 %v513
      %v1100 = vpop.f32.mrb[0].mxu0
      %v1101 = vadd.f32 %v309, %v1100
      %v1102 = vpop.f32.mrb[0].mxu0
      %1103 = vmatprep.mubr.f32.mxu0 0.0
      %1104 = vmatmul.mubr.f32.gmra.mrb[0].mxu0 %v516
      %v1105 = vpop.f32.mrb[0].mxu0
      %v1106 = vadd.f32 %v309, %v1105
      %v1107 = vpop.f32.mrb[0].mxu0
      %1108 = vmatprep.mubr.f32.mxu0 0.0
      %1109 = vmatmul.mubr.f32.gmra.mrb[0].mxu0 %v519
      %v1110 = vpop.f32.mrb[0].mxu0
      %v1111 = vadd.f32 %v309, %v1110
      %v1112 = vpop.f32.mrb[0].mxu0
      %1113 = vmatprep.mubr.f32.mxu0 0.0
      %1114 = vmatmul.mubr.f32.gmra.mrb[0].mxu0 %v522
      %v1115 = vpop.f32.mrb[0].mxu0
      %v1116 = vadd.f32 %v309, %v1115
      %v1117 = vpop.f32.mrb[0].mxu0
      %1118 = vmatprep.mubr.f32.mxu0 0.0
      %1119 = vmatmul.mubr.f32.gmra.mrb[0].mxu0 %v525
      %v1120 = vpop.f32.mrb[0].mxu0
      %v1121 = vadd.f32 %v309, %v1120
      %v1122 = vpop.f32.mrb[0].mxu0
      %1123 = vmatprep.mubr.f32.mxu0 0.0
      %1124 = vmatmul.mubr.f32.gmra.mrb[0].mxu0 %v528
      %v1125 = vpop.f32.mrb[0].mxu0
      %v1126 = vadd.f32 %v309, %v1125
      %v1127 = vpop.f32.mrb[0].mxu0
      %1128 = vmatprep.mubr.f32.mxu0 0.0
      %1129 = vmatmul.mubr.f32.gmra.mrb[0].mxu0 %v531
      %v1130 = vpop.f32.mrb[0].mxu0
      %v1131 = vadd.f32 %v309, %v1130
      %v1132 = vpop.f32.mrb[0].mxu0
      %1133 = vmatprep.mubr.f32.mxu0 0.0
      %1134 = vmatmul.mubr.f32.gmra.mrb[0].mxu0 %v534
      %v1135 = vpop.f32.mrb[0].mxu0
      %v1136 = vadd.f32 %v309, %v1135
      %v1137 = vpop.f32.mrb[0].mxu0
      %1138 = vmatprep.mubr.f32.mxu0 0.0
      %1139 = vmatmul.mubr.f32.gmra.mrb[0].mxu0 %v537
      %v1140 = vpop.f32.mrb[0].mxu0
      %v1141 = vadd.f32 %v309, %v1140
      %v1142 = vpop.f32.mrb[0].mxu0
      %1143 = vmatprep.mubr.f32.mxu0 0.0
      %1144 = vmatmul.mubr.f32.gmra.mrb[0].mxu0 %v540
      %v1145 = vpop.f32.mrb[0].mxu0
      %v1146 = vadd.f32 %v309, %v1145
      %v1147 = vpop.f32.mrb[0].mxu0
      %1148 = vmatprep.mubr.f32.mxu0 0.0
      %1149 = vmatmul.mubr.f32.gmra.mrb[0].mxu0 %v543
      %v1150 = vpop.f32.mrb[0].mxu0
      %v1151 = vadd.f32 %v309, %v1150
      %v1152 = vpop.f32.mrb[0].mxu0
      %1153 = vmatprep.mubr.f32.mxu0 0.0
      %1154 = vmatmul.mubr.f32.gmra.mrb[0].mxu0 %v546
      %v1155 = vpop.f32.mrb[0].mxu0
      %v1156 = vadd.f32 %v309, %v1155
      %v1157 = vpop.f32.mrb[0].mxu0
      %1158 = vmatprep.mubr.f32.mxu0 0.0
      %1159 = vmatmul.mubr.f32.gmra.mrb[0].mxu0 %v549
      %v1160 = vpop.f32.mrb[0].mxu0
      %v1161 = vadd.f32 %v309, %v1160
      %v1162 = vpop.f32.mrb[0].mxu0
      %1163 = vmatprep.mubr.f32.mxu0 0.0
      %1164 = vmatmul.mubr.f32.gmra.mrb[0].mxu0 %v552
      %v1165 = vpop.f32.mrb[0].mxu0
      %v1166 = vadd.f32 %v309, %v1165
      %v1167 = vpop.f32.mrb[0].mxu0
      %1168 = vmatprep.mubr.f32.mxu0 0.0
      %1169 = vmatmul.mubr.f32.gmra.mrb[0].mxu0 %v555
      %v1170 = vpop.f32.mrb[0].mxu0
      %v1171 = vadd.f32 %v309, %v1170
      %v1172 = vpop.f32.mrb[0].mxu0
      %1173 = vmatprep.mubr.f32.mxu0 0.0
      %1174 = vmatmul.mubr.f32.gmra.mrb[0].mxu0 %v558
      %v1175 = vpop.f32.mrb[0].mxu0
      %v1176 = vadd.f32 %v309, %v1175
      %v1177 = vpop.f32.mrb[0].mxu0
      %1178 = vmatprep.mubr.f32.mxu0 0.0
      %1179 = vmatmul.mubr.f32.gmra.mrb[0].mxu0 %v561
      %v1180 = vpop.f32.mrb[0].mxu0
      %v1181 = vadd.f32 %v309, %v1180
      %v1182 = vpop.f32.mrb[0].mxu0
      %1183 = vmatprep.mubr.f32.mxu0 0.0
      %1184 = vmatmul.mubr.f32.gmra.mrb[0].mxu0 %v564
      %v1185 = vpop.f32.mrb[0].mxu0
      %v1186 = vadd.f32 %v309, %v1185
      %v1187 = vpop.f32.mrb[0].mxu0
      %1188 = vmatprep.mubr.f32.mxu0 0.0
      %1189 = vmatmul.mubr.f32.gmra.mrb[0].mxu0 %v567
      %v1190 = vpop.f32.mrb[0].mxu0
      %v1191 = vadd.f32 %v309, %v1190
      %v1192 = vpop.f32.mrb[0].mxu0
      %1193 = vmatprep.mubr.f32.mxu0 0.0
      %1194 = vmatmul.mubr.f32.gmra.mrb[0].mxu0 %v570
      %v1195 = vpop.f32.mrb[0].mxu0
      %v1196 = vadd.f32 %v309, %v1195
      %v1197 = vpop.f32.mrb[0].mxu0
      %1198 = vmatprep.mubr.f32.mxu0 0.0
      %1199 = vmatmul.mubr.f32.gmra.mrb[0].mxu0 %v573
      %v1200 = vpop.f32.mrb[0].mxu0
      %v1201 = vadd.f32 %v309, %v1200
      %v1202 = vpop.f32.mrb[0].mxu0
      %1203 = vmatprep.mubr.f32.mxu0 0.0
      %1204 = vmatmul.mubr.f32.gmra.mrb[0].mxu0 %v576
      %v1205 = vpop.f32.mrb[0].mxu0
      %v1206 = vadd.f32 %v309, %v1205
      %v1207 = vpop.f32.mrb[0].mxu0
      %1208 = vmatprep.mubr.f32.mxu0 0.0
      %1209 = vmatmul.mubr.f32.gmra.mrb[0].mxu0 %v579
      %v1210 = vpop.f32.mrb[0].mxu0
      %v1211 = vadd.f32 %v309, %v1210
      %v1212 = vpop.f32.mrb[0].mxu0
      %1213 = vmatprep.mubr.f32.mxu0 0.0
      %1214 = vmatmul.mubr.f32.gmra.mrb[0].mxu0 %v582
      %v1215 = vpop.f32.mrb[0].mxu0
      %v1216 = vadd.f32 %v309, %v1215
      %v1217 = vpop.f32.mrb[0].mxu0
      %1218 = vmatprep.mubr.f32.mxu0 0.0
      %1219 = vmatmul.mubr.f32.gmra.mrb[0].mxu0 %v585
      %v1220 = vpop.f32.mrb[0].mxu0
      %v1221 = vadd.f32 %v309, %v1220
      %v1222 = vpop.f32.mrb[0].mxu0
      %1223 = vmatprep.mubr.f32.mxu0 0.0
      %1224 = vmatmul.mubr.f32.gmra.mrb[0].mxu0 %v588
      %v1225 = vpop.f32.mrb[0].mxu0
      %v1226 = vadd.f32 %v309, %v1225
      %v1227 = vpop.f32.mrb[0].mxu0
      %1228 = vmatprep.mubr.f32.mxu0 0.0
      %1229 = vmatmul.mubr.f32.gmra.mrb[0].mxu0 %v591
      %v1230 = vpop.f32.mrb[0].mxu0
      %v1231 = vadd.f32 %v309, %v1230
      %v1232 = vpop.f32.mrb[0].mxu0
      %1233 = vmatprep.mubr.f32.mxu0 0.0
      %1234 = vmatmul.mubr.f32.gmra.mrb[0].mxu0 %v594
      %v1235 = vpop.f32.mrb[0].mxu0
      %v1236 = vadd.f32 %v309, %v1235
      %v1237 = vpop.f32.mrb[0].mxu0
      %1238 = vmatprep.mubr.f32.mxu0 0.0
      %1239 = vmatmul.mubr.f32.gmra.mrb[0].mxu0 %v597
      %v1240 = vpop.f32.mrb[0].mxu0
      %v1241 = vadd.f32 %v309, %v1240
      %v1242 = vpop.f32.mrb[0].mxu0
      %1243 = vmatprep.mubr.f32.mxu0 0.0
      %1244 = vmatmul.mubr.f32.gmra.mrb[0].mxu0 %v600
      %v1245 = vpop.f32.mrb[0].mxu0
      %v1246 = vadd.f32 %v309, %v1245
      %v1247 = vpop.f32.mrb[0].mxu0
      %1248 = vmatprep.mubr.f32.mxu0 0.0
      %1249 = vmatmul.mubr.f32.gmra.mrb[0].mxu0 %v603
      %v1250 = vpop.f32.mrb[0].mxu0
      %v1251 = vadd.f32 %v309, %v1250
      %v1252 = vpop.f32.mrb[0].mxu0
      %1253 = vmatprep.mubr.f32.mxu0 0.0
      %1254 = vmatmul.mubr.f32.gmra.mrb[0].mxu0 %v606
      %v1255 = vpop.f32.mrb[0].mxu0
      %v1256 = vadd.f32 %v309, %v1255
      %v1257 = vpop.f32.mrb[0].mxu0
      %1258 = vmatprep.mubr.f32.mxu0 0.0
      %1259 = vmatmul.mubr.f32.gmra.mrb[0].mxu0 %v609
      %v1260 = vpop.f32.mrb[0].mxu0
      %v1261 = vadd.f32 %v309, %v1260
      %v1262 = vpop.f32.mrb[0].mxu0
      %1263 = vmatprep.mubr.f32.mxu0 0.0
      %1264 = vmatmul.mubr.f32.gmra.mrb[0].mxu0 %v612
      %v1265 = vpop.f32.mrb[0].mxu0
      %v1266 = vadd.f32 %v309, %v1265
      %v1267 = vpop.f32.mrb[0].mxu0
      %1268 = vmatprep.mubr.f32.mxu0 0.0
      %1269 = vmatmul.mubr.f32.gmra.mrb[0].mxu0 %v615
      %v1270 = vpop.f32.mrb[0].mxu0
      %v1271 = vadd.f32 %v309, %v1270
      %v1272 = vpop.f32.mrb[0].mxu0
      %1273 = vmatprep.mubr.f32.mxu0 0.0
      %1274 = vmatmul.mubr.f32.gmra.mrb[0].mxu0 %v618
      %v1275 = vpop.f32.mrb[0].mxu0
      %v1276 = vadd.f32 %v309, %v1275
      %v1277 = vpop.f32.mrb[0].mxu0
      %1278 = vmatprep.mubr.f32.mxu0 0.0
      %1279 = vmatmul.mubr.f32.gmra.mrb[0].mxu0 %v621
      %v1280 = vpop.f32.mrb[0].mxu0
      %v1281 = vadd.f32 %v309, %v1280
      %v1282 = vpop.f32.mrb[0].mxu0
      %1283 = vmatprep.mubr.f32.mxu0 0.0
      %1284 = vmatmul.mubr.f32.gmra.mrb[0].mxu0 %v624
      %v1285 = vpop.f32.mrb[0].mxu0
      %v1286 = vadd.f32 %v309, %v1285
      %v1287 = vpop.f32.mrb[0].mxu0
      %1288 = vmatprep.mubr.f32.mxu0 0.0
      %1289 = vmatmul.mubr.f32.gmra.mrb[0].mxu0 %v627
      %v1290 = vpop.f32.mrb[0].mxu0
      %v1291 = vadd.f32 %v309, %v1290
      %v1292 = vpop.f32.mrb[0].mxu0
      %1293 = vmatprep.mubr.f32.mxu0 0.0
      %1294 = vmatmul.mubr.f32.gmra.mrb[0].mxu0 %v630
      %v1295 = vpop.f32.mrb[0].mxu0
      %v1296 = vadd.f32 %v309, %v1295
      %v1297 = vpop.f32.mrb[0].mxu0
      %1298 = vmatprep.mubr.f32.mxu0 0.0
      %1299 = vmatmul.mubr.f32.gmra.mrb[0].mxu0 %v633
      %v1300 = vpop.f32.mrb[0].mxu0
      %v1301 = vadd.f32 %v309, %v1300
      %v1302 = vpop.f32.mrb[0].mxu0
      %1303 = vmatprep.mubr.f32.mxu0 0.0
      %1304 = vmatmul.mubr.f32.gmra.mrb[0].mxu0 %v636
      %v1305 = vpop.f32.mrb[0].mxu0
      %v1306 = vadd.f32 %v309, %v1305
      %v1307 = vpop.f32.mrb[0].mxu0
      %1308 = vmatprep.mubr.f32.mxu0 0.0
      %1309 = vmatmul.mubr.f32.gmra.mrb[0].mxu0 %v639
      %v1310 = vpop.f32.mrb[0].mxu0
      %v1311 = vadd.f32 %v309, %v1310
      %v1312 = vpop.f32.mrb[0].mxu0
      %1313 = vmatprep.mubr.f32.mxu0 0.0
      %1314 = vmatmul.mubr.f32.gmra.mrb[0].mxu0 %v642
      %v1315 = vpop.f32.mrb[0].mxu0
      %v1316 = vadd.f32 %v309, %v1315
      %v1317 = vpop.f32.mrb[0].mxu0
      %1318 = vmatprep.mubr.f32.mxu0 0.0
      %1319 = vmatmul.mubr.f32.gmra.mrb[0].mxu0 %v645
      %v1320 = vpop.f32.mrb[0].mxu0
      %v1321 = vadd.f32 %v309, %v1320
      %v1322 = vpop.f32.mrb[0].mxu0
      %1323 = vmatprep.mubr.f32.mxu0 0.0
      %1324 = vmatmul.mubr.f32.gmra.mrb[0].mxu0 %v648
      %v1325 = vpop.f32.mrb[0].mxu0
      %v1326 = vadd.f32 %v309, %v1325
      %v1327 = vpop.f32.mrb[0].mxu0
      %1328 = vmatprep.mubr.f32.mxu0 0.0
      %1329 = vmatmul.mubr.f32.gmra.mrb[0].mxu0 %v651
      %v1330 = vpop.f32.mrb[0].mxu0
      %v1331 = vadd.f32 %v309, %v1330
      %v1332 = vpop.f32.mrb[0].mxu0
      %1333 = vmatprep.mubr.f32.mxu0 0.0
      %1334 = vmatmul.mubr.f32.gmra.mrb[0].mxu0 %v654
      %v1335 = vpop.f32.mrb[0].mxu0
      %v1336 = vadd.f32 %v309, %v1335
      %v1337 = vpop.f32.mrb[0].mxu0
      %1338 = vmatprep.mubr.f32.mxu0 0.0
      %1339 = vmatmul.mubr.f32.gmra.mrb[0].mxu0 %v657
      %v1340 = vpop.f32.mrb[0].mxu0
      %v1341 = vadd.f32 %v309, %v1340
      %v1342 = vpop.f32.mrb[0].mxu0
      %1343 = vmatprep.mubr.f32.mxu0 0.0
      %1344 = vmatmul.mubr.f32.gmra.mrb[0].mxu0 %v660
      %v1345 = vpop.f32.mrb[0].mxu0
      %v1346 = vadd.f32 %v309, %v1345
      %v1347 = vpop.f32.mrb[0].mxu0
      %1348 = vmatprep.mubr.f32.mxu0 0.0
      %1349 = vmatmul.mubr.f32.gmra.mrb[0].mxu0 %v663
      %v1350 = vpop.f32.mrb[0].mxu0
      %v1351 = vadd.f32 %v309, %v1350
      %v1352 = vpop.f32.mrb[0].mxu0
      %1353 = vmatprep.mubr.f32.mxu0 0.0
      %1354 = vmatmul.mubr.f32.gmra.mrb[0].mxu0 %v666
      %v1355 = vpop.f32.mrb[0].mxu0
      %v1356 = vadd.f32 %v309, %v1355
      %v1357 = vpop.f32.mrb[0].mxu0
      %1358 = vmatprep.mubr.f32.mxu0 0.0
      %1359 = vmatmul.mubr.f32.gmra.mrb[0].mxu0 %v669
      %v1360 = vpop.f32.mrb[0].mxu0
      %v1361 = vadd.f32 %v309, %v1360
      %v1362 = vpop.f32.mrb[0].mxu0
      %1363 = vmatprep.mubr.f32.mxu0 0.0
      %1364 = vmatmul.mubr.f32.gmra.mrb[0].mxu0 %v672
      %v1365 = vpop.f32.mrb[0].mxu0
      %v1366 = vadd.f32 %v309, %v1365
      %v1367 = vpop.f32.mrb[0].mxu0
      %1368 = vmatprep.mubr.f32.mxu0 0.0
      %1369 = vmatmul.mubr.f32.gmra.mrb[0].mxu0 %v675
      %v1370 = vpop.f32.mrb[0].mxu0
      %v1371 = vadd.f32 %v309, %v1370
      %v1372 = vpop.f32.mrb[0].mxu0
      %1373 = vmatprep.mubr.f32.mxu0 0.0
      %1374 = vmatmul.mubr.f32.gmra.mrb[0].mxu0 %v678
      %v1375 = vpop.f32.mrb[0].mxu0
      %v1376 = vadd.f32 %v309, %v1375
      %v1377 = vpop.f32.mrb[0].mxu0
      %1378 = vmatprep.mubr.f32.mxu0 0.0
      %1379 = vmatmul.mubr.f32.gmra.mrb[0].mxu0 %v681
      %v1380 = vpop.f32.mrb[0].mxu0
      %v1381 = vadd.f32 %v309, %v1380
      %v1382 = vpop.f32.mrb[0].mxu0
      %1383 = vmatprep.mubr.f32.mxu0 0.0
      %1384 = vmatmul.mubr.f32.gmra.mrb[0].mxu0 %v684
      %v1385 = vpop.f32.mrb[0].mxu0
      %v1386 = vadd.f32 %v309, %v1385
      %v1387 = vpop.f32.mrb[0].mxu0
      %1388 = vmatprep.mubr.f32.mxu0 0.0
      %1389 = vmatmul.mubr.f32.gmra.mrb[0].mxu0 %v687
      %v1390 = vpop.f32.mrb[0].mxu0
      %v1391 = vadd.f32 %v309, %v1390
      %v1392 = vpop.f32.mrb[0].mxu0
      %1393 = vmatprep.mubr.f32.mxu0 0.0
      %1394 = vmatmul.mubr.f32.gmra.mrb[0].mxu0 %v690
      %v1395 = vpop.f32.mrb[0].mxu0
      %v1396 = vadd.f32 %v309, %v1395
      %v1397 = vpop.f32.mrb[0].mxu0
      %1398 = vmatprep.mubr.f32.mxu0 0.0
      %1399 = vmatmul.mubr.f32.gmra.mrb[0].mxu0 %v693
      %v1400 = vpop.f32.mrb[0].mxu0
      %v1401 = vadd.f32 %v309, %v1400
      %v1402 = vpop.f32.mrb[0].mxu0
      %1403 = vdwg.mxu0
      %v1404 = vmax.f32 %v766, 0.0
      %v1405 = vmax.f32 %v771, 0.0
      %v1406 = vmax.f32 %v776, 0.0
      %v1407 = vmax.f32 %v781, 0.0
      %v1408 = vmax.f32 %v786, 0.0
      %v1409 = vmax.f32 %v791, 0.0
      %v1410 = vmax.f32 %v796, 0.0
      %v1411 = vmax.f32 %v801, 0.0
      %v1412 = vmax.f32 %v806, 0.0
      %v1413 = vmax.f32 %v811, 0.0
      %v1414 = vmax.f32 %v816, 0.0
      %v1415 = vmax.f32 %v821, 0.0
      %v1416 = vmax.f32 %v826, 0.0
      %v1417 = vmax.f32 %v831, 0.0
      %v1418 = vmax.f32 %v836, 0.0
      %v1419 = vmax.f32 %v841, 0.0
      %v1420 = vmax.f32 %v846, 0.0
      %v1421 = vmax.f32 %v851, 0.0
      %v1422 = vmax.f32 %v856, 0.0
      %v1423 = vmax.f32 %v861, 0.0
      %v1424 = vmax.f32 %v866, 0.0
      %v1425 = vmax.f32 %v871, 0.0
      %v1426 = vmax.f32 %v876, 0.0
      %v1427 = vmax.f32 %v881, 0.0
      %v1428 = vmax.f32 %v886, 0.0
      %v1429 = vmax.f32 %v891, 0.0
      %v1430 = vmax.f32 %v896, 0.0
      %v1431 = vmax.f32 %v901, 0.0
      %v1432 = vmax.f32 %v906, 0.0
      %v1433 = vmax.f32 %v911, 0.0
      %v1434 = vmax.f32 %v916, 0.0
      %v1435 = vmax.f32 %v921, 0.0
      %v1436 = vmax.f32 %v926, 0.0
      %v1437 = vmax.f32 %v931, 0.0
      %v1438 = vmax.f32 %v936, 0.0
      %v1439 = vmax.f32 %v941, 0.0
      %v1440 = vmax.f32 %v946, 0.0
      %v1441 = vmax.f32 %v951, 0.0
      %v1442 = vmax.f32 %v956, 0.0
      %v1443 = vmax.f32 %v961, 0.0
      %v1444 = vmax.f32 %v966, 0.0
      %v1445 = vmax.f32 %v971, 0.0
      %v1446 = vmax.f32 %v976, 0.0
      %v1447 = vmax.f32 %v981, 0.0
      %v1448 = vmax.f32 %v986, 0.0
      %v1449 = vmax.f32 %v991, 0.0
      %v1450 = vmax.f32 %v996, 0.0
      %v1451 = vmax.f32 %v1001, 0.0
      %v1452 = vmax.f32 %v1006, 0.0
      %v1453 = vmax.f32 %v1011, 0.0
      %v1454 = vmax.f32 %v1016, 0.0
      %v1455 = vmax.f32 %v1021, 0.0
      %v1456 = vmax.f32 %v1026, 0.0
      %v1457 = vmax.f32 %v1031, 0.0
      %v1458 = vmax.f32 %v1036, 0.0
      %v1459 = vmax.f32 %v1041, 0.0
      %v1460 = vmax.f32 %v1046, 0.0
      %v1461 = vmax.f32 %v1051, 0.0
      %v1462 = vmax.f32 %v1056, 0.0
      %v1463 = vmax.f32 %v1061, 0.0
      %v1464 = vmax.f32 %v1066, 0.0
      %v1465 = vmax.f32 %v1071, 0.0
      %v1466 = vmax.f32 %v1076, 0.0
      %v1467 = vmax.f32 %v1081, 0.0
      %v1468 = vmax.f32 %v1086, 0.0
      %v1469 = vmax.f32 %v1091, 0.0
      %v1470 = vmax.f32 %v1096, 0.0
      %v1471 = vmax.f32 %v1101, 0.0
      %v1472 = vmax.f32 %v1106, 0.0
      %v1473 = vmax.f32 %v1111, 0.0
      %v1474 = vmax.f32 %v1116, 0.0
      %v1475 = vmax.f32 %v1121, 0.0
      %v1476 = vmax.f32 %v1126, 0.0
      %v1477 = vmax.f32 %v1131, 0.0
      %v1478 = vmax.f32 %v1136, 0.0
      %v1479 = vmax.f32 %v1141, 0.0
      %v1480 = vmax.f32 %v1146, 0.0
      %v1481 = vmax.f32 %v1151, 0.0
      %v1482 = vmax.f32 %v1156, 0.0
      %v1483 = vmax.f32 %v1161, 0.0
      %v1484 = vmax.f32 %v1166, 0.0
      %v1485 = vmax.f32 %v1171, 0.0
      %v1486 = vmax.f32 %v1176, 0.0
      %v1487 = vmax.f32 %v1181, 0.0
      %v1488 = vmax.f32 %v1186, 0.0
      %v1489 = vmax.f32 %v1191, 0.0
      %v1490 = vmax.f32 %v1196, 0.0
      %v1491 = vmax.f32 %v1201, 0.0
      %v1492 = vmax.f32 %v1206, 0.0
      %v1493 = vmax.f32 %v1211, 0.0
      %v1494 = vmax.f32 %v1216, 0.0
      %v1495 = vmax.f32 %v1221, 0.0
      %v1496 = vmax.f32 %v1226, 0.0
      %v1497 = vmax.f32 %v1231, 0.0
      %v1498 = vmax.f32 %v1236, 0.0
      %v1499 = vmax.f32 %v1241, 0.0
      %v1500 = vmax.f32 %v1246, 0.0
      %v1501 = vmax.f32 %v1251, 0.0
      %v1502 = vmax.f32 %v1256, 0.0
      %v1503 = vmax.f32 %v1261, 0.0
      %v1504 = vmax.f32 %v1266, 0.0
      %v1505 = vmax.f32 %v1271, 0.0
      %v1506 = vmax.f32 %v1276, 0.0
      %v1507 = vmax.f32 %v1281, 0.0
      %v1508 = vmax.f32 %v1286, 0.0
      %v1509 = vmax.f32 %v1291, 0.0
      %v1510 = vmax.f32 %v1296, 0.0
      %v1511 = vmax.f32 %v1301, 0.0
      %v1512 = vmax.f32 %v1306, 0.0
      %v1513 = vmax.f32 %v1311, 0.0
      %v1514 = vmax.f32 %v1316, 0.0
      %v1515 = vmax.f32 %v1321, 0.0
      %v1516 = vmax.f32 %v1326, 0.0
      %v1517 = vmax.f32 %v1331, 0.0
      %v1518 = vmax.f32 %v1336, 0.0
      %v1519 = vmax.f32 %v1341, 0.0
      %v1520 = vmax.f32 %v1346, 0.0
      %v1521 = vmax.f32 %v1351, 0.0
      %v1522 = vmax.f32 %v1356, 0.0
      %v1523 = vmax.f32 %v1361, 0.0
      %v1524 = vmax.f32 %v1366, 0.0
      %v1525 = vmax.f32 %v1371, 0.0
      %v1526 = vmax.f32 %v1376, 0.0
      %v1527 = vmax.f32 %v1381, 0.0
      %v1528 = vmax.f32 %v1386, 0.0
      %v1529 = vmax.f32 %v1391, 0.0
      %v1530 = vmax.f32 %v1396, 0.0
      %v1531 = vmax.f32 %v1401, 0.0
      %v1532 = vlaneseq
      %v1533 = vshrl.u32 %v1532, 7
      %v1534 = vsub.s32 0, %v1533
      %v1535 = vrot.slane %v176, %v1534
      %v1536 = vmul.f32 %v1404, %v1535
      %v1537 = vmul.f32 %v1405, %v1535
      %v1538 = vmul.f32 %v1406, %v1535
      %v1539 = vmul.f32 %v1407, %v1535
      %v1540 = vmul.f32 %v1408, %v1535
      %v1541 = vmul.f32 %v1409, %v1535
      %v1542 = vmul.f32 %v1410, %v1535
      %v1543 = vmul.f32 %v1411, %v1535
      %v1544 = vmul.f32 %v1412, %v1535
      %v1545 = vmul.f32 %v1413, %v1535
      %v1546 = vmul.f32 %v1414, %v1535
      %v1547 = vmul.f32 %v1415, %v1535
      %v1548 = vmul.f32 %v1416, %v1535
      %v1549 = vmul.f32 %v1417, %v1535
      %v1550 = vmul.f32 %v1418, %v1535
      %v1551 = vmul.f32 %v1419, %v1535
      %v1552 = vmul.f32 %v1420, %v1535
      %v1553 = vmul.f32 %v1421, %v1535
      %v1554 = vmul.f32 %v1422, %v1535
      %v1555 = vmul.f32 %v1423, %v1535
      %v1556 = vmul.f32 %v1424, %v1535
      %v1557 = vmul.f32 %v1425, %v1535
      %v1558 = vmul.f32 %v1426, %v1535
      %v1559 = vmul.f32 %v1427, %v1535
      %v1560 = vmul.f32 %v1428, %v1535
      %v1561 = vmul.f32 %v1429, %v1535
      %v1562 = vmul.f32 %v1430, %v1535
      %v1563 = vmul.f32 %v1431, %v1535
      %v1564 = vmul.f32 %v1432, %v1535
      %v1565 = vmul.f32 %v1433, %v1535
      %v1566 = vmul.f32 %v1434, %v1535
      %v1567 = vmul.f32 %v1435, %v1535
      %v1568 = vmul.f32 %v1436, %v1535
      %v1569 = vmul.f32 %v1437, %v1535
      %v1570 = vmul.f32 %v1438, %v1535
      %v1571 = vmul.f32 %v1439, %v1535
      %v1572 = vmul.f32 %v1440, %v1535
      %v1573 = vmul.f32 %v1441, %v1535
      %v1574 = vmul.f32 %v1442, %v1535
      %v1575 = vmul.f32 %v1443, %v1535
      %v1576 = vmul.f32 %v1444, %v1535
      %v1577 = vmul.f32 %v1445, %v1535
      %v1578 = vmul.f32 %v1446, %v1535
      %v1579 = vmul.f32 %v1447, %v1535
      %v1580 = vmul.f32 %v1448, %v1535
      %v1581 = vmul.f32 %v1449, %v1535
      %v1582 = vmul.f32 %v1450, %v1535
      %v1583 = vmul.f32 %v1451, %v1535
      %v1584 = vmul.f32 %v1452, %v1535
      %v1585 = vmul.f32 %v1453, %v1535
      %v1586 = vmul.f32 %v1454, %v1535
      %v1587 = vmul.f32 %v1455, %v1535
      %v1588 = vmul.f32 %v1456, %v1535
      %v1589 = vmul.f32 %v1457, %v1535
      %v1590 = vmul.f32 %v1458, %v1535
      %v1591 = vmul.f32 %v1459, %v1535
      %v1592 = vmul.f32 %v1460, %v1535
      %v1593 = vmul.f32 %v1461, %v1535
      %v1594 = vmul.f32 %v1462, %v1535
      %v1595 = vmul.f32 %v1463, %v1535
      %v1596 = vmul.f32 %v1464, %v1535
      %v1597 = vmul.f32 %v1465, %v1535
      %v1598 = vmul.f32 %v1466, %v1535
      %v1599 = vmul.f32 %v1467, %v1535
      %v1600 = vmul.f32 %v1468, %v1535
      %v1601 = vmul.f32 %v1469, %v1535
      %v1602 = vmul.f32 %v1470, %v1535
      %v1603 = vmul.f32 %v1471, %v1535
      %v1604 = vmul.f32 %v1472, %v1535
      %v1605 = vmul.f32 %v1473, %v1535
      %v1606 = vmul.f32 %v1474, %v1535
      %v1607 = vmul.f32 %v1475, %v1535
      %v1608 = vmul.f32 %v1476, %v1535
      %v1609 = vmul.f32 %v1477, %v1535
      %v1610 = vmul.f32 %v1478, %v1535
      %v1611 = vmul.f32 %v1479, %v1535
      %v1612 = vmul.f32 %v1480, %v1535
      %v1613 = vmul.f32 %v1481, %v1535
      %v1614 = vmul.f32 %v1482, %v1535
      %v1615 = vmul.f32 %v1483, %v1535
      %v1616 = vmul.f32 %v1484, %v1535
      %v1617 = vmul.f32 %v1485, %v1535
      %v1618 = vmul.f32 %v1486, %v1535
      %v1619 = vmul.f32 %v1487, %v1535
      %v1620 = vmul.f32 %v1488, %v1535
      %v1621 = vmul.f32 %v1489, %v1535
      %v1622 = vmul.f32 %v1490, %v1535
      %v1623 = vmul.f32 %v1491, %v1535
      %v1624 = vmul.f32 %v1492, %v1535
      %v1625 = vmul.f32 %v1493, %v1535
      %v1626 = vmul.f32 %v1494, %v1535
      %v1627 = vmul.f32 %v1495, %v1535
      %v1628 = vmul.f32 %v1496, %v1535
      %v1629 = vmul.f32 %v1497, %v1535
      %v1630 = vmul.f32 %v1498, %v1535
      %v1631 = vmul.f32 %v1499, %v1535
      %v1632 = vmul.f32 %v1500, %v1535
      %v1633 = vmul.f32 %v1501, %v1535
      %v1634 = vmul.f32 %v1502, %v1535
      %v1635 = vmul.f32 %v1503, %v1535
      %v1636 = vmul.f32 %v1504, %v1535
      %v1637 = vmul.f32 %v1505, %v1535
      %v1638 = vmul.f32 %v1506, %v1535
      %v1639 = vmul.f32 %v1507, %v1535
      %v1640 = vmul.f32 %v1508, %v1535
      %v1641 = vmul.f32 %v1509, %v1535
      %v1642 = vmul.f32 %v1510, %v1535
      %v1643 = vmul.f32 %v1511, %v1535
      %v1644 = vmul.f32 %v1512, %v1535
      %v1645 = vmul.f32 %v1513, %v1535
      %v1646 = vmul.f32 %v1514, %v1535
      %v1647 = vmul.f32 %v1515, %v1535
      %v1648 = vmul.f32 %v1516, %v1535
      %v1649 = vmul.f32 %v1517, %v1535
      %v1650 = vmul.f32 %v1518, %v1535
      %v1651 = vmul.f32 %v1519, %v1535
      %v1652 = vmul.f32 %v1520, %v1535
      %v1653 = vmul.f32 %v1521, %v1535
      %v1654 = vmul.f32 %v1522, %v1535
      %v1655 = vmul.f32 %v1523, %v1535
      %v1656 = vmul.f32 %v1524, %v1535
      %v1657 = vmul.f32 %v1525, %v1535
      %v1658 = vmul.f32 %v1526, %v1535
      %v1659 = vmul.f32 %v1527, %v1535
      %v1660 = vmul.f32 %v1528, %v1535
      %v1661 = vmul.f32 %v1529, %v1535
      %v1662 = vmul.f32 %v1530, %v1535
      %v1663 = vmul.f32 %v1531, %v1535
      %v1664 = vlaneseq
      %v1665 = vshrl.u32 %v1664, 7
      %v1666 = vsub.s32 0, %v1665
      %v1667 = vrot.slane %v177, %v1666
      %v1668 = vadd.f32 %v1536, %v1667
      %v1669 = vadd.f32 %v1537, %v1667
      %v1670 = vadd.f32 %v1538, %v1667
      %v1671 = vadd.f32 %v1539, %v1667
      %v1672 = vadd.f32 %v1540, %v1667
      %v1673 = vadd.f32 %v1541, %v1667
      %v1674 = vadd.f32 %v1542, %v1667
      %v1675 = vadd.f32 %v1543, %v1667
      %v1676 = vadd.f32 %v1544, %v1667
      %v1677 = vadd.f32 %v1545, %v1667
      %v1678 = vadd.f32 %v1546, %v1667
      %v1679 = vadd.f32 %v1547, %v1667
      %v1680 = vadd.f32 %v1548, %v1667
      %v1681 = vadd.f32 %v1549, %v1667
      %v1682 = vadd.f32 %v1550, %v1667
      %v1683 = vadd.f32 %v1551, %v1667
      %v1684 = vadd.f32 %v1552, %v1667
      %v1685 = vadd.f32 %v1553, %v1667
      %v1686 = vadd.f32 %v1554, %v1667
      %v1687 = vadd.f32 %v1555, %v1667
      %v1688 = vadd.f32 %v1556, %v1667
      %v1689 = vadd.f32 %v1557, %v1667
      %v1690 = vadd.f32 %v1558, %v1667
      %v1691 = vadd.f32 %v1559, %v1667
      %v1692 = vadd.f32 %v1560, %v1667
      %v1693 = vadd.f32 %v1561, %v1667
      %v1694 = vadd.f32 %v1562, %v1667
      %v1695 = vadd.f32 %v1563, %v1667
      %v1696 = vadd.f32 %v1564, %v1667
      %v1697 = vadd.f32 %v1565, %v1667
      %v1698 = vadd.f32 %v1566, %v1667
      %v1699 = vadd.f32 %v1567, %v1667
      %v1700 = vadd.f32 %v1568, %v1667
      %v1701 = vadd.f32 %v1569, %v1667
      %v1702 = vadd.f32 %v1570, %v1667
      %v1703 = vadd.f32 %v1571, %v1667
      %v1704 = vadd.f32 %v1572, %v1667
      %v1705 = vadd.f32 %v1573, %v1667
      %v1706 = vadd.f32 %v1574, %v1667
      %v1707 = vadd.f32 %v1575, %v1667
      %v1708 = vadd.f32 %v1576, %v1667
      %v1709 = vadd.f32 %v1577, %v1667
      %v1710 = vadd.f32 %v1578, %v1667
      %v1711 = vadd.f32 %v1579, %v1667
      %v1712 = vadd.f32 %v1580, %v1667
      %v1713 = vadd.f32 %v1581, %v1667
      %v1714 = vadd.f32 %v1582, %v1667
      %v1715 = vadd.f32 %v1583, %v1667
      %v1716 = vadd.f32 %v1584, %v1667
      %v1717 = vadd.f32 %v1585, %v1667
      %v1718 = vadd.f32 %v1586, %v1667
      %v1719 = vadd.f32 %v1587, %v1667
      %v1720 = vadd.f32 %v1588, %v1667
      %v1721 = vadd.f32 %v1589, %v1667
      %v1722 = vadd.f32 %v1590, %v1667
      %v1723 = vadd.f32 %v1591, %v1667
      %v1724 = vadd.f32 %v1592, %v1667
      %v1725 = vadd.f32 %v1593, %v1667
      %v1726 = vadd.f32 %v1594, %v1667
      %v1727 = vadd.f32 %v1595, %v1667
      %v1728 = vadd.f32 %v1596, %v1667
      %v1729 = vadd.f32 %v1597, %v1667
      %v1730 = vadd.f32 %v1598, %v1667
      %v1731 = vadd.f32 %v1599, %v1667
      %v1732 = vadd.f32 %v1600, %v1667
      %v1733 = vadd.f32 %v1601, %v1667
      %v1734 = vadd.f32 %v1602, %v1667
      %v1735 = vadd.f32 %v1603, %v1667
      %v1736 = vadd.f32 %v1604, %v1667
      %v1737 = vadd.f32 %v1605, %v1667
      %v1738 = vadd.f32 %v1606, %v1667
      %v1739 = vadd.f32 %v1607, %v1667
      %v1740 = vadd.f32 %v1608, %v1667
      %v1741 = vadd.f32 %v1609, %v1667
      %v1742 = vadd.f32 %v1610, %v1667
      %v1743 = vadd.f32 %v1611, %v1667
      %v1744 = vadd.f32 %v1612, %v1667
      %v1745 = vadd.f32 %v1613, %v1667
      %v1746 = vadd.f32 %v1614, %v1667
      %v1747 = vadd.f32 %v1615, %v1667
      %v1748 = vadd.f32 %v1616, %v1667
      %v1749 = vadd.f32 %v1617, %v1667
      %v1750 = vadd.f32 %v1618, %v1667
      %v1751 = vadd.f32 %v1619, %v1667
      %v1752 = vadd.f32 %v1620, %v1667
      %v1753 = vadd.f32 %v1621, %v1667
      %v1754 = vadd.f32 %v1622, %v1667
      %v1755 = vadd.f32 %v1623, %v1667
      %v1756 = vadd.f32 %v1624, %v1667
      %v1757 = vadd.f32 %v1625, %v1667
      %v1758 = vadd.f32 %v1626, %v1667
      %v1759 = vadd.f32 %v1627, %v1667
      %v1760 = vadd.f32 %v1628, %v1667
      %v1761 = vadd.f32 %v1629, %v1667
      %v1762 = vadd.f32 %v1630, %v1667
      %v1763 = vadd.f32 %v1631, %v1667
      %v1764 = vadd.f32 %v1632, %v1667
      %v1765 = vadd.f32 %v1633, %v1667
      %v1766 = vadd.f32 %v1634, %v1667
      %v1767 = vadd.f32 %v1635, %v1667
      %v1768 = vadd.f32 %v1636, %v1667
      %v1769 = vadd.f32 %v1637, %v1667
      %v1770 = vadd.f32 %v1638, %v1667
      %v1771 = vadd.f32 %v1639, %v1667
      %v1772 = vadd.f32 %v1640, %v1667
      %v1773 = vadd.f32 %v1641, %v1667
      %v1774 = vadd.f32 %v1642, %v1667
      %v1775 = vadd.f32 %v1643, %v1667
      %v1776 = vadd.f32 %v1644, %v1667
      %v1777 = vadd.f32 %v1645, %v1667
      %v1778 = vadd.f32 %v1646, %v1667
      %v1779 = vadd.f32 %v1647, %v1667
      %v1780 = vadd.f32 %v1648, %v1667
      %v1781 = vadd.f32 %v1649, %v1667
      %v1782 = vadd.f32 %v1650, %v1667
      %v1783 = vadd.f32 %v1651, %v1667
      %v1784 = vadd.f32 %v1652, %v1667
      %v1785 = vadd.f32 %v1653, %v1667
      %v1786 = vadd.f32 %v1654, %v1667
      %v1787 = vadd.f32 %v1655, %v1667
      %v1788 = vadd.f32 %v1656, %v1667
      %v1789 = vadd.f32 %v1657, %v1667
      %v1790 = vadd.f32 %v1658, %v1667
      %v1791 = vadd.f32 %v1659, %v1667
      %v1792 = vadd.f32 %v1660, %v1667
      %v1793 = vadd.f32 %v1661, %v1667
      %v1794 = vadd.f32 %v1662, %v1667
      %v1795 = vadd.f32 %v1663, %v1667
      %s1796 = scalar_lea.vmem %s165, 1024
      %v1797 = vld [vmem:[%s1796] sm:$0xff]
      %v1798 = vld [vmem:[%s1796 + $0x8] sm:$0xff]
      %v1799 = vld [vmem:[%s1796 + $0x10] sm:$0xff]
      %v1800 = vld [vmem:[%s1796 + $0x18] sm:$0xff]
      %v1801 = vld [vmem:[%s1796 + $0x20] sm:$0xff]
      %v1802 = vld [vmem:[%s1796 + $0x28] sm:$0xff]
      %v1803 = vld [vmem:[%s1796 + $0x30] sm:$0xff]
      %v1804 = vld [vmem:[%s1796 + $0x38] sm:$0xff]
      %v1805 = vld [vmem:[%s1796 + $0x40] sm:$0xff]
      %v1806 = vld [vmem:[%s1796 + $0x48] sm:$0xff]
      %v1807 = vld [vmem:[%s1796 + $0x50] sm:$0xff]
      %v1808 = vld [vmem:[%s1796 + $0x58] sm:$0xff]
      %v1809 = vld [vmem:[%s1796 + $0x60] sm:$0xff]
      %v1810 = vld [vmem:[%s1796 + $0x68] sm:$0xff]
      %v1811 = vld [vmem:[%s1796 + $0x70] sm:$0xff]
      %v1812 = vld [vmem:[%s1796 + $0x78] sm:$0xff]
      %v1813 = vld [vmem:[%s1796 + $0x80] sm:$0xff]
      %v1814 = vld [vmem:[%s1796 + $0x88] sm:$0xff]
      %v1815 = vld [vmem:[%s1796 + $0x90] sm:$0xff]
      %v1816 = vld [vmem:[%s1796 + $0x98] sm:$0xff]
      %v1817 = vld [vmem:[%s1796 + $0xa0] sm:$0xff]
      %v1818 = vld [vmem:[%s1796 + $0xa8] sm:$0xff]
      %v1819 = vld [vmem:[%s1796 + $0xb0] sm:$0xff]
      %v1820 = vld [vmem:[%s1796 + $0xb8] sm:$0xff]
      %v1821 = vld [vmem:[%s1796 + $0xc0] sm:$0xff]
      %v1822 = vld [vmem:[%s1796 + $0xc8] sm:$0xff]
      %v1823 = vld [vmem:[%s1796 + $0xd0] sm:$0xff]
      %v1824 = vld [vmem:[%s1796 + $0xd8] sm:$0xff]
      %v1825 = vld [vmem:[%s1796 + $0xe0] sm:$0xff]
      %v1826 = vld [vmem:[%s1796 + $0xe8] sm:$0xff]
      %v1827 = vld [vmem:[%s1796 + $0xf0] sm:$0xff]
      %v1828 = vld [vmem:[%s1796 + $0xf8] sm:$0xff]
      %v1829 = vld [vmem:[%s1796 + $0x100] sm:$0xff]
      %v1830 = vld [vmem:[%s1796 + $0x108] sm:$0xff]
      %v1831 = vld [vmem:[%s1796 + $0x110] sm:$0xff]
      %v1832 = vld [vmem:[%s1796 + $0x118] sm:$0xff]
      %v1833 = vld [vmem:[%s1796 + $0x120] sm:$0xff]
      %v1834 = vld [vmem:[%s1796 + $0x128] sm:$0xff]
      %v1835 = vld [vmem:[%s1796 + $0x130] sm:$0xff]
      %v1836 = vld [vmem:[%s1796 + $0x138] sm:$0xff]
      %v1837 = vld [vmem:[%s1796 + $0x140] sm:$0xff]
      %v1838 = vld [vmem:[%s1796 + $0x148] sm:$0xff]
      %v1839 = vld [vmem:[%s1796 + $0x150] sm:$0xff]
      %v1840 = vld [vmem:[%s1796 + $0x158] sm:$0xff]
      %v1841 = vld [vmem:[%s1796 + $0x160] sm:$0xff]
      %v1842 = vld [vmem:[%s1796 + $0x168] sm:$0xff]
      %v1843 = vld [vmem:[%s1796 + $0x170] sm:$0xff]
      %v1844 = vld [vmem:[%s1796 + $0x178] sm:$0xff]
      %v1845 = vld [vmem:[%s1796 + $0x180] sm:$0xff]
      %v1846 = vld [vmem:[%s1796 + $0x188] sm:$0xff]
      %v1847 = vld [vmem:[%s1796 + $0x190] sm:$0xff]
      %v1848 = vld [vmem:[%s1796 + $0x198] sm:$0xff]
      %v1849 = vld [vmem:[%s1796 + $0x1a0] sm:$0xff]
      %v1850 = vld [vmem:[%s1796 + $0x1a8] sm:$0xff]
      %v1851 = vld [vmem:[%s1796 + $0x1b0] sm:$0xff]
      %v1852 = vld [vmem:[%s1796 + $0x1b8] sm:$0xff]
      %v1853 = vld [vmem:[%s1796 + $0x1c0] sm:$0xff]
      %v1854 = vld [vmem:[%s1796 + $0x1c8] sm:$0xff]
      %v1855 = vld [vmem:[%s1796 + $0x1d0] sm:$0xff]
      %v1856 = vld [vmem:[%s1796 + $0x1d8] sm:$0xff]
      %v1857 = vld [vmem:[%s1796 + $0x1e0] sm:$0xff]
      %v1858 = vld [vmem:[%s1796 + $0x1e8] sm:$0xff]
      %v1859 = vld [vmem:[%s1796 + $0x1f0] sm:$0xff]
      %v1860 = vld [vmem:[%s1796 + $0x1f8] sm:$0xff]
      %v1861 = vld [vmem:[%s1796 + $0x200] sm:$0xff]
      %v1862 = vld [vmem:[%s1796 + $0x208] sm:$0xff]
      %v1863 = vld [vmem:[%s1796 + $0x210] sm:$0xff]
      %v1864 = vld [vmem:[%s1796 + $0x218] sm:$0xff]
      %v1865 = vld [vmem:[%s1796 + $0x220] sm:$0xff]
      %v1866 = vld [vmem:[%s1796 + $0x228] sm:$0xff]
      %v1867 = vld [vmem:[%s1796 + $0x230] sm:$0xff]
      %v1868 = vld [vmem:[%s1796 + $0x238] sm:$0xff]
      %v1869 = vld [vmem:[%s1796 + $0x240] sm:$0xff]
      %v1870 = vld [vmem:[%s1796 + $0x248] sm:$0xff]
      %v1871 = vld [vmem:[%s1796 + $0x250] sm:$0xff]
      %v1872 = vld [vmem:[%s1796 + $0x258] sm:$0xff]
      %v1873 = vld [vmem:[%s1796 + $0x260] sm:$0xff]
      %v1874 = vld [vmem:[%s1796 + $0x268] sm:$0xff]
      %v1875 = vld [vmem:[%s1796 + $0x270] sm:$0xff]
      %v1876 = vld [vmem:[%s1796 + $0x278] sm:$0xff]
      %v1877 = vld [vmem:[%s1796 + $0x280] sm:$0xff]
      %v1878 = vld [vmem:[%s1796 + $0x288] sm:$0xff]
      %v1879 = vld [vmem:[%s1796 + $0x290] sm:$0xff]
      %v1880 = vld [vmem:[%s1796 + $0x298] sm:$0xff]
      %v1881 = vld [vmem:[%s1796 + $0x2a0] sm:$0xff]
      %v1882 = vld [vmem:[%s1796 + $0x2a8] sm:$0xff]
      %v1883 = vld [vmem:[%s1796 + $0x2b0] sm:$0xff]
      %v1884 = vld [vmem:[%s1796 + $0x2b8] sm:$0xff]
      %v1885 = vld [vmem:[%s1796 + $0x2c0] sm:$0xff]
      %v1886 = vld [vmem:[%s1796 + $0x2c8] sm:$0xff]
      %v1887 = vld [vmem:[%s1796 + $0x2d0] sm:$0xff]
      %v1888 = vld [vmem:[%s1796 + $0x2d8] sm:$0xff]
      %v1889 = vld [vmem:[%s1796 + $0x2e0] sm:$0xff]
      %v1890 = vld [vmem:[%s1796 + $0x2e8] sm:$0xff]
      %v1891 = vld [vmem:[%s1796 + $0x2f0] sm:$0xff]
      %v1892 = vld [vmem:[%s1796 + $0x2f8] sm:$0xff]
      %v1893 = vld [vmem:[%s1796 + $0x300] sm:$0xff]
      %v1894 = vld [vmem:[%s1796 + $0x308] sm:$0xff]
      %v1895 = vld [vmem:[%s1796 + $0x310] sm:$0xff]
      %v1896 = vld [vmem:[%s1796 + $0x318] sm:$0xff]
      %v1897 = vld [vmem:[%s1796 + $0x320] sm:$0xff]
      %v1898 = vld [vmem:[%s1796 + $0x328] sm:$0xff]
      %v1899 = vld [vmem:[%s1796 + $0x330] sm:$0xff]
      %v1900 = vld [vmem:[%s1796 + $0x338] sm:$0xff]
      %v1901 = vld [vmem:[%s1796 + $0x340] sm:$0xff]
      %v1902 = vld [vmem:[%s1796 + $0x348] sm:$0xff]
      %v1903 = vld [vmem:[%s1796 + $0x350] sm:$0xff]
      %v1904 = vld [vmem:[%s1796 + $0x358] sm:$0xff]
      %v1905 = vld [vmem:[%s1796 + $0x360] sm:$0xff]
      %v1906 = vld [vmem:[%s1796 + $0x368] sm:$0xff]
      %v1907 = vld [vmem:[%s1796 + $0x370] sm:$0xff]
      %v1908 = vld [vmem:[%s1796 + $0x378] sm:$0xff]
      %v1909 = vld [vmem:[%s1796 + $0x380] sm:$0xff]
      %v1910 = vld [vmem:[%s1796 + $0x388] sm:$0xff]
      %v1911 = vld [vmem:[%s1796 + $0x390] sm:$0xff]
      %v1912 = vld [vmem:[%s1796 + $0x398] sm:$0xff]
      %v1913 = vld [vmem:[%s1796 + $0x3a0] sm:$0xff]
      %v1914 = vld [vmem:[%s1796 + $0x3a8] sm:$0xff]
      %v1915 = vld [vmem:[%s1796 + $0x3b0] sm:$0xff]
      %v1916 = vld [vmem:[%s1796 + $0x3b8] sm:$0xff]
      %v1917 = vld [vmem:[%s1796 + $0x3c0] sm:$0xff]
      %v1918 = vld [vmem:[%s1796 + $0x3c8] sm:$0xff]
      %v1919 = vld [vmem:[%s1796 + $0x3d0] sm:$0xff]
      %v1920 = vld [vmem:[%s1796 + $0x3d8] sm:$0xff]
      %v1921 = vld [vmem:[%s1796 + $0x3e0] sm:$0xff]
      %v1922 = vld [vmem:[%s1796 + $0x3e8] sm:$0xff]
      %v1923 = vld [vmem:[%s1796 + $0x3f0] sm:$0xff]
      %v1924 = vld [vmem:[%s1796 + $0x3f8] sm:$0xff]
      %v1926 = vsel %vm310, %v1797, 0
      %v1929 = vsel %vm310, %v1798, 0
      %v1932 = vsel %vm310, %v1799, 0
      %v1935 = vsel %vm310, %v1800, 0
      %v1938 = vsel %vm310, %v1801, 0
      %v1941 = vsel %vm310, %v1802, 0
      %v1944 = vsel %vm310, %v1803, 0
      %v1947 = vsel %vm310, %v1804, 0
      %v1950 = vsel %vm310, %v1805, 0
      %v1953 = vsel %vm310, %v1806, 0
      %v1956 = vsel %vm310, %v1807, 0
      %v1959 = vsel %vm310, %v1808, 0
      %v1962 = vsel %vm310, %v1809, 0
      %v1965 = vsel %vm310, %v1810, 0
      %v1968 = vsel %vm310, %v1811, 0
      %v1971 = vsel %vm310, %v1812, 0
      %v1974 = vsel %vm310, %v1813, 0
      %v1977 = vsel %vm310, %v1814, 0
      %v1980 = vsel %vm310, %v1815, 0
      %v1983 = vsel %vm310, %v1816, 0
      %v1986 = vsel %vm310, %v1817, 0
      %v1989 = vsel %vm310, %v1818, 0
      %v1992 = vsel %vm310, %v1819, 0
      %v1995 = vsel %vm310, %v1820, 0
      %v1998 = vsel %vm310, %v1821, 0
      %v2001 = vsel %vm310, %v1822, 0
      %v2004 = vsel %vm310, %v1823, 0
      %v2007 = vsel %vm310, %v1824, 0
      %v2010 = vsel %vm310, %v1825, 0
      %v2013 = vsel %vm310, %v1826, 0
      %v2016 = vsel %vm310, %v1827, 0
      %v2019 = vsel %vm310, %v1828, 0
      %v2022 = vsel %vm310, %v1829, 0
      %v2025 = vsel %vm310, %v1830, 0
      %v2028 = vsel %vm310, %v1831, 0
      %v2031 = vsel %vm310, %v1832, 0
      %v2034 = vsel %vm310, %v1833, 0
      %v2037 = vsel %vm310, %v1834, 0
      %v2040 = vsel %vm310, %v1835, 0
      %v2043 = vsel %vm310, %v1836, 0
      %v2046 = vsel %vm310, %v1837, 0
      %v2049 = vsel %vm310, %v1838, 0
      %v2052 = vsel %vm310, %v1839, 0
      %v2055 = vsel %vm310, %v1840, 0
      %v2058 = vsel %vm310, %v1841, 0
      %v2061 = vsel %vm310, %v1842, 0
      %v2064 = vsel %vm310, %v1843, 0
      %v2067 = vsel %vm310, %v1844, 0
      %v2070 = vsel %vm310, %v1845, 0
      %v2073 = vsel %vm310, %v1846, 0
      %v2076 = vsel %vm310, %v1847, 0
      %v2079 = vsel %vm310, %v1848, 0
      %v2082 = vsel %vm310, %v1849, 0
      %v2085 = vsel %vm310, %v1850, 0
      %v2088 = vsel %vm310, %v1851, 0
      %v2091 = vsel %vm310, %v1852, 0
      %v2094 = vsel %vm310, %v1853, 0
      %v2097 = vsel %vm310, %v1854, 0
      %v2100 = vsel %vm310, %v1855, 0
      %v2103 = vsel %vm310, %v1856, 0
      %v2106 = vsel %vm310, %v1857, 0
      %v2109 = vsel %vm310, %v1858, 0
      %v2112 = vsel %vm310, %v1859, 0
      %v2115 = vsel %vm310, %v1860, 0
      %v2118 = vsel %vm310, %v1861, 0
      %v2121 = vsel %vm310, %v1862, 0
      %v2124 = vsel %vm310, %v1863, 0
      %v2127 = vsel %vm310, %v1864, 0
      %v2130 = vsel %vm310, %v1865, 0
      %v2133 = vsel %vm310, %v1866, 0
      %v2136 = vsel %vm310, %v1867, 0
      %v2139 = vsel %vm310, %v1868, 0
      %v2142 = vsel %vm310, %v1869, 0
      %v2145 = vsel %vm310, %v1870, 0
      %v2148 = vsel %vm310, %v1871, 0
      %v2151 = vsel %vm310, %v1872, 0
      %v2154 = vsel %vm310, %v1873, 0
      %v2157 = vsel %vm310, %v1874, 0
      %v2160 = vsel %vm310, %v1875, 0
      %v2163 = vsel %vm310, %v1876, 0
      %v2166 = vsel %vm310, %v1877, 0
      %v2169 = vsel %vm310, %v1878, 0
      %v2172 = vsel %vm310, %v1879, 0
      %v2175 = vsel %vm310, %v1880, 0
      %v2178 = vsel %vm310, %v1881, 0
      %v2181 = vsel %vm310, %v1882, 0
      %v2184 = vsel %vm310, %v1883, 0
      %v2187 = vsel %vm310, %v1884, 0
      %v2190 = vsel %vm310, %v1885, 0
      %v2193 = vsel %vm310, %v1886, 0
      %v2196 = vsel %vm310, %v1887, 0
      %v2199 = vsel %vm310, %v1888, 0
      %v2202 = vsel %vm310, %v1889, 0
      %v2205 = vsel %vm310, %v1890, 0
      %v2208 = vsel %vm310, %v1891, 0
      %v2211 = vsel %vm310, %v1892, 0
      %v2214 = vsel %vm310, %v1893, 0
      %v2217 = vsel %vm310, %v1894, 0
      %v2220 = vsel %vm310, %v1895, 0
      %v2223 = vsel %vm310, %v1896, 0
      %v2226 = vsel %vm310, %v1897, 0
      %v2229 = vsel %vm310, %v1898, 0
      %v2232 = vsel %vm310, %v1899, 0
      %v2235 = vsel %vm310, %v1900, 0
      %v2238 = vsel %vm310, %v1901, 0
      %v2241 = vsel %vm310, %v1902, 0
      %v2244 = vsel %vm310, %v1903, 0
      %v2247 = vsel %vm310, %v1904, 0
      %v2250 = vsel %vm310, %v1905, 0
      %v2253 = vsel %vm310, %v1906, 0
      %v2256 = vsel %vm310, %v1907, 0
      %v2259 = vsel %vm310, %v1908, 0
      %v2262 = vsel %vm310, %v1909, 0
      %v2265 = vsel %vm310, %v1910, 0
      %v2268 = vsel %vm310, %v1911, 0
      %v2271 = vsel %vm310, %v1912, 0
      %v2274 = vsel %vm310, %v1913, 0
      %v2277 = vsel %vm310, %v1914, 0
      %v2280 = vsel %vm310, %v1915, 0
      %v2283 = vsel %vm310, %v1916, 0
      %v2286 = vsel %vm310, %v1917, 0
      %v2289 = vsel %vm310, %v1918, 0
      %v2292 = vsel %vm310, %v1919, 0
      %v2295 = vsel %vm310, %v1920, 0
      %v2298 = vsel %vm310, %v1921, 0
      %v2301 = vsel %vm310, %v1922, 0
      %v2304 = vsel %vm310, %v1923, 0
      %v2307 = vsel %vm310, %v1924, 0
      %2309 = vmatprep.subr.mxu0 0.0
      %2310 = vmatpush1.msra.mxu0 %v171
      %2311 = vmatprep.subr.mxu0 0.0
      %2312 = vmatpush1.msra.mxu0 %v172
      %2313 = vmatprep.subr.mxu0 0.0
      %2314 = vmatpush1.msra.mxu0 %v173
      %2315 = vmatprep.subr.mxu0 0.0
      %2316 = vmatpush1.msra.mxu0 %v697
      %2317 = vmatprep.subr.mxu0 0.0
      %2318 = vmatpush1.msra.mxu0 0.0
      %2319 = vmatprep.subr.mxu0 0.0
      %2320 = vmatpush1.msra.mxu0 0.0
      %2321 = vmatprep.subr.mxu0 0.0
      %2322 = vmatpush1.msra.mxu0 0.0
      %2323 = vmatprep.subr.mxu0 0.0
      %2324 = vmatpush1.msra.mxu0 0.0
      %2325 = vmatprep.subr.mxu0 0.0
      %2326 = vmatpush1.msra.mxu0 0.0
      %2327 = vmatprep.subr.mxu0 0.0
      %2328 = vmatpush1.msra.mxu0 0.0
      %2329 = vmatprep.subr.mxu0 0.0
      %2330 = vmatpush1.msra.mxu0 0.0
      %2331 = vmatprep.subr.mxu0 0.0
      %2332 = vmatpush1.msra.mxu0 0.0
      %2333 = vmatprep.subr.mxu0 0.0
      %2334 = vmatpush1.msra.mxu0 0.0
      %2335 = vmatprep.subr.mxu0 0.0
      %2336 = vmatpush1.msra.mxu0 0.0
      %2337 = vmatprep.subr.mxu0 0.0
      %2338 = vmatpush1.msra.mxu0 0.0
      %2339 = vmatprep.subr.mxu0 0.0
      %2340 = vmatpush1.msra.mxu0 0.0
      %2341 = vmatprep.subr.mxu0 0.0
      %2342 = vmatpush1.msra.mxu0 0.0
      %2343 = vmatprep.subr.mxu0 0.0
      %2344 = vmatpush1.msra.mxu0 0.0
      %2345 = vmatprep.subr.mxu0 0.0
      %2346 = vmatpush1.msra.mxu0 0.0
      %2347 = vmatprep.subr.mxu0 0.0
      %2348 = vmatpush1.msra.mxu0 0.0
      %2349 = vmatprep.subr.mxu0 0.0
      %2350 = vmatpush1.msra.mxu0 0.0
      %2351 = vmatprep.subr.mxu0 0.0
      %2352 = vmatpush1.msra.mxu0 0.0
      %2353 = vmatprep.subr.mxu0 0.0
      %2354 = vmatpush1.msra.mxu0 0.0
      %2355 = vmatprep.subr.mxu0 0.0
      %2356 = vmatpush1.msra.mxu0 0.0
      %2357 = vmatprep.subr.mxu0 0.0
      %2358 = vmatpush1.msra.mxu0 0.0
      %2359 = vmatprep.subr.mxu0 0.0
      %2360 = vmatpush1.msra.mxu0 0.0
      %2361 = vmatprep.subr.mxu0 0.0
      %2362 = vmatpush1.msra.mxu0 0.0
      %2363 = vmatprep.subr.mxu0 0.0
      %2364 = vmatpush1.msra.mxu0 0.0
      %2365 = vmatprep.subr.mxu0 0.0
      %2366 = vmatpush1.msra.mxu0 0.0
      %2367 = vmatprep.subr.mxu0 0.0
      %2368 = vmatpush1.msra.mxu0 0.0
      %2369 = vmatprep.subr.mxu0 0.0
      %2370 = vmatpush1.msra.mxu0 0.0
      %2371 = vmatprep.subr.mxu0 0.0
      %2372 = vmatpush1.msra.mxu0 0.0
      %2373 = vmatprep.mubr.f32.mxu0 0.0
      %2374 = vmatmul.mubr.f32.gmra.mrb[0].mxu0 %v1926
      %v2375 = vpop.f32.mrb[0].mxu0
      %v2376 = vadd.f32 %v309, %v2375
      %v2377 = vpop.f32.mrb[0].mxu0
      %2378 = vmatprep.mubr.f32.mxu0 0.0
      %2379 = vmatmul.mubr.f32.gmra.mrb[0].mxu0 %v1929
      %v2380 = vpop.f32.mrb[0].mxu0
      %v2381 = vadd.f32 %v309, %v2380
      %v2382 = vpop.f32.mrb[0].mxu0
      %2383 = vmatprep.mubr.f32.mxu0 0.0
      %2384 = vmatmul.mubr.f32.gmra.mrb[0].mxu0 %v1932
      %v2385 = vpop.f32.mrb[0].mxu0
      %v2386 = vadd.f32 %v309, %v2385
      %v2387 = vpop.f32.mrb[0].mxu0
      %2388 = vmatprep.mubr.f32.mxu0 0.0
      %2389 = vmatmul.mubr.f32.gmra.mrb[0].mxu0 %v1935
      %v2390 = vpop.f32.mrb[0].mxu0
      %v2391 = vadd.f32 %v309, %v2390
      %v2392 = vpop.f32.mrb[0].mxu0
      %2393 = vmatprep.mubr.f32.mxu0 0.0
      %2394 = vmatmul.mubr.f32.gmra.mrb[0].mxu0 %v1938
      %v2395 = vpop.f32.mrb[0].mxu0
      %v2396 = vadd.f32 %v309, %v2395
      %v2397 = vpop.f32.mrb[0].mxu0
      %2398 = vmatprep.mubr.f32.mxu0 0.0
      %2399 = vmatmul.mubr.f32.gmra.mrb[0].mxu0 %v1941
      %v2400 = vpop.f32.mrb[0].mxu0
      %v2401 = vadd.f32 %v309, %v2400
      %v2402 = vpop.f32.mrb[0].mxu0
      %2403 = vmatprep.mubr.f32.mxu0 0.0
      %2404 = vmatmul.mubr.f32.gmra.mrb[0].mxu0 %v1944
      %v2405 = vpop.f32.mrb[0].mxu0
      %v2406 = vadd.f32 %v309, %v2405
      %v2407 = vpop.f32.mrb[0].mxu0
      %2408 = vmatprep.mubr.f32.mxu0 0.0
      %2409 = vmatmul.mubr.f32.gmra.mrb[0].mxu0 %v1947
      %v2410 = vpop.f32.mrb[0].mxu0
      %v2411 = vadd.f32 %v309, %v2410
      %v2412 = vpop.f32.mrb[0].mxu0
      %2413 = vmatprep.mubr.f32.mxu0 0.0
      %2414 = vmatmul.mubr.f32.gmra.mrb[0].mxu0 %v1950
      %v2415 = vpop.f32.mrb[0].mxu0
      %v2416 = vadd.f32 %v309, %v2415
      %v2417 = vpop.f32.mrb[0].mxu0
      %2418 = vmatprep.mubr.f32.mxu0 0.0
      %2419 = vmatmul.mubr.f32.gmra.mrb[0].mxu0 %v1953
      %v2420 = vpop.f32.mrb[0].mxu0
      %v2421 = vadd.f32 %v309, %v2420
      %v2422 = vpop.f32.mrb[0].mxu0
      %2423 = vmatprep.mubr.f32.mxu0 0.0
      %2424 = vmatmul.mubr.f32.gmra.mrb[0].mxu0 %v1956
      %v2425 = vpop.f32.mrb[0].mxu0
      %v2426 = vadd.f32 %v309, %v2425
      %v2427 = vpop.f32.mrb[0].mxu0
      %2428 = vmatprep.mubr.f32.mxu0 0.0
      %2429 = vmatmul.mubr.f32.gmra.mrb[0].mxu0 %v1959
      %v2430 = vpop.f32.mrb[0].mxu0
      %v2431 = vadd.f32 %v309, %v2430
      %v2432 = vpop.f32.mrb[0].mxu0
      %2433 = vmatprep.mubr.f32.mxu0 0.0
      %2434 = vmatmul.mubr.f32.gmra.mrb[0].mxu0 %v1962
      %v2435 = vpop.f32.mrb[0].mxu0
      %v2436 = vadd.f32 %v309, %v2435
      %v2437 = vpop.f32.mrb[0].mxu0
      %2438 = vmatprep.mubr.f32.mxu0 0.0
      %2439 = vmatmul.mubr.f32.gmra.mrb[0].mxu0 %v1965
      %v2440 = vpop.f32.mrb[0].mxu0
      %v2441 = vadd.f32 %v309, %v2440
      %v2442 = vpop.f32.mrb[0].mxu0
      %2443 = vmatprep.mubr.f32.mxu0 0.0
      %2444 = vmatmul.mubr.f32.gmra.mrb[0].mxu0 %v1968
      %v2445 = vpop.f32.mrb[0].mxu0
      %v2446 = vadd.f32 %v309, %v2445
      %v2447 = vpop.f32.mrb[0].mxu0
      %2448 = vmatprep.mubr.f32.mxu0 0.0
      %2449 = vmatmul.mubr.f32.gmra.mrb[0].mxu0 %v1971
      %v2450 = vpop.f32.mrb[0].mxu0
      %v2451 = vadd.f32 %v309, %v2450
      %v2452 = vpop.f32.mrb[0].mxu0
      %2453 = vmatprep.mubr.f32.mxu0 0.0
      %2454 = vmatmul.mubr.f32.gmra.mrb[0].mxu0 %v1974
      %v2455 = vpop.f32.mrb[0].mxu0
      %v2456 = vadd.f32 %v309, %v2455
      %v2457 = vpop.f32.mrb[0].mxu0
      %2458 = vmatprep.mubr.f32.mxu0 0.0
      %2459 = vmatmul.mubr.f32.gmra.mrb[0].mxu0 %v1977
      %v2460 = vpop.f32.mrb[0].mxu0
      %v2461 = vadd.f32 %v309, %v2460
      %v2462 = vpop.f32.mrb[0].mxu0
      %2463 = vmatprep.mubr.f32.mxu0 0.0
      %2464 = vmatmul.mubr.f32.gmra.mrb[0].mxu0 %v1980
      %v2465 = vpop.f32.mrb[0].mxu0
      %v2466 = vadd.f32 %v309, %v2465
      %v2467 = vpop.f32.mrb[0].mxu0
      %2468 = vmatprep.mubr.f32.mxu0 0.0
      %2469 = vmatmul.mubr.f32.gmra.mrb[0].mxu0 %v1983
      %v2470 = vpop.f32.mrb[0].mxu0
      %v2471 = vadd.f32 %v309, %v2470
      %v2472 = vpop.f32.mrb[0].mxu0
      %2473 = vmatprep.mubr.f32.mxu0 0.0
      %2474 = vmatmul.mubr.f32.gmra.mrb[0].mxu0 %v1986
      %v2475 = vpop.f32.mrb[0].mxu0
      %v2476 = vadd.f32 %v309, %v2475
      %v2477 = vpop.f32.mrb[0].mxu0
      %2478 = vmatprep.mubr.f32.mxu0 0.0
      %2479 = vmatmul.mubr.f32.gmra.mrb[0].mxu0 %v1989
      %v2480 = vpop.f32.mrb[0].mxu0
      %v2481 = vadd.f32 %v309, %v2480
      %v2482 = vpop.f32.mrb[0].mxu0
      %2483 = vmatprep.mubr.f32.mxu0 0.0
      %2484 = vmatmul.mubr.f32.gmra.mrb[0].mxu0 %v1992
      %v2485 = vpop.f32.mrb[0].mxu0
      %v2486 = vadd.f32 %v309, %v2485
      %v2487 = vpop.f32.mrb[0].mxu0
      %2488 = vmatprep.mubr.f32.mxu0 0.0
      %2489 = vmatmul.mubr.f32.gmra.mrb[0].mxu0 %v1995
      %v2490 = vpop.f32.mrb[0].mxu0
      %v2491 = vadd.f32 %v309, %v2490
      %v2492 = vpop.f32.mrb[0].mxu0
      %2493 = vmatprep.mubr.f32.mxu0 0.0
      %2494 = vmatmul.mubr.f32.gmra.mrb[0].mxu0 %v1998
      %v2495 = vpop.f32.mrb[0].mxu0
      %v2496 = vadd.f32 %v309, %v2495
      %v2497 = vpop.f32.mrb[0].mxu0
      %2498 = vmatprep.mubr.f32.mxu0 0.0
      %2499 = vmatmul.mubr.f32.gmra.mrb[0].mxu0 %v2001
      %v2500 = vpop.f32.mrb[0].mxu0
      %v2501 = vadd.f32 %v309, %v2500
      %v2502 = vpop.f32.mrb[0].mxu0
      %2503 = vmatprep.mubr.f32.mxu0 0.0
      %2504 = vmatmul.mubr.f32.gmra.mrb[0].mxu0 %v2004
      %v2505 = vpop.f32.mrb[0].mxu0
      %v2506 = vadd.f32 %v309, %v2505
      %v2507 = vpop.f32.mrb[0].mxu0
      %2508 = vmatprep.mubr.f32.mxu0 0.0
      %2509 = vmatmul.mubr.f32.gmra.mrb[0].mxu0 %v2007
      %v2510 = vpop.f32.mrb[0].mxu0
      %v2511 = vadd.f32 %v309, %v2510
      %v2512 = vpop.f32.mrb[0].mxu0
      %2513 = vmatprep.mubr.f32.mxu0 0.0
      %2514 = vmatmul.mubr.f32.gmra.mrb[0].mxu0 %v2010
      %v2515 = vpop.f32.mrb[0].mxu0
      %v2516 = vadd.f32 %v309, %v2515
      %v2517 = vpop.f32.mrb[0].mxu0
      %2518 = vmatprep.mubr.f32.mxu0 0.0
      %2519 = vmatmul.mubr.f32.gmra.mrb[0].mxu0 %v2013
      %v2520 = vpop.f32.mrb[0].mxu0
      %v2521 = vadd.f32 %v309, %v2520
      %v2522 = vpop.f32.mrb[0].mxu0
      %2523 = vmatprep.mubr.f32.mxu0 0.0
      %2524 = vmatmul.mubr.f32.gmra.mrb[0].mxu0 %v2016
      %v2525 = vpop.f32.mrb[0].mxu0
      %v2526 = vadd.f32 %v309, %v2525
      %v2527 = vpop.f32.mrb[0].mxu0
      %2528 = vmatprep.mubr.f32.mxu0 0.0
      %2529 = vmatmul.mubr.f32.gmra.mrb[0].mxu0 %v2019
      %v2530 = vpop.f32.mrb[0].mxu0
      %v2531 = vadd.f32 %v309, %v2530
      %v2532 = vpop.f32.mrb[0].mxu0
      %2533 = vmatprep.mubr.f32.mxu0 0.0
      %2534 = vmatmul.mubr.f32.gmra.mrb[0].mxu0 %v2022
      %v2535 = vpop.f32.mrb[0].mxu0
      %v2536 = vadd.f32 %v309, %v2535
      %v2537 = vpop.f32.mrb[0].mxu0
      %2538 = vmatprep.mubr.f32.mxu0 0.0
      %2539 = vmatmul.mubr.f32.gmra.mrb[0].mxu0 %v2025
      %v2540 = vpop.f32.mrb[0].mxu0
      %v2541 = vadd.f32 %v309, %v2540
      %v2542 = vpop.f32.mrb[0].mxu0
      %2543 = vmatprep.mubr.f32.mxu0 0.0
      %2544 = vmatmul.mubr.f32.gmra.mrb[0].mxu0 %v2028
      %v2545 = vpop.f32.mrb[0].mxu0
      %v2546 = vadd.f32 %v309, %v2545
      %v2547 = vpop.f32.mrb[0].mxu0
      %2548 = vmatprep.mubr.f32.mxu0 0.0
      %2549 = vmatmul.mubr.f32.gmra.mrb[0].mxu0 %v2031
      %v2550 = vpop.f32.mrb[0].mxu0
      %v2551 = vadd.f32 %v309, %v2550
      %v2552 = vpop.f32.mrb[0].mxu0
      %2553 = vmatprep.mubr.f32.mxu0 0.0
      %2554 = vmatmul.mubr.f32.gmra.mrb[0].mxu0 %v2034
      %v2555 = vpop.f32.mrb[0].mxu0
      %v2556 = vadd.f32 %v309, %v2555
      %v2557 = vpop.f32.mrb[0].mxu0
      %2558 = vmatprep.mubr.f32.mxu0 0.0
      %2559 = vmatmul.mubr.f32.gmra.mrb[0].mxu0 %v2037
      %v2560 = vpop.f32.mrb[0].mxu0
      %v2561 = vadd.f32 %v309, %v2560
      %v2562 = vpop.f32.mrb[0].mxu0
      %2563 = vmatprep.mubr.f32.mxu0 0.0
      %2564 = vmatmul.mubr.f32.gmra.mrb[0].mxu0 %v2040
      %v2565 = vpop.f32.mrb[0].mxu0
      %v2566 = vadd.f32 %v309, %v2565
      %v2567 = vpop.f32.mrb[0].mxu0
      %2568 = vmatprep.mubr.f32.mxu0 0.0
      %2569 = vmatmul.mubr.f32.gmra.mrb[0].mxu0 %v2043
      %v2570 = vpop.f32.mrb[0].mxu0
      %v2571 = vadd.f32 %v309, %v2570
      %v2572 = vpop.f32.mrb[0].mxu0
      %2573 = vmatprep.mubr.f32.mxu0 0.0
      %2574 = vmatmul.mubr.f32.gmra.mrb[0].mxu0 %v2046
      %v2575 = vpop.f32.mrb[0].mxu0
      %v2576 = vadd.f32 %v309, %v2575
      %v2577 = vpop.f32.mrb[0].mxu0
      %2578 = vmatprep.mubr.f32.mxu0 0.0
      %2579 = vmatmul.mubr.f32.gmra.mrb[0].mxu0 %v2049
      %v2580 = vpop.f32.mrb[0].mxu0
      %v2581 = vadd.f32 %v309, %v2580
      %v2582 = vpop.f32.mrb[0].mxu0
      %2583 = vmatprep.mubr.f32.mxu0 0.0
      %2584 = vmatmul.mubr.f32.gmra.mrb[0].mxu0 %v2052
      %v2585 = vpop.f32.mrb[0].mxu0
      %v2586 = vadd.f32 %v309, %v2585
      %v2587 = vpop.f32.mrb[0].mxu0
      %2588 = vmatprep.mubr.f32.mxu0 0.0
      %2589 = vmatmul.mubr.f32.gmra.mrb[0].mxu0 %v2055
      %v2590 = vpop.f32.mrb[0].mxu0
      %v2591 = vadd.f32 %v309, %v2590
      %v2592 = vpop.f32.mrb[0].mxu0
      %2593 = vmatprep.mubr.f32.mxu0 0.0
      %2594 = vmatmul.mubr.f32.gmra.mrb[0].mxu0 %v2058
      %v2595 = vpop.f32.mrb[0].mxu0
      %v2596 = vadd.f32 %v309, %v2595
      %v2597 = vpop.f32.mrb[0].mxu0
      %2598 = vmatprep.mubr.f32.mxu0 0.0
      %2599 = vmatmul.mubr.f32.gmra.mrb[0].mxu0 %v2061
      %v2600 = vpop.f32.mrb[0].mxu0
      %v2601 = vadd.f32 %v309, %v2600
      %v2602 = vpop.f32.mrb[0].mxu0
      %2603 = vmatprep.mubr.f32.mxu0 0.0
      %2604 = vmatmul.mubr.f32.gmra.mrb[0].mxu0 %v2064
      %v2605 = vpop.f32.mrb[0].mxu0
      %v2606 = vadd.f32 %v309, %v2605
      %v2607 = vpop.f32.mrb[0].mxu0
      %2608 = vmatprep.mubr.f32.mxu0 0.0
      %2609 = vmatmul.mubr.f32.gmra.mrb[0].mxu0 %v2067
      %v2610 = vpop.f32.mrb[0].mxu0
      %v2611 = vadd.f32 %v309, %v2610
      %v2612 = vpop.f32.mrb[0].mxu0
      %2613 = vmatprep.mubr.f32.mxu0 0.0
      %2614 = vmatmul.mubr.f32.gmra.mrb[0].mxu0 %v2070
      %v2615 = vpop.f32.mrb[0].mxu0
      %v2616 = vadd.f32 %v309, %v2615
      %v2617 = vpop.f32.mrb[0].mxu0
      %2618 = vmatprep.mubr.f32.mxu0 0.0
      %2619 = vmatmul.mubr.f32.gmra.mrb[0].mxu0 %v2073
      %v2620 = vpop.f32.mrb[0].mxu0
      %v2621 = vadd.f32 %v309, %v2620
      %v2622 = vpop.f32.mrb[0].mxu0
      %2623 = vmatprep.mubr.f32.mxu0 0.0
      %2624 = vmatmul.mubr.f32.gmra.mrb[0].mxu0 %v2076
      %v2625 = vpop.f32.mrb[0].mxu0
      %v2626 = vadd.f32 %v309, %v2625
      %v2627 = vpop.f32.mrb[0].mxu0
      %2628 = vmatprep.mubr.f32.mxu0 0.0
      %2629 = vmatmul.mubr.f32.gmra.mrb[0].mxu0 %v2079
      %v2630 = vpop.f32.mrb[0].mxu0
      %v2631 = vadd.f32 %v309, %v2630
      %v2632 = vpop.f32.mrb[0].mxu0
      %2633 = vmatprep.mubr.f32.mxu0 0.0
      %2634 = vmatmul.mubr.f32.gmra.mrb[0].mxu0 %v2082
      %v2635 = vpop.f32.mrb[0].mxu0
      %v2636 = vadd.f32 %v309, %v2635
      %v2637 = vpop.f32.mrb[0].mxu0
      %2638 = vmatprep.mubr.f32.mxu0 0.0
      %2639 = vmatmul.mubr.f32.gmra.mrb[0].mxu0 %v2085
      %v2640 = vpop.f32.mrb[0].mxu0
      %v2641 = vadd.f32 %v309, %v2640
      %v2642 = vpop.f32.mrb[0].mxu0
      %2643 = vmatprep.mubr.f32.mxu0 0.0
      %2644 = vmatmul.mubr.f32.gmra.mrb[0].mxu0 %v2088
      %v2645 = vpop.f32.mrb[0].mxu0
      %v2646 = vadd.f32 %v309, %v2645
      %v2647 = vpop.f32.mrb[0].mxu0
      %2648 = vmatprep.mubr.f32.mxu0 0.0
      %2649 = vmatmul.mubr.f32.gmra.mrb[0].mxu0 %v2091
      %v2650 = vpop.f32.mrb[0].mxu0
      %v2651 = vadd.f32 %v309, %v2650
      %v2652 = vpop.f32.mrb[0].mxu0
      %2653 = vmatprep.mubr.f32.mxu0 0.0
      %2654 = vmatmul.mubr.f32.gmra.mrb[0].mxu0 %v2094
      %v2655 = vpop.f32.mrb[0].mxu0
      %v2656 = vadd.f32 %v309, %v2655
      %v2657 = vpop.f32.mrb[0].mxu0
      %2658 = vmatprep.mubr.f32.mxu0 0.0
      %2659 = vmatmul.mubr.f32.gmra.mrb[0].mxu0 %v2097
      %v2660 = vpop.f32.mrb[0].mxu0
      %v2661 = vadd.f32 %v309, %v2660
      %v2662 = vpop.f32.mrb[0].mxu0
      %2663 = vmatprep.mubr.f32.mxu0 0.0
      %2664 = vmatmul.mubr.f32.gmra.mrb[0].mxu0 %v2100
      %v2665 = vpop.f32.mrb[0].mxu0
      %v2666 = vadd.f32 %v309, %v2665
      %v2667 = vpop.f32.mrb[0].mxu0
      %2668 = vmatprep.mubr.f32.mxu0 0.0
      %2669 = vmatmul.mubr.f32.gmra.mrb[0].mxu0 %v2103
      %v2670 = vpop.f32.mrb[0].mxu0
      %v2671 = vadd.f32 %v309, %v2670
      %v2672 = vpop.f32.mrb[0].mxu0
      %2673 = vmatprep.mubr.f32.mxu0 0.0
      %2674 = vmatmul.mubr.f32.gmra.mrb[0].mxu0 %v2106
      %v2675 = vpop.f32.mrb[0].mxu0
      %v2676 = vadd.f32 %v309, %v2675
      %v2677 = vpop.f32.mrb[0].mxu0
      %2678 = vmatprep.mubr.f32.mxu0 0.0
      %2679 = vmatmul.mubr.f32.gmra.mrb[0].mxu0 %v2109
      %v2680 = vpop.f32.mrb[0].mxu0
      %v2681 = vadd.f32 %v309, %v2680
      %v2682 = vpop.f32.mrb[0].mxu0
      %2683 = vmatprep.mubr.f32.mxu0 0.0
      %2684 = vmatmul.mubr.f32.gmra.mrb[0].mxu0 %v2112
      %v2685 = vpop.f32.mrb[0].mxu0
      %v2686 = vadd.f32 %v309, %v2685
      %v2687 = vpop.f32.mrb[0].mxu0
      %2688 = vmatprep.mubr.f32.mxu0 0.0
      %2689 = vmatmul.mubr.f32.gmra.mrb[0].mxu0 %v2115
      %v2690 = vpop.f32.mrb[0].mxu0
      %v2691 = vadd.f32 %v309, %v2690
      %v2692 = vpop.f32.mrb[0].mxu0
      %2693 = vmatprep.mubr.f32.mxu0 0.0
      %2694 = vmatmul.mubr.f32.gmra.mrb[0].mxu0 %v2118
      %v2695 = vpop.f32.mrb[0].mxu0
      %v2696 = vadd.f32 %v309, %v2695
      %v2697 = vpop.f32.mrb[0].mxu0
      %2698 = vmatprep.mubr.f32.mxu0 0.0
      %2699 = vmatmul.mubr.f32.gmra.mrb[0].mxu0 %v2121
      %v2700 = vpop.f32.mrb[0].mxu0
      %v2701 = vadd.f32 %v309, %v2700
      %v2702 = vpop.f32.mrb[0].mxu0
      %2703 = vmatprep.mubr.f32.mxu0 0.0
      %2704 = vmatmul.mubr.f32.gmra.mrb[0].mxu0 %v2124
      %v2705 = vpop.f32.mrb[0].mxu0
      %v2706 = vadd.f32 %v309, %v2705
      %v2707 = vpop.f32.mrb[0].mxu0
      %2708 = vmatprep.mubr.f32.mxu0 0.0
      %2709 = vmatmul.mubr.f32.gmra.mrb[0].mxu0 %v2127
      %v2710 = vpop.f32.mrb[0].mxu0
      %v2711 = vadd.f32 %v309, %v2710
      %v2712 = vpop.f32.mrb[0].mxu0
      %2713 = vmatprep.mubr.f32.mxu0 0.0
      %2714 = vmatmul.mubr.f32.gmra.mrb[0].mxu0 %v2130
      %v2715 = vpop.f32.mrb[0].mxu0
      %v2716 = vadd.f32 %v309, %v2715
      %v2717 = vpop.f32.mrb[0].mxu0
      %2718 = vmatprep.mubr.f32.mxu0 0.0
      %2719 = vmatmul.mubr.f32.gmra.mrb[0].mxu0 %v2133
      %v2720 = vpop.f32.mrb[0].mxu0
      %v2721 = vadd.f32 %v309, %v2720
      %v2722 = vpop.f32.mrb[0].mxu0
      %2723 = vmatprep.mubr.f32.mxu0 0.0
      %2724 = vmatmul.mubr.f32.gmra.mrb[0].mxu0 %v2136
      %v2725 = vpop.f32.mrb[0].mxu0
      %v2726 = vadd.f32 %v309, %v2725
      %v2727 = vpop.f32.mrb[0].mxu0
      %2728 = vmatprep.mubr.f32.mxu0 0.0
      %2729 = vmatmul.mubr.f32.gmra.mrb[0].mxu0 %v2139
      %v2730 = vpop.f32.mrb[0].mxu0
      %v2731 = vadd.f32 %v309, %v2730
      %v2732 = vpop.f32.mrb[0].mxu0
      %2733 = vmatprep.mubr.f32.mxu0 0.0
      %2734 = vmatmul.mubr.f32.gmra.mrb[0].mxu0 %v2142
      %v2735 = vpop.f32.mrb[0].mxu0
      %v2736 = vadd.f32 %v309, %v2735
      %v2737 = vpop.f32.mrb[0].mxu0
      %2738 = vmatprep.mubr.f32.mxu0 0.0
      %2739 = vmatmul.mubr.f32.gmra.mrb[0].mxu0 %v2145
      %v2740 = vpop.f32.mrb[0].mxu0
      %v2741 = vadd.f32 %v309, %v2740
      %v2742 = vpop.f32.mrb[0].mxu0
      %2743 = vmatprep.mubr.f32.mxu0 0.0
      %2744 = vmatmul.mubr.f32.gmra.mrb[0].mxu0 %v2148
      %v2745 = vpop.f32.mrb[0].mxu0
      %v2746 = vadd.f32 %v309, %v2745
      %v2747 = vpop.f32.mrb[0].mxu0
      %2748 = vmatprep.mubr.f32.mxu0 0.0
      %2749 = vmatmul.mubr.f32.gmra.mrb[0].mxu0 %v2151
      %v2750 = vpop.f32.mrb[0].mxu0
      %v2751 = vadd.f32 %v309, %v2750
      %v2752 = vpop.f32.mrb[0].mxu0
      %2753 = vmatprep.mubr.f32.mxu0 0.0
      %2754 = vmatmul.mubr.f32.gmra.mrb[0].mxu0 %v2154
      %v2755 = vpop.f32.mrb[0].mxu0
      %v2756 = vadd.f32 %v309, %v2755
      %v2757 = vpop.f32.mrb[0].mxu0
      %2758 = vmatprep.mubr.f32.mxu0 0.0
      %2759 = vmatmul.mubr.f32.gmra.mrb[0].mxu0 %v2157
      %v2760 = vpop.f32.mrb[0].mxu0
      %v2761 = vadd.f32 %v309, %v2760
      %v2762 = vpop.f32.mrb[0].mxu0
      %2763 = vmatprep.mubr.f32.mxu0 0.0
      %2764 = vmatmul.mubr.f32.gmra.mrb[0].mxu0 %v2160
      %v2765 = vpop.f32.mrb[0].mxu0
      %v2766 = vadd.f32 %v309, %v2765
      %v2767 = vpop.f32.mrb[0].mxu0
      %2768 = vmatprep.mubr.f32.mxu0 0.0
      %2769 = vmatmul.mubr.f32.gmra.mrb[0].mxu0 %v2163
      %v2770 = vpop.f32.mrb[0].mxu0
      %v2771 = vadd.f32 %v309, %v2770
      %v2772 = vpop.f32.mrb[0].mxu0
      %2773 = vmatprep.mubr.f32.mxu0 0.0
      %2774 = vmatmul.mubr.f32.gmra.mrb[0].mxu0 %v2166
      %v2775 = vpop.f32.mrb[0].mxu0
      %v2776 = vadd.f32 %v309, %v2775
      %v2777 = vpop.f32.mrb[0].mxu0
      %2778 = vmatprep.mubr.f32.mxu0 0.0
      %2779 = vmatmul.mubr.f32.gmra.mrb[0].mxu0 %v2169
      %v2780 = vpop.f32.mrb[0].mxu0
      %v2781 = vadd.f32 %v309, %v2780
      %v2782 = vpop.f32.mrb[0].mxu0
      %2783 = vmatprep.mubr.f32.mxu0 0.0
      %2784 = vmatmul.mubr.f32.gmra.mrb[0].mxu0 %v2172
      %v2785 = vpop.f32.mrb[0].mxu0
      %v2786 = vadd.f32 %v309, %v2785
      %v2787 = vpop.f32.mrb[0].mxu0
      %2788 = vmatprep.mubr.f32.mxu0 0.0
      %2789 = vmatmul.mubr.f32.gmra.mrb[0].mxu0 %v2175
      %v2790 = vpop.f32.mrb[0].mxu0
      %v2791 = vadd.f32 %v309, %v2790
      %v2792 = vpop.f32.mrb[0].mxu0
      %2793 = vmatprep.mubr.f32.mxu0 0.0
      %2794 = vmatmul.mubr.f32.gmra.mrb[0].mxu0 %v2178
      %v2795 = vpop.f32.mrb[0].mxu0
      %v2796 = vadd.f32 %v309, %v2795
      %v2797 = vpop.f32.mrb[0].mxu0
      %2798 = vmatprep.mubr.f32.mxu0 0.0
      %2799 = vmatmul.mubr.f32.gmra.mrb[0].mxu0 %v2181
      %v2800 = vpop.f32.mrb[0].mxu0
      %v2801 = vadd.f32 %v309, %v2800
      %v2802 = vpop.f32.mrb[0].mxu0
      %2803 = vmatprep.mubr.f32.mxu0 0.0
      %2804 = vmatmul.mubr.f32.gmra.mrb[0].mxu0 %v2184
      %v2805 = vpop.f32.mrb[0].mxu0
      %v2806 = vadd.f32 %v309, %v2805
      %v2807 = vpop.f32.mrb[0].mxu0
      %2808 = vmatprep.mubr.f32.mxu0 0.0
      %2809 = vmatmul.mubr.f32.gmra.mrb[0].mxu0 %v2187
      %v2810 = vpop.f32.mrb[0].mxu0
      %v2811 = vadd.f32 %v309, %v2810
      %v2812 = vpop.f32.mrb[0].mxu0
      %2813 = vmatprep.mubr.f32.mxu0 0.0
      %2814 = vmatmul.mubr.f32.gmra.mrb[0].mxu0 %v2190
      %v2815 = vpop.f32.mrb[0].mxu0
      %v2816 = vadd.f32 %v309, %v2815
      %v2817 = vpop.f32.mrb[0].mxu0
      %2818 = vmatprep.mubr.f32.mxu0 0.0
      %2819 = vmatmul.mubr.f32.gmra.mrb[0].mxu0 %v2193
      %v2820 = vpop.f32.mrb[0].mxu0
      %v2821 = vadd.f32 %v309, %v2820
      %v2822 = vpop.f32.mrb[0].mxu0
      %2823 = vmatprep.mubr.f32.mxu0 0.0
      %2824 = vmatmul.mubr.f32.gmra.mrb[0].mxu0 %v2196
      %v2825 = vpop.f32.mrb[0].mxu0
      %v2826 = vadd.f32 %v309, %v2825
      %v2827 = vpop.f32.mrb[0].mxu0
      %2828 = vmatprep.mubr.f32.mxu0 0.0
      %2829 = vmatmul.mubr.f32.gmra.mrb[0].mxu0 %v2199
      %v2830 = vpop.f32.mrb[0].mxu0
      %v2831 = vadd.f32 %v309, %v2830
      %v2832 = vpop.f32.mrb[0].mxu0
      %2833 = vmatprep.mubr.f32.mxu0 0.0
      %2834 = vmatmul.mubr.f32.gmra.mrb[0].mxu0 %v2202
      %v2835 = vpop.f32.mrb[0].mxu0
      %v2836 = vadd.f32 %v309, %v2835
      %v2837 = vpop.f32.mrb[0].mxu0
      %2838 = vmatprep.mubr.f32.mxu0 0.0
      %2839 = vmatmul.mubr.f32.gmra.mrb[0].mxu0 %v2205
      %v2840 = vpop.f32.mrb[0].mxu0
      %v2841 = vadd.f32 %v309, %v2840
      %v2842 = vpop.f32.mrb[0].mxu0
      %2843 = vmatprep.mubr.f32.mxu0 0.0
      %2844 = vmatmul.mubr.f32.gmra.mrb[0].mxu0 %v2208
      %v2845 = vpop.f32.mrb[0].mxu0
      %v2846 = vadd.f32 %v309, %v2845
      %v2847 = vpop.f32.mrb[0].mxu0
      %2848 = vmatprep.mubr.f32.mxu0 0.0
      %2849 = vmatmul.mubr.f32.gmra.mrb[0].mxu0 %v2211
      %v2850 = vpop.f32.mrb[0].mxu0
      %v2851 = vadd.f32 %v309, %v2850
      %v2852 = vpop.f32.mrb[0].mxu0
      %2853 = vmatprep.mubr.f32.mxu0 0.0
      %2854 = vmatmul.mubr.f32.gmra.mrb[0].mxu0 %v2214
      %v2855 = vpop.f32.mrb[0].mxu0
      %v2856 = vadd.f32 %v309, %v2855
      %v2857 = vpop.f32.mrb[0].mxu0
      %2858 = vmatprep.mubr.f32.mxu0 0.0
      %2859 = vmatmul.mubr.f32.gmra.mrb[0].mxu0 %v2217
      %v2860 = vpop.f32.mrb[0].mxu0
      %v2861 = vadd.f32 %v309, %v2860
      %v2862 = vpop.f32.mrb[0].mxu0
      %2863 = vmatprep.mubr.f32.mxu0 0.0
      %2864 = vmatmul.mubr.f32.gmra.mrb[0].mxu0 %v2220
      %v2865 = vpop.f32.mrb[0].mxu0
      %v2866 = vadd.f32 %v309, %v2865
      %v2867 = vpop.f32.mrb[0].mxu0
      %2868 = vmatprep.mubr.f32.mxu0 0.0
      %2869 = vmatmul.mubr.f32.gmra.mrb[0].mxu0 %v2223
      %v2870 = vpop.f32.mrb[0].mxu0
      %v2871 = vadd.f32 %v309, %v2870
      %v2872 = vpop.f32.mrb[0].mxu0
      %2873 = vmatprep.mubr.f32.mxu0 0.0
      %2874 = vmatmul.mubr.f32.gmra.mrb[0].mxu0 %v2226
      %v2875 = vpop.f32.mrb[0].mxu0
      %v2876 = vadd.f32 %v309, %v2875
      %v2877 = vpop.f32.mrb[0].mxu0
      %2878 = vmatprep.mubr.f32.mxu0 0.0
      %2879 = vmatmul.mubr.f32.gmra.mrb[0].mxu0 %v2229
      %v2880 = vpop.f32.mrb[0].mxu0
      %v2881 = vadd.f32 %v309, %v2880
      %v2882 = vpop.f32.mrb[0].mxu0
      %2883 = vmatprep.mubr.f32.mxu0 0.0
      %2884 = vmatmul.mubr.f32.gmra.mrb[0].mxu0 %v2232
      %v2885 = vpop.f32.mrb[0].mxu0
      %v2886 = vadd.f32 %v309, %v2885
      %v2887 = vpop.f32.mrb[0].mxu0
      %2888 = vmatprep.mubr.f32.mxu0 0.0
      %2889 = vmatmul.mubr.f32.gmra.mrb[0].mxu0 %v2235
      %v2890 = vpop.f32.mrb[0].mxu0
      %v2891 = vadd.f32 %v309, %v2890
      %v2892 = vpop.f32.mrb[0].mxu0
      %2893 = vmatprep.mubr.f32.mxu0 0.0
      %2894 = vmatmul.mubr.f32.gmra.mrb[0].mxu0 %v2238
      %v2895 = vpop.f32.mrb[0].mxu0
      %v2896 = vadd.f32 %v309, %v2895
      %v2897 = vpop.f32.mrb[0].mxu0
      %2898 = vmatprep.mubr.f32.mxu0 0.0
      %2899 = vmatmul.mubr.f32.gmra.mrb[0].mxu0 %v2241
      %v2900 = vpop.f32.mrb[0].mxu0
      %v2901 = vadd.f32 %v309, %v2900
      %v2902 = vpop.f32.mrb[0].mxu0
      %2903 = vmatprep.mubr.f32.mxu0 0.0
      %2904 = vmatmul.mubr.f32.gmra.mrb[0].mxu0 %v2244
      %v2905 = vpop.f32.mrb[0].mxu0
      %v2906 = vadd.f32 %v309, %v2905
      %v2907 = vpop.f32.mrb[0].mxu0
      %2908 = vmatprep.mubr.f32.mxu0 0.0
      %2909 = vmatmul.mubr.f32.gmra.mrb[0].mxu0 %v2247
      %v2910 = vpop.f32.mrb[0].mxu0
      %v2911 = vadd.f32 %v309, %v2910
      %v2912 = vpop.f32.mrb[0].mxu0
      %2913 = vmatprep.mubr.f32.mxu0 0.0
      %2914 = vmatmul.mubr.f32.gmra.mrb[0].mxu0 %v2250
      %v2915 = vpop.f32.mrb[0].mxu0
      %v2916 = vadd.f32 %v309, %v2915
      %v2917 = vpop.f32.mrb[0].mxu0
      %2918 = vmatprep.mubr.f32.mxu0 0.0
      %2919 = vmatmul.mubr.f32.gmra.mrb[0].mxu0 %v2253
      %v2920 = vpop.f32.mrb[0].mxu0
      %v2921 = vadd.f32 %v309, %v2920
      %v2922 = vpop.f32.mrb[0].mxu0
      %2923 = vmatprep.mubr.f32.mxu0 0.0
      %2924 = vmatmul.mubr.f32.gmra.mrb[0].mxu0 %v2256
      %v2925 = vpop.f32.mrb[0].mxu0
      %v2926 = vadd.f32 %v309, %v2925
      %v2927 = vpop.f32.mrb[0].mxu0
      %2928 = vmatprep.mubr.f32.mxu0 0.0
      %2929 = vmatmul.mubr.f32.gmra.mrb[0].mxu0 %v2259
      %v2930 = vpop.f32.mrb[0].mxu0
      %v2931 = vadd.f32 %v309, %v2930
      %v2932 = vpop.f32.mrb[0].mxu0
      %2933 = vmatprep.mubr.f32.mxu0 0.0
      %2934 = vmatmul.mubr.f32.gmra.mrb[0].mxu0 %v2262
      %v2935 = vpop.f32.mrb[0].mxu0
      %v2936 = vadd.f32 %v309, %v2935
      %v2937 = vpop.f32.mrb[0].mxu0
      %2938 = vmatprep.mubr.f32.mxu0 0.0
      %2939 = vmatmul.mubr.f32.gmra.mrb[0].mxu0 %v2265
      %v2940 = vpop.f32.mrb[0].mxu0
      %v2941 = vadd.f32 %v309, %v2940
      %v2942 = vpop.f32.mrb[0].mxu0
      %2943 = vmatprep.mubr.f32.mxu0 0.0
      %2944 = vmatmul.mubr.f32.gmra.mrb[0].mxu0 %v2268
      %v2945 = vpop.f32.mrb[0].mxu0
      %v2946 = vadd.f32 %v309, %v2945
      %v2947 = vpop.f32.mrb[0].mxu0
      %2948 = vmatprep.mubr.f32.mxu0 0.0
      %2949 = vmatmul.mubr.f32.gmra.mrb[0].mxu0 %v2271
      %v2950 = vpop.f32.mrb[0].mxu0
      %v2951 = vadd.f32 %v309, %v2950
      %v2952 = vpop.f32.mrb[0].mxu0
      %2953 = vmatprep.mubr.f32.mxu0 0.0
      %2954 = vmatmul.mubr.f32.gmra.mrb[0].mxu0 %v2274
      %v2955 = vpop.f32.mrb[0].mxu0
      %v2956 = vadd.f32 %v309, %v2955
      %v2957 = vpop.f32.mrb[0].mxu0
      %2958 = vmatprep.mubr.f32.mxu0 0.0
      %2959 = vmatmul.mubr.f32.gmra.mrb[0].mxu0 %v2277
      %v2960 = vpop.f32.mrb[0].mxu0
      %v2961 = vadd.f32 %v309, %v2960
      %v2962 = vpop.f32.mrb[0].mxu0
      %2963 = vmatprep.mubr.f32.mxu0 0.0
      %2964 = vmatmul.mubr.f32.gmra.mrb[0].mxu0 %v2280
      %v2965 = vpop.f32.mrb[0].mxu0
      %v2966 = vadd.f32 %v309, %v2965
      %v2967 = vpop.f32.mrb[0].mxu0
      %2968 = vmatprep.mubr.f32.mxu0 0.0
      %2969 = vmatmul.mubr.f32.gmra.mrb[0].mxu0 %v2283
      %v2970 = vpop.f32.mrb[0].mxu0
      %v2971 = vadd.f32 %v309, %v2970
      %v2972 = vpop.f32.mrb[0].mxu0
      %2973 = vmatprep.mubr.f32.mxu0 0.0
      %2974 = vmatmul.mubr.f32.gmra.mrb[0].mxu0 %v2286
      %v2975 = vpop.f32.mrb[0].mxu0
      %v2976 = vadd.f32 %v309, %v2975
      %v2977 = vpop.f32.mrb[0].mxu0
      %2978 = vmatprep.mubr.f32.mxu0 0.0
      %2979 = vmatmul.mubr.f32.gmra.mrb[0].mxu0 %v2289
      %v2980 = vpop.f32.mrb[0].mxu0
      %v2981 = vadd.f32 %v309, %v2980
      %v2982 = vpop.f32.mrb[0].mxu0
      %2983 = vmatprep.mubr.f32.mxu0 0.0
      %2984 = vmatmul.mubr.f32.gmra.mrb[0].mxu0 %v2292
      %v2985 = vpop.f32.mrb[0].mxu0
      %v2986 = vadd.f32 %v309, %v2985
      %v2987 = vpop.f32.mrb[0].mxu0
      %2988 = vmatprep.mubr.f32.mxu0 0.0
      %2989 = vmatmul.mubr.f32.gmra.mrb[0].mxu0 %v2295
      %v2990 = vpop.f32.mrb[0].mxu0
      %v2991 = vadd.f32 %v309, %v2990
      %v2992 = vpop.f32.mrb[0].mxu0
      %2993 = vmatprep.mubr.f32.mxu0 0.0
      %2994 = vmatmul.mubr.f32.gmra.mrb[0].mxu0 %v2298
      %v2995 = vpop.f32.mrb[0].mxu0
      %v2996 = vadd.f32 %v309, %v2995
      %v2997 = vpop.f32.mrb[0].mxu0
      %2998 = vmatprep.mubr.f32.mxu0 0.0
      %2999 = vmatmul.mubr.f32.gmra.mrb[0].mxu0 %v2301
      %v3000 = vpop.f32.mrb[0].mxu0
      %v3001 = vadd.f32 %v309, %v3000
      %v3002 = vpop.f32.mrb[0].mxu0
      %3003 = vmatprep.mubr.f32.mxu0 0.0
      %3004 = vmatmul.mubr.f32.gmra.mrb[0].mxu0 %v2304
      %v3005 = vpop.f32.mrb[0].mxu0
      %v3006 = vadd.f32 %v309, %v3005
      %v3007 = vpop.f32.mrb[0].mxu0
      %3008 = vmatprep.mubr.f32.mxu0 0.0
      %3009 = vmatmul.mubr.f32.gmra.mrb[0].mxu0 %v2307
      %v3010 = vpop.f32.mrb[0].mxu0
      %v3011 = vadd.f32 %v309, %v3010
      %v3012 = vpop.f32.mrb[0].mxu0
      %3013 = vdwg.mxu0
      %v3014 = vmax.f32 %v2376, 0.0
      %v3015 = vmax.f32 %v2381, 0.0
      %v3016 = vmax.f32 %v2386, 0.0
      %v3017 = vmax.f32 %v2391, 0.0
      %v3018 = vmax.f32 %v2396, 0.0
      %v3019 = vmax.f32 %v2401, 0.0
      %v3020 = vmax.f32 %v2406, 0.0
      %v3021 = vmax.f32 %v2411, 0.0
      %v3022 = vmax.f32 %v2416, 0.0
      %v3023 = vmax.f32 %v2421, 0.0
      %v3024 = vmax.f32 %v2426, 0.0
      %v3025 = vmax.f32 %v2431, 0.0
      %v3026 = vmax.f32 %v2436, 0.0
      %v3027 = vmax.f32 %v2441, 0.0
      %v3028 = vmax.f32 %v2446, 0.0
      %v3029 = vmax.f32 %v2451, 0.0
      %v3030 = vmax.f32 %v2456, 0.0
      %v3031 = vmax.f32 %v2461, 0.0
      %v3032 = vmax.f32 %v2466, 0.0
      %v3033 = vmax.f32 %v2471, 0.0
      %v3034 = vmax.f32 %v2476, 0.0
      %v3035 = vmax.f32 %v2481, 0.0
      %v3036 = vmax.f32 %v2486, 0.0
      %v3037 = vmax.f32 %v2491, 0.0
      %v3038 = vmax.f32 %v2496, 0.0
      %v3039 = vmax.f32 %v2501, 0.0
      %v3040 = vmax.f32 %v2506, 0.0
      %v3041 = vmax.f32 %v2511, 0.0
      %v3042 = vmax.f32 %v2516, 0.0
      %v3043 = vmax.f32 %v2521, 0.0
      %v3044 = vmax.f32 %v2526, 0.0
      %v3045 = vmax.f32 %v2531, 0.0
      %v3046 = vmax.f32 %v2536, 0.0
      %v3047 = vmax.f32 %v2541, 0.0
      %v3048 = vmax.f32 %v2546, 0.0
      %v3049 = vmax.f32 %v2551, 0.0
      %v3050 = vmax.f32 %v2556, 0.0
      %v3051 = vmax.f32 %v2561, 0.0
      %v3052 = vmax.f32 %v2566, 0.0
      %v3053 = vmax.f32 %v2571, 0.0
      %v3054 = vmax.f32 %v2576, 0.0
      %v3055 = vmax.f32 %v2581, 0.0
      %v3056 = vmax.f32 %v2586, 0.0
      %v3057 = vmax.f32 %v2591, 0.0
      %v3058 = vmax.f32 %v2596, 0.0
      %v3059 = vmax.f32 %v2601, 0.0
      %v3060 = vmax.f32 %v2606, 0.0
      %v3061 = vmax.f32 %v2611, 0.0
      %v3062 = vmax.f32 %v2616, 0.0
      %v3063 = vmax.f32 %v2621, 0.0
      %v3064 = vmax.f32 %v2626, 0.0
      %v3065 = vmax.f32 %v2631, 0.0
      %v3066 = vmax.f32 %v2636, 0.0
      %v3067 = vmax.f32 %v2641, 0.0
      %v3068 = vmax.f32 %v2646, 0.0
      %v3069 = vmax.f32 %v2651, 0.0
      %v3070 = vmax.f32 %v2656, 0.0
      %v3071 = vmax.f32 %v2661, 0.0
      %v3072 = vmax.f32 %v2666, 0.0
      %v3073 = vmax.f32 %v2671, 0.0
      %v3074 = vmax.f32 %v2676, 0.0
      %v3075 = vmax.f32 %v2681, 0.0
      %v3076 = vmax.f32 %v2686, 0.0
      %v3077 = vmax.f32 %v2691, 0.0
      %v3078 = vmax.f32 %v2696, 0.0
      %v3079 = vmax.f32 %v2701, 0.0
      %v3080 = vmax.f32 %v2706, 0.0
      %v3081 = vmax.f32 %v2711, 0.0
      %v3082 = vmax.f32 %v2716, 0.0
      %v3083 = vmax.f32 %v2721, 0.0
      %v3084 = vmax.f32 %v2726, 0.0
      %v3085 = vmax.f32 %v2731, 0.0
      %v3086 = vmax.f32 %v2736, 0.0
      %v3087 = vmax.f32 %v2741, 0.0
      %v3088 = vmax.f32 %v2746, 0.0
      %v3089 = vmax.f32 %v2751, 0.0
      %v3090 = vmax.f32 %v2756, 0.0
      %v3091 = vmax.f32 %v2761, 0.0
      %v3092 = vmax.f32 %v2766, 0.0
      %v3093 = vmax.f32 %v2771, 0.0
      %v3094 = vmax.f32 %v2776, 0.0
      %v3095 = vmax.f32 %v2781, 0.0
      %v3096 = vmax.f32 %v2786, 0.0
      %v3097 = vmax.f32 %v2791, 0.0
      %v3098 = vmax.f32 %v2796, 0.0
      %v3099 = vmax.f32 %v2801, 0.0
      %v3100 = vmax.f32 %v2806, 0.0
      %v3101 = vmax.f32 %v2811, 0.0
      %v3102 = vmax.f32 %v2816, 0.0
      %v3103 = vmax.f32 %v2821, 0.0
      %v3104 = vmax.f32 %v2826, 0.0
      %v3105 = vmax.f32 %v2831, 0.0
      %v3106 = vmax.f32 %v2836, 0.0
      %v3107 = vmax.f32 %v2841, 0.0
      %v3108 = vmax.f32 %v2846, 0.0
      %v3109 = vmax.f32 %v2851, 0.0
      %v3110 = vmax.f32 %v2856, 0.0
      %v3111 = vmax.f32 %v2861, 0.0
      %v3112 = vmax.f32 %v2866, 0.0
      %v3113 = vmax.f32 %v2871, 0.0
      %v3114 = vmax.f32 %v2876, 0.0
      %v3115 = vmax.f32 %v2881, 0.0
      %v3116 = vmax.f32 %v2886, 0.0
      %v3117 = vmax.f32 %v2891, 0.0
      %v3118 = vmax.f32 %v2896, 0.0
      %v3119 = vmax.f32 %v2901, 0.0
      %v3120 = vmax.f32 %v2906, 0.0
      %v3121 = vmax.f32 %v2911, 0.0
      %v3122 = vmax.f32 %v2916, 0.0
      %v3123 = vmax.f32 %v2921, 0.0
      %v3124 = vmax.f32 %v2926, 0.0
      %v3125 = vmax.f32 %v2931, 0.0
      %v3126 = vmax.f32 %v2936, 0.0
      %v3127 = vmax.f32 %v2941, 0.0
      %v3128 = vmax.f32 %v2946, 0.0
      %v3129 = vmax.f32 %v2951, 0.0
      %v3130 = vmax.f32 %v2956, 0.0
      %v3131 = vmax.f32 %v2961, 0.0
      %v3132 = vmax.f32 %v2966, 0.0
      %v3133 = vmax.f32 %v2971, 0.0
      %v3134 = vmax.f32 %v2976, 0.0
      %v3135 = vmax.f32 %v2981, 0.0
      %v3136 = vmax.f32 %v2986, 0.0
      %v3137 = vmax.f32 %v2991, 0.0
      %v3138 = vmax.f32 %v2996, 0.0
      %v3139 = vmax.f32 %v3001, 0.0
      %v3140 = vmax.f32 %v3006, 0.0
      %v3141 = vmax.f32 %v3011, 0.0
      %v3142 = vmul.f32 %v3014, %v1535
      %v3143 = vmul.f32 %v3015, %v1535
      %v3144 = vmul.f32 %v3016, %v1535
      %v3145 = vmul.f32 %v3017, %v1535
      %v3146 = vmul.f32 %v3018, %v1535
      %v3147 = vmul.f32 %v3019, %v1535
      %v3148 = vmul.f32 %v3020, %v1535
      %v3149 = vmul.f32 %v3021, %v1535
      %v3150 = vmul.f32 %v3022, %v1535
      %v3151 = vmul.f32 %v3023, %v1535
      %v3152 = vmul.f32 %v3024, %v1535
      %v3153 = vmul.f32 %v3025, %v1535
      %v3154 = vmul.f32 %v3026, %v1535
      %v3155 = vmul.f32 %v3027, %v1535
      %v3156 = vmul.f32 %v3028, %v1535
      %v3157 = vmul.f32 %v3029, %v1535
      %v3158 = vmul.f32 %v3030, %v1535
      %v3159 = vmul.f32 %v3031, %v1535
      %v3160 = vmul.f32 %v3032, %v1535
      %v3161 = vmul.f32 %v3033, %v1535
      %v3162 = vmul.f32 %v3034, %v1535
      %v3163 = vmul.f32 %v3035, %v1535
      %v3164 = vmul.f32 %v3036, %v1535
      %v3165 = vmul.f32 %v3037, %v1535
      %v3166 = vmul.f32 %v3038, %v1535
      %v3167 = vmul.f32 %v3039, %v1535
      %v3168 = vmul.f32 %v3040, %v1535
      %v3169 = vmul.f32 %v3041, %v1535
      %v3170 = vmul.f32 %v3042, %v1535
      %v3171 = vmul.f32 %v3043, %v1535
      %v3172 = vmul.f32 %v3044, %v1535
      %v3173 = vmul.f32 %v3045, %v1535
      %v3174 = vmul.f32 %v3046, %v1535
      %v3175 = vmul.f32 %v3047, %v1535
      %v3176 = vmul.f32 %v3048, %v1535
      %v3177 = vmul.f32 %v3049, %v1535
      %v3178 = vmul.f32 %v3050, %v1535
      %v3179 = vmul.f32 %v3051, %v1535
      %v3180 = vmul.f32 %v3052, %v1535
      %v3181 = vmul.f32 %v3053, %v1535
      %v3182 = vmul.f32 %v3054, %v1535
      %v3183 = vmul.f32 %v3055, %v1535
      %v3184 = vmul.f32 %v3056, %v1535
      %v3185 = vmul.f32 %v3057, %v1535
      %v3186 = vmul.f32 %v3058, %v1535
      %v3187 = vmul.f32 %v3059, %v1535
      %v3188 = vmul.f32 %v3060, %v1535
      %v3189 = vmul.f32 %v3061, %v1535
      %v3190 = vmul.f32 %v3062, %v1535
      %v3191 = vmul.f32 %v3063, %v1535
      %v3192 = vmul.f32 %v3064, %v1535
      %v3193 = vmul.f32 %v3065, %v1535
      %v3194 = vmul.f32 %v3066, %v1535
      %v3195 = vmul.f32 %v3067, %v1535
      %v3196 = vmul.f32 %v3068, %v1535
      %v3197 = vmul.f32 %v3069, %v1535
      %v3198 = vmul.f32 %v3070, %v1535
      %v3199 = vmul.f32 %v3071, %v1535
      %v3200 = vmul.f32 %v3072, %v1535
      %v3201 = vmul.f32 %v3073, %v1535
      %v3202 = vmul.f32 %v3074, %v1535
      %v3203 = vmul.f32 %v3075, %v1535
      %v3204 = vmul.f32 %v3076, %v1535
      %v3205 = vmul.f32 %v3077, %v1535
      %v3206 = vmul.f32 %v3078, %v1535
      %v3207 = vmul.f32 %v3079, %v1535
      %v3208 = vmul.f32 %v3080, %v1535
      %v3209 = vmul.f32 %v3081, %v1535
      %v3210 = vmul.f32 %v3082, %v1535
      %v3211 = vmul.f32 %v3083, %v1535
      %v3212 = vmul.f32 %v3084, %v1535
      %v3213 = vmul.f32 %v3085, %v1535
      %v3214 = vmul.f32 %v3086, %v1535
      %v3215 = vmul.f32 %v3087, %v1535
      %v3216 = vmul.f32 %v3088, %v1535
      %v3217 = vmul.f32 %v3089, %v1535
      %v3218 = vmul.f32 %v3090, %v1535
      %v3219 = vmul.f32 %v3091, %v1535
      %v3220 = vmul.f32 %v3092, %v1535
      %v3221 = vmul.f32 %v3093, %v1535
      %v3222 = vmul.f32 %v3094, %v1535
      %v3223 = vmul.f32 %v3095, %v1535
      %v3224 = vmul.f32 %v3096, %v1535
      %v3225 = vmul.f32 %v3097, %v1535
      %v3226 = vmul.f32 %v3098, %v1535
      %v3227 = vmul.f32 %v3099, %v1535
      %v3228 = vmul.f32 %v3100, %v1535
      %v3229 = vmul.f32 %v3101, %v1535
      %v3230 = vmul.f32 %v3102, %v1535
      %v3231 = vmul.f32 %v3103, %v1535
      %v3232 = vmul.f32 %v3104, %v1535
      %v3233 = vmul.f32 %v3105, %v1535
      %v3234 = vmul.f32 %v3106, %v1535
      %v3235 = vmul.f32 %v3107, %v1535
      %v3236 = vmul.f32 %v3108, %v1535
      %v3237 = vmul.f32 %v3109, %v1535
      %v3238 = vmul.f32 %v3110, %v1535
      %v3239 = vmul.f32 %v3111, %v1535
      %v3240 = vmul.f32 %v3112, %v1535
      %v3241 = vmul.f32 %v3113, %v1535
      %v3242 = vmul.f32 %v3114, %v1535
      %v3243 = vmul.f32 %v3115, %v1535
      %v3244 = vmul.f32 %v3116, %v1535
      %v3245 = vmul.f32 %v3117, %v1535
      %v3246 = vmul.f32 %v3118, %v1535
      %v3247 = vmul.f32 %v3119, %v1535
      %v3248 = vmul.f32 %v3120, %v1535
      %v3249 = vmul.f32 %v3121, %v1535
      %v3250 = vmul.f32 %v3122, %v1535
      %v3251 = vmul.f32 %v3123, %v1535
      %v3252 = vmul.f32 %v3124, %v1535
      %v3253 = vmul.f32 %v3125, %v1535
      %v3254 = vmul.f32 %v3126, %v1535
      %v3255 = vmul.f32 %v3127, %v1535
      %v3256 = vmul.f32 %v3128, %v1535
      %v3257 = vmul.f32 %v3129, %v1535
      %v3258 = vmul.f32 %v3130, %v1535
      %v3259 = vmul.f32 %v3131, %v1535
      %v3260 = vmul.f32 %v3132, %v1535
      %v3261 = vmul.f32 %v3133, %v1535
      %v3262 = vmul.f32 %v3134, %v1535
      %v3263 = vmul.f32 %v3135, %v1535
      %v3264 = vmul.f32 %v3136, %v1535
      %v3265 = vmul.f32 %v3137, %v1535
      %v3266 = vmul.f32 %v3138, %v1535
      %v3267 = vmul.f32 %v3139, %v1535
      %v3268 = vmul.f32 %v3140, %v1535
      %v3269 = vmul.f32 %v3141, %v1535
      %v3270 = vadd.f32 %v3142, %v1667
      %v3271 = vadd.f32 %v3143, %v1667
      %v3272 = vadd.f32 %v3144, %v1667
      %v3273 = vadd.f32 %v3145, %v1667
      %v3274 = vadd.f32 %v3146, %v1667
      %v3275 = vadd.f32 %v3147, %v1667
      %v3276 = vadd.f32 %v3148, %v1667
      %v3277 = vadd.f32 %v3149, %v1667
      %v3278 = vadd.f32 %v3150, %v1667
      %v3279 = vadd.f32 %v3151, %v1667
      %v3280 = vadd.f32 %v3152, %v1667
      %v3281 = vadd.f32 %v3153, %v1667
      %v3282 = vadd.f32 %v3154, %v1667
      %v3283 = vadd.f32 %v3155, %v1667
      %v3284 = vadd.f32 %v3156, %v1667
      %v3285 = vadd.f32 %v3157, %v1667
      %v3286 = vadd.f32 %v3158, %v1667
      %v3287 = vadd.f32 %v3159, %v1667
      %v3288 = vadd.f32 %v3160, %v1667
      %v3289 = vadd.f32 %v3161, %v1667
      %v3290 = vadd.f32 %v3162, %v1667
      %v3291 = vadd.f32 %v3163, %v1667
      %v3292 = vadd.f32 %v3164, %v1667
      %v3293 = vadd.f32 %v3165, %v1667
      %v3294 = vadd.f32 %v3166, %v1667
      %v3295 = vadd.f32 %v3167, %v1667
      %v3296 = vadd.f32 %v3168, %v1667
      %v3297 = vadd.f32 %v3169, %v1667
      %v3298 = vadd.f32 %v3170, %v1667
      %v3299 = vadd.f32 %v3171, %v1667
      %v3300 = vadd.f32 %v3172, %v1667
      %v3301 = vadd.f32 %v3173, %v1667
      %v3302 = vadd.f32 %v3174, %v1667
      %v3303 = vadd.f32 %v3175, %v1667
      %v3304 = vadd.f32 %v3176, %v1667
      %v3305 = vadd.f32 %v3177, %v1667
      %v3306 = vadd.f32 %v3178, %v1667
      %v3307 = vadd.f32 %v3179, %v1667
      %v3308 = vadd.f32 %v3180, %v1667
      %v3309 = vadd.f32 %v3181, %v1667
      %v3310 = vadd.f32 %v3182, %v1667
      %v3311 = vadd.f32 %v3183, %v1667
      %v3312 = vadd.f32 %v3184, %v1667
      %v3313 = vadd.f32 %v3185, %v1667
      %v3314 = vadd.f32 %v3186, %v1667
      %v3315 = vadd.f32 %v3187, %v1667
      %v3316 = vadd.f32 %v3188, %v1667
      %v3317 = vadd.f32 %v3189, %v1667
      %v3318 = vadd.f32 %v3190, %v1667
      %v3319 = vadd.f32 %v3191, %v1667
      %v3320 = vadd.f32 %v3192, %v1667
      %v3321 = vadd.f32 %v3193, %v1667
      %v3322 = vadd.f32 %v3194, %v1667
      %v3323 = vadd.f32 %v3195, %v1667
      %v3324 = vadd.f32 %v3196, %v1667
      %v3325 = vadd.f32 %v3197, %v1667
      %v3326 = vadd.f32 %v3198, %v1667
      %v3327 = vadd.f32 %v3199, %v1667
      %v3328 = vadd.f32 %v3200, %v1667
      %v3329 = vadd.f32 %v3201, %v1667
      %v3330 = vadd.f32 %v3202, %v1667
      %v3331 = vadd.f32 %v3203, %v1667
      %v3332 = vadd.f32 %v3204, %v1667
      %v3333 = vadd.f32 %v3205, %v1667
      %v3334 = vadd.f32 %v3206, %v1667
      %v3335 = vadd.f32 %v3207, %v1667
      %v3336 = vadd.f32 %v3208, %v1667
      %v3337 = vadd.f32 %v3209, %v1667
      %v3338 = vadd.f32 %v3210, %v1667
      %v3339 = vadd.f32 %v3211, %v1667
      %v3340 = vadd.f32 %v3212, %v1667
      %v3341 = vadd.f32 %v3213, %v1667
      %v3342 = vadd.f32 %v3214, %v1667
      %v3343 = vadd.f32 %v3215, %v1667
      %v3344 = vadd.f32 %v3216, %v1667
      %v3345 = vadd.f32 %v3217, %v1667
      %v3346 = vadd.f32 %v3218, %v1667
      %v3347 = vadd.f32 %v3219, %v1667
      %v3348 = vadd.f32 %v3220, %v1667
      %v3349 = vadd.f32 %v3221, %v1667
      %v3350 = vadd.f32 %v3222, %v1667
      %v3351 = vadd.f32 %v3223, %v1667
      %v3352 = vadd.f32 %v3224, %v1667
      %v3353 = vadd.f32 %v3225, %v1667
      %v3354 = vadd.f32 %v3226, %v1667
      %v3355 = vadd.f32 %v3227, %v1667
      %v3356 = vadd.f32 %v3228, %v1667
      %v3357 = vadd.f32 %v3229, %v1667
      %v3358 = vadd.f32 %v3230, %v1667
      %v3359 = vadd.f32 %v3231, %v1667
      %v3360 = vadd.f32 %v3232, %v1667
      %v3361 = vadd.f32 %v3233, %v1667
      %v3362 = vadd.f32 %v3234, %v1667
      %v3363 = vadd.f32 %v3235, %v1667
      %v3364 = vadd.f32 %v3236, %v1667
      %v3365 = vadd.f32 %v3237, %v1667
      %v3366 = vadd.f32 %v3238, %v1667
      %v3367 = vadd.f32 %v3239, %v1667
      %v3368 = vadd.f32 %v3240, %v1667
      %v3369 = vadd.f32 %v3241, %v1667
      %v3370 = vadd.f32 %v3242, %v1667
      %v3371 = vadd.f32 %v3243, %v1667
      %v3372 = vadd.f32 %v3244, %v1667
      %v3373 = vadd.f32 %v3245, %v1667
      %v3374 = vadd.f32 %v3246, %v1667
      %v3375 = vadd.f32 %v3247, %v1667
      %v3376 = vadd.f32 %v3248, %v1667
      %v3377 = vadd.f32 %v3249, %v1667
      %v3378 = vadd.f32 %v3250, %v1667
      %v3379 = vadd.f32 %v3251, %v1667
      %v3380 = vadd.f32 %v3252, %v1667
      %v3381 = vadd.f32 %v3253, %v1667
      %v3382 = vadd.f32 %v3254, %v1667
      %v3383 = vadd.f32 %v3255, %v1667
      %v3384 = vadd.f32 %v3256, %v1667
      %v3385 = vadd.f32 %v3257, %v1667
      %v3386 = vadd.f32 %v3258, %v1667
      %v3387 = vadd.f32 %v3259, %v1667
      %v3388 = vadd.f32 %v3260, %v1667
      %v3389 = vadd.f32 %v3261, %v1667
      %v3390 = vadd.f32 %v3262, %v1667
      %v3391 = vadd.f32 %v3263, %v1667
      %v3392 = vadd.f32 %v3264, %v1667
      %v3393 = vadd.f32 %v3265, %v1667
      %v3394 = vadd.f32 %v3266, %v1667
      %v3395 = vadd.f32 %v3267, %v1667
      %v3396 = vadd.f32 %v3268, %v1667
      %v3397 = vadd.f32 %v3269, %v1667
      %v3398 = vmax.f32 %v1668, %v3270
      %v3399 = vmax.f32 %v1669, %v3271
      %v3400 = vmax.f32 %v1670, %v3272
      %v3401 = vmax.f32 %v1671, %v3273
      %v3402 = vmax.f32 %v1672, %v3274
      %v3403 = vmax.f32 %v1673, %v3275
      %v3404 = vmax.f32 %v1674, %v3276
      %v3405 = vmax.f32 %v1675, %v3277
      %v3406 = vmax.f32 %v1676, %v3278
      %v3407 = vmax.f32 %v1677, %v3279
      %v3408 = vmax.f32 %v1678, %v3280
      %v3409 = vmax.f32 %v1679, %v3281
      %v3410 = vmax.f32 %v1680, %v3282
      %v3411 = vmax.f32 %v1681, %v3283
      %v3412 = vmax.f32 %v1682, %v3284
      %v3413 = vmax.f32 %v1683, %v3285
      %v3414 = vmax.f32 %v1684, %v3286
      %v3415 = vmax.f32 %v1685, %v3287
      %v3416 = vmax.f32 %v1686, %v3288
      %v3417 = vmax.f32 %v1687, %v3289
      %v3418 = vmax.f32 %v1688, %v3290
      %v3419 = vmax.f32 %v1689, %v3291
      %v3420 = vmax.f32 %v1690, %v3292
      %v3421 = vmax.f32 %v1691, %v3293
      %v3422 = vmax.f32 %v1692, %v3294
      %v3423 = vmax.f32 %v1693, %v3295
      %v3424 = vmax.f32 %v1694, %v3296
      %v3425 = vmax.f32 %v1695, %v3297
      %v3426 = vmax.f32 %v1696, %v3298
      %v3427 = vmax.f32 %v1697, %v3299
      %v3428 = vmax.f32 %v1698, %v3300
      %v3429 = vmax.f32 %v1699, %v3301
      %v3430 = vmax.f32 %v1700, %v3302
      %v3431 = vmax.f32 %v1701, %v3303
      %v3432 = vmax.f32 %v1702, %v3304
      %v3433 = vmax.f32 %v1703, %v3305
      %v3434 = vmax.f32 %v1704, %v3306
      %v3435 = vmax.f32 %v1705, %v3307
      %v3436 = vmax.f32 %v1706, %v3308
      %v3437 = vmax.f32 %v1707, %v3309
      %v3438 = vmax.f32 %v1708, %v3310
      %v3439 = vmax.f32 %v1709, %v3311
      %v3440 = vmax.f32 %v1710, %v3312
      %v3441 = vmax.f32 %v1711, %v3313
      %v3442 = vmax.f32 %v1712, %v3314
      %v3443 = vmax.f32 %v1713, %v3315
      %v3444 = vmax.f32 %v1714, %v3316
      %v3445 = vmax.f32 %v1715, %v3317
      %v3446 = vmax.f32 %v1716, %v3318
      %v3447 = vmax.f32 %v1717, %v3319
      %v3448 = vmax.f32 %v1718, %v3320
      %v3449 = vmax.f32 %v1719, %v3321
      %v3450 = vmax.f32 %v1720, %v3322
      %v3451 = vmax.f32 %v1721, %v3323
      %v3452 = vmax.f32 %v1722, %v3324
      %v3453 = vmax.f32 %v1723, %v3325
      %v3454 = vmax.f32 %v1724, %v3326
      %v3455 = vmax.f32 %v1725, %v3327
      %v3456 = vmax.f32 %v1726, %v3328
      %v3457 = vmax.f32 %v1727, %v3329
      %v3458 = vmax.f32 %v1728, %v3330
      %v3459 = vmax.f32 %v1729, %v3331
      %v3460 = vmax.f32 %v1730, %v3332
      %v3461 = vmax.f32 %v1731, %v3333
      %v3462 = vmax.f32 %v1732, %v3334
      %v3463 = vmax.f32 %v1733, %v3335
      %v3464 = vmax.f32 %v1734, %v3336
      %v3465 = vmax.f32 %v1735, %v3337
      %v3466 = vmax.f32 %v1736, %v3338
      %v3467 = vmax.f32 %v1737, %v3339
      %v3468 = vmax.f32 %v1738, %v3340
      %v3469 = vmax.f32 %v1739, %v3341
      %v3470 = vmax.f32 %v1740, %v3342
      %v3471 = vmax.f32 %v1741, %v3343
      %v3472 = vmax.f32 %v1742, %v3344
      %v3473 = vmax.f32 %v1743, %v3345
      %v3474 = vmax.f32 %v1744, %v3346
      %v3475 = vmax.f32 %v1745, %v3347
      %v3476 = vmax.f32 %v1746, %v3348
      %v3477 = vmax.f32 %v1747, %v3349
      %v3478 = vmax.f32 %v1748, %v3350
      %v3479 = vmax.f32 %v1749, %v3351
      %v3480 = vmax.f32 %v1750, %v3352
      %v3481 = vmax.f32 %v1751, %v3353
      %v3482 = vmax.f32 %v1752, %v3354
      %v3483 = vmax.f32 %v1753, %v3355
      %v3484 = vmax.f32 %v1754, %v3356
      %v3485 = vmax.f32 %v1755, %v3357
      %v3486 = vmax.f32 %v1756, %v3358
      %v3487 = vmax.f32 %v1757, %v3359
      %v3488 = vmax.f32 %v1758, %v3360
      %v3489 = vmax.f32 %v1759, %v3361
      %v3490 = vmax.f32 %v1760, %v3362
      %v3491 = vmax.f32 %v1761, %v3363
      %v3492 = vmax.f32 %v1762, %v3364
      %v3493 = vmax.f32 %v1763, %v3365
      %v3494 = vmax.f32 %v1764, %v3366
      %v3495 = vmax.f32 %v1765, %v3367
      %v3496 = vmax.f32 %v1766, %v3368
      %v3497 = vmax.f32 %v1767, %v3369
      %v3498 = vmax.f32 %v1768, %v3370
      %v3499 = vmax.f32 %v1769, %v3371
      %v3500 = vmax.f32 %v1770, %v3372
      %v3501 = vmax.f32 %v1771, %v3373
      %v3502 = vmax.f32 %v1772, %v3374
      %v3503 = vmax.f32 %v1773, %v3375
      %v3504 = vmax.f32 %v1774, %v3376
      %v3505 = vmax.f32 %v1775, %v3377
      %v3506 = vmax.f32 %v1776, %v3378
      %v3507 = vmax.f32 %v1777, %v3379
      %v3508 = vmax.f32 %v1778, %v3380
      %v3509 = vmax.f32 %v1779, %v3381
      %v3510 = vmax.f32 %v1780, %v3382
      %v3511 = vmax.f32 %v1781, %v3383
      %v3512 = vmax.f32 %v1782, %v3384
      %v3513 = vmax.f32 %v1783, %v3385
      %v3514 = vmax.f32 %v1784, %v3386
      %v3515 = vmax.f32 %v1785, %v3387
      %v3516 = vmax.f32 %v1786, %v3388
      %v3517 = vmax.f32 %v1787, %v3389
      %v3518 = vmax.f32 %v1788, %v3390
      %v3519 = vmax.f32 %v1789, %v3391
      %v3520 = vmax.f32 %v1790, %v3392
      %v3521 = vmax.f32 %v1791, %v3393
      %v3522 = vmax.f32 %v1792, %v3394
      %v3523 = vmax.f32 %v1793, %v3395
      %v3524 = vmax.f32 %v1794, %v3396
      %v3525 = vmax.f32 %v1795, %v3397
      %s3526 = scalar_lea.vmem %s165, 2048
      %v3527 = vld [vmem:[%s3526] sm:$0xff]
      %v3528 = vld [vmem:[%s3526 + $0x8] sm:$0xff]
      %v3529 = vld [vmem:[%s3526 + $0x10] sm:$0xff]
      %v3530 = vld [vmem:[%s3526 + $0x18] sm:$0xff]
      %v3531 = vld [vmem:[%s3526 + $0x20] sm:$0xff]
      %v3532 = vld [vmem:[%s3526 + $0x28] sm:$0xff]
      %v3533 = vld [vmem:[%s3526 + $0x30] sm:$0xff]
      %v3534 = vld [vmem:[%s3526 + $0x38] sm:$0xff]
      %v3535 = vld [vmem:[%s3526 + $0x40] sm:$0xff]
      %v3536 = vld [vmem:[%s3526 + $0x48] sm:$0xff]
      %v3537 = vld [vmem:[%s3526 + $0x50] sm:$0xff]
      %v3538 = vld [vmem:[%s3526 + $0x58] sm:$0xff]
      %v3539 = vld [vmem:[%s3526 + $0x60] sm:$0xff]
      %v3540 = vld [vmem:[%s3526 + $0x68] sm:$0xff]
      %v3541 = vld [vmem:[%s3526 + $0x70] sm:$0xff]
      %v3542 = vld [vmem:[%s3526 + $0x78] sm:$0xff]
      %v3543 = vld [vmem:[%s3526 + $0x80] sm:$0xff]
      %v3544 = vld [vmem:[%s3526 + $0x88] sm:$0xff]
      %v3545 = vld [vmem:[%s3526 + $0x90] sm:$0xff]
      %v3546 = vld [vmem:[%s3526 + $0x98] sm:$0xff]
      %v3547 = vld [vmem:[%s3526 + $0xa0] sm:$0xff]
      %v3548 = vld [vmem:[%s3526 + $0xa8] sm:$0xff]
      %v3549 = vld [vmem:[%s3526 + $0xb0] sm:$0xff]
      %v3550 = vld [vmem:[%s3526 + $0xb8] sm:$0xff]
      %v3551 = vld [vmem:[%s3526 + $0xc0] sm:$0xff]
      %v3552 = vld [vmem:[%s3526 + $0xc8] sm:$0xff]
      %v3553 = vld [vmem:[%s3526 + $0xd0] sm:$0xff]
      %v3554 = vld [vmem:[%s3526 + $0xd8] sm:$0xff]
      %v3555 = vld [vmem:[%s3526 + $0xe0] sm:$0xff]
      %v3556 = vld [vmem:[%s3526 + $0xe8] sm:$0xff]
      %v3557 = vld [vmem:[%s3526 + $0xf0] sm:$0xff]
      %v3558 = vld [vmem:[%s3526 + $0xf8] sm:$0xff]
      %v3559 = vld [vmem:[%s3526 + $0x100] sm:$0xff]
      %v3560 = vld [vmem:[%s3526 + $0x108] sm:$0xff]
      %v3561 = vld [vmem:[%s3526 + $0x110] sm:$0xff]
      %v3562 = vld [vmem:[%s3526 + $0x118] sm:$0xff]
      %v3563 = vld [vmem:[%s3526 + $0x120] sm:$0xff]
      %v3564 = vld [vmem:[%s3526 + $0x128] sm:$0xff]
      %v3565 = vld [vmem:[%s3526 + $0x130] sm:$0xff]
      %v3566 = vld [vmem:[%s3526 + $0x138] sm:$0xff]
      %v3567 = vld [vmem:[%s3526 + $0x140] sm:$0xff]
      %v3568 = vld [vmem:[%s3526 + $0x148] sm:$0xff]
      %v3569 = vld [vmem:[%s3526 + $0x150] sm:$0xff]
      %v3570 = vld [vmem:[%s3526 + $0x158] sm:$0xff]
      %v3571 = vld [vmem:[%s3526 + $0x160] sm:$0xff]
      %v3572 = vld [vmem:[%s3526 + $0x168] sm:$0xff]
      %v3573 = vld [vmem:[%s3526 + $0x170] sm:$0xff]
      %v3574 = vld [vmem:[%s3526 + $0x178] sm:$0xff]
      %v3575 = vld [vmem:[%s3526 + $0x180] sm:$0xff]
      %v3576 = vld [vmem:[%s3526 + $0x188] sm:$0xff]
      %v3577 = vld [vmem:[%s3526 + $0x190] sm:$0xff]
      %v3578 = vld [vmem:[%s3526 + $0x198] sm:$0xff]
      %v3579 = vld [vmem:[%s3526 + $0x1a0] sm:$0xff]
      %v3580 = vld [vmem:[%s3526 + $0x1a8] sm:$0xff]
      %v3581 = vld [vmem:[%s3526 + $0x1b0] sm:$0xff]
      %v3582 = vld [vmem:[%s3526 + $0x1b8] sm:$0xff]
      %v3583 = vld [vmem:[%s3526 + $0x1c0] sm:$0xff]
      %v3584 = vld [vmem:[%s3526 + $0x1c8] sm:$0xff]
      %v3585 = vld [vmem:[%s3526 + $0x1d0] sm:$0xff]
      %v3586 = vld [vmem:[%s3526 + $0x1d8] sm:$0xff]
      %v3587 = vld [vmem:[%s3526 + $0x1e0] sm:$0xff]
      %v3588 = vld [vmem:[%s3526 + $0x1e8] sm:$0xff]
      %v3589 = vld [vmem:[%s3526 + $0x1f0] sm:$0xff]
      %v3590 = vld [vmem:[%s3526 + $0x1f8] sm:$0xff]
      %v3591 = vld [vmem:[%s3526 + $0x200] sm:$0xff]
      %v3592 = vld [vmem:[%s3526 + $0x208] sm:$0xff]
      %v3593 = vld [vmem:[%s3526 + $0x210] sm:$0xff]
      %v3594 = vld [vmem:[%s3526 + $0x218] sm:$0xff]
      %v3595 = vld [vmem:[%s3526 + $0x220] sm:$0xff]
      %v3596 = vld [vmem:[%s3526 + $0x228] sm:$0xff]
      %v3597 = vld [vmem:[%s3526 + $0x230] sm:$0xff]
      %v3598 = vld [vmem:[%s3526 + $0x238] sm:$0xff]
      %v3599 = vld [vmem:[%s3526 + $0x240] sm:$0xff]
      %v3600 = vld [vmem:[%s3526 + $0x248] sm:$0xff]
      %v3601 = vld [vmem:[%s3526 + $0x250] sm:$0xff]
      %v3602 = vld [vmem:[%s3526 + $0x258] sm:$0xff]
      %v3603 = vld [vmem:[%s3526 + $0x260] sm:$0xff]
      %v3604 = vld [vmem:[%s3526 + $0x268] sm:$0xff]
      %v3605 = vld [vmem:[%s3526 + $0x270] sm:$0xff]
      %v3606 = vld [vmem:[%s3526 + $0x278] sm:$0xff]
      %v3607 = vld [vmem:[%s3526 + $0x280] sm:$0xff]
      %v3608 = vld [vmem:[%s3526 + $0x288] sm:$0xff]
      %v3609 = vld [vmem:[%s3526 + $0x290] sm:$0xff]
      %v3610 = vld [vmem:[%s3526 + $0x298] sm:$0xff]
      %v3611 = vld [vmem:[%s3526 + $0x2a0] sm:$0xff]
      %v3612 = vld [vmem:[%s3526 + $0x2a8] sm:$0xff]
      %v3613 = vld [vmem:[%s3526 + $0x2b0] sm:$0xff]
      %v3614 = vld [vmem:[%s3526 + $0x2b8] sm:$0xff]
      %v3615 = vld [vmem:[%s3526 + $0x2c0] sm:$0xff]
      %v3616 = vld [vmem:[%s3526 + $0x2c8] sm:$0xff]
      %v3617 = vld [vmem:[%s3526 + $0x2d0] sm:$0xff]
      %v3618 = vld [vmem:[%s3526 + $0x2d8] sm:$0xff]
      %v3619 = vld [vmem:[%s3526 + $0x2e0] sm:$0xff]
      %v3620 = vld [vmem:[%s3526 + $0x2e8] sm:$0xff]
      %v3621 = vld [vmem:[%s3526 + $0x2f0] sm:$0xff]
      %v3622 = vld [vmem:[%s3526 + $0x2f8] sm:$0xff]
      %v3623 = vld [vmem:[%s3526 + $0x300] sm:$0xff]
      %v3624 = vld [vmem:[%s3526 + $0x308] sm:$0xff]
      %v3625 = vld [vmem:[%s3526 + $0x310] sm:$0xff]
      %v3626 = vld [vmem:[%s3526 + $0x318] sm:$0xff]
      %v3627 = vld [vmem:[%s3526 + $0x320] sm:$0xff]
      %v3628 = vld [vmem:[%s3526 + $0x328] sm:$0xff]
      %v3629 = vld [vmem:[%s3526 + $0x330] sm:$0xff]
      %v3630 = vld [vmem:[%s3526 + $0x338] sm:$0xff]
      %v3631 = vld [vmem:[%s3526 + $0x340] sm:$0xff]
      %v3632 = vld [vmem:[%s3526 + $0x348] sm:$0xff]
      %v3633 = vld [vmem:[%s3526 + $0x350] sm:$0xff]
      %v3634 = vld [vmem:[%s3526 + $0x358] sm:$0xff]
      %v3635 = vld [vmem:[%s3526 + $0x360] sm:$0xff]
      %v3636 = vld [vmem:[%s3526 + $0x368] sm:$0xff]
      %v3637 = vld [vmem:[%s3526 + $0x370] sm:$0xff]
      %v3638 = vld [vmem:[%s3526 + $0x378] sm:$0xff]
      %v3639 = vld [vmem:[%s3526 + $0x380] sm:$0xff]
      %v3640 = vld [vmem:[%s3526 + $0x388] sm:$0xff]
      %v3641 = vld [vmem:[%s3526 + $0x390] sm:$0xff]
      %v3642 = vld [vmem:[%s3526 + $0x398] sm:$0xff]
      %v3643 = vld [vmem:[%s3526 + $0x3a0] sm:$0xff]
      %v3644 = vld [vmem:[%s3526 + $0x3a8] sm:$0xff]
      %v3645 = vld [vmem:[%s3526 + $0x3b0] sm:$0xff]
      %v3646 = vld [vmem:[%s3526 + $0x3b8] sm:$0xff]
      %v3647 = vld [vmem:[%s3526 + $0x3c0] sm:$0xff]
      %v3648 = vld [vmem:[%s3526 + $0x3c8] sm:$0xff]
      %v3649 = vld [vmem:[%s3526 + $0x3d0] sm:$0xff]
      %v3650 = vld [vmem:[%s3526 + $0x3d8] sm:$0xff]
      %v3651 = vld [vmem:[%s3526 + $0x3e0] sm:$0xff]
      %v3652 = vld [vmem:[%s3526 + $0x3e8] sm:$0xff]
      %v3653 = vld [vmem:[%s3526 + $0x3f0] sm:$0xff]
      %v3654 = vld [vmem:[%s3526 + $0x3f8] sm:$0xff]
      %v3656 = vsel %vm310, %v3527, 0
      %v3659 = vsel %vm310, %v3528, 0
      %v3662 = vsel %vm310, %v3529, 0
      %v3665 = vsel %vm310, %v3530, 0
      %v3668 = vsel %vm310, %v3531, 0
      %v3671 = vsel %vm310, %v3532, 0
      %v3674 = vsel %vm310, %v3533, 0
      %v3677 = vsel %vm310, %v3534, 0
      %v3680 = vsel %vm310, %v3535, 0
      %v3683 = vsel %vm310, %v3536, 0
      %v3686 = vsel %vm310, %v3537, 0
      %v3689 = vsel %vm310, %v3538, 0
      %v3692 = vsel %vm310, %v3539, 0
      %v3695 = vsel %vm310, %v3540, 0
      %v3698 = vsel %vm310, %v3541, 0
      %v3701 = vsel %vm310, %v3542, 0
      %v3704 = vsel %vm310, %v3543, 0
      %v3707 = vsel %vm310, %v3544, 0
      %v3710 = vsel %vm310, %v3545, 0
      %v3713 = vsel %vm310, %v3546, 0
      %v3716 = vsel %vm310, %v3547, 0
      %v3719 = vsel %vm310, %v3548, 0
      %v3722 = vsel %vm310, %v3549, 0
      %v3725 = vsel %vm310, %v3550, 0
      %v3728 = vsel %vm310, %v3551, 0
      %v3731 = vsel %vm310, %v3552, 0
      %v3734 = vsel %vm310, %v3553, 0
      %v3737 = vsel %vm310, %v3554, 0
      %v3740 = vsel %vm310, %v3555, 0
      %v3743 = vsel %vm310, %v3556, 0
      %v3746 = vsel %vm310, %v3557, 0
      %v3749 = vsel %vm310, %v3558, 0
      %v3752 = vsel %vm310, %v3559, 0
      %v3755 = vsel %vm310, %v3560, 0
      %v3758 = vsel %vm310, %v3561, 0
      %v3761 = vsel %vm310, %v3562, 0
      %v3764 = vsel %vm310, %v3563, 0
      %v3767 = vsel %vm310, %v3564, 0
      %v3770 = vsel %vm310, %v3565, 0
      %v3773 = vsel %vm310, %v3566, 0
      %v3776 = vsel %vm310, %v3567, 0
      %v3779 = vsel %vm310, %v3568, 0
      %v3782 = vsel %vm310, %v3569, 0
      %v3785 = vsel %vm310, %v3570, 0
      %v3788 = vsel %vm310, %v3571, 0
      %v3791 = vsel %vm310, %v3572, 0
      %v3794 = vsel %vm310, %v3573, 0
      %v3797 = vsel %vm310, %v3574, 0
      %v3800 = vsel %vm310, %v3575, 0
      %v3803 = vsel %vm310, %v3576, 0
      %v3806 = vsel %vm310, %v3577, 0
      %v3809 = vsel %vm310, %v3578, 0
      %v3812 = vsel %vm310, %v3579, 0
      %v3815 = vsel %vm310, %v3580, 0
      %v3818 = vsel %vm310, %v3581, 0
      %v3821 = vsel %vm310, %v3582, 0
      %v3824 = vsel %vm310, %v3583, 0
      %v3827 = vsel %vm310, %v3584, 0
      %v3830 = vsel %vm310, %v3585, 0
      %v3833 = vsel %vm310, %v3586, 0
      %v3836 = vsel %vm310, %v3587, 0
      %v3839 = vsel %vm310, %v3588, 0
      %v3842 = vsel %vm310, %v3589, 0
      %v3845 = vsel %vm310, %v3590, 0
      %v3848 = vsel %vm310, %v3591, 0
      %v3851 = vsel %vm310, %v3592, 0
      %v3854 = vsel %vm310, %v3593, 0
      %v3857 = vsel %vm310, %v3594, 0
      %v3860 = vsel %vm310, %v3595, 0
      %v3863 = vsel %vm310, %v3596, 0
      %v3866 = vsel %vm310, %v3597, 0
      %v3869 = vsel %vm310, %v3598, 0
      %v3872 = vsel %vm310, %v3599, 0
      %v3875 = vsel %vm310, %v3600, 0
      %v3878 = vsel %vm310, %v3601, 0
      %v3881 = vsel %vm310, %v3602, 0
      %v3884 = vsel %vm310, %v3603, 0
      %v3887 = vsel %vm310, %v3604, 0
      %v3890 = vsel %vm310, %v3605, 0
      %v3893 = vsel %vm310, %v3606, 0
      %v3896 = vsel %vm310, %v3607, 0
      %v3899 = vsel %vm310, %v3608, 0
      %v3902 = vsel %vm310, %v3609, 0
      %v3905 = vsel %vm310, %v3610, 0
      %v3908 = vsel %vm310, %v3611, 0
      %v3911 = vsel %vm310, %v3612, 0
      %v3914 = vsel %vm310, %v3613, 0
      %v3917 = vsel %vm310, %v3614, 0
      %v3920 = vsel %vm310, %v3615, 0
      %v3923 = vsel %vm310, %v3616, 0
      %v3926 = vsel %vm310, %v3617, 0
      %v3929 = vsel %vm310, %v3618, 0
      %v3932 = vsel %vm310, %v3619, 0
      %v3935 = vsel %vm310, %v3620, 0
      %v3938 = vsel %vm310, %v3621, 0
      %v3941 = vsel %vm310, %v3622, 0
      %v3944 = vsel %vm310, %v3623, 0
      %v3947 = vsel %vm310, %v3624, 0
      %v3950 = vsel %vm310, %v3625, 0
      %v3953 = vsel %vm310, %v3626, 0
      %v3956 = vsel %vm310, %v3627, 0
      %v3959 = vsel %vm310, %v3628, 0
      %v3962 = vsel %vm310, %v3629, 0
      %v3965 = vsel %vm310, %v3630, 0
      %v3968 = vsel %vm310, %v3631, 0
      %v3971 = vsel %vm310, %v3632, 0
      %v3974 = vsel %vm310, %v3633, 0
      %v3977 = vsel %vm310, %v3634, 0
      %v3980 = vsel %vm310, %v3635, 0
      %v3983 = vsel %vm310, %v3636, 0
      %v3986 = vsel %vm310, %v3637, 0
      %v3989 = vsel %vm310, %v3638, 0
      %v3992 = vsel %vm310, %v3639, 0
      %v3995 = vsel %vm310, %v3640, 0
      %v3998 = vsel %vm310, %v3641, 0
      %v4001 = vsel %vm310, %v3642, 0
      %v4004 = vsel %vm310, %v3643, 0
      %v4007 = vsel %vm310, %v3644, 0
      %v4010 = vsel %vm310, %v3645, 0
      %v4013 = vsel %vm310, %v3646, 0
      %v4016 = vsel %vm310, %v3647, 0
      %v4019 = vsel %vm310, %v3648, 0
      %v4022 = vsel %vm310, %v3649, 0
      %v4025 = vsel %vm310, %v3650, 0
      %v4028 = vsel %vm310, %v3651, 0
      %v4031 = vsel %vm310, %v3652, 0
      %v4034 = vsel %vm310, %v3653, 0
      %v4037 = vsel %vm310, %v3654, 0
      %4039 = vmatprep.subr.mxu0 0.0
      %4040 = vmatpush1.msra.mxu0 %v171
      %4041 = vmatprep.subr.mxu0 0.0
      %4042 = vmatpush1.msra.mxu0 %v172
      %4043 = vmatprep.subr.mxu0 0.0
      %4044 = vmatpush1.msra.mxu0 %v173
      %4045 = vmatprep.subr.mxu0 0.0
      %4046 = vmatpush1.msra.mxu0 %v697
      %4047 = vmatprep.subr.mxu0 0.0
      %4048 = vmatpush1.msra.mxu0 0.0
      %4049 = vmatprep.subr.mxu0 0.0
      %4050 = vmatpush1.msra.mxu0 0.0
      %4051 = vmatprep.subr.mxu0 0.0
      %4052 = vmatpush1.msra.mxu0 0.0
      %4053 = vmatprep.subr.mxu0 0.0
      %4054 = vmatpush1.msra.mxu0 0.0
      %4055 = vmatprep.subr.mxu0 0.0
      %4056 = vmatpush1.msra.mxu0 0.0
      %4057 = vmatprep.subr.mxu0 0.0
      %4058 = vmatpush1.msra.mxu0 0.0
      %4059 = vmatprep.subr.mxu0 0.0
      %4060 = vmatpush1.msra.mxu0 0.0
      %4061 = vmatprep.subr.mxu0 0.0
      %4062 = vmatpush1.msra.mxu0 0.0
      %4063 = vmatprep.subr.mxu0 0.0
      %4064 = vmatpush1.msra.mxu0 0.0
      %4065 = vmatprep.subr.mxu0 0.0
      %4066 = vmatpush1.msra.mxu0 0.0
      %4067 = vmatprep.subr.mxu0 0.0
      %4068 = vmatpush1.msra.mxu0 0.0
      %4069 = vmatprep.subr.mxu0 0.0
      %4070 = vmatpush1.msra.mxu0 0.0
      %4071 = vmatprep.subr.mxu0 0.0
      %4072 = vmatpush1.msra.mxu0 0.0
      %4073 = vmatprep.subr.mxu0 0.0
      %4074 = vmatpush1.msra.mxu0 0.0
      %4075 = vmatprep.subr.mxu0 0.0
      %4076 = vmatpush1.msra.mxu0 0.0
      %4077 = vmatprep.subr.mxu0 0.0
      %4078 = vmatpush1.msra.mxu0 0.0
      %4079 = vmatprep.subr.mxu0 0.0
      %4080 = vmatpush1.msra.mxu0 0.0
      %4081 = vmatprep.subr.mxu0 0.0
      %4082 = vmatpush1.msra.mxu0 0.0
      %4083 = vmatprep.subr.mxu0 0.0
      %4084 = vmatpush1.msra.mxu0 0.0
      %4085 = vmatprep.subr.mxu0 0.0
      %4086 = vmatpush1.msra.mxu0 0.0
      %4087 = vmatprep.subr.mxu0 0.0
      %4088 = vmatpush1.msra.mxu0 0.0
      %4089 = vmatprep.subr.mxu0 0.0
      %4090 = vmatpush1.msra.mxu0 0.0
      %4091 = vmatprep.subr.mxu0 0.0
      %4092 = vmatpush1.msra.mxu0 0.0
      %4093 = vmatprep.subr.mxu0 0.0
      %4094 = vmatpush1.msra.mxu0 0.0
      %4095 = vmatprep.subr.mxu0 0.0
      %4096 = vmatpush1.msra.mxu0 0.0
      %4097 = vmatprep.subr.mxu0 0.0
      %4098 = vmatpush1.msra.mxu0 0.0
      %4099 = vmatprep.subr.mxu0 0.0
      %4100 = vmatpush1.msra.mxu0 0.0
      %4101 = vmatprep.subr.mxu0 0.0
      %4102 = vmatpush1.msra.mxu0 0.0
      %4103 = vmatprep.mubr.f32.mxu0 0.0
      %4104 = vmatmul.mubr.f32.gmra.mrb[0].mxu0 %v3656
      %v4105 = vpop.f32.mrb[0].mxu0
      %v4106 = vadd.f32 %v309, %v4105
      %v4107 = vpop.f32.mrb[0].mxu0
      %4108 = vmatprep.mubr.f32.mxu0 0.0
      %4109 = vmatmul.mubr.f32.gmra.mrb[0].mxu0 %v3659
      %v4110 = vpop.f32.mrb[0].mxu0
      %v4111 = vadd.f32 %v309, %v4110
      %v4112 = vpop.f32.mrb[0].mxu0
      %4113 = vmatprep.mubr.f32.mxu0 0.0
      %4114 = vmatmul.mubr.f32.gmra.mrb[0].mxu0 %v3662
      %v4115 = vpop.f32.mrb[0].mxu0
      %v4116 = vadd.f32 %v309, %v4115
      %v4117 = vpop.f32.mrb[0].mxu0
      %4118 = vmatprep.mubr.f32.mxu0 0.0
      %4119 = vmatmul.mubr.f32.gmra.mrb[0].mxu0 %v3665
      %v4120 = vpop.f32.mrb[0].mxu0
      %v4121 = vadd.f32 %v309, %v4120
      %v4122 = vpop.f32.mrb[0].mxu0
      %4123 = vmatprep.mubr.f32.mxu0 0.0
      %4124 = vmatmul.mubr.f32.gmra.mrb[0].mxu0 %v3668
      %v4125 = vpop.f32.mrb[0].mxu0
      %v4126 = vadd.f32 %v309, %v4125
      %v4127 = vpop.f32.mrb[0].mxu0
      %4128 = vmatprep.mubr.f32.mxu0 0.0
      %4129 = vmatmul.mubr.f32.gmra.mrb[0].mxu0 %v3671
      %v4130 = vpop.f32.mrb[0].mxu0
      %v4131 = vadd.f32 %v309, %v4130
      %v4132 = vpop.f32.mrb[0].mxu0
      %4133 = vmatprep.mubr.f32.mxu0 0.0
      %4134 = vmatmul.mubr.f32.gmra.mrb[0].mxu0 %v3674
      %v4135 = vpop.f32.mrb[0].mxu0
      %v4136 = vadd.f32 %v309, %v4135
      %v4137 = vpop.f32.mrb[0].mxu0
      %4138 = vmatprep.mubr.f32.mxu0 0.0
      %4139 = vmatmul.mubr.f32.gmra.mrb[0].mxu0 %v3677
      %v4140 = vpop.f32.mrb[0].mxu0
      %v4141 = vadd.f32 %v309, %v4140
      %v4142 = vpop.f32.mrb[0].mxu0
      %4143 = vmatprep.mubr.f32.mxu0 0.0
      %4144 = vmatmul.mubr.f32.gmra.mrb[0].mxu0 %v3680
      %v4145 = vpop.f32.mrb[0].mxu0
      %v4146 = vadd.f32 %v309, %v4145
      %v4147 = vpop.f32.mrb[0].mxu0
      %4148 = vmatprep.mubr.f32.mxu0 0.0
      %4149 = vmatmul.mubr.f32.gmra.mrb[0].mxu0 %v3683
      %v4150 = vpop.f32.mrb[0].mxu0
      %v4151 = vadd.f32 %v309, %v4150
      %v4152 = vpop.f32.mrb[0].mxu0
      %4153 = vmatprep.mubr.f32.mxu0 0.0
      %4154 = vmatmul.mubr.f32.gmra.mrb[0].mxu0 %v3686
      %v4155 = vpop.f32.mrb[0].mxu0
      %v4156 = vadd.f32 %v309, %v4155
      %v4157 = vpop.f32.mrb[0].mxu0
      %4158 = vmatprep.mubr.f32.mxu0 0.0
      %4159 = vmatmul.mubr.f32.gmra.mrb[0].mxu0 %v3689
      %v4160 = vpop.f32.mrb[0].mxu0
      %v4161 = vadd.f32 %v309, %v4160
      %v4162 = vpop.f32.mrb[0].mxu0
      %4163 = vmatprep.mubr.f32.mxu0 0.0
      %4164 = vmatmul.mubr.f32.gmra.mrb[0].mxu0 %v3692
      %v4165 = vpop.f32.mrb[0].mxu0
      %v4166 = vadd.f32 %v309, %v4165
      %v4167 = vpop.f32.mrb[0].mxu0
      %4168 = vmatprep.mubr.f32.mxu0 0.0
      %4169 = vmatmul.mubr.f32.gmra.mrb[0].mxu0 %v3695
      %v4170 = vpop.f32.mrb[0].mxu0
      %v4171 = vadd.f32 %v309, %v4170
      %v4172 = vpop.f32.mrb[0].mxu0
      %4173 = vmatprep.mubr.f32.mxu0 0.0
      %4174 = vmatmul.mubr.f32.gmra.mrb[0].mxu0 %v3698
      %v4175 = vpop.f32.mrb[0].mxu0
      %v4176 = vadd.f32 %v309, %v4175
      %v4177 = vpop.f32.mrb[0].mxu0
      %4178 = vmatprep.mubr.f32.mxu0 0.0
      %4179 = vmatmul.mubr.f32.gmra.mrb[0].mxu0 %v3701
      %v4180 = vpop.f32.mrb[0].mxu0
      %v4181 = vadd.f32 %v309, %v4180
      %v4182 = vpop.f32.mrb[0].mxu0
      %4183 = vmatprep.mubr.f32.mxu0 0.0
      %4184 = vmatmul.mubr.f32.gmra.mrb[0].mxu0 %v3704
      %v4185 = vpop.f32.mrb[0].mxu0
      %v4186 = vadd.f32 %v309, %v4185
      %v4187 = vpop.f32.mrb[0].mxu0
      %4188 = vmatprep.mubr.f32.mxu0 0.0
      %4189 = vmatmul.mubr.f32.gmra.mrb[0].mxu0 %v3707
      %v4190 = vpop.f32.mrb[0].mxu0
      %v4191 = vadd.f32 %v309, %v4190
      %v4192 = vpop.f32.mrb[0].mxu0
      %4193 = vmatprep.mubr.f32.mxu0 0.0
      %4194 = vmatmul.mubr.f32.gmra.mrb[0].mxu0 %v3710
      %v4195 = vpop.f32.mrb[0].mxu0
      %v4196 = vadd.f32 %v309, %v4195
      %v4197 = vpop.f32.mrb[0].mxu0
      %4198 = vmatprep.mubr.f32.mxu0 0.0
      %4199 = vmatmul.mubr.f32.gmra.mrb[0].mxu0 %v3713
      %v4200 = vpop.f32.mrb[0].mxu0
      %v4201 = vadd.f32 %v309, %v4200
      %v4202 = vpop.f32.mrb[0].mxu0
      %4203 = vmatprep.mubr.f32.mxu0 0.0
      %4204 = vmatmul.mubr.f32.gmra.mrb[0].mxu0 %v3716
      %v4205 = vpop.f32.mrb[0].mxu0
      %v4206 = vadd.f32 %v309, %v4205
      %v4207 = vpop.f32.mrb[0].mxu0
      %4208 = vmatprep.mubr.f32.mxu0 0.0
      %4209 = vmatmul.mubr.f32.gmra.mrb[0].mxu0 %v3719
      %v4210 = vpop.f32.mrb[0].mxu0
      %v4211 = vadd.f32 %v309, %v4210
      %v4212 = vpop.f32.mrb[0].mxu0
      %4213 = vmatprep.mubr.f32.mxu0 0.0
      %4214 = vmatmul.mubr.f32.gmra.mrb[0].mxu0 %v3722
      %v4215 = vpop.f32.mrb[0].mxu0
      %v4216 = vadd.f32 %v309, %v4215
      %v4217 = vpop.f32.mrb[0].mxu0
      %4218 = vmatprep.mubr.f32.mxu0 0.0
      %4219 = vmatmul.mubr.f32.gmra.mrb[0].mxu0 %v3725
      %v4220 = vpop.f32.mrb[0].mxu0
      %v4221 = vadd.f32 %v309, %v4220
      %v4222 = vpop.f32.mrb[0].mxu0
      %4223 = vmatprep.mubr.f32.mxu0 0.0
      %4224 = vmatmul.mubr.f32.gmra.mrb[0].mxu0 %v3728
      %v4225 = vpop.f32.mrb[0].mxu0
      %v4226 = vadd.f32 %v309, %v4225
      %v4227 = vpop.f32.mrb[0].mxu0
      %4228 = vmatprep.mubr.f32.mxu0 0.0
      %4229 = vmatmul.mubr.f32.gmra.mrb[0].mxu0 %v3731
      %v4230 = vpop.f32.mrb[0].mxu0
      %v4231 = vadd.f32 %v309, %v4230
      %v4232 = vpop.f32.mrb[0].mxu0
      %4233 = vmatprep.mubr.f32.mxu0 0.0
      %4234 = vmatmul.mubr.f32.gmra.mrb[0].mxu0 %v3734
      %v4235 = vpop.f32.mrb[0].mxu0
      %v4236 = vadd.f32 %v309, %v4235
      %v4237 = vpop.f32.mrb[0].mxu0
      %4238 = vmatprep.mubr.f32.mxu0 0.0
      %4239 = vmatmul.mubr.f32.gmra.mrb[0].mxu0 %v3737
      %v4240 = vpop.f32.mrb[0].mxu0
      %v4241 = vadd.f32 %v309, %v4240
      %v4242 = vpop.f32.mrb[0].mxu0
      %4243 = vmatprep.mubr.f32.mxu0 0.0
      %4244 = vmatmul.mubr.f32.gmra.mrb[0].mxu0 %v3740
      %v4245 = vpop.f32.mrb[0].mxu0
      %v4246 = vadd.f32 %v309, %v4245
      %v4247 = vpop.f32.mrb[0].mxu0
      %4248 = vmatprep.mubr.f32.mxu0 0.0
      %4249 = vmatmul.mubr.f32.gmra.mrb[0].mxu0 %v3743
      %v4250 = vpop.f32.mrb[0].mxu0
      %v4251 = vadd.f32 %v309, %v4250
      %v4252 = vpop.f32.mrb[0].mxu0
      %4253 = vmatprep.mubr.f32.mxu0 0.0
      %4254 = vmatmul.mubr.f32.gmra.mrb[0].mxu0 %v3746
      %v4255 = vpop.f32.mrb[0].mxu0
      %v4256 = vadd.f32 %v309, %v4255
      %v4257 = vpop.f32.mrb[0].mxu0
      %4258 = vmatprep.mubr.f32.mxu0 0.0
      %4259 = vmatmul.mubr.f32.gmra.mrb[0].mxu0 %v3749
      %v4260 = vpop.f32.mrb[0].mxu0
      %v4261 = vadd.f32 %v309, %v4260
      %v4262 = vpop.f32.mrb[0].mxu0
      %4263 = vmatprep.mubr.f32.mxu0 0.0
      %4264 = vmatmul.mubr.f32.gmra.mrb[0].mxu0 %v3752
      %v4265 = vpop.f32.mrb[0].mxu0
      %v4266 = vadd.f32 %v309, %v4265
      %v4267 = vpop.f32.mrb[0].mxu0
      %4268 = vmatprep.mubr.f32.mxu0 0.0
      %4269 = vmatmul.mubr.f32.gmra.mrb[0].mxu0 %v3755
      %v4270 = vpop.f32.mrb[0].mxu0
      %v4271 = vadd.f32 %v309, %v4270
      %v4272 = vpop.f32.mrb[0].mxu0
      %4273 = vmatprep.mubr.f32.mxu0 0.0
      %4274 = vmatmul.mubr.f32.gmra.mrb[0].mxu0 %v3758
      %v4275 = vpop.f32.mrb[0].mxu0
      %v4276 = vadd.f32 %v309, %v4275
      %v4277 = vpop.f32.mrb[0].mxu0
      %4278 = vmatprep.mubr.f32.mxu0 0.0
      %4279 = vmatmul.mubr.f32.gmra.mrb[0].mxu0 %v3761
      %v4280 = vpop.f32.mrb[0].mxu0
      %v4281 = vadd.f32 %v309, %v4280
      %v4282 = vpop.f32.mrb[0].mxu0
      %4283 = vmatprep.mubr.f32.mxu0 0.0
      %4284 = vmatmul.mubr.f32.gmra.mrb[0].mxu0 %v3764
      %v4285 = vpop.f32.mrb[0].mxu0
      %v4286 = vadd.f32 %v309, %v4285
      %v4287 = vpop.f32.mrb[0].mxu0
      %4288 = vmatprep.mubr.f32.mxu0 0.0
      %4289 = vmatmul.mubr.f32.gmra.mrb[0].mxu0 %v3767
      %v4290 = vpop.f32.mrb[0].mxu0
      %v4291 = vadd.f32 %v309, %v4290
      %v4292 = vpop.f32.mrb[0].mxu0
      %4293 = vmatprep.mubr.f32.mxu0 0.0
      %4294 = vmatmul.mubr.f32.gmra.mrb[0].mxu0 %v3770
      %v4295 = vpop.f32.mrb[0].mxu0
      %v4296 = vadd.f32 %v309, %v4295
      %v4297 = vpop.f32.mrb[0].mxu0
      %4298 = vmatprep.mubr.f32.mxu0 0.0
      %4299 = vmatmul.mubr.f32.gmra.mrb[0].mxu0 %v3773
      %v4300 = vpop.f32.mrb[0].mxu0
      %v4301 = vadd.f32 %v309, %v4300
      %v4302 = vpop.f32.mrb[0].mxu0
      %4303 = vmatprep.mubr.f32.mxu0 0.0
      %4304 = vmatmul.mubr.f32.gmra.mrb[0].mxu0 %v3776
      %v4305 = vpop.f32.mrb[0].mxu0
      %v4306 = vadd.f32 %v309, %v4305
      %v4307 = vpop.f32.mrb[0].mxu0
      %4308 = vmatprep.mubr.f32.mxu0 0.0
      %4309 = vmatmul.mubr.f32.gmra.mrb[0].mxu0 %v3779
      %v4310 = vpop.f32.mrb[0].mxu0
      %v4311 = vadd.f32 %v309, %v4310
      %v4312 = vpop.f32.mrb[0].mxu0
      %4313 = vmatprep.mubr.f32.mxu0 0.0
      %4314 = vmatmul.mubr.f32.gmra.mrb[0].mxu0 %v3782
      %v4315 = vpop.f32.mrb[0].mxu0
      %v4316 = vadd.f32 %v309, %v4315
      %v4317 = vpop.f32.mrb[0].mxu0
      %4318 = vmatprep.mubr.f32.mxu0 0.0
      %4319 = vmatmul.mubr.f32.gmra.mrb[0].mxu0 %v3785
      %v4320 = vpop.f32.mrb[0].mxu0
      %v4321 = vadd.f32 %v309, %v4320
      %v4322 = vpop.f32.mrb[0].mxu0
      %4323 = vmatprep.mubr.f32.mxu0 0.0
      %4324 = vmatmul.mubr.f32.gmra.mrb[0].mxu0 %v3788
      %v4325 = vpop.f32.mrb[0].mxu0
      %v4326 = vadd.f32 %v309, %v4325
      %v4327 = vpop.f32.mrb[0].mxu0
      %4328 = vmatprep.mubr.f32.mxu0 0.0
      %4329 = vmatmul.mubr.f32.gmra.mrb[0].mxu0 %v3791
      %v4330 = vpop.f32.mrb[0].mxu0
      %v4331 = vadd.f32 %v309, %v4330
      %v4332 = vpop.f32.mrb[0].mxu0
      %4333 = vmatprep.mubr.f32.mxu0 0.0
      %4334 = vmatmul.mubr.f32.gmra.mrb[0].mxu0 %v3794
      %v4335 = vpop.f32.mrb[0].mxu0
      %v4336 = vadd.f32 %v309, %v4335
      %v4337 = vpop.f32.mrb[0].mxu0
      %4338 = vmatprep.mubr.f32.mxu0 0.0
      %4339 = vmatmul.mubr.f32.gmra.mrb[0].mxu0 %v3797
      %v4340 = vpop.f32.mrb[0].mxu0
      %v4341 = vadd.f32 %v309, %v4340
      %v4342 = vpop.f32.mrb[0].mxu0
      %4343 = vmatprep.mubr.f32.mxu0 0.0
      %4344 = vmatmul.mubr.f32.gmra.mrb[0].mxu0 %v3800
      %v4345 = vpop.f32.mrb[0].mxu0
      %v4346 = vadd.f32 %v309, %v4345
      %v4347 = vpop.f32.mrb[0].mxu0
      %4348 = vmatprep.mubr.f32.mxu0 0.0
      %4349 = vmatmul.mubr.f32.gmra.mrb[0].mxu0 %v3803
      %v4350 = vpop.f32.mrb[0].mxu0
      %v4351 = vadd.f32 %v309, %v4350
      %v4352 = vpop.f32.mrb[0].mxu0
      %4353 = vmatprep.mubr.f32.mxu0 0.0
      %4354 = vmatmul.mubr.f32.gmra.mrb[0].mxu0 %v3806
      %v4355 = vpop.f32.mrb[0].mxu0
      %v4356 = vadd.f32 %v309, %v4355
      %v4357 = vpop.f32.mrb[0].mxu0
      %4358 = vmatprep.mubr.f32.mxu0 0.0
      %4359 = vmatmul.mubr.f32.gmra.mrb[0].mxu0 %v3809
      %v4360 = vpop.f32.mrb[0].mxu0
      %v4361 = vadd.f32 %v309, %v4360
      %v4362 = vpop.f32.mrb[0].mxu0
      %4363 = vmatprep.mubr.f32.mxu0 0.0
      %4364 = vmatmul.mubr.f32.gmra.mrb[0].mxu0 %v3812
      %v4365 = vpop.f32.mrb[0].mxu0
      %v4366 = vadd.f32 %v309, %v4365
      %v4367 = vpop.f32.mrb[0].mxu0
      %4368 = vmatprep.mubr.f32.mxu0 0.0
      %4369 = vmatmul.mubr.f32.gmra.mrb[0].mxu0 %v3815
      %v4370 = vpop.f32.mrb[0].mxu0
      %v4371 = vadd.f32 %v309, %v4370
      %v4372 = vpop.f32.mrb[0].mxu0
      %4373 = vmatprep.mubr.f32.mxu0 0.0
      %4374 = vmatmul.mubr.f32.gmra.mrb[0].mxu0 %v3818
      %v4375 = vpop.f32.mrb[0].mxu0
      %v4376 = vadd.f32 %v309, %v4375
      %v4377 = vpop.f32.mrb[0].mxu0
      %4378 = vmatprep.mubr.f32.mxu0 0.0
      %4379 = vmatmul.mubr.f32.gmra.mrb[0].mxu0 %v3821
      %v4380 = vpop.f32.mrb[0].mxu0
      %v4381 = vadd.f32 %v309, %v4380
      %v4382 = vpop.f32.mrb[0].mxu0
      %4383 = vmatprep.mubr.f32.mxu0 0.0
      %4384 = vmatmul.mubr.f32.gmra.mrb[0].mxu0 %v3824
      %v4385 = vpop.f32.mrb[0].mxu0
      %v4386 = vadd.f32 %v309, %v4385
      %v4387 = vpop.f32.mrb[0].mxu0
      %4388 = vmatprep.mubr.f32.mxu0 0.0
      %4389 = vmatmul.mubr.f32.gmra.mrb[0].mxu0 %v3827
      %v4390 = vpop.f32.mrb[0].mxu0
      %v4391 = vadd.f32 %v309, %v4390
      %v4392 = vpop.f32.mrb[0].mxu0
      %4393 = vmatprep.mubr.f32.mxu0 0.0
      %4394 = vmatmul.mubr.f32.gmra.mrb[0].mxu0 %v3830
      %v4395 = vpop.f32.mrb[0].mxu0
      %v4396 = vadd.f32 %v309, %v4395
      %v4397 = vpop.f32.mrb[0].mxu0
      %4398 = vmatprep.mubr.f32.mxu0 0.0
      %4399 = vmatmul.mubr.f32.gmra.mrb[0].mxu0 %v3833
      %v4400 = vpop.f32.mrb[0].mxu0
      %v4401 = vadd.f32 %v309, %v4400
      %v4402 = vpop.f32.mrb[0].mxu0
      %4403 = vmatprep.mubr.f32.mxu0 0.0
      %4404 = vmatmul.mubr.f32.gmra.mrb[0].mxu0 %v3836
      %v4405 = vpop.f32.mrb[0].mxu0
      %v4406 = vadd.f32 %v309, %v4405
      %v4407 = vpop.f32.mrb[0].mxu0
      %4408 = vmatprep.mubr.f32.mxu0 0.0
      %4409 = vmatmul.mubr.f32.gmra.mrb[0].mxu0 %v3839
      %v4410 = vpop.f32.mrb[0].mxu0
      %v4411 = vadd.f32 %v309, %v4410
      %v4412 = vpop.f32.mrb[0].mxu0
      %4413 = vmatprep.mubr.f32.mxu0 0.0
      %4414 = vmatmul.mubr.f32.gmra.mrb[0].mxu0 %v3842
      %v4415 = vpop.f32.mrb[0].mxu0
      %v4416 = vadd.f32 %v309, %v4415
      %v4417 = vpop.f32.mrb[0].mxu0
      %4418 = vmatprep.mubr.f32.mxu0 0.0
      %4419 = vmatmul.mubr.f32.gmra.mrb[0].mxu0 %v3845
      %v4420 = vpop.f32.mrb[0].mxu0
      %v4421 = vadd.f32 %v309, %v4420
      %v4422 = vpop.f32.mrb[0].mxu0
      %4423 = vmatprep.mubr.f32.mxu0 0.0
      %4424 = vmatmul.mubr.f32.gmra.mrb[0].mxu0 %v3848
      %v4425 = vpop.f32.mrb[0].mxu0
      %v4426 = vadd.f32 %v309, %v4425
      %v4427 = vpop.f32.mrb[0].mxu0
      %4428 = vmatprep.mubr.f32.mxu0 0.0
      %4429 = vmatmul.mubr.f32.gmra.mrb[0].mxu0 %v3851
      %v4430 = vpop.f32.mrb[0].mxu0
      %v4431 = vadd.f32 %v309, %v4430
      %v4432 = vpop.f32.mrb[0].mxu0
      %4433 = vmatprep.mubr.f32.mxu0 0.0
      %4434 = vmatmul.mubr.f32.gmra.mrb[0].mxu0 %v3854
      %v4435 = vpop.f32.mrb[0].mxu0
      %v4436 = vadd.f32 %v309, %v4435
      %v4437 = vpop.f32.mrb[0].mxu0
      %4438 = vmatprep.mubr.f32.mxu0 0.0
      %4439 = vmatmul.mubr.f32.gmra.mrb[0].mxu0 %v3857
      %v4440 = vpop.f32.mrb[0].mxu0
      %v4441 = vadd.f32 %v309, %v4440
      %v4442 = vpop.f32.mrb[0].mxu0
      %4443 = vmatprep.mubr.f32.mxu0 0.0
      %4444 = vmatmul.mubr.f32.gmra.mrb[0].mxu0 %v3860
      %v4445 = vpop.f32.mrb[0].mxu0
      %v4446 = vadd.f32 %v309, %v4445
      %v4447 = vpop.f32.mrb[0].mxu0
      %4448 = vmatprep.mubr.f32.mxu0 0.0
      %4449 = vmatmul.mubr.f32.gmra.mrb[0].mxu0 %v3863
      %v4450 = vpop.f32.mrb[0].mxu0
      %v4451 = vadd.f32 %v309, %v4450
      %v4452 = vpop.f32.mrb[0].mxu0
      %4453 = vmatprep.mubr.f32.mxu0 0.0
      %4454 = vmatmul.mubr.f32.gmra.mrb[0].mxu0 %v3866
      %v4455 = vpop.f32.mrb[0].mxu0
      %v4456 = vadd.f32 %v309, %v4455
      %v4457 = vpop.f32.mrb[0].mxu0
      %4458 = vmatprep.mubr.f32.mxu0 0.0
      %4459 = vmatmul.mubr.f32.gmra.mrb[0].mxu0 %v3869
      %v4460 = vpop.f32.mrb[0].mxu0
      %v4461 = vadd.f32 %v309, %v4460
      %v4462 = vpop.f32.mrb[0].mxu0
      %4463 = vmatprep.mubr.f32.mxu0 0.0
      %4464 = vmatmul.mubr.f32.gmra.mrb[0].mxu0 %v3872
      %v4465 = vpop.f32.mrb[0].mxu0
      %v4466 = vadd.f32 %v309, %v4465
      %v4467 = vpop.f32.mrb[0].mxu0
      %4468 = vmatprep.mubr.f32.mxu0 0.0
      %4469 = vmatmul.mubr.f32.gmra.mrb[0].mxu0 %v3875
      %v4470 = vpop.f32.mrb[0].mxu0
      %v4471 = vadd.f32 %v309, %v4470
      %v4472 = vpop.f32.mrb[0].mxu0
      %4473 = vmatprep.mubr.f32.mxu0 0.0
      %4474 = vmatmul.mubr.f32.gmra.mrb[0].mxu0 %v3878
      %v4475 = vpop.f32.mrb[0].mxu0
      %v4476 = vadd.f32 %v309, %v4475
      %v4477 = vpop.f32.mrb[0].mxu0
      %4478 = vmatprep.mubr.f32.mxu0 0.0
      %4479 = vmatmul.mubr.f32.gmra.mrb[0].mxu0 %v3881
      %v4480 = vpop.f32.mrb[0].mxu0
      %v4481 = vadd.f32 %v309, %v4480
      %v4482 = vpop.f32.mrb[0].mxu0
      %4483 = vmatprep.mubr.f32.mxu0 0.0
      %4484 = vmatmul.mubr.f32.gmra.mrb[0].mxu0 %v3884
      %v4485 = vpop.f32.mrb[0].mxu0
      %v4486 = vadd.f32 %v309, %v4485
      %v4487 = vpop.f32.mrb[0].mxu0
      %4488 = vmatprep.mubr.f32.mxu0 0.0
      %4489 = vmatmul.mubr.f32.gmra.mrb[0].mxu0 %v3887
      %v4490 = vpop.f32.mrb[0].mxu0
      %v4491 = vadd.f32 %v309, %v4490
      %v4492 = vpop.f32.mrb[0].mxu0
      %4493 = vmatprep.mubr.f32.mxu0 0.0
      %4494 = vmatmul.mubr.f32.gmra.mrb[0].mxu0 %v3890
      %v4495 = vpop.f32.mrb[0].mxu0
      %v4496 = vadd.f32 %v309, %v4495
      %v4497 = vpop.f32.mrb[0].mxu0
      %4498 = vmatprep.mubr.f32.mxu0 0.0
      %4499 = vmatmul.mubr.f32.gmra.mrb[0].mxu0 %v3893
      %v4500 = vpop.f32.mrb[0].mxu0
      %v4501 = vadd.f32 %v309, %v4500
      %v4502 = vpop.f32.mrb[0].mxu0
      %4503 = vmatprep.mubr.f32.mxu0 0.0
      %4504 = vmatmul.mubr.f32.gmra.mrb[0].mxu0 %v3896
      %v4505 = vpop.f32.mrb[0].mxu0
      %v4506 = vadd.f32 %v309, %v4505
      %v4507 = vpop.f32.mrb[0].mxu0
      %4508 = vmatprep.mubr.f32.mxu0 0.0
      %4509 = vmatmul.mubr.f32.gmra.mrb[0].mxu0 %v3899
      %v4510 = vpop.f32.mrb[0].mxu0
      %v4511 = vadd.f32 %v309, %v4510
      %v4512 = vpop.f32.mrb[0].mxu0
      %4513 = vmatprep.mubr.f32.mxu0 0.0
      %4514 = vmatmul.mubr.f32.gmra.mrb[0].mxu0 %v3902
      %v4515 = vpop.f32.mrb[0].mxu0
      %v4516 = vadd.f32 %v309, %v4515
      %v4517 = vpop.f32.mrb[0].mxu0
      %4518 = vmatprep.mubr.f32.mxu0 0.0
      %4519 = vmatmul.mubr.f32.gmra.mrb[0].mxu0 %v3905
      %v4520 = vpop.f32.mrb[0].mxu0
      %v4521 = vadd.f32 %v309, %v4520
      %v4522 = vpop.f32.mrb[0].mxu0
      %4523 = vmatprep.mubr.f32.mxu0 0.0
      %4524 = vmatmul.mubr.f32.gmra.mrb[0].mxu0 %v3908
      %v4525 = vpop.f32.mrb[0].mxu0
      %v4526 = vadd.f32 %v309, %v4525
      %v4527 = vpop.f32.mrb[0].mxu0
      %4528 = vmatprep.mubr.f32.mxu0 0.0
      %4529 = vmatmul.mubr.f32.gmra.mrb[0].mxu0 %v3911
      %v4530 = vpop.f32.mrb[0].mxu0
      %v4531 = vadd.f32 %v309, %v4530
      %v4532 = vpop.f32.mrb[0].mxu0
      %4533 = vmatprep.mubr.f32.mxu0 0.0
      %4534 = vmatmul.mubr.f32.gmra.mrb[0].mxu0 %v3914
      %v4535 = vpop.f32.mrb[0].mxu0
      %v4536 = vadd.f32 %v309, %v4535
      %v4537 = vpop.f32.mrb[0].mxu0
      %4538 = vmatprep.mubr.f32.mxu0 0.0
      %4539 = vmatmul.mubr.f32.gmra.mrb[0].mxu0 %v3917
      %v4540 = vpop.f32.mrb[0].mxu0
      %v4541 = vadd.f32 %v309, %v4540
      %v4542 = vpop.f32.mrb[0].mxu0
      %4543 = vmatprep.mubr.f32.mxu0 0.0
      %4544 = vmatmul.mubr.f32.gmra.mrb[0].mxu0 %v3920
      %v4545 = vpop.f32.mrb[0].mxu0
      %v4546 = vadd.f32 %v309, %v4545
      %v4547 = vpop.f32.mrb[0].mxu0
      %4548 = vmatprep.mubr.f32.mxu0 0.0
      %4549 = vmatmul.mubr.f32.gmra.mrb[0].mxu0 %v3923
      %v4550 = vpop.f32.mrb[0].mxu0
      %v4551 = vadd.f32 %v309, %v4550
      %v4552 = vpop.f32.mrb[0].mxu0
      %4553 = vmatprep.mubr.f32.mxu0 0.0
      %4554 = vmatmul.mubr.f32.gmra.mrb[0].mxu0 %v3926
      %v4555 = vpop.f32.mrb[0].mxu0
      %v4556 = vadd.f32 %v309, %v4555
      %v4557 = vpop.f32.mrb[0].mxu0
      %4558 = vmatprep.mubr.f32.mxu0 0.0
      %4559 = vmatmul.mubr.f32.gmra.mrb[0].mxu0 %v3929
      %v4560 = vpop.f32.mrb[0].mxu0
      %v4561 = vadd.f32 %v309, %v4560
      %v4562 = vpop.f32.mrb[0].mxu0
      %4563 = vmatprep.mubr.f32.mxu0 0.0
      %4564 = vmatmul.mubr.f32.gmra.mrb[0].mxu0 %v3932
      %v4565 = vpop.f32.mrb[0].mxu0
      %v4566 = vadd.f32 %v309, %v4565
      %v4567 = vpop.f32.mrb[0].mxu0
      %4568 = vmatprep.mubr.f32.mxu0 0.0
      %4569 = vmatmul.mubr.f32.gmra.mrb[0].mxu0 %v3935
      %v4570 = vpop.f32.mrb[0].mxu0
      %v4571 = vadd.f32 %v309, %v4570
      %v4572 = vpop.f32.mrb[0].mxu0
      %4573 = vmatprep.mubr.f32.mxu0 0.0
      %4574 = vmatmul.mubr.f32.gmra.mrb[0].mxu0 %v3938
      %v4575 = vpop.f32.mrb[0].mxu0
      %v4576 = vadd.f32 %v309, %v4575
      %v4577 = vpop.f32.mrb[0].mxu0
      %4578 = vmatprep.mubr.f32.mxu0 0.0
      %4579 = vmatmul.mubr.f32.gmra.mrb[0].mxu0 %v3941
      %v4580 = vpop.f32.mrb[0].mxu0
      %v4581 = vadd.f32 %v309, %v4580
      %v4582 = vpop.f32.mrb[0].mxu0
      %4583 = vmatprep.mubr.f32.mxu0 0.0
      %4584 = vmatmul.mubr.f32.gmra.mrb[0].mxu0 %v3944
      %v4585 = vpop.f32.mrb[0].mxu0
      %v4586 = vadd.f32 %v309, %v4585
      %v4587 = vpop.f32.mrb[0].mxu0
      %4588 = vmatprep.mubr.f32.mxu0 0.0
      %4589 = vmatmul.mubr.f32.gmra.mrb[0].mxu0 %v3947
      %v4590 = vpop.f32.mrb[0].mxu0
      %v4591 = vadd.f32 %v309, %v4590
      %v4592 = vpop.f32.mrb[0].mxu0
      %4593 = vmatprep.mubr.f32.mxu0 0.0
      %4594 = vmatmul.mubr.f32.gmra.mrb[0].mxu0 %v3950
      %v4595 = vpop.f32.mrb[0].mxu0
      %v4596 = vadd.f32 %v309, %v4595
      %v4597 = vpop.f32.mrb[0].mxu0
      %4598 = vmatprep.mubr.f32.mxu0 0.0
      %4599 = vmatmul.mubr.f32.gmra.mrb[0].mxu0 %v3953
      %v4600 = vpop.f32.mrb[0].mxu0
      %v4601 = vadd.f32 %v309, %v4600
      %v4602 = vpop.f32.mrb[0].mxu0
      %4603 = vmatprep.mubr.f32.mxu0 0.0
      %4604 = vmatmul.mubr.f32.gmra.mrb[0].mxu0 %v3956
      %v4605 = vpop.f32.mrb[0].mxu0
      %v4606 = vadd.f32 %v309, %v4605
      %v4607 = vpop.f32.mrb[0].mxu0
      %4608 = vmatprep.mubr.f32.mxu0 0.0
      %4609 = vmatmul.mubr.f32.gmra.mrb[0].mxu0 %v3959
      %v4610 = vpop.f32.mrb[0].mxu0
      %v4611 = vadd.f32 %v309, %v4610
      %v4612 = vpop.f32.mrb[0].mxu0
      %4613 = vmatprep.mubr.f32.mxu0 0.0
      %4614 = vmatmul.mubr.f32.gmra.mrb[0].mxu0 %v3962
      %v4615 = vpop.f32.mrb[0].mxu0
      %v4616 = vadd.f32 %v309, %v4615
      %v4617 = vpop.f32.mrb[0].mxu0
      %4618 = vmatprep.mubr.f32.mxu0 0.0
      %4619 = vmatmul.mubr.f32.gmra.mrb[0].mxu0 %v3965
      %v4620 = vpop.f32.mrb[0].mxu0
      %v4621 = vadd.f32 %v309, %v4620
      %v4622 = vpop.f32.mrb[0].mxu0
      %4623 = vmatprep.mubr.f32.mxu0 0.0
      %4624 = vmatmul.mubr.f32.gmra.mrb[0].mxu0 %v3968
      %v4625 = vpop.f32.mrb[0].mxu0
      %v4626 = vadd.f32 %v309, %v4625
      %v4627 = vpop.f32.mrb[0].mxu0
      %4628 = vmatprep.mubr.f32.mxu0 0.0
      %4629 = vmatmul.mubr.f32.gmra.mrb[0].mxu0 %v3971
      %v4630 = vpop.f32.mrb[0].mxu0
      %v4631 = vadd.f32 %v309, %v4630
      %v4632 = vpop.f32.mrb[0].mxu0
      %4633 = vmatprep.mubr.f32.mxu0 0.0
      %4634 = vmatmul.mubr.f32.gmra.mrb[0].mxu0 %v3974
      %v4635 = vpop.f32.mrb[0].mxu0
      %v4636 = vadd.f32 %v309, %v4635
      %v4637 = vpop.f32.mrb[0].mxu0
      %4638 = vmatprep.mubr.f32.mxu0 0.0
      %4639 = vmatmul.mubr.f32.gmra.mrb[0].mxu0 %v3977
      %v4640 = vpop.f32.mrb[0].mxu0
      %v4641 = vadd.f32 %v309, %v4640
      %v4642 = vpop.f32.mrb[0].mxu0
      %4643 = vmatprep.mubr.f32.mxu0 0.0
      %4644 = vmatmul.mubr.f32.gmra.mrb[0].mxu0 %v3980
      %v4645 = vpop.f32.mrb[0].mxu0
      %v4646 = vadd.f32 %v309, %v4645
      %v4647 = vpop.f32.mrb[0].mxu0
      %4648 = vmatprep.mubr.f32.mxu0 0.0
      %4649 = vmatmul.mubr.f32.gmra.mrb[0].mxu0 %v3983
      %v4650 = vpop.f32.mrb[0].mxu0
      %v4651 = vadd.f32 %v309, %v4650
      %v4652 = vpop.f32.mrb[0].mxu0
      %4653 = vmatprep.mubr.f32.mxu0 0.0
      %4654 = vmatmul.mubr.f32.gmra.mrb[0].mxu0 %v3986
      %v4655 = vpop.f32.mrb[0].mxu0
      %v4656 = vadd.f32 %v309, %v4655
      %v4657 = vpop.f32.mrb[0].mxu0
      %4658 = vmatprep.mubr.f32.mxu0 0.0
      %4659 = vmatmul.mubr.f32.gmra.mrb[0].mxu0 %v3989
      %v4660 = vpop.f32.mrb[0].mxu0
      %v4661 = vadd.f32 %v309, %v4660
      %v4662 = vpop.f32.mrb[0].mxu0
      %4663 = vmatprep.mubr.f32.mxu0 0.0
      %4664 = vmatmul.mubr.f32.gmra.mrb[0].mxu0 %v3992
      %v4665 = vpop.f32.mrb[0].mxu0
      %v4666 = vadd.f32 %v309, %v4665
      %v4667 = vpop.f32.mrb[0].mxu0
      %4668 = vmatprep.mubr.f32.mxu0 0.0
      %4669 = vmatmul.mubr.f32.gmra.mrb[0].mxu0 %v3995
      %v4670 = vpop.f32.mrb[0].mxu0
      %v4671 = vadd.f32 %v309, %v4670
      %v4672 = vpop.f32.mrb[0].mxu0
      %4673 = vmatprep.mubr.f32.mxu0 0.0
      %4674 = vmatmul.mubr.f32.gmra.mrb[0].mxu0 %v3998
      %v4675 = vpop.f32.mrb[0].mxu0
      %v4676 = vadd.f32 %v309, %v4675
      %v4677 = vpop.f32.mrb[0].mxu0
      %4678 = vmatprep.mubr.f32.mxu0 0.0
      %4679 = vmatmul.mubr.f32.gmra.mrb[0].mxu0 %v4001
      %v4680 = vpop.f32.mrb[0].mxu0
      %v4681 = vadd.f32 %v309, %v4680
      %v4682 = vpop.f32.mrb[0].mxu0
      %4683 = vmatprep.mubr.f32.mxu0 0.0
      %4684 = vmatmul.mubr.f32.gmra.mrb[0].mxu0 %v4004
      %v4685 = vpop.f32.mrb[0].mxu0
      %v4686 = vadd.f32 %v309, %v4685
      %v4687 = vpop.f32.mrb[0].mxu0
      %4688 = vmatprep.mubr.f32.mxu0 0.0
      %4689 = vmatmul.mubr.f32.gmra.mrb[0].mxu0 %v4007
      %v4690 = vpop.f32.mrb[0].mxu0
      %v4691 = vadd.f32 %v309, %v4690
      %v4692 = vpop.f32.mrb[0].mxu0
      %4693 = vmatprep.mubr.f32.mxu0 0.0
      %4694 = vmatmul.mubr.f32.gmra.mrb[0].mxu0 %v4010
      %v4695 = vpop.f32.mrb[0].mxu0
      %v4696 = vadd.f32 %v309, %v4695
      %v4697 = vpop.f32.mrb[0].mxu0
      %4698 = vmatprep.mubr.f32.mxu0 0.0
      %4699 = vmatmul.mubr.f32.gmra.mrb[0].mxu0 %v4013
      %v4700 = vpop.f32.mrb[0].mxu0
      %v4701 = vadd.f32 %v309, %v4700
      %v4702 = vpop.f32.mrb[0].mxu0
      %4703 = vmatprep.mubr.f32.mxu0 0.0
      %4704 = vmatmul.mubr.f32.gmra.mrb[0].mxu0 %v4016
      %v4705 = vpop.f32.mrb[0].mxu0
      %v4706 = vadd.f32 %v309, %v4705
      %v4707 = vpop.f32.mrb[0].mxu0
      %4708 = vmatprep.mubr.f32.mxu0 0.0
      %4709 = vmatmul.mubr.f32.gmra.mrb[0].mxu0 %v4019
      %v4710 = vpop.f32.mrb[0].mxu0
      %v4711 = vadd.f32 %v309, %v4710
      %v4712 = vpop.f32.mrb[0].mxu0
      %4713 = vmatprep.mubr.f32.mxu0 0.0
      %4714 = vmatmul.mubr.f32.gmra.mrb[0].mxu0 %v4022
      %v4715 = vpop.f32.mrb[0].mxu0
      %v4716 = vadd.f32 %v309, %v4715
      %v4717 = vpop.f32.mrb[0].mxu0
      %4718 = vmatprep.mubr.f32.mxu0 0.0
      %4719 = vmatmul.mubr.f32.gmra.mrb[0].mxu0 %v4025
      %v4720 = vpop.f32.mrb[0].mxu0
      %v4721 = vadd.f32 %v309, %v4720
      %v4722 = vpop.f32.mrb[0].mxu0
      %4723 = vmatprep.mubr.f32.mxu0 0.0
      %4724 = vmatmul.mubr.f32.gmra.mrb[0].mxu0 %v4028
      %v4725 = vpop.f32.mrb[0].mxu0
      %v4726 = vadd.f32 %v309, %v4725
      %v4727 = vpop.f32.mrb[0].mxu0
      %4728 = vmatprep.mubr.f32.mxu0 0.0
      %4729 = vmatmul.mubr.f32.gmra.mrb[0].mxu0 %v4031
      %v4730 = vpop.f32.mrb[0].mxu0
      %v4731 = vadd.f32 %v309, %v4730
      %v4732 = vpop.f32.mrb[0].mxu0
      %4733 = vmatprep.mubr.f32.mxu0 0.0
      %4734 = vmatmul.mubr.f32.gmra.mrb[0].mxu0 %v4034
      %v4735 = vpop.f32.mrb[0].mxu0
      %v4736 = vadd.f32 %v309, %v4735
      %v4737 = vpop.f32.mrb[0].mxu0
      %4738 = vmatprep.mubr.f32.mxu0 0.0
      %4739 = vmatmul.mubr.f32.gmra.mrb[0].mxu0 %v4037
      %v4740 = vpop.f32.mrb[0].mxu0
      %v4741 = vadd.f32 %v309, %v4740
      %v4742 = vpop.f32.mrb[0].mxu0
      %4743 = vdwg.mxu0
      %v4744 = vmax.f32 %v4106, 0.0
      %v4745 = vmax.f32 %v4111, 0.0
      %v4746 = vmax.f32 %v4116, 0.0
      %v4747 = vmax.f32 %v4121, 0.0
      %v4748 = vmax.f32 %v4126, 0.0
      %v4749 = vmax.f32 %v4131, 0.0
      %v4750 = vmax.f32 %v4136, 0.0
      %v4751 = vmax.f32 %v4141, 0.0
      %v4752 = vmax.f32 %v4146, 0.0
      %v4753 = vmax.f32 %v4151, 0.0
      %v4754 = vmax.f32 %v4156, 0.0
      %v4755 = vmax.f32 %v4161, 0.0
      %v4756 = vmax.f32 %v4166, 0.0
      %v4757 = vmax.f32 %v4171, 0.0
      %v4758 = vmax.f32 %v4176, 0.0
      %v4759 = vmax.f32 %v4181, 0.0
      %v4760 = vmax.f32 %v4186, 0.0
      %v4761 = vmax.f32 %v4191, 0.0
      %v4762 = vmax.f32 %v4196, 0.0
      %v4763 = vmax.f32 %v4201, 0.0
      %v4764 = vmax.f32 %v4206, 0.0
      %v4765 = vmax.f32 %v4211, 0.0
      %v4766 = vmax.f32 %v4216, 0.0
      %v4767 = vmax.f32 %v4221, 0.0
      %v4768 = vmax.f32 %v4226, 0.0
      %v4769 = vmax.f32 %v4231, 0.0
      %v4770 = vmax.f32 %v4236, 0.0
      %v4771 = vmax.f32 %v4241, 0.0
      %v4772 = vmax.f32 %v4246, 0.0
      %v4773 = vmax.f32 %v4251, 0.0
      %v4774 = vmax.f32 %v4256, 0.0
      %v4775 = vmax.f32 %v4261, 0.0
      %v4776 = vmax.f32 %v4266, 0.0
      %v4777 = vmax.f32 %v4271, 0.0
      %v4778 = vmax.f32 %v4276, 0.0
      %v4779 = vmax.f32 %v4281, 0.0
      %v4780 = vmax.f32 %v4286, 0.0
      %v4781 = vmax.f32 %v4291, 0.0
      %v4782 = vmax.f32 %v4296, 0.0
      %v4783 = vmax.f32 %v4301, 0.0
      %v4784 = vmax.f32 %v4306, 0.0
      %v4785 = vmax.f32 %v4311, 0.0
      %v4786 = vmax.f32 %v4316, 0.0
      %v4787 = vmax.f32 %v4321, 0.0
      %v4788 = vmax.f32 %v4326, 0.0
      %v4789 = vmax.f32 %v4331, 0.0
      %v4790 = vmax.f32 %v4336, 0.0
      %v4791 = vmax.f32 %v4341, 0.0
      %v4792 = vmax.f32 %v4346, 0.0
      %v4793 = vmax.f32 %v4351, 0.0
      %v4794 = vmax.f32 %v4356, 0.0
      %v4795 = vmax.f32 %v4361, 0.0
      %v4796 = vmax.f32 %v4366, 0.0
      %v4797 = vmax.f32 %v4371, 0.0
      %v4798 = vmax.f32 %v4376, 0.0
      %v4799 = vmax.f32 %v4381, 0.0
      %v4800 = vmax.f32 %v4386, 0.0
      %v4801 = vmax.f32 %v4391, 0.0
      %v4802 = vmax.f32 %v4396, 0.0
      %v4803 = vmax.f32 %v4401, 0.0
      %v4804 = vmax.f32 %v4406, 0.0
      %v4805 = vmax.f32 %v4411, 0.0
      %v4806 = vmax.f32 %v4416, 0.0
      %v4807 = vmax.f32 %v4421, 0.0
      %v4808 = vmax.f32 %v4426, 0.0
      %v4809 = vmax.f32 %v4431, 0.0
      %v4810 = vmax.f32 %v4436, 0.0
      %v4811 = vmax.f32 %v4441, 0.0
      %v4812 = vmax.f32 %v4446, 0.0
      %v4813 = vmax.f32 %v4451, 0.0
      %v4814 = vmax.f32 %v4456, 0.0
      %v4815 = vmax.f32 %v4461, 0.0
      %v4816 = vmax.f32 %v4466, 0.0
      %v4817 = vmax.f32 %v4471, 0.0
      %v4818 = vmax.f32 %v4476, 0.0
      %v4819 = vmax.f32 %v4481, 0.0
      %v4820 = vmax.f32 %v4486, 0.0
      %v4821 = vmax.f32 %v4491, 0.0
      %v4822 = vmax.f32 %v4496, 0.0
      %v4823 = vmax.f32 %v4501, 0.0
      %v4824 = vmax.f32 %v4506, 0.0
      %v4825 = vmax.f32 %v4511, 0.0
      %v4826 = vmax.f32 %v4516, 0.0
      %v4827 = vmax.f32 %v4521, 0.0
      %v4828 = vmax.f32 %v4526, 0.0
      %v4829 = vmax.f32 %v4531, 0.0
      %v4830 = vmax.f32 %v4536, 0.0
      %v4831 = vmax.f32 %v4541, 0.0
      %v4832 = vmax.f32 %v4546, 0.0
      %v4833 = vmax.f32 %v4551, 0.0
      %v4834 = vmax.f32 %v4556, 0.0
      %v4835 = vmax.f32 %v4561, 0.0
      %v4836 = vmax.f32 %v4566, 0.0
      %v4837 = vmax.f32 %v4571, 0.0
      %v4838 = vmax.f32 %v4576, 0.0
      %v4839 = vmax.f32 %v4581, 0.0
      %v4840 = vmax.f32 %v4586, 0.0
      %v4841 = vmax.f32 %v4591, 0.0
      %v4842 = vmax.f32 %v4596, 0.0
      %v4843 = vmax.f32 %v4601, 0.0
      %v4844 = vmax.f32 %v4606, 0.0
      %v4845 = vmax.f32 %v4611, 0.0
      %v4846 = vmax.f32 %v4616, 0.0
      %v4847 = vmax.f32 %v4621, 0.0
      %v4848 = vmax.f32 %v4626, 0.0
      %v4849 = vmax.f32 %v4631, 0.0
      %v4850 = vmax.f32 %v4636, 0.0
      %v4851 = vmax.f32 %v4641, 0.0
      %v4852 = vmax.f32 %v4646, 0.0
      %v4853 = vmax.f32 %v4651, 0.0
      %v4854 = vmax.f32 %v4656, 0.0
      %v4855 = vmax.f32 %v4661, 0.0
      %v4856 = vmax.f32 %v4666, 0.0
      %v4857 = vmax.f32 %v4671, 0.0
      %v4858 = vmax.f32 %v4676, 0.0
      %v4859 = vmax.f32 %v4681, 0.0
      %v4860 = vmax.f32 %v4686, 0.0
      %v4861 = vmax.f32 %v4691, 0.0
      %v4862 = vmax.f32 %v4696, 0.0
      %v4863 = vmax.f32 %v4701, 0.0
      %v4864 = vmax.f32 %v4706, 0.0
      %v4865 = vmax.f32 %v4711, 0.0
      %v4866 = vmax.f32 %v4716, 0.0
      %v4867 = vmax.f32 %v4721, 0.0
      %v4868 = vmax.f32 %v4726, 0.0
      %v4869 = vmax.f32 %v4731, 0.0
      %v4870 = vmax.f32 %v4736, 0.0
      %v4871 = vmax.f32 %v4741, 0.0
      %v4872 = vmul.f32 %v4744, %v1535
      %v4873 = vmul.f32 %v4745, %v1535
      %v4874 = vmul.f32 %v4746, %v1535
      %v4875 = vmul.f32 %v4747, %v1535
      %v4876 = vmul.f32 %v4748, %v1535
      %v4877 = vmul.f32 %v4749, %v1535
      %v4878 = vmul.f32 %v4750, %v1535
      %v4879 = vmul.f32 %v4751, %v1535
      %v4880 = vmul.f32 %v4752, %v1535
      %v4881 = vmul.f32 %v4753, %v1535
      %v4882 = vmul.f32 %v4754, %v1535
      %v4883 = vmul.f32 %v4755, %v1535
      %v4884 = vmul.f32 %v4756, %v1535
      %v4885 = vmul.f32 %v4757, %v1535
      %v4886 = vmul.f32 %v4758, %v1535
      %v4887 = vmul.f32 %v4759, %v1535
      %v4888 = vmul.f32 %v4760, %v1535
      %v4889 = vmul.f32 %v4761, %v1535
      %v4890 = vmul.f32 %v4762, %v1535
      %v4891 = vmul.f32 %v4763, %v1535
      %v4892 = vmul.f32 %v4764, %v1535
      %v4893 = vmul.f32 %v4765, %v1535
      %v4894 = vmul.f32 %v4766, %v1535
      %v4895 = vmul.f32 %v4767, %v1535
      %v4896 = vmul.f32 %v4768, %v1535
      %v4897 = vmul.f32 %v4769, %v1535
      %v4898 = vmul.f32 %v4770, %v1535
      %v4899 = vmul.f32 %v4771, %v1535
      %v4900 = vmul.f32 %v4772, %v1535
      %v4901 = vmul.f32 %v4773, %v1535
      %v4902 = vmul.f32 %v4774, %v1535
      %v4903 = vmul.f32 %v4775, %v1535
      %v4904 = vmul.f32 %v4776, %v1535
      %v4905 = vmul.f32 %v4777, %v1535
      %v4906 = vmul.f32 %v4778, %v1535
      %v4907 = vmul.f32 %v4779, %v1535
      %v4908 = vmul.f32 %v4780, %v1535
      %v4909 = vmul.f32 %v4781, %v1535
      %v4910 = vmul.f32 %v4782, %v1535
      %v4911 = vmul.f32 %v4783, %v1535
      %v4912 = vmul.f32 %v4784, %v1535
      %v4913 = vmul.f32 %v4785, %v1535
      %v4914 = vmul.f32 %v4786, %v1535
      %v4915 = vmul.f32 %v4787, %v1535
      %v4916 = vmul.f32 %v4788, %v1535
      %v4917 = vmul.f32 %v4789, %v1535
      %v4918 = vmul.f32 %v4790, %v1535
      %v4919 = vmul.f32 %v4791, %v1535
      %v4920 = vmul.f32 %v4792, %v1535
      %v4921 = vmul.f32 %v4793, %v1535
      %v4922 = vmul.f32 %v4794, %v1535
      %v4923 = vmul.f32 %v4795, %v1535
      %v4924 = vmul.f32 %v4796, %v1535
      %v4925 = vmul.f32 %v4797, %v1535
      %v4926 = vmul.f32 %v4798, %v1535
      %v4927 = vmul.f32 %v4799, %v1535
      %v4928 = vmul.f32 %v4800, %v1535
      %v4929 = vmul.f32 %v4801, %v1535
      %v4930 = vmul.f32 %v4802, %v1535
      %v4931 = vmul.f32 %v4803, %v1535
      %v4932 = vmul.f32 %v4804, %v1535
      %v4933 = vmul.f32 %v4805, %v1535
      %v4934 = vmul.f32 %v4806, %v1535
      %v4935 = vmul.f32 %v4807, %v1535
      %v4936 = vmul.f32 %v4808, %v1535
      %v4937 = vmul.f32 %v4809, %v1535
      %v4938 = vmul.f32 %v4810, %v1535
      %v4939 = vmul.f32 %v4811, %v1535
      %v4940 = vmul.f32 %v4812, %v1535
      %v4941 = vmul.f32 %v4813, %v1535
      %v4942 = vmul.f32 %v4814, %v1535
      %v4943 = vmul.f32 %v4815, %v1535
      %v4944 = vmul.f32 %v4816, %v1535
      %v4945 = vmul.f32 %v4817, %v1535
      %v4946 = vmul.f32 %v4818, %v1535
      %v4947 = vmul.f32 %v4819, %v1535
      %v4948 = vmul.f32 %v4820, %v1535
      %v4949 = vmul.f32 %v4821, %v1535
      %v4950 = vmul.f32 %v4822, %v1535
      %v4951 = vmul.f32 %v4823, %v1535
      %v4952 = vmul.f32 %v4824, %v1535
      %v4953 = vmul.f32 %v4825, %v1535
      %v4954 = vmul.f32 %v4826, %v1535
      %v4955 = vmul.f32 %v4827, %v1535
      %v4956 = vmul.f32 %v4828, %v1535
      %v4957 = vmul.f32 %v4829, %v1535
      %v4958 = vmul.f32 %v4830, %v1535
      %v4959 = vmul.f32 %v4831, %v1535
      %v4960 = vmul.f32 %v4832, %v1535
      %v4961 = vmul.f32 %v4833, %v1535
      %v4962 = vmul.f32 %v4834, %v1535
      %v4963 = vmul.f32 %v4835, %v1535
      %v4964 = vmul.f32 %v4836, %v1535
      %v4965 = vmul.f32 %v4837, %v1535
      %v4966 = vmul.f32 %v4838, %v1535
      %v4967 = vmul.f32 %v4839, %v1535
      %v4968 = vmul.f32 %v4840, %v1535
      %v4969 = vmul.f32 %v4841, %v1535
      %v4970 = vmul.f32 %v4842, %v1535
      %v4971 = vmul.f32 %v4843, %v1535
      %v4972 = vmul.f32 %v4844, %v1535
      %v4973 = vmul.f32 %v4845, %v1535
      %v4974 = vmul.f32 %v4846, %v1535
      %v4975 = vmul.f32 %v4847, %v1535
      %v4976 = vmul.f32 %v4848, %v1535
      %v4977 = vmul.f32 %v4849, %v1535
      %v4978 = vmul.f32 %v4850, %v1535
      %v4979 = vmul.f32 %v4851, %v1535
      %v4980 = vmul.f32 %v4852, %v1535
      %v4981 = vmul.f32 %v4853, %v1535
      %v4982 = vmul.f32 %v4854, %v1535
      %v4983 = vmul.f32 %v4855, %v1535
      %v4984 = vmul.f32 %v4856, %v1535
      %v4985 = vmul.f32 %v4857, %v1535
      %v4986 = vmul.f32 %v4858, %v1535
      %v4987 = vmul.f32 %v4859, %v1535
      %v4988 = vmul.f32 %v4860, %v1535
      %v4989 = vmul.f32 %v4861, %v1535
      %v4990 = vmul.f32 %v4862, %v1535
      %v4991 = vmul.f32 %v4863, %v1535
      %v4992 = vmul.f32 %v4864, %v1535
      %v4993 = vmul.f32 %v4865, %v1535
      %v4994 = vmul.f32 %v4866, %v1535
      %v4995 = vmul.f32 %v4867, %v1535
      %v4996 = vmul.f32 %v4868, %v1535
      %v4997 = vmul.f32 %v4869, %v1535
      %v4998 = vmul.f32 %v4870, %v1535
      %v4999 = vmul.f32 %v4871, %v1535
      %v5000 = vadd.f32 %v4872, %v1667
      %v5001 = vadd.f32 %v4873, %v1667
      %v5002 = vadd.f32 %v4874, %v1667
      %v5003 = vadd.f32 %v4875, %v1667
      %v5004 = vadd.f32 %v4876, %v1667
      %v5005 = vadd.f32 %v4877, %v1667
      %v5006 = vadd.f32 %v4878, %v1667
      %v5007 = vadd.f32 %v4879, %v1667
      %v5008 = vadd.f32 %v4880, %v1667
      %v5009 = vadd.f32 %v4881, %v1667
      %v5010 = vadd.f32 %v4882, %v1667
      %v5011 = vadd.f32 %v4883, %v1667
      %v5012 = vadd.f32 %v4884, %v1667
      %v5013 = vadd.f32 %v4885, %v1667
      %v5014 = vadd.f32 %v4886, %v1667
      %v5015 = vadd.f32 %v4887, %v1667
      %v5016 = vadd.f32 %v4888, %v1667
      %v5017 = vadd.f32 %v4889, %v1667
      %v5018 = vadd.f32 %v4890, %v1667
      %v5019 = vadd.f32 %v4891, %v1667
      %v5020 = vadd.f32 %v4892, %v1667
      %v5021 = vadd.f32 %v4893, %v1667
      %v5022 = vadd.f32 %v4894, %v1667
      %v5023 = vadd.f32 %v4895, %v1667
      %v5024 = vadd.f32 %v4896, %v1667
      %v5025 = vadd.f32 %v4897, %v1667
      %v5026 = vadd.f32 %v4898, %v1667
      %v5027 = vadd.f32 %v4899, %v1667
      %v5028 = vadd.f32 %v4900, %v1667
      %v5029 = vadd.f32 %v4901, %v1667
      %v5030 = vadd.f32 %v4902, %v1667
      %v5031 = vadd.f32 %v4903, %v1667
      %v5032 = vadd.f32 %v4904, %v1667
      %v5033 = vadd.f32 %v4905, %v1667
      %v5034 = vadd.f32 %v4906, %v1667
      %v5035 = vadd.f32 %v4907, %v1667
      %v5036 = vadd.f32 %v4908, %v1667
      %v5037 = vadd.f32 %v4909, %v1667
      %v5038 = vadd.f32 %v4910, %v1667
      %v5039 = vadd.f32 %v4911, %v1667
      %v5040 = vadd.f32 %v4912, %v1667
      %v5041 = vadd.f32 %v4913, %v1667
      %v5042 = vadd.f32 %v4914, %v1667
      %v5043 = vadd.f32 %v4915, %v1667
      %v5044 = vadd.f32 %v4916, %v1667
      %v5045 = vadd.f32 %v4917, %v1667
      %v5046 = vadd.f32 %v4918, %v1667
      %v5047 = vadd.f32 %v4919, %v1667
      %v5048 = vadd.f32 %v4920, %v1667
      %v5049 = vadd.f32 %v4921, %v1667
      %v5050 = vadd.f32 %v4922, %v1667
      %v5051 = vadd.f32 %v4923, %v1667
      %v5052 = vadd.f32 %v4924, %v1667
      %v5053 = vadd.f32 %v4925, %v1667
      %v5054 = vadd.f32 %v4926, %v1667
      %v5055 = vadd.f32 %v4927, %v1667
      %v5056 = vadd.f32 %v4928, %v1667
      %v5057 = vadd.f32 %v4929, %v1667
      %v5058 = vadd.f32 %v4930, %v1667
      %v5059 = vadd.f32 %v4931, %v1667
      %v5060 = vadd.f32 %v4932, %v1667
      %v5061 = vadd.f32 %v4933, %v1667
      %v5062 = vadd.f32 %v4934, %v1667
      %v5063 = vadd.f32 %v4935, %v1667
      %v5064 = vadd.f32 %v4936, %v1667
      %v5065 = vadd.f32 %v4937, %v1667
      %v5066 = vadd.f32 %v4938, %v1667
      %v5067 = vadd.f32 %v4939, %v1667
      %v5068 = vadd.f32 %v4940, %v1667
      %v5069 = vadd.f32 %v4941, %v1667
      %v5070 = vadd.f32 %v4942, %v1667
      %v5071 = vadd.f32 %v4943, %v1667
      %v5072 = vadd.f32 %v4944, %v1667
      %v5073 = vadd.f32 %v4945, %v1667
      %v5074 = vadd.f32 %v4946, %v1667
      %v5075 = vadd.f32 %v4947, %v1667
      %v5076 = vadd.f32 %v4948, %v1667
      %v5077 = vadd.f32 %v4949, %v1667
      %v5078 = vadd.f32 %v4950, %v1667
      %v5079 = vadd.f32 %v4951, %v1667
      %v5080 = vadd.f32 %v4952, %v1667
      %v5081 = vadd.f32 %v4953, %v1667
      %v5082 = vadd.f32 %v4954, %v1667
      %v5083 = vadd.f32 %v4955, %v1667
      %v5084 = vadd.f32 %v4956, %v1667
      %v5085 = vadd.f32 %v4957, %v1667
      %v5086 = vadd.f32 %v4958, %v1667
      %v5087 = vadd.f32 %v4959, %v1667
      %v5088 = vadd.f32 %v4960, %v1667
      %v5089 = vadd.f32 %v4961, %v1667
      %v5090 = vadd.f32 %v4962, %v1667
      %v5091 = vadd.f32 %v4963, %v1667
      %v5092 = vadd.f32 %v4964, %v1667
      %v5093 = vadd.f32 %v4965, %v1667
      %v5094 = vadd.f32 %v4966, %v1667
      %v5095 = vadd.f32 %v4967, %v1667
      %v5096 = vadd.f32 %v4968, %v1667
      %v5097 = vadd.f32 %v4969, %v1667
      %v5098 = vadd.f32 %v4970, %v1667
      %v5099 = vadd.f32 %v4971, %v1667
      %v5100 = vadd.f32 %v4972, %v1667
      %v5101 = vadd.f32 %v4973, %v1667
      %v5102 = vadd.f32 %v4974, %v1667
      %v5103 = vadd.f32 %v4975, %v1667
      %v5104 = vadd.f32 %v4976, %v1667
      %v5105 = vadd.f32 %v4977, %v1667
      %v5106 = vadd.f32 %v4978, %v1667
      %v5107 = vadd.f32 %v4979, %v1667
      %v5108 = vadd.f32 %v4980, %v1667
      %v5109 = vadd.f32 %v4981, %v1667
      %v5110 = vadd.f32 %v4982, %v1667
      %v5111 = vadd.f32 %v4983, %v1667
      %v5112 = vadd.f32 %v4984, %v1667
      %v5113 = vadd.f32 %v4985, %v1667
      %v5114 = vadd.f32 %v4986, %v1667
      %v5115 = vadd.f32 %v4987, %v1667
      %v5116 = vadd.f32 %v4988, %v1667
      %v5117 = vadd.f32 %v4989, %v1667
      %v5118 = vadd.f32 %v4990, %v1667
      %v5119 = vadd.f32 %v4991, %v1667
      %v5120 = vadd.f32 %v4992, %v1667
      %v5121 = vadd.f32 %v4993, %v1667
      %v5122 = vadd.f32 %v4994, %v1667
      %v5123 = vadd.f32 %v4995, %v1667
      %v5124 = vadd.f32 %v4996, %v1667
      %v5125 = vadd.f32 %v4997, %v1667
      %v5126 = vadd.f32 %v4998, %v1667
      %v5127 = vadd.f32 %v4999, %v1667
      %v5128 = vmax.f32 %v3398, %v5000
      %v5129 = vmax.f32 %v3399, %v5001
      %v5130 = vmax.f32 %v3400, %v5002
      %v5131 = vmax.f32 %v3401, %v5003
      %v5132 = vmax.f32 %v3402, %v5004
      %v5133 = vmax.f32 %v3403, %v5005
      %v5134 = vmax.f32 %v3404, %v5006
      %v5135 = vmax.f32 %v3405, %v5007
      %v5136 = vmax.f32 %v3406, %v5008
      %v5137 = vmax.f32 %v3407, %v5009
      %v5138 = vmax.f32 %v3408, %v5010
      %v5139 = vmax.f32 %v3409, %v5011
      %v5140 = vmax.f32 %v3410, %v5012
      %v5141 = vmax.f32 %v3411, %v5013
      %v5142 = vmax.f32 %v3412, %v5014
      %v5143 = vmax.f32 %v3413, %v5015
      %v5144 = vmax.f32 %v3414, %v5016
      %v5145 = vmax.f32 %v3415, %v5017
      %v5146 = vmax.f32 %v3416, %v5018
      %v5147 = vmax.f32 %v3417, %v5019
      %v5148 = vmax.f32 %v3418, %v5020
      %v5149 = vmax.f32 %v3419, %v5021
      %v5150 = vmax.f32 %v3420, %v5022
      %v5151 = vmax.f32 %v3421, %v5023
      %v5152 = vmax.f32 %v3422, %v5024
      %v5153 = vmax.f32 %v3423, %v5025
      %v5154 = vmax.f32 %v3424, %v5026
      %v5155 = vmax.f32 %v3425, %v5027
      %v5156 = vmax.f32 %v3426, %v5028
      %v5157 = vmax.f32 %v3427, %v5029
      %v5158 = vmax.f32 %v3428, %v5030
      %v5159 = vmax.f32 %v3429, %v5031
      %v5160 = vmax.f32 %v3430, %v5032
      %v5161 = vmax.f32 %v3431, %v5033
      %v5162 = vmax.f32 %v3432, %v5034
      %v5163 = vmax.f32 %v3433, %v5035
      %v5164 = vmax.f32 %v3434, %v5036
      %v5165 = vmax.f32 %v3435, %v5037
      %v5166 = vmax.f32 %v3436, %v5038
      %v5167 = vmax.f32 %v3437, %v5039
      %v5168 = vmax.f32 %v3438, %v5040
      %v5169 = vmax.f32 %v3439, %v5041
      %v5170 = vmax.f32 %v3440, %v5042
      %v5171 = vmax.f32 %v3441, %v5043
      %v5172 = vmax.f32 %v3442, %v5044
      %v5173 = vmax.f32 %v3443, %v5045
      %v5174 = vmax.f32 %v3444, %v5046
      %v5175 = vmax.f32 %v3445, %v5047
      %v5176 = vmax.f32 %v3446, %v5048
      %v5177 = vmax.f32 %v3447, %v5049
      %v5178 = vmax.f32 %v3448, %v5050
      %v5179 = vmax.f32 %v3449, %v5051
      %v5180 = vmax.f32 %v3450, %v5052
      %v5181 = vmax.f32 %v3451, %v5053
      %v5182 = vmax.f32 %v3452, %v5054
      %v5183 = vmax.f32 %v3453, %v5055
      %v5184 = vmax.f32 %v3454, %v5056
      %v5185 = vmax.f32 %v3455, %v5057
      %v5186 = vmax.f32 %v3456, %v5058
      %v5187 = vmax.f32 %v3457, %v5059
      %v5188 = vmax.f32 %v3458, %v5060
      %v5189 = vmax.f32 %v3459, %v5061
      %v5190 = vmax.f32 %v3460, %v5062
      %v5191 = vmax.f32 %v3461, %v5063
      %v5192 = vmax.f32 %v3462, %v5064
      %v5193 = vmax.f32 %v3463, %v5065
      %v5194 = vmax.f32 %v3464, %v5066
      %v5195 = vmax.f32 %v3465, %v5067
      %v5196 = vmax.f32 %v3466, %v5068
      %v5197 = vmax.f32 %v3467, %v5069
      %v5198 = vmax.f32 %v3468, %v5070
      %v5199 = vmax.f32 %v3469, %v5071
      %v5200 = vmax.f32 %v3470, %v5072
      %v5201 = vmax.f32 %v3471, %v5073
      %v5202 = vmax.f32 %v3472, %v5074
      %v5203 = vmax.f32 %v3473, %v5075
      %v5204 = vmax.f32 %v3474, %v5076
      %v5205 = vmax.f32 %v3475, %v5077
      %v5206 = vmax.f32 %v3476, %v5078
      %v5207 = vmax.f32 %v3477, %v5079
      %v5208 = vmax.f32 %v3478, %v5080
      %v5209 = vmax.f32 %v3479, %v5081
      %v5210 = vmax.f32 %v3480, %v5082
      %v5211 = vmax.f32 %v3481, %v5083
      %v5212 = vmax.f32 %v3482, %v5084
      %v5213 = vmax.f32 %v3483, %v5085
      %v5214 = vmax.f32 %v3484, %v5086
      %v5215 = vmax.f32 %v3485, %v5087
      %v5216 = vmax.f32 %v3486, %v5088
      %v5217 = vmax.f32 %v3487, %v5089
      %v5218 = vmax.f32 %v3488, %v5090
      %v5219 = vmax.f32 %v3489, %v5091
      %v5220 = vmax.f32 %v3490, %v5092
      %v5221 = vmax.f32 %v3491, %v5093
      %v5222 = vmax.f32 %v3492, %v5094
      %v5223 = vmax.f32 %v3493, %v5095
      %v5224 = vmax.f32 %v3494, %v5096
      %v5225 = vmax.f32 %v3495, %v5097
      %v5226 = vmax.f32 %v3496, %v5098
      %v5227 = vmax.f32 %v3497, %v5099
      %v5228 = vmax.f32 %v3498, %v5100
      %v5229 = vmax.f32 %v3499, %v5101
      %v5230 = vmax.f32 %v3500, %v5102
      %v5231 = vmax.f32 %v3501, %v5103
      %v5232 = vmax.f32 %v3502, %v5104
      %v5233 = vmax.f32 %v3503, %v5105
      %v5234 = vmax.f32 %v3504, %v5106
      %v5235 = vmax.f32 %v3505, %v5107
      %v5236 = vmax.f32 %v3506, %v5108
      %v5237 = vmax.f32 %v3507, %v5109
      %v5238 = vmax.f32 %v3508, %v5110
      %v5239 = vmax.f32 %v3509, %v5111
      %v5240 = vmax.f32 %v3510, %v5112
      %v5241 = vmax.f32 %v3511, %v5113
      %v5242 = vmax.f32 %v3512, %v5114
      %v5243 = vmax.f32 %v3513, %v5115
      %v5244 = vmax.f32 %v3514, %v5116
      %v5245 = vmax.f32 %v3515, %v5117
      %v5246 = vmax.f32 %v3516, %v5118
      %v5247 = vmax.f32 %v3517, %v5119
      %v5248 = vmax.f32 %v3518, %v5120
      %v5249 = vmax.f32 %v3519, %v5121
      %v5250 = vmax.f32 %v3520, %v5122
      %v5251 = vmax.f32 %v3521, %v5123
      %v5252 = vmax.f32 %v3522, %v5124
      %v5253 = vmax.f32 %v3523, %v5125
      %v5254 = vmax.f32 %v3524, %v5126
      %v5255 = vmax.f32 %v3525, %v5127
      %s5256 = scalar_lea.vmem %s165, 3072
      %v5257 = vld [vmem:[%s5256] sm:$0xff]
      %v5258 = vld [vmem:[%s5256 + $0x8] sm:$0xff]
      %v5259 = vld [vmem:[%s5256 + $0x10] sm:$0xff]
      %v5260 = vld [vmem:[%s5256 + $0x18] sm:$0xff]
      %v5261 = vld [vmem:[%s5256 + $0x20] sm:$0xff]
      %v5262 = vld [vmem:[%s5256 + $0x28] sm:$0xff]
      %v5263 = vld [vmem:[%s5256 + $0x30] sm:$0xff]
      %v5264 = vld [vmem:[%s5256 + $0x38] sm:$0xff]
      %v5265 = vld [vmem:[%s5256 + $0x40] sm:$0xff]
      %v5266 = vld [vmem:[%s5256 + $0x48] sm:$0xff]
      %v5267 = vld [vmem:[%s5256 + $0x50] sm:$0xff]
      %v5268 = vld [vmem:[%s5256 + $0x58] sm:$0xff]
      %v5269 = vld [vmem:[%s5256 + $0x60] sm:$0xff]
      %v5270 = vld [vmem:[%s5256 + $0x68] sm:$0xff]
      %v5271 = vld [vmem:[%s5256 + $0x70] sm:$0xff]
      %v5272 = vld [vmem:[%s5256 + $0x78] sm:$0xff]
      %v5273 = vld [vmem:[%s5256 + $0x80] sm:$0xff]
      %v5274 = vld [vmem:[%s5256 + $0x88] sm:$0xff]
      %v5275 = vld [vmem:[%s5256 + $0x90] sm:$0xff]
      %v5276 = vld [vmem:[%s5256 + $0x98] sm:$0xff]
      %v5277 = vld [vmem:[%s5256 + $0xa0] sm:$0xff]
      %v5278 = vld [vmem:[%s5256 + $0xa8] sm:$0xff]
      %v5279 = vld [vmem:[%s5256 + $0xb0] sm:$0xff]
      %v5280 = vld [vmem:[%s5256 + $0xb8] sm:$0xff]
      %v5281 = vld [vmem:[%s5256 + $0xc0] sm:$0xff]
      %v5282 = vld [vmem:[%s5256 + $0xc8] sm:$0xff]
      %v5283 = vld [vmem:[%s5256 + $0xd0] sm:$0xff]
      %v5284 = vld [vmem:[%s5256 + $0xd8] sm:$0xff]
      %v5285 = vld [vmem:[%s5256 + $0xe0] sm:$0xff]
      %v5286 = vld [vmem:[%s5256 + $0xe8] sm:$0xff]
      %v5287 = vld [vmem:[%s5256 + $0xf0] sm:$0xff]
      %v5288 = vld [vmem:[%s5256 + $0xf8] sm:$0xff]
      %v5289 = vld [vmem:[%s5256 + $0x100] sm:$0xff]
      %v5290 = vld [vmem:[%s5256 + $0x108] sm:$0xff]
      %v5291 = vld [vmem:[%s5256 + $0x110] sm:$0xff]
      %v5292 = vld [vmem:[%s5256 + $0x118] sm:$0xff]
      %v5293 = vld [vmem:[%s5256 + $0x120] sm:$0xff]
      %v5294 = vld [vmem:[%s5256 + $0x128] sm:$0xff]
      %v5295 = vld [vmem:[%s5256 + $0x130] sm:$0xff]
      %v5296 = vld [vmem:[%s5256 + $0x138] sm:$0xff]
      %v5297 = vld [vmem:[%s5256 + $0x140] sm:$0xff]
      %v5298 = vld [vmem:[%s5256 + $0x148] sm:$0xff]
      %v5299 = vld [vmem:[%s5256 + $0x150] sm:$0xff]
      %v5300 = vld [vmem:[%s5256 + $0x158] sm:$0xff]
      %v5301 = vld [vmem:[%s5256 + $0x160] sm:$0xff]
      %v5302 = vld [vmem:[%s5256 + $0x168] sm:$0xff]
      %v5303 = vld [vmem:[%s5256 + $0x170] sm:$0xff]
      %v5304 = vld [vmem:[%s5256 + $0x178] sm:$0xff]
      %v5305 = vld [vmem:[%s5256 + $0x180] sm:$0xff]
      %v5306 = vld [vmem:[%s5256 + $0x188] sm:$0xff]
      %v5307 = vld [vmem:[%s5256 + $0x190] sm:$0xff]
      %v5308 = vld [vmem:[%s5256 + $0x198] sm:$0xff]
      %v5309 = vld [vmem:[%s5256 + $0x1a0] sm:$0xff]
      %v5310 = vld [vmem:[%s5256 + $0x1a8] sm:$0xff]
      %v5311 = vld [vmem:[%s5256 + $0x1b0] sm:$0xff]
      %v5312 = vld [vmem:[%s5256 + $0x1b8] sm:$0xff]
      %v5313 = vld [vmem:[%s5256 + $0x1c0] sm:$0xff]
      %v5314 = vld [vmem:[%s5256 + $0x1c8] sm:$0xff]
      %v5315 = vld [vmem:[%s5256 + $0x1d0] sm:$0xff]
      %v5316 = vld [vmem:[%s5256 + $0x1d8] sm:$0xff]
      %v5317 = vld [vmem:[%s5256 + $0x1e0] sm:$0xff]
      %v5318 = vld [vmem:[%s5256 + $0x1e8] sm:$0xff]
      %v5319 = vld [vmem:[%s5256 + $0x1f0] sm:$0xff]
      %v5320 = vld [vmem:[%s5256 + $0x1f8] sm:$0xff]
      %v5321 = vld [vmem:[%s5256 + $0x200] sm:$0xff]
      %v5322 = vld [vmem:[%s5256 + $0x208] sm:$0xff]
      %v5323 = vld [vmem:[%s5256 + $0x210] sm:$0xff]
      %v5324 = vld [vmem:[%s5256 + $0x218] sm:$0xff]
      %v5325 = vld [vmem:[%s5256 + $0x220] sm:$0xff]
      %v5326 = vld [vmem:[%s5256 + $0x228] sm:$0xff]
      %v5327 = vld [vmem:[%s5256 + $0x230] sm:$0xff]
      %v5328 = vld [vmem:[%s5256 + $0x238] sm:$0xff]
      %v5329 = vld [vmem:[%s5256 + $0x240] sm:$0xff]
      %v5330 = vld [vmem:[%s5256 + $0x248] sm:$0xff]
      %v5331 = vld [vmem:[%s5256 + $0x250] sm:$0xff]
      %v5332 = vld [vmem:[%s5256 + $0x258] sm:$0xff]
      %v5333 = vld [vmem:[%s5256 + $0x260] sm:$0xff]
      %v5334 = vld [vmem:[%s5256 + $0x268] sm:$0xff]
      %v5335 = vld [vmem:[%s5256 + $0x270] sm:$0xff]
      %v5336 = vld [vmem:[%s5256 + $0x278] sm:$0xff]
      %v5337 = vld [vmem:[%s5256 + $0x280] sm:$0xff]
      %v5338 = vld [vmem:[%s5256 + $0x288] sm:$0xff]
      %v5339 = vld [vmem:[%s5256 + $0x290] sm:$0xff]
      %v5340 = vld [vmem:[%s5256 + $0x298] sm:$0xff]
      %v5341 = vld [vmem:[%s5256 + $0x2a0] sm:$0xff]
      %v5342 = vld [vmem:[%s5256 + $0x2a8] sm:$0xff]
      %v5343 = vld [vmem:[%s5256 + $0x2b0] sm:$0xff]
      %v5344 = vld [vmem:[%s5256 + $0x2b8] sm:$0xff]
      %v5345 = vld [vmem:[%s5256 + $0x2c0] sm:$0xff]
      %v5346 = vld [vmem:[%s5256 + $0x2c8] sm:$0xff]
      %v5347 = vld [vmem:[%s5256 + $0x2d0] sm:$0xff]
      %v5348 = vld [vmem:[%s5256 + $0x2d8] sm:$0xff]
      %v5349 = vld [vmem:[%s5256 + $0x2e0] sm:$0xff]
      %v5350 = vld [vmem:[%s5256 + $0x2e8] sm:$0xff]
      %v5351 = vld [vmem:[%s5256 + $0x2f0] sm:$0xff]
      %v5352 = vld [vmem:[%s5256 + $0x2f8] sm:$0xff]
      %v5353 = vld [vmem:[%s5256 + $0x300] sm:$0xff]
      %v5354 = vld [vmem:[%s5256 + $0x308] sm:$0xff]
      %v5355 = vld [vmem:[%s5256 + $0x310] sm:$0xff]
      %v5356 = vld [vmem:[%s5256 + $0x318] sm:$0xff]
      %v5357 = vld [vmem:[%s5256 + $0x320] sm:$0xff]
      %v5358 = vld [vmem:[%s5256 + $0x328] sm:$0xff]
      %v5359 = vld [vmem:[%s5256 + $0x330] sm:$0xff]
      %v5360 = vld [vmem:[%s5256 + $0x338] sm:$0xff]
      %v5361 = vld [vmem:[%s5256 + $0x340] sm:$0xff]
      %v5362 = vld [vmem:[%s5256 + $0x348] sm:$0xff]
      %v5363 = vld [vmem:[%s5256 + $0x350] sm:$0xff]
      %v5364 = vld [vmem:[%s5256 + $0x358] sm:$0xff]
      %v5365 = vld [vmem:[%s5256 + $0x360] sm:$0xff]
      %v5366 = vld [vmem:[%s5256 + $0x368] sm:$0xff]
      %v5367 = vld [vmem:[%s5256 + $0x370] sm:$0xff]
      %v5368 = vld [vmem:[%s5256 + $0x378] sm:$0xff]
      %v5369 = vld [vmem:[%s5256 + $0x380] sm:$0xff]
      %v5370 = vld [vmem:[%s5256 + $0x388] sm:$0xff]
      %v5371 = vld [vmem:[%s5256 + $0x390] sm:$0xff]
      %v5372 = vld [vmem:[%s5256 + $0x398] sm:$0xff]
      %v5373 = vld [vmem:[%s5256 + $0x3a0] sm:$0xff]
      %v5374 = vld [vmem:[%s5256 + $0x3a8] sm:$0xff]
      %v5375 = vld [vmem:[%s5256 + $0x3b0] sm:$0xff]
      %v5376 = vld [vmem:[%s5256 + $0x3b8] sm:$0xff]
      %v5377 = vld [vmem:[%s5256 + $0x3c0] sm:$0xff]
      %v5378 = vld [vmem:[%s5256 + $0x3c8] sm:$0xff]
      %v5379 = vld [vmem:[%s5256 + $0x3d0] sm:$0xff]
      %v5380 = vld [vmem:[%s5256 + $0x3d8] sm:$0xff]
      %v5381 = vld [vmem:[%s5256 + $0x3e0] sm:$0xff]
      %v5382 = vld [vmem:[%s5256 + $0x3e8] sm:$0xff]
      %v5383 = vld [vmem:[%s5256 + $0x3f0] sm:$0xff]
      %v5384 = vld [vmem:[%s5256 + $0x3f8] sm:$0xff]
      %v5386 = vsel %vm310, %v5257, 0
      %v5389 = vsel %vm310, %v5258, 0
      %v5392 = vsel %vm310, %v5259, 0
      %v5395 = vsel %vm310, %v5260, 0
      %v5398 = vsel %vm310, %v5261, 0
      %v5401 = vsel %vm310, %v5262, 0
      %v5404 = vsel %vm310, %v5263, 0
      %v5407 = vsel %vm310, %v5264, 0
      %v5410 = vsel %vm310, %v5265, 0
      %v5413 = vsel %vm310, %v5266, 0
      %v5416 = vsel %vm310, %v5267, 0
      %v5419 = vsel %vm310, %v5268, 0
      %v5422 = vsel %vm310, %v5269, 0
      %v5425 = vsel %vm310, %v5270, 0
      %v5428 = vsel %vm310, %v5271, 0
      %v5431 = vsel %vm310, %v5272, 0
      %v5434 = vsel %vm310, %v5273, 0
      %v5437 = vsel %vm310, %v5274, 0
      %v5440 = vsel %vm310, %v5275, 0
      %v5443 = vsel %vm310, %v5276, 0
      %v5446 = vsel %vm310, %v5277, 0
      %v5449 = vsel %vm310, %v5278, 0
      %v5452 = vsel %vm310, %v5279, 0
      %v5455 = vsel %vm310, %v5280, 0
      %v5458 = vsel %vm310, %v5281, 0
      %v5461 = vsel %vm310, %v5282, 0
      %v5464 = vsel %vm310, %v5283, 0
      %v5467 = vsel %vm310, %v5284, 0
      %v5470 = vsel %vm310, %v5285, 0
      %v5473 = vsel %vm310, %v5286, 0
      %v5476 = vsel %vm310, %v5287, 0
      %v5479 = vsel %vm310, %v5288, 0
      %v5482 = vsel %vm310, %v5289, 0
      %v5485 = vsel %vm310, %v5290, 0
      %v5488 = vsel %vm310, %v5291, 0
      %v5491 = vsel %vm310, %v5292, 0
      %v5494 = vsel %vm310, %v5293, 0
      %v5497 = vsel %vm310, %v5294, 0
      %v5500 = vsel %vm310, %v5295, 0
      %v5503 = vsel %vm310, %v5296, 0
      %v5506 = vsel %vm310, %v5297, 0
      %v5509 = vsel %vm310, %v5298, 0
      %v5512 = vsel %vm310, %v5299, 0
      %v5515 = vsel %vm310, %v5300, 0
      %v5518 = vsel %vm310, %v5301, 0
      %v5521 = vsel %vm310, %v5302, 0
      %v5524 = vsel %vm310, %v5303, 0
      %v5527 = vsel %vm310, %v5304, 0
      %v5530 = vsel %vm310, %v5305, 0
      %v5533 = vsel %vm310, %v5306, 0
      %v5536 = vsel %vm310, %v5307, 0
      %v5539 = vsel %vm310, %v5308, 0
      %v5542 = vsel %vm310, %v5309, 0
      %v5545 = vsel %vm310, %v5310, 0
      %v5548 = vsel %vm310, %v5311, 0
      %v5551 = vsel %vm310, %v5312, 0
      %v5554 = vsel %vm310, %v5313, 0
      %v5557 = vsel %vm310, %v5314, 0
      %v5560 = vsel %vm310, %v5315, 0
      %v5563 = vsel %vm310, %v5316, 0
      %v5566 = vsel %vm310, %v5317, 0
      %v5569 = vsel %vm310, %v5318, 0
      %v5572 = vsel %vm310, %v5319, 0
      %v5575 = vsel %vm310, %v5320, 0
      %v5578 = vsel %vm310, %v5321, 0
      %v5581 = vsel %vm310, %v5322, 0
      %v5584 = vsel %vm310, %v5323, 0
      %v5587 = vsel %vm310, %v5324, 0
      %v5590 = vsel %vm310, %v5325, 0
      %v5593 = vsel %vm310, %v5326, 0
      %v5596 = vsel %vm310, %v5327, 0
      %v5599 = vsel %vm310, %v5328, 0
      %v5602 = vsel %vm310, %v5329, 0
      %v5605 = vsel %vm310, %v5330, 0
      %v5608 = vsel %vm310, %v5331, 0
      %v5611 = vsel %vm310, %v5332, 0
      %v5614 = vsel %vm310, %v5333, 0
      %v5617 = vsel %vm310, %v5334, 0
      %v5620 = vsel %vm310, %v5335, 0
      %v5623 = vsel %vm310, %v5336, 0
      %v5626 = vsel %vm310, %v5337, 0
      %v5629 = vsel %vm310, %v5338, 0
      %v5632 = vsel %vm310, %v5339, 0
      %v5635 = vsel %vm310, %v5340, 0
      %v5638 = vsel %vm310, %v5341, 0
      %v5641 = vsel %vm310, %v5342, 0
      %v5644 = vsel %vm310, %v5343, 0
      %v5647 = vsel %vm310, %v5344, 0
      %v5650 = vsel %vm310, %v5345, 0
      %v5653 = vsel %vm310, %v5346, 0
      %v5656 = vsel %vm310, %v5347, 0
      %v5659 = vsel %vm310, %v5348, 0
      %v5662 = vsel %vm310, %v5349, 0
      %v5665 = vsel %vm310, %v5350, 0
      %v5668 = vsel %vm310, %v5351, 0
      %v5671 = vsel %vm310, %v5352, 0
      %v5674 = vsel %vm310, %v5353, 0
      %v5677 = vsel %vm310, %v5354, 0
      %v5680 = vsel %vm310, %v5355, 0
      %v5683 = vsel %vm310, %v5356, 0
      %v5686 = vsel %vm310, %v5357, 0
      %v5689 = vsel %vm310, %v5358, 0
      %v5692 = vsel %vm310, %v5359, 0
      %v5695 = vsel %vm310, %v5360, 0
      %v5698 = vsel %vm310, %v5361, 0
      %v5701 = vsel %vm310, %v5362, 0
      %v5704 = vsel %vm310, %v5363, 0
      %v5707 = vsel %vm310, %v5364, 0
      %v5710 = vsel %vm310, %v5365, 0
      %v5713 = vsel %vm310, %v5366, 0
      %v5716 = vsel %vm310, %v5367, 0
      %v5719 = vsel %vm310, %v5368, 0
      %v5722 = vsel %vm310, %v5369, 0
      %v5725 = vsel %vm310, %v5370, 0
      %v5728 = vsel %vm310, %v5371, 0
      %v5731 = vsel %vm310, %v5372, 0
      %v5734 = vsel %vm310, %v5373, 0
      %v5737 = vsel %vm310, %v5374, 0
      %v5740 = vsel %vm310, %v5375, 0
      %v5743 = vsel %vm310, %v5376, 0
      %v5746 = vsel %vm310, %v5377, 0
      %v5749 = vsel %vm310, %v5378, 0
      %v5752 = vsel %vm310, %v5379, 0
      %v5755 = vsel %vm310, %v5380, 0
      %v5758 = vsel %vm310, %v5381, 0
      %v5761 = vsel %vm310, %v5382, 0
      %v5764 = vsel %vm310, %v5383, 0
      %v5767 = vsel %vm310, %v5384, 0
      %5769 = vmatprep.subr.mxu0 0.0
      %5770 = vmatpush1.msra.mxu0 %v171
      %5771 = vmatprep.subr.mxu0 0.0
      %5772 = vmatpush1.msra.mxu0 %v172
      %5773 = vmatprep.subr.mxu0 0.0
      %5774 = vmatpush1.msra.mxu0 %v173
      %5775 = vmatprep.subr.mxu0 0.0
      %5776 = vmatpush1.msra.mxu0 %v697
      %5777 = vmatprep.subr.mxu0 0.0
      %5778 = vmatpush1.msra.mxu0 0.0
      %5779 = vmatprep.subr.mxu0 0.0
      %5780 = vmatpush1.msra.mxu0 0.0
      %5781 = vmatprep.subr.mxu0 0.0
      %5782 = vmatpush1.msra.mxu0 0.0
      %5783 = vmatprep.subr.mxu0 0.0
      %5784 = vmatpush1.msra.mxu0 0.0
      %5785 = vmatprep.subr.mxu0 0.0
      %5786 = vmatpush1.msra.mxu0 0.0
      %5787 = vmatprep.subr.mxu0 0.0
      %5788 = vmatpush1.msra.mxu0 0.0
      %5789 = vmatprep.subr.mxu0 0.0
      %5790 = vmatpush1.msra.mxu0 0.0
      %5791 = vmatprep.subr.mxu0 0.0
      %5792 = vmatpush1.msra.mxu0 0.0
      %5793 = vmatprep.subr.mxu0 0.0
      %5794 = vmatpush1.msra.mxu0 0.0
      %5795 = vmatprep.subr.mxu0 0.0
      %5796 = vmatpush1.msra.mxu0 0.0
      %5797 = vmatprep.subr.mxu0 0.0
      %5798 = vmatpush1.msra.mxu0 0.0
      %5799 = vmatprep.subr.mxu0 0.0
      %5800 = vmatpush1.msra.mxu0 0.0
      %5801 = vmatprep.subr.mxu0 0.0
      %5802 = vmatpush1.msra.mxu0 0.0
      %5803 = vmatprep.subr.mxu0 0.0
      %5804 = vmatpush1.msra.mxu0 0.0
      %5805 = vmatprep.subr.mxu0 0.0
      %5806 = vmatpush1.msra.mxu0 0.0
      %5807 = vmatprep.subr.mxu0 0.0
      %5808 = vmatpush1.msra.mxu0 0.0
      %5809 = vmatprep.subr.mxu0 0.0
      %5810 = vmatpush1.msra.mxu0 0.0
      %5811 = vmatprep.subr.mxu0 0.0
      %5812 = vmatpush1.msra.mxu0 0.0
      %5813 = vmatprep.subr.mxu0 0.0
      %5814 = vmatpush1.msra.mxu0 0.0
      %5815 = vmatprep.subr.mxu0 0.0
      %5816 = vmatpush1.msra.mxu0 0.0
      %5817 = vmatprep.subr.mxu0 0.0
      %5818 = vmatpush1.msra.mxu0 0.0
      %5819 = vmatprep.subr.mxu0 0.0
      %5820 = vmatpush1.msra.mxu0 0.0
      %5821 = vmatprep.subr.mxu0 0.0
      %5822 = vmatpush1.msra.mxu0 0.0
      %5823 = vmatprep.subr.mxu0 0.0
      %5824 = vmatpush1.msra.mxu0 0.0
      %5825 = vmatprep.subr.mxu0 0.0
      %5826 = vmatpush1.msra.mxu0 0.0
      %5827 = vmatprep.subr.mxu0 0.0
      %5828 = vmatpush1.msra.mxu0 0.0
      %5829 = vmatprep.subr.mxu0 0.0
      %5830 = vmatpush1.msra.mxu0 0.0
      %5831 = vmatprep.subr.mxu0 0.0
      %5832 = vmatpush1.msra.mxu0 0.0
      %5833 = vmatprep.mubr.f32.mxu0 0.0
      %5834 = vmatmul.mubr.f32.gmra.mrb[0].mxu0 %v5386
      %v5835 = vpop.f32.mrb[0].mxu0
      %v5836 = vadd.f32 %v309, %v5835
      %v5837 = vpop.f32.mrb[0].mxu0
      %5838 = vmatprep.mubr.f32.mxu0 0.0
      %5839 = vmatmul.mubr.f32.gmra.mrb[0].mxu0 %v5389
      %v5840 = vpop.f32.mrb[0].mxu0
      %v5841 = vadd.f32 %v309, %v5840
      %v5842 = vpop.f32.mrb[0].mxu0
      %5843 = vmatprep.mubr.f32.mxu0 0.0
      %5844 = vmatmul.mubr.f32.gmra.mrb[0].mxu0 %v5392
      %v5845 = vpop.f32.mrb[0].mxu0
      %v5846 = vadd.f32 %v309, %v5845
      %v5847 = vpop.f32.mrb[0].mxu0
      %5848 = vmatprep.mubr.f32.mxu0 0.0
      %5849 = vmatmul.mubr.f32.gmra.mrb[0].mxu0 %v5395
      %v5850 = vpop.f32.mrb[0].mxu0
      %v5851 = vadd.f32 %v309, %v5850
      %v5852 = vpop.f32.mrb[0].mxu0
      %5853 = vmatprep.mubr.f32.mxu0 0.0
      %5854 = vmatmul.mubr.f32.gmra.mrb[0].mxu0 %v5398
      %v5855 = vpop.f32.mrb[0].mxu0
      %v5856 = vadd.f32 %v309, %v5855
      %v5857 = vpop.f32.mrb[0].mxu0
      %5858 = vmatprep.mubr.f32.mxu0 0.0
      %5859 = vmatmul.mubr.f32.gmra.mrb[0].mxu0 %v5401
      %v5860 = vpop.f32.mrb[0].mxu0
      %v5861 = vadd.f32 %v309, %v5860
      %v5862 = vpop.f32.mrb[0].mxu0
      %5863 = vmatprep.mubr.f32.mxu0 0.0
      %5864 = vmatmul.mubr.f32.gmra.mrb[0].mxu0 %v5404
      %v5865 = vpop.f32.mrb[0].mxu0
      %v5866 = vadd.f32 %v309, %v5865
      %v5867 = vpop.f32.mrb[0].mxu0
      %5868 = vmatprep.mubr.f32.mxu0 0.0
      %5869 = vmatmul.mubr.f32.gmra.mrb[0].mxu0 %v5407
      %v5870 = vpop.f32.mrb[0].mxu0
      %v5871 = vadd.f32 %v309, %v5870
      %v5872 = vpop.f32.mrb[0].mxu0
      %5873 = vmatprep.mubr.f32.mxu0 0.0
      %5874 = vmatmul.mubr.f32.gmra.mrb[0].mxu0 %v5410
      %v5875 = vpop.f32.mrb[0].mxu0
      %v5876 = vadd.f32 %v309, %v5875
      %v5877 = vpop.f32.mrb[0].mxu0
      %5878 = vmatprep.mubr.f32.mxu0 0.0
      %5879 = vmatmul.mubr.f32.gmra.mrb[0].mxu0 %v5413
      %v5880 = vpop.f32.mrb[0].mxu0
      %v5881 = vadd.f32 %v309, %v5880
      %v5882 = vpop.f32.mrb[0].mxu0
      %5883 = vmatprep.mubr.f32.mxu0 0.0
      %5884 = vmatmul.mubr.f32.gmra.mrb[0].mxu0 %v5416
      %v5885 = vpop.f32.mrb[0].mxu0
      %v5886 = vadd.f32 %v309, %v5885
      %v5887 = vpop.f32.mrb[0].mxu0
      %5888 = vmatprep.mubr.f32.mxu0 0.0
      %5889 = vmatmul.mubr.f32.gmra.mrb[0].mxu0 %v5419
      %v5890 = vpop.f32.mrb[0].mxu0
      %v5891 = vadd.f32 %v309, %v5890
      %v5892 = vpop.f32.mrb[0].mxu0
      %5893 = vmatprep.mubr.f32.mxu0 0.0
      %5894 = vmatmul.mubr.f32.gmra.mrb[0].mxu0 %v5422
      %v5895 = vpop.f32.mrb[0].mxu0
      %v5896 = vadd.f32 %v309, %v5895
      %v5897 = vpop.f32.mrb[0].mxu0
      %5898 = vmatprep.mubr.f32.mxu0 0.0
      %5899 = vmatmul.mubr.f32.gmra.mrb[0].mxu0 %v5425
      %v5900 = vpop.f32.mrb[0].mxu0
      %v5901 = vadd.f32 %v309, %v5900
      %v5902 = vpop.f32.mrb[0].mxu0
      %5903 = vmatprep.mubr.f32.mxu0 0.0
      %5904 = vmatmul.mubr.f32.gmra.mrb[0].mxu0 %v5428
      %v5905 = vpop.f32.mrb[0].mxu0
      %v5906 = vadd.f32 %v309, %v5905
      %v5907 = vpop.f32.mrb[0].mxu0
      %5908 = vmatprep.mubr.f32.mxu0 0.0
      %5909 = vmatmul.mubr.f32.gmra.mrb[0].mxu0 %v5431
      %v5910 = vpop.f32.mrb[0].mxu0
      %v5911 = vadd.f32 %v309, %v5910
      %v5912 = vpop.f32.mrb[0].mxu0
      %5913 = vmatprep.mubr.f32.mxu0 0.0
      %5914 = vmatmul.mubr.f32.gmra.mrb[0].mxu0 %v5434
      %v5915 = vpop.f32.mrb[0].mxu0
      %v5916 = vadd.f32 %v309, %v5915
      %v5917 = vpop.f32.mrb[0].mxu0
      %5918 = vmatprep.mubr.f32.mxu0 0.0
      %5919 = vmatmul.mubr.f32.gmra.mrb[0].mxu0 %v5437
      %v5920 = vpop.f32.mrb[0].mxu0
      %v5921 = vadd.f32 %v309, %v5920
      %v5922 = vpop.f32.mrb[0].mxu0
      %5923 = vmatprep.mubr.f32.mxu0 0.0
      %5924 = vmatmul.mubr.f32.gmra.mrb[0].mxu0 %v5440
      %v5925 = vpop.f32.mrb[0].mxu0
      %v5926 = vadd.f32 %v309, %v5925
      %v5927 = vpop.f32.mrb[0].mxu0
      %5928 = vmatprep.mubr.f32.mxu0 0.0
      %5929 = vmatmul.mubr.f32.gmra.mrb[0].mxu0 %v5443
      %v5930 = vpop.f32.mrb[0].mxu0
      %v5931 = vadd.f32 %v309, %v5930
      %v5932 = vpop.f32.mrb[0].mxu0
      %5933 = vmatprep.mubr.f32.mxu0 0.0
      %5934 = vmatmul.mubr.f32.gmra.mrb[0].mxu0 %v5446
      %v5935 = vpop.f32.mrb[0].mxu0
      %v5936 = vadd.f32 %v309, %v5935
      %v5937 = vpop.f32.mrb[0].mxu0
      %5938 = vmatprep.mubr.f32.mxu0 0.0
      %5939 = vmatmul.mubr.f32.gmra.mrb[0].mxu0 %v5449
      %v5940 = vpop.f32.mrb[0].mxu0
      %v5941 = vadd.f32 %v309, %v5940
      %v5942 = vpop.f32.mrb[0].mxu0
      %5943 = vmatprep.mubr.f32.mxu0 0.0
      %5944 = vmatmul.mubr.f32.gmra.mrb[0].mxu0 %v5452
      %v5945 = vpop.f32.mrb[0].mxu0
      %v5946 = vadd.f32 %v309, %v5945
      %v5947 = vpop.f32.mrb[0].mxu0
      %5948 = vmatprep.mubr.f32.mxu0 0.0
      %5949 = vmatmul.mubr.f32.gmra.mrb[0].mxu0 %v5455
      %v5950 = vpop.f32.mrb[0].mxu0
      %v5951 = vadd.f32 %v309, %v5950
      %v5952 = vpop.f32.mrb[0].mxu0
      %5953 = vmatprep.mubr.f32.mxu0 0.0
      %5954 = vmatmul.mubr.f32.gmra.mrb[0].mxu0 %v5458
      %v5955 = vpop.f32.mrb[0].mxu0
      %v5956 = vadd.f32 %v309, %v5955
      %v5957 = vpop.f32.mrb[0].mxu0
      %5958 = vmatprep.mubr.f32.mxu0 0.0
      %5959 = vmatmul.mubr.f32.gmra.mrb[0].mxu0 %v5461
      %v5960 = vpop.f32.mrb[0].mxu0
      %v5961 = vadd.f32 %v309, %v5960
      %v5962 = vpop.f32.mrb[0].mxu0
      %5963 = vmatprep.mubr.f32.mxu0 0.0
      %5964 = vmatmul.mubr.f32.gmra.mrb[0].mxu0 %v5464
      %v5965 = vpop.f32.mrb[0].mxu0
      %v5966 = vadd.f32 %v309, %v5965
      %v5967 = vpop.f32.mrb[0].mxu0
      %5968 = vmatprep.mubr.f32.mxu0 0.0
      %5969 = vmatmul.mubr.f32.gmra.mrb[0].mxu0 %v5467
      %v5970 = vpop.f32.mrb[0].mxu0
      %v5971 = vadd.f32 %v309, %v5970
      %v5972 = vpop.f32.mrb[0].mxu0
      %5973 = vmatprep.mubr.f32.mxu0 0.0
      %5974 = vmatmul.mubr.f32.gmra.mrb[0].mxu0 %v5470
      %v5975 = vpop.f32.mrb[0].mxu0
      %v5976 = vadd.f32 %v309, %v5975
      %v5977 = vpop.f32.mrb[0].mxu0
      %5978 = vmatprep.mubr.f32.mxu0 0.0
      %5979 = vmatmul.mubr.f32.gmra.mrb[0].mxu0 %v5473
      %v5980 = vpop.f32.mrb[0].mxu0
      %v5981 = vadd.f32 %v309, %v5980
      %v5982 = vpop.f32.mrb[0].mxu0
      %5983 = vmatprep.mubr.f32.mxu0 0.0
      %5984 = vmatmul.mubr.f32.gmra.mrb[0].mxu0 %v5476
      %v5985 = vpop.f32.mrb[0].mxu0
      %v5986 = vadd.f32 %v309, %v5985
      %v5987 = vpop.f32.mrb[0].mxu0
      %5988 = vmatprep.mubr.f32.mxu0 0.0
      %5989 = vmatmul.mubr.f32.gmra.mrb[0].mxu0 %v5479
      %v5990 = vpop.f32.mrb[0].mxu0
      %v5991 = vadd.f32 %v309, %v5990
      %v5992 = vpop.f32.mrb[0].mxu0
      %5993 = vmatprep.mubr.f32.mxu0 0.0
      %5994 = vmatmul.mubr.f32.gmra.mrb[0].mxu0 %v5482
      %v5995 = vpop.f32.mrb[0].mxu0
      %v5996 = vadd.f32 %v309, %v5995
      %v5997 = vpop.f32.mrb[0].mxu0
      %5998 = vmatprep.mubr.f32.mxu0 0.0
      %5999 = vmatmul.mubr.f32.gmra.mrb[0].mxu0 %v5485
      %v6000 = vpop.f32.mrb[0].mxu0
      %v6001 = vadd.f32 %v309, %v6000
      %v6002 = vpop.f32.mrb[0].mxu0
      %6003 = vmatprep.mubr.f32.mxu0 0.0
      %6004 = vmatmul.mubr.f32.gmra.mrb[0].mxu0 %v5488
      %v6005 = vpop.f32.mrb[0].mxu0
      %v6006 = vadd.f32 %v309, %v6005
      %v6007 = vpop.f32.mrb[0].mxu0
      %6008 = vmatprep.mubr.f32.mxu0 0.0
      %6009 = vmatmul.mubr.f32.gmra.mrb[0].mxu0 %v5491
      %v6010 = vpop.f32.mrb[0].mxu0
      %v6011 = vadd.f32 %v309, %v6010
      %v6012 = vpop.f32.mrb[0].mxu0
      %6013 = vmatprep.mubr.f32.mxu0 0.0
      %6014 = vmatmul.mubr.f32.gmra.mrb[0].mxu0 %v5494
      %v6015 = vpop.f32.mrb[0].mxu0
      %v6016 = vadd.f32 %v309, %v6015
      %v6017 = vpop.f32.mrb[0].mxu0
      %6018 = vmatprep.mubr.f32.mxu0 0.0
      %6019 = vmatmul.mubr.f32.gmra.mrb[0].mxu0 %v5497
      %v6020 = vpop.f32.mrb[0].mxu0
      %v6021 = vadd.f32 %v309, %v6020
      %v6022 = vpop.f32.mrb[0].mxu0
      %6023 = vmatprep.mubr.f32.mxu0 0.0
      %6024 = vmatmul.mubr.f32.gmra.mrb[0].mxu0 %v5500
      %v6025 = vpop.f32.mrb[0].mxu0
      %v6026 = vadd.f32 %v309, %v6025
      %v6027 = vpop.f32.mrb[0].mxu0
      %6028 = vmatprep.mubr.f32.mxu0 0.0
      %6029 = vmatmul.mubr.f32.gmra.mrb[0].mxu0 %v5503
      %v6030 = vpop.f32.mrb[0].mxu0
      %v6031 = vadd.f32 %v309, %v6030
      %v6032 = vpop.f32.mrb[0].mxu0
      %6033 = vmatprep.mubr.f32.mxu0 0.0
      %6034 = vmatmul.mubr.f32.gmra.mrb[0].mxu0 %v5506
      %v6035 = vpop.f32.mrb[0].mxu0
      %v6036 = vadd.f32 %v309, %v6035
      %v6037 = vpop.f32.mrb[0].mxu0
      %6038 = vmatprep.mubr.f32.mxu0 0.0
      %6039 = vmatmul.mubr.f32.gmra.mrb[0].mxu0 %v5509
      %v6040 = vpop.f32.mrb[0].mxu0
      %v6041 = vadd.f32 %v309, %v6040
      %v6042 = vpop.f32.mrb[0].mxu0
      %6043 = vmatprep.mubr.f32.mxu0 0.0
      %6044 = vmatmul.mubr.f32.gmra.mrb[0].mxu0 %v5512
      %v6045 = vpop.f32.mrb[0].mxu0
      %v6046 = vadd.f32 %v309, %v6045
      %v6047 = vpop.f32.mrb[0].mxu0
      %6048 = vmatprep.mubr.f32.mxu0 0.0
      %6049 = vmatmul.mubr.f32.gmra.mrb[0].mxu0 %v5515
      %v6050 = vpop.f32.mrb[0].mxu0
      %v6051 = vadd.f32 %v309, %v6050
      %v6052 = vpop.f32.mrb[0].mxu0
      %6053 = vmatprep.mubr.f32.mxu0 0.0
      %6054 = vmatmul.mubr.f32.gmra.mrb[0].mxu0 %v5518
      %v6055 = vpop.f32.mrb[0].mxu0
      %v6056 = vadd.f32 %v309, %v6055
      %v6057 = vpop.f32.mrb[0].mxu0
      %6058 = vmatprep.mubr.f32.mxu0 0.0
      %6059 = vmatmul.mubr.f32.gmra.mrb[0].mxu0 %v5521
      %v6060 = vpop.f32.mrb[0].mxu0
      %v6061 = vadd.f32 %v309, %v6060
      %v6062 = vpop.f32.mrb[0].mxu0
      %6063 = vmatprep.mubr.f32.mxu0 0.0
      %6064 = vmatmul.mubr.f32.gmra.mrb[0].mxu0 %v5524
      %v6065 = vpop.f32.mrb[0].mxu0
      %v6066 = vadd.f32 %v309, %v6065
      %v6067 = vpop.f32.mrb[0].mxu0
      %6068 = vmatprep.mubr.f32.mxu0 0.0
      %6069 = vmatmul.mubr.f32.gmra.mrb[0].mxu0 %v5527
      %v6070 = vpop.f32.mrb[0].mxu0
      %v6071 = vadd.f32 %v309, %v6070
      %v6072 = vpop.f32.mrb[0].mxu0
      %6073 = vmatprep.mubr.f32.mxu0 0.0
      %6074 = vmatmul.mubr.f32.gmra.mrb[0].mxu0 %v5530
      %v6075 = vpop.f32.mrb[0].mxu0
      %v6076 = vadd.f32 %v309, %v6075
      %v6077 = vpop.f32.mrb[0].mxu0
      %6078 = vmatprep.mubr.f32.mxu0 0.0
      %6079 = vmatmul.mubr.f32.gmra.mrb[0].mxu0 %v5533
      %v6080 = vpop.f32.mrb[0].mxu0
      %v6081 = vadd.f32 %v309, %v6080
      %v6082 = vpop.f32.mrb[0].mxu0
      %6083 = vmatprep.mubr.f32.mxu0 0.0
      %6084 = vmatmul.mubr.f32.gmra.mrb[0].mxu0 %v5536
      %v6085 = vpop.f32.mrb[0].mxu0
      %v6086 = vadd.f32 %v309, %v6085
      %v6087 = vpop.f32.mrb[0].mxu0
      %6088 = vmatprep.mubr.f32.mxu0 0.0
      %6089 = vmatmul.mubr.f32.gmra.mrb[0].mxu0 %v5539
      %v6090 = vpop.f32.mrb[0].mxu0
      %v6091 = vadd.f32 %v309, %v6090
      %v6092 = vpop.f32.mrb[0].mxu0
      %6093 = vmatprep.mubr.f32.mxu0 0.0
      %6094 = vmatmul.mubr.f32.gmra.mrb[0].mxu0 %v5542
      %v6095 = vpop.f32.mrb[0].mxu0
      %v6096 = vadd.f32 %v309, %v6095
      %v6097 = vpop.f32.mrb[0].mxu0
      %6098 = vmatprep.mubr.f32.mxu0 0.0
      %6099 = vmatmul.mubr.f32.gmra.mrb[0].mxu0 %v5545
      %v6100 = vpop.f32.mrb[0].mxu0
      %v6101 = vadd.f32 %v309, %v6100
      %v6102 = vpop.f32.mrb[0].mxu0
      %6103 = vmatprep.mubr.f32.mxu0 0.0
      %6104 = vmatmul.mubr.f32.gmra.mrb[0].mxu0 %v5548
      %v6105 = vpop.f32.mrb[0].mxu0
      %v6106 = vadd.f32 %v309, %v6105
      %v6107 = vpop.f32.mrb[0].mxu0
      %6108 = vmatprep.mubr.f32.mxu0 0.0
      %6109 = vmatmul.mubr.f32.gmra.mrb[0].mxu0 %v5551
      %v6110 = vpop.f32.mrb[0].mxu0
      %v6111 = vadd.f32 %v309, %v6110
      %v6112 = vpop.f32.mrb[0].mxu0
      %6113 = vmatprep.mubr.f32.mxu0 0.0
      %6114 = vmatmul.mubr.f32.gmra.mrb[0].mxu0 %v5554
      %v6115 = vpop.f32.mrb[0].mxu0
      %v6116 = vadd.f32 %v309, %v6115
      %v6117 = vpop.f32.mrb[0].mxu0
      %6118 = vmatprep.mubr.f32.mxu0 0.0
      %6119 = vmatmul.mubr.f32.gmra.mrb[0].mxu0 %v5557
      %v6120 = vpop.f32.mrb[0].mxu0
      %v6121 = vadd.f32 %v309, %v6120
      %v6122 = vpop.f32.mrb[0].mxu0
      %6123 = vmatprep.mubr.f32.mxu0 0.0
      %6124 = vmatmul.mubr.f32.gmra.mrb[0].mxu0 %v5560
      %v6125 = vpop.f32.mrb[0].mxu0
      %v6126 = vadd.f32 %v309, %v6125
      %v6127 = vpop.f32.mrb[0].mxu0
      %6128 = vmatprep.mubr.f32.mxu0 0.0
      %6129 = vmatmul.mubr.f32.gmra.mrb[0].mxu0 %v5563
      %v6130 = vpop.f32.mrb[0].mxu0
      %v6131 = vadd.f32 %v309, %v6130
      %v6132 = vpop.f32.mrb[0].mxu0
      %6133 = vmatprep.mubr.f32.mxu0 0.0
      %6134 = vmatmul.mubr.f32.gmra.mrb[0].mxu0 %v5566
      %v6135 = vpop.f32.mrb[0].mxu0
      %v6136 = vadd.f32 %v309, %v6135
      %v6137 = vpop.f32.mrb[0].mxu0
      %6138 = vmatprep.mubr.f32.mxu0 0.0
      %6139 = vmatmul.mubr.f32.gmra.mrb[0].mxu0 %v5569
      %v6140 = vpop.f32.mrb[0].mxu0
      %v6141 = vadd.f32 %v309, %v6140
      %v6142 = vpop.f32.mrb[0].mxu0
      %6143 = vmatprep.mubr.f32.mxu0 0.0
      %6144 = vmatmul.mubr.f32.gmra.mrb[0].mxu0 %v5572
      %v6145 = vpop.f32.mrb[0].mxu0
      %v6146 = vadd.f32 %v309, %v6145
      %v6147 = vpop.f32.mrb[0].mxu0
      %6148 = vmatprep.mubr.f32.mxu0 0.0
      %6149 = vmatmul.mubr.f32.gmra.mrb[0].mxu0 %v5575
      %v6150 = vpop.f32.mrb[0].mxu0
      %v6151 = vadd.f32 %v309, %v6150
      %v6152 = vpop.f32.mrb[0].mxu0
      %6153 = vmatprep.mubr.f32.mxu0 0.0
      %6154 = vmatmul.mubr.f32.gmra.mrb[0].mxu0 %v5578
      %v6155 = vpop.f32.mrb[0].mxu0
      %v6156 = vadd.f32 %v309, %v6155
      %v6157 = vpop.f32.mrb[0].mxu0
      %6158 = vmatprep.mubr.f32.mxu0 0.0
      %6159 = vmatmul.mubr.f32.gmra.mrb[0].mxu0 %v5581
      %v6160 = vpop.f32.mrb[0].mxu0
      %v6161 = vadd.f32 %v309, %v6160
      %v6162 = vpop.f32.mrb[0].mxu0
      %6163 = vmatprep.mubr.f32.mxu0 0.0
      %6164 = vmatmul.mubr.f32.gmra.mrb[0].mxu0 %v5584
      %v6165 = vpop.f32.mrb[0].mxu0
      %v6166 = vadd.f32 %v309, %v6165
      %v6167 = vpop.f32.mrb[0].mxu0
      %6168 = vmatprep.mubr.f32.mxu0 0.0
      %6169 = vmatmul.mubr.f32.gmra.mrb[0].mxu0 %v5587
      %v6170 = vpop.f32.mrb[0].mxu0
      %v6171 = vadd.f32 %v309, %v6170
      %v6172 = vpop.f32.mrb[0].mxu0
      %6173 = vmatprep.mubr.f32.mxu0 0.0
      %6174 = vmatmul.mubr.f32.gmra.mrb[0].mxu0 %v5590
      %v6175 = vpop.f32.mrb[0].mxu0
      %v6176 = vadd.f32 %v309, %v6175
      %v6177 = vpop.f32.mrb[0].mxu0
      %6178 = vmatprep.mubr.f32.mxu0 0.0
      %6179 = vmatmul.mubr.f32.gmra.mrb[0].mxu0 %v5593
      %v6180 = vpop.f32.mrb[0].mxu0
      %v6181 = vadd.f32 %v309, %v6180
      %v6182 = vpop.f32.mrb[0].mxu0
      %6183 = vmatprep.mubr.f32.mxu0 0.0
      %6184 = vmatmul.mubr.f32.gmra.mrb[0].mxu0 %v5596
      %v6185 = vpop.f32.mrb[0].mxu0
      %v6186 = vadd.f32 %v309, %v6185
      %v6187 = vpop.f32.mrb[0].mxu0
      %6188 = vmatprep.mubr.f32.mxu0 0.0
      %6189 = vmatmul.mubr.f32.gmra.mrb[0].mxu0 %v5599
      %v6190 = vpop.f32.mrb[0].mxu0
      %v6191 = vadd.f32 %v309, %v6190
      %v6192 = vpop.f32.mrb[0].mxu0
      %6193 = vmatprep.mubr.f32.mxu0 0.0
      %6194 = vmatmul.mubr.f32.gmra.mrb[0].mxu0 %v5602
      %v6195 = vpop.f32.mrb[0].mxu0
      %v6196 = vadd.f32 %v309, %v6195
      %v6197 = vpop.f32.mrb[0].mxu0
      %6198 = vmatprep.mubr.f32.mxu0 0.0
      %6199 = vmatmul.mubr.f32.gmra.mrb[0].mxu0 %v5605
      %v6200 = vpop.f32.mrb[0].mxu0
      %v6201 = vadd.f32 %v309, %v6200
      %v6202 = vpop.f32.mrb[0].mxu0
      %6203 = vmatprep.mubr.f32.mxu0 0.0
      %6204 = vmatmul.mubr.f32.gmra.mrb[0].mxu0 %v5608
      %v6205 = vpop.f32.mrb[0].mxu0
      %v6206 = vadd.f32 %v309, %v6205
      %v6207 = vpop.f32.mrb[0].mxu0
      %6208 = vmatprep.mubr.f32.mxu0 0.0
      %6209 = vmatmul.mubr.f32.gmra.mrb[0].mxu0 %v5611
      %v6210 = vpop.f32.mrb[0].mxu0
      %v6211 = vadd.f32 %v309, %v6210
      %v6212 = vpop.f32.mrb[0].mxu0
      %6213 = vmatprep.mubr.f32.mxu0 0.0
      %6214 = vmatmul.mubr.f32.gmra.mrb[0].mxu0 %v5614
      %v6215 = vpop.f32.mrb[0].mxu0
      %v6216 = vadd.f32 %v309, %v6215
      %v6217 = vpop.f32.mrb[0].mxu0
      %6218 = vmatprep.mubr.f32.mxu0 0.0
      %6219 = vmatmul.mubr.f32.gmra.mrb[0].mxu0 %v5617
      %v6220 = vpop.f32.mrb[0].mxu0
      %v6221 = vadd.f32 %v309, %v6220
      %v6222 = vpop.f32.mrb[0].mxu0
      %6223 = vmatprep.mubr.f32.mxu0 0.0
      %6224 = vmatmul.mubr.f32.gmra.mrb[0].mxu0 %v5620
      %v6225 = vpop.f32.mrb[0].mxu0
      %v6226 = vadd.f32 %v309, %v6225
      %v6227 = vpop.f32.mrb[0].mxu0
      %6228 = vmatprep.mubr.f32.mxu0 0.0
      %6229 = vmatmul.mubr.f32.gmra.mrb[0].mxu0 %v5623
      %v6230 = vpop.f32.mrb[0].mxu0
      %v6231 = vadd.f32 %v309, %v6230
      %v6232 = vpop.f32.mrb[0].mxu0
      %6233 = vmatprep.mubr.f32.mxu0 0.0
      %6234 = vmatmul.mubr.f32.gmra.mrb[0].mxu0 %v5626
      %v6235 = vpop.f32.mrb[0].mxu0
      %v6236 = vadd.f32 %v309, %v6235
      %v6237 = vpop.f32.mrb[0].mxu0
      %6238 = vmatprep.mubr.f32.mxu0 0.0
      %6239 = vmatmul.mubr.f32.gmra.mrb[0].mxu0 %v5629
      %v6240 = vpop.f32.mrb[0].mxu0
      %v6241 = vadd.f32 %v309, %v6240
      %v6242 = vpop.f32.mrb[0].mxu0
      %6243 = vmatprep.mubr.f32.mxu0 0.0
      %6244 = vmatmul.mubr.f32.gmra.mrb[0].mxu0 %v5632
      %v6245 = vpop.f32.mrb[0].mxu0
      %v6246 = vadd.f32 %v309, %v6245
      %v6247 = vpop.f32.mrb[0].mxu0
      %6248 = vmatprep.mubr.f32.mxu0 0.0
      %6249 = vmatmul.mubr.f32.gmra.mrb[0].mxu0 %v5635
      %v6250 = vpop.f32.mrb[0].mxu0
      %v6251 = vadd.f32 %v309, %v6250
      %v6252 = vpop.f32.mrb[0].mxu0
      %6253 = vmatprep.mubr.f32.mxu0 0.0
      %6254 = vmatmul.mubr.f32.gmra.mrb[0].mxu0 %v5638
      %v6255 = vpop.f32.mrb[0].mxu0
      %v6256 = vadd.f32 %v309, %v6255
      %v6257 = vpop.f32.mrb[0].mxu0
      %6258 = vmatprep.mubr.f32.mxu0 0.0
      %6259 = vmatmul.mubr.f32.gmra.mrb[0].mxu0 %v5641
      %v6260 = vpop.f32.mrb[0].mxu0
      %v6261 = vadd.f32 %v309, %v6260
      %v6262 = vpop.f32.mrb[0].mxu0
      %6263 = vmatprep.mubr.f32.mxu0 0.0
      %6264 = vmatmul.mubr.f32.gmra.mrb[0].mxu0 %v5644
      %v6265 = vpop.f32.mrb[0].mxu0
      %v6266 = vadd.f32 %v309, %v6265
      %v6267 = vpop.f32.mrb[0].mxu0
      %6268 = vmatprep.mubr.f32.mxu0 0.0
      %6269 = vmatmul.mubr.f32.gmra.mrb[0].mxu0 %v5647
      %v6270 = vpop.f32.mrb[0].mxu0
      %v6271 = vadd.f32 %v309, %v6270
      %v6272 = vpop.f32.mrb[0].mxu0
      %6273 = vmatprep.mubr.f32.mxu0 0.0
      %6274 = vmatmul.mubr.f32.gmra.mrb[0].mxu0 %v5650
      %v6275 = vpop.f32.mrb[0].mxu0
      %v6276 = vadd.f32 %v309, %v6275
      %v6277 = vpop.f32.mrb[0].mxu0
      %6278 = vmatprep.mubr.f32.mxu0 0.0
      %6279 = vmatmul.mubr.f32.gmra.mrb[0].mxu0 %v5653
      %v6280 = vpop.f32.mrb[0].mxu0
      %v6281 = vadd.f32 %v309, %v6280
      %v6282 = vpop.f32.mrb[0].mxu0
      %6283 = vmatprep.mubr.f32.mxu0 0.0
      %6284 = vmatmul.mubr.f32.gmra.mrb[0].mxu0 %v5656
      %v6285 = vpop.f32.mrb[0].mxu0
      %v6286 = vadd.f32 %v309, %v6285
      %v6287 = vpop.f32.mrb[0].mxu0
      %6288 = vmatprep.mubr.f32.mxu0 0.0
      %6289 = vmatmul.mubr.f32.gmra.mrb[0].mxu0 %v5659
      %v6290 = vpop.f32.mrb[0].mxu0
      %v6291 = vadd.f32 %v309, %v6290
      %v6292 = vpop.f32.mrb[0].mxu0
      %6293 = vmatprep.mubr.f32.mxu0 0.0
      %6294 = vmatmul.mubr.f32.gmra.mrb[0].mxu0 %v5662
      %v6295 = vpop.f32.mrb[0].mxu0
      %v6296 = vadd.f32 %v309, %v6295
      %v6297 = vpop.f32.mrb[0].mxu0
      %6298 = vmatprep.mubr.f32.mxu0 0.0
      %6299 = vmatmul.mubr.f32.gmra.mrb[0].mxu0 %v5665
      %v6300 = vpop.f32.mrb[0].mxu0
      %v6301 = vadd.f32 %v309, %v6300
      %v6302 = vpop.f32.mrb[0].mxu0
      %6303 = vmatprep.mubr.f32.mxu0 0.0
      %6304 = vmatmul.mubr.f32.gmra.mrb[0].mxu0 %v5668
      %v6305 = vpop.f32.mrb[0].mxu0
      %v6306 = vadd.f32 %v309, %v6305
      %v6307 = vpop.f32.mrb[0].mxu0
      %6308 = vmatprep.mubr.f32.mxu0 0.0
      %6309 = vmatmul.mubr.f32.gmra.mrb[0].mxu0 %v5671
      %v6310 = vpop.f32.mrb[0].mxu0
      %v6311 = vadd.f32 %v309, %v6310
      %v6312 = vpop.f32.mrb[0].mxu0
      %6313 = vmatprep.mubr.f32.mxu0 0.0
      %6314 = vmatmul.mubr.f32.gmra.mrb[0].mxu0 %v5674
      %v6315 = vpop.f32.mrb[0].mxu0
      %v6316 = vadd.f32 %v309, %v6315
      %v6317 = vpop.f32.mrb[0].mxu0
      %6318 = vmatprep.mubr.f32.mxu0 0.0
      %6319 = vmatmul.mubr.f32.gmra.mrb[0].mxu0 %v5677
      %v6320 = vpop.f32.mrb[0].mxu0
      %v6321 = vadd.f32 %v309, %v6320
      %v6322 = vpop.f32.mrb[0].mxu0
      %6323 = vmatprep.mubr.f32.mxu0 0.0
      %6324 = vmatmul.mubr.f32.gmra.mrb[0].mxu0 %v5680
      %v6325 = vpop.f32.mrb[0].mxu0
      %v6326 = vadd.f32 %v309, %v6325
      %v6327 = vpop.f32.mrb[0].mxu0
      %6328 = vmatprep.mubr.f32.mxu0 0.0
      %6329 = vmatmul.mubr.f32.gmra.mrb[0].mxu0 %v5683
      %v6330 = vpop.f32.mrb[0].mxu0
      %v6331 = vadd.f32 %v309, %v6330
      %v6332 = vpop.f32.mrb[0].mxu0
      %6333 = vmatprep.mubr.f32.mxu0 0.0
      %6334 = vmatmul.mubr.f32.gmra.mrb[0].mxu0 %v5686
      %v6335 = vpop.f32.mrb[0].mxu0
      %v6336 = vadd.f32 %v309, %v6335
      %v6337 = vpop.f32.mrb[0].mxu0
      %6338 = vmatprep.mubr.f32.mxu0 0.0
      %6339 = vmatmul.mubr.f32.gmra.mrb[0].mxu0 %v5689
      %v6340 = vpop.f32.mrb[0].mxu0
      %v6341 = vadd.f32 %v309, %v6340
      %v6342 = vpop.f32.mrb[0].mxu0
      %6343 = vmatprep.mubr.f32.mxu0 0.0
      %6344 = vmatmul.mubr.f32.gmra.mrb[0].mxu0 %v5692
      %v6345 = vpop.f32.mrb[0].mxu0
      %v6346 = vadd.f32 %v309, %v6345
      %v6347 = vpop.f32.mrb[0].mxu0
      %6348 = vmatprep.mubr.f32.mxu0 0.0
      %6349 = vmatmul.mubr.f32.gmra.mrb[0].mxu0 %v5695
      %v6350 = vpop.f32.mrb[0].mxu0
      %v6351 = vadd.f32 %v309, %v6350
      %v6352 = vpop.f32.mrb[0].mxu0
      %6353 = vmatprep.mubr.f32.mxu0 0.0
      %6354 = vmatmul.mubr.f32.gmra.mrb[0].mxu0 %v5698
      %v6355 = vpop.f32.mrb[0].mxu0
      %v6356 = vadd.f32 %v309, %v6355
      %v6357 = vpop.f32.mrb[0].mxu0
      %6358 = vmatprep.mubr.f32.mxu0 0.0
      %6359 = vmatmul.mubr.f32.gmra.mrb[0].mxu0 %v5701
      %v6360 = vpop.f32.mrb[0].mxu0
      %v6361 = vadd.f32 %v309, %v6360
      %v6362 = vpop.f32.mrb[0].mxu0
      %6363 = vmatprep.mubr.f32.mxu0 0.0
      %6364 = vmatmul.mubr.f32.gmra.mrb[0].mxu0 %v5704
      %v6365 = vpop.f32.mrb[0].mxu0
      %v6366 = vadd.f32 %v309, %v6365
      %v6367 = vpop.f32.mrb[0].mxu0
      %6368 = vmatprep.mubr.f32.mxu0 0.0
      %6369 = vmatmul.mubr.f32.gmra.mrb[0].mxu0 %v5707
      %v6370 = vpop.f32.mrb[0].mxu0
      %v6371 = vadd.f32 %v309, %v6370
      %v6372 = vpop.f32.mrb[0].mxu0
      %6373 = vmatprep.mubr.f32.mxu0 0.0
      %6374 = vmatmul.mubr.f32.gmra.mrb[0].mxu0 %v5710
      %v6375 = vpop.f32.mrb[0].mxu0
      %v6376 = vadd.f32 %v309, %v6375
      %v6377 = vpop.f32.mrb[0].mxu0
      %6378 = vmatprep.mubr.f32.mxu0 0.0
      %6379 = vmatmul.mubr.f32.gmra.mrb[0].mxu0 %v5713
      %v6380 = vpop.f32.mrb[0].mxu0
      %v6381 = vadd.f32 %v309, %v6380
      %v6382 = vpop.f32.mrb[0].mxu0
      %6383 = vmatprep.mubr.f32.mxu0 0.0
      %6384 = vmatmul.mubr.f32.gmra.mrb[0].mxu0 %v5716
      %v6385 = vpop.f32.mrb[0].mxu0
      %v6386 = vadd.f32 %v309, %v6385
      %v6387 = vpop.f32.mrb[0].mxu0
      %6388 = vmatprep.mubr.f32.mxu0 0.0
      %6389 = vmatmul.mubr.f32.gmra.mrb[0].mxu0 %v5719
      %v6390 = vpop.f32.mrb[0].mxu0
      %v6391 = vadd.f32 %v309, %v6390
      %v6392 = vpop.f32.mrb[0].mxu0
      %6393 = vmatprep.mubr.f32.mxu0 0.0
      %6394 = vmatmul.mubr.f32.gmra.mrb[0].mxu0 %v5722
      %v6395 = vpop.f32.mrb[0].mxu0
      %v6396 = vadd.f32 %v309, %v6395
      %v6397 = vpop.f32.mrb[0].mxu0
      %6398 = vmatprep.mubr.f32.mxu0 0.0
      %6399 = vmatmul.mubr.f32.gmra.mrb[0].mxu0 %v5725
      %v6400 = vpop.f32.mrb[0].mxu0
      %v6401 = vadd.f32 %v309, %v6400
      %v6402 = vpop.f32.mrb[0].mxu0
      %6403 = vmatprep.mubr.f32.mxu0 0.0
      %6404 = vmatmul.mubr.f32.gmra.mrb[0].mxu0 %v5728
      %v6405 = vpop.f32.mrb[0].mxu0
      %v6406 = vadd.f32 %v309, %v6405
      %v6407 = vpop.f32.mrb[0].mxu0
      %6408 = vmatprep.mubr.f32.mxu0 0.0
      %6409 = vmatmul.mubr.f32.gmra.mrb[0].mxu0 %v5731
      %v6410 = vpop.f32.mrb[0].mxu0
      %v6411 = vadd.f32 %v309, %v6410
      %v6412 = vpop.f32.mrb[0].mxu0
      %6413 = vmatprep.mubr.f32.mxu0 0.0
      %6414 = vmatmul.mubr.f32.gmra.mrb[0].mxu0 %v5734
      %v6415 = vpop.f32.mrb[0].mxu0
      %v6416 = vadd.f32 %v309, %v6415
      %v6417 = vpop.f32.mrb[0].mxu0
      %6418 = vmatprep.mubr.f32.mxu0 0.0
      %6419 = vmatmul.mubr.f32.gmra.mrb[0].mxu0 %v5737
      %v6420 = vpop.f32.mrb[0].mxu0
      %v6421 = vadd.f32 %v309, %v6420
      %v6422 = vpop.f32.mrb[0].mxu0
      %6423 = vmatprep.mubr.f32.mxu0 0.0
      %6424 = vmatmul.mubr.f32.gmra.mrb[0].mxu0 %v5740
      %v6425 = vpop.f32.mrb[0].mxu0
      %v6426 = vadd.f32 %v309, %v6425
      %v6427 = vpop.f32.mrb[0].mxu0
      %6428 = vmatprep.mubr.f32.mxu0 0.0
      %6429 = vmatmul.mubr.f32.gmra.mrb[0].mxu0 %v5743
      %v6430 = vpop.f32.mrb[0].mxu0
      %v6431 = vadd.f32 %v309, %v6430
      %v6432 = vpop.f32.mrb[0].mxu0
      %6433 = vmatprep.mubr.f32.mxu0 0.0
      %6434 = vmatmul.mubr.f32.gmra.mrb[0].mxu0 %v5746
      %v6435 = vpop.f32.mrb[0].mxu0
      %v6436 = vadd.f32 %v309, %v6435
      %v6437 = vpop.f32.mrb[0].mxu0
      %6438 = vmatprep.mubr.f32.mxu0 0.0
      %6439 = vmatmul.mubr.f32.gmra.mrb[0].mxu0 %v5749
      %v6440 = vpop.f32.mrb[0].mxu0
      %v6441 = vadd.f32 %v309, %v6440
      %v6442 = vpop.f32.mrb[0].mxu0
      %6443 = vmatprep.mubr.f32.mxu0 0.0
      %6444 = vmatmul.mubr.f32.gmra.mrb[0].mxu0 %v5752
      %v6445 = vpop.f32.mrb[0].mxu0
      %v6446 = vadd.f32 %v309, %v6445
      %v6447 = vpop.f32.mrb[0].mxu0
      %6448 = vmatprep.mubr.f32.mxu0 0.0
      %6449 = vmatmul.mubr.f32.gmra.mrb[0].mxu0 %v5755
      %v6450 = vpop.f32.mrb[0].mxu0
      %v6451 = vadd.f32 %v309, %v6450
      %v6452 = vpop.f32.mrb[0].mxu0
      %6453 = vmatprep.mubr.f32.mxu0 0.0
      %6454 = vmatmul.mubr.f32.gmra.mrb[0].mxu0 %v5758
      %v6455 = vpop.f32.mrb[0].mxu0
      %v6456 = vadd.f32 %v309, %v6455
      %v6457 = vpop.f32.mrb[0].mxu0
      %6458 = vmatprep.mubr.f32.mxu0 0.0
      %6459 = vmatmul.mubr.f32.gmra.mrb[0].mxu0 %v5761
      %v6460 = vpop.f32.mrb[0].mxu0
      %v6461 = vadd.f32 %v309, %v6460
      %v6462 = vpop.f32.mrb[0].mxu0
      %6463 = vmatprep.mubr.f32.mxu0 0.0
      %6464 = vmatmul.mubr.f32.gmra.mrb[0].mxu0 %v5764
      %v6465 = vpop.f32.mrb[0].mxu0
      %v6466 = vadd.f32 %v309, %v6465
      %v6467 = vpop.f32.mrb[0].mxu0
      %6468 = vmatprep.mubr.f32.mxu0 0.0
      %6469 = vmatmul.mubr.f32.gmra.mrb[0].mxu0 %v5767
      %v6470 = vpop.f32.mrb[0].mxu0
      %v6471 = vadd.f32 %v309, %v6470
      %v6472 = vpop.f32.mrb[0].mxu0
      %6473 = vdwg.mxu0
      %v6474 = vmax.f32 %v5836, 0.0
      %v6475 = vmax.f32 %v5841, 0.0
      %v6476 = vmax.f32 %v5846, 0.0
      %v6477 = vmax.f32 %v5851, 0.0
      %v6478 = vmax.f32 %v5856, 0.0
      %v6479 = vmax.f32 %v5861, 0.0
      %v6480 = vmax.f32 %v5866, 0.0
      %v6481 = vmax.f32 %v5871, 0.0
      %v6482 = vmax.f32 %v5876, 0.0
      %v6483 = vmax.f32 %v5881, 0.0
      %v6484 = vmax.f32 %v5886, 0.0
      %v6485 = vmax.f32 %v5891, 0.0
      %v6486 = vmax.f32 %v5896, 0.0
      %v6487 = vmax.f32 %v5901, 0.0
      %v6488 = vmax.f32 %v5906, 0.0
      %v6489 = vmax.f32 %v5911, 0.0
      %v6490 = vmax.f32 %v5916, 0.0
      %v6491 = vmax.f32 %v5921, 0.0
      %v6492 = vmax.f32 %v5926, 0.0
      %v6493 = vmax.f32 %v5931, 0.0
      %v6494 = vmax.f32 %v5936, 0.0
      %v6495 = vmax.f32 %v5941, 0.0
      %v6496 = vmax.f32 %v5946, 0.0
      %v6497 = vmax.f32 %v5951, 0.0
      %v6498 = vmax.f32 %v5956, 0.0
      %v6499 = vmax.f32 %v5961, 0.0
      %v6500 = vmax.f32 %v5966, 0.0
      %v6501 = vmax.f32 %v5971, 0.0
      %v6502 = vmax.f32 %v5976, 0.0
      %v6503 = vmax.f32 %v5981, 0.0
      %v6504 = vmax.f32 %v5986, 0.0
      %v6505 = vmax.f32 %v5991, 0.0
      %v6506 = vmax.f32 %v5996, 0.0
      %v6507 = vmax.f32 %v6001, 0.0
      %v6508 = vmax.f32 %v6006, 0.0
      %v6509 = vmax.f32 %v6011, 0.0
      %v6510 = vmax.f32 %v6016, 0.0
      %v6511 = vmax.f32 %v6021, 0.0
      %v6512 = vmax.f32 %v6026, 0.0
      %v6513 = vmax.f32 %v6031, 0.0
      %v6514 = vmax.f32 %v6036, 0.0
      %v6515 = vmax.f32 %v6041, 0.0
      %v6516 = vmax.f32 %v6046, 0.0
      %v6517 = vmax.f32 %v6051, 0.0
      %v6518 = vmax.f32 %v6056, 0.0
      %v6519 = vmax.f32 %v6061, 0.0
      %v6520 = vmax.f32 %v6066, 0.0
      %v6521 = vmax.f32 %v6071, 0.0
      %v6522 = vmax.f32 %v6076, 0.0
      %v6523 = vmax.f32 %v6081, 0.0
      %v6524 = vmax.f32 %v6086, 0.0
      %v6525 = vmax.f32 %v6091, 0.0
      %v6526 = vmax.f32 %v6096, 0.0
      %v6527 = vmax.f32 %v6101, 0.0
      %v6528 = vmax.f32 %v6106, 0.0
      %v6529 = vmax.f32 %v6111, 0.0
      %v6530 = vmax.f32 %v6116, 0.0
      %v6531 = vmax.f32 %v6121, 0.0
      %v6532 = vmax.f32 %v6126, 0.0
      %v6533 = vmax.f32 %v6131, 0.0
      %v6534 = vmax.f32 %v6136, 0.0
      %v6535 = vmax.f32 %v6141, 0.0
      %v6536 = vmax.f32 %v6146, 0.0
      %v6537 = vmax.f32 %v6151, 0.0
      %v6538 = vmax.f32 %v6156, 0.0
      %v6539 = vmax.f32 %v6161, 0.0
      %v6540 = vmax.f32 %v6166, 0.0
      %v6541 = vmax.f32 %v6171, 0.0
      %v6542 = vmax.f32 %v6176, 0.0
      %v6543 = vmax.f32 %v6181, 0.0
      %v6544 = vmax.f32 %v6186, 0.0
      %v6545 = vmax.f32 %v6191, 0.0
      %v6546 = vmax.f32 %v6196, 0.0
      %v6547 = vmax.f32 %v6201, 0.0
      %v6548 = vmax.f32 %v6206, 0.0
      %v6549 = vmax.f32 %v6211, 0.0
      %v6550 = vmax.f32 %v6216, 0.0
      %v6551 = vmax.f32 %v6221, 0.0
      %v6552 = vmax.f32 %v6226, 0.0
      %v6553 = vmax.f32 %v6231, 0.0
      %v6554 = vmax.f32 %v6236, 0.0
      %v6555 = vmax.f32 %v6241, 0.0
      %v6556 = vmax.f32 %v6246, 0.0
      %v6557 = vmax.f32 %v6251, 0.0
      %v6558 = vmax.f32 %v6256, 0.0
      %v6559 = vmax.f32 %v6261, 0.0
      %v6560 = vmax.f32 %v6266, 0.0
      %v6561 = vmax.f32 %v6271, 0.0
      %v6562 = vmax.f32 %v6276, 0.0
      %v6563 = vmax.f32 %v6281, 0.0
      %v6564 = vmax.f32 %v6286, 0.0
      %v6565 = vmax.f32 %v6291, 0.0
      %v6566 = vmax.f32 %v6296, 0.0
      %v6567 = vmax.f32 %v6301, 0.0
      %v6568 = vmax.f32 %v6306, 0.0
      %v6569 = vmax.f32 %v6311, 0.0
      %v6570 = vmax.f32 %v6316, 0.0
      %v6571 = vmax.f32 %v6321, 0.0
      %v6572 = vmax.f32 %v6326, 0.0
      %v6573 = vmax.f32 %v6331, 0.0
      %v6574 = vmax.f32 %v6336, 0.0
      %v6575 = vmax.f32 %v6341, 0.0
      %v6576 = vmax.f32 %v6346, 0.0
      %v6577 = vmax.f32 %v6351, 0.0
      %v6578 = vmax.f32 %v6356, 0.0
      %v6579 = vmax.f32 %v6361, 0.0
      %v6580 = vmax.f32 %v6366, 0.0
      %v6581 = vmax.f32 %v6371, 0.0
      %v6582 = vmax.f32 %v6376, 0.0
      %v6583 = vmax.f32 %v6381, 0.0
      %v6584 = vmax.f32 %v6386, 0.0
      %v6585 = vmax.f32 %v6391, 0.0
      %v6586 = vmax.f32 %v6396, 0.0
      %v6587 = vmax.f32 %v6401, 0.0
      %v6588 = vmax.f32 %v6406, 0.0
      %v6589 = vmax.f32 %v6411, 0.0
      %v6590 = vmax.f32 %v6416, 0.0
      %v6591 = vmax.f32 %v6421, 0.0
      %v6592 = vmax.f32 %v6426, 0.0
      %v6593 = vmax.f32 %v6431, 0.0
      %v6594 = vmax.f32 %v6436, 0.0
      %v6595 = vmax.f32 %v6441, 0.0
      %v6596 = vmax.f32 %v6446, 0.0
      %v6597 = vmax.f32 %v6451, 0.0
      %v6598 = vmax.f32 %v6456, 0.0
      %v6599 = vmax.f32 %v6461, 0.0
      %v6600 = vmax.f32 %v6466, 0.0
      %v6601 = vmax.f32 %v6471, 0.0
      %v6602 = vmul.f32 %v6474, %v1535
      %v6603 = vmul.f32 %v6475, %v1535
      %v6604 = vmul.f32 %v6476, %v1535
      %v6605 = vmul.f32 %v6477, %v1535
      %v6606 = vmul.f32 %v6478, %v1535
      %v6607 = vmul.f32 %v6479, %v1535
      %v6608 = vmul.f32 %v6480, %v1535
      %v6609 = vmul.f32 %v6481, %v1535
      %v6610 = vmul.f32 %v6482, %v1535
      %v6611 = vmul.f32 %v6483, %v1535
      %v6612 = vmul.f32 %v6484, %v1535
      %v6613 = vmul.f32 %v6485, %v1535
      %v6614 = vmul.f32 %v6486, %v1535
      %v6615 = vmul.f32 %v6487, %v1535
      %v6616 = vmul.f32 %v6488, %v1535
      %v6617 = vmul.f32 %v6489, %v1535
      %v6618 = vmul.f32 %v6490, %v1535
      %v6619 = vmul.f32 %v6491, %v1535
      %v6620 = vmul.f32 %v6492, %v1535
      %v6621 = vmul.f32 %v6493, %v1535
      %v6622 = vmul.f32 %v6494, %v1535
      %v6623 = vmul.f32 %v6495, %v1535
      %v6624 = vmul.f32 %v6496, %v1535
      %v6625 = vmul.f32 %v6497, %v1535
      %v6626 = vmul.f32 %v6498, %v1535
      %v6627 = vmul.f32 %v6499, %v1535
      %v6628 = vmul.f32 %v6500, %v1535
      %v6629 = vmul.f32 %v6501, %v1535
      %v6630 = vmul.f32 %v6502, %v1535
      %v6631 = vmul.f32 %v6503, %v1535
      %v6632 = vmul.f32 %v6504, %v1535
      %v6633 = vmul.f32 %v6505, %v1535
      %v6634 = vmul.f32 %v6506, %v1535
      %v6635 = vmul.f32 %v6507, %v1535
      %v6636 = vmul.f32 %v6508, %v1535
      %v6637 = vmul.f32 %v6509, %v1535
      %v6638 = vmul.f32 %v6510, %v1535
      %v6639 = vmul.f32 %v6511, %v1535
      %v6640 = vmul.f32 %v6512, %v1535
      %v6641 = vmul.f32 %v6513, %v1535
      %v6642 = vmul.f32 %v6514, %v1535
      %v6643 = vmul.f32 %v6515, %v1535
      %v6644 = vmul.f32 %v6516, %v1535
      %v6645 = vmul.f32 %v6517, %v1535
      %v6646 = vmul.f32 %v6518, %v1535
      %v6647 = vmul.f32 %v6519, %v1535
      %v6648 = vmul.f32 %v6520, %v1535
      %v6649 = vmul.f32 %v6521, %v1535
      %v6650 = vmul.f32 %v6522, %v1535
      %v6651 = vmul.f32 %v6523, %v1535
      %v6652 = vmul.f32 %v6524, %v1535
      %v6653 = vmul.f32 %v6525, %v1535
      %v6654 = vmul.f32 %v6526, %v1535
      %v6655 = vmul.f32 %v6527, %v1535
      %v6656 = vmul.f32 %v6528, %v1535
      %v6657 = vmul.f32 %v6529, %v1535
      %v6658 = vmul.f32 %v6530, %v1535
      %v6659 = vmul.f32 %v6531, %v1535
      %v6660 = vmul.f32 %v6532, %v1535
      %v6661 = vmul.f32 %v6533, %v1535
      %v6662 = vmul.f32 %v6534, %v1535
      %v6663 = vmul.f32 %v6535, %v1535
      %v6664 = vmul.f32 %v6536, %v1535
      %v6665 = vmul.f32 %v6537, %v1535
      %v6666 = vmul.f32 %v6538, %v1535
      %v6667 = vmul.f32 %v6539, %v1535
      %v6668 = vmul.f32 %v6540, %v1535
      %v6669 = vmul.f32 %v6541, %v1535
      %v6670 = vmul.f32 %v6542, %v1535
      %v6671 = vmul.f32 %v6543, %v1535
      %v6672 = vmul.f32 %v6544, %v1535
      %v6673 = vmul.f32 %v6545, %v1535
      %v6674 = vmul.f32 %v6546, %v1535
      %v6675 = vmul.f32 %v6547, %v1535
      %v6676 = vmul.f32 %v6548, %v1535
      %v6677 = vmul.f32 %v6549, %v1535
      %v6678 = vmul.f32 %v6550, %v1535
      %v6679 = vmul.f32 %v6551, %v1535
      %v6680 = vmul.f32 %v6552, %v1535
      %v6681 = vmul.f32 %v6553, %v1535
      %v6682 = vmul.f32 %v6554, %v1535
      %v6683 = vmul.f32 %v6555, %v1535
      %v6684 = vmul.f32 %v6556, %v1535
      %v6685 = vmul.f32 %v6557, %v1535
      %v6686 = vmul.f32 %v6558, %v1535
      %v6687 = vmul.f32 %v6559, %v1535
      %v6688 = vmul.f32 %v6560, %v1535
      %v6689 = vmul.f32 %v6561, %v1535
      %v6690 = vmul.f32 %v6562, %v1535
      %v6691 = vmul.f32 %v6563, %v1535
      %v6692 = vmul.f32 %v6564, %v1535
      %v6693 = vmul.f32 %v6565, %v1535
      %v6694 = vmul.f32 %v6566, %v1535
      %v6695 = vmul.f32 %v6567, %v1535
      %v6696 = vmul.f32 %v6568, %v1535
      %v6697 = vmul.f32 %v6569, %v1535
      %v6698 = vmul.f32 %v6570, %v1535
      %v6699 = vmul.f32 %v6571, %v1535
      %v6700 = vmul.f32 %v6572, %v1535
      %v6701 = vmul.f32 %v6573, %v1535
      %v6702 = vmul.f32 %v6574, %v1535
      %v6703 = vmul.f32 %v6575, %v1535
      %v6704 = vmul.f32 %v6576, %v1535
      %v6705 = vmul.f32 %v6577, %v1535
      %v6706 = vmul.f32 %v6578, %v1535
      %v6707 = vmul.f32 %v6579, %v1535
      %v6708 = vmul.f32 %v6580, %v1535
      %v6709 = vmul.f32 %v6581, %v1535
      %v6710 = vmul.f32 %v6582, %v1535
      %v6711 = vmul.f32 %v6583, %v1535
      %v6712 = vmul.f32 %v6584, %v1535
      %v6713 = vmul.f32 %v6585, %v1535
      %v6714 = vmul.f32 %v6586, %v1535
      %v6715 = vmul.f32 %v6587, %v1535
      %v6716 = vmul.f32 %v6588, %v1535
      %v6717 = vmul.f32 %v6589, %v1535
      %v6718 = vmul.f32 %v6590, %v1535
      %v6719 = vmul.f32 %v6591, %v1535
      %v6720 = vmul.f32 %v6592, %v1535
      %v6721 = vmul.f32 %v6593, %v1535
      %v6722 = vmul.f32 %v6594, %v1535
      %v6723 = vmul.f32 %v6595, %v1535
      %v6724 = vmul.f32 %v6596, %v1535
      %v6725 = vmul.f32 %v6597, %v1535
      %v6726 = vmul.f32 %v6598, %v1535
      %v6727 = vmul.f32 %v6599, %v1535
      %v6728 = vmul.f32 %v6600, %v1535
      %v6729 = vmul.f32 %v6601, %v1535
      %v6730 = vadd.f32 %v6602, %v1667
      %v6731 = vadd.f32 %v6603, %v1667
      %v6732 = vadd.f32 %v6604, %v1667
      %v6733 = vadd.f32 %v6605, %v1667
      %v6734 = vadd.f32 %v6606, %v1667
      %v6735 = vadd.f32 %v6607, %v1667
      %v6736 = vadd.f32 %v6608, %v1667
      %v6737 = vadd.f32 %v6609, %v1667
      %v6738 = vadd.f32 %v6610, %v1667
      %v6739 = vadd.f32 %v6611, %v1667
      %v6740 = vadd.f32 %v6612, %v1667
      %v6741 = vadd.f32 %v6613, %v1667
      %v6742 = vadd.f32 %v6614, %v1667
      %v6743 = vadd.f32 %v6615, %v1667
      %v6744 = vadd.f32 %v6616, %v1667
      %v6745 = vadd.f32 %v6617, %v1667
      %v6746 = vadd.f32 %v6618, %v1667
      %v6747 = vadd.f32 %v6619, %v1667
      %v6748 = vadd.f32 %v6620, %v1667
      %v6749 = vadd.f32 %v6621, %v1667
      %v6750 = vadd.f32 %v6622, %v1667
      %v6751 = vadd.f32 %v6623, %v1667
      %v6752 = vadd.f32 %v6624, %v1667
      %v6753 = vadd.f32 %v6625, %v1667
      %v6754 = vadd.f32 %v6626, %v1667
      %v6755 = vadd.f32 %v6627, %v1667
      %v6756 = vadd.f32 %v6628, %v1667
      %v6757 = vadd.f32 %v6629, %v1667
      %v6758 = vadd.f32 %v6630, %v1667
      %v6759 = vadd.f32 %v6631, %v1667
      %v6760 = vadd.f32 %v6632, %v1667
      %v6761 = vadd.f32 %v6633, %v1667
      %v6762 = vadd.f32 %v6634, %v1667
      %v6763 = vadd.f32 %v6635, %v1667
      %v6764 = vadd.f32 %v6636, %v1667
      %v6765 = vadd.f32 %v6637, %v1667
      %v6766 = vadd.f32 %v6638, %v1667
      %v6767 = vadd.f32 %v6639, %v1667
      %v6768 = vadd.f32 %v6640, %v1667
      %v6769 = vadd.f32 %v6641, %v1667
      %v6770 = vadd.f32 %v6642, %v1667
      %v6771 = vadd.f32 %v6643, %v1667
      %v6772 = vadd.f32 %v6644, %v1667
      %v6773 = vadd.f32 %v6645, %v1667
      %v6774 = vadd.f32 %v6646, %v1667
      %v6775 = vadd.f32 %v6647, %v1667
      %v6776 = vadd.f32 %v6648, %v1667
      %v6777 = vadd.f32 %v6649, %v1667
      %v6778 = vadd.f32 %v6650, %v1667
      %v6779 = vadd.f32 %v6651, %v1667
      %v6780 = vadd.f32 %v6652, %v1667
      %v6781 = vadd.f32 %v6653, %v1667
      %v6782 = vadd.f32 %v6654, %v1667
      %v6783 = vadd.f32 %v6655, %v1667
      %v6784 = vadd.f32 %v6656, %v1667
      %v6785 = vadd.f32 %v6657, %v1667
      %v6786 = vadd.f32 %v6658, %v1667
      %v6787 = vadd.f32 %v6659, %v1667
      %v6788 = vadd.f32 %v6660, %v1667
      %v6789 = vadd.f32 %v6661, %v1667
      %v6790 = vadd.f32 %v6662, %v1667
      %v6791 = vadd.f32 %v6663, %v1667
      %v6792 = vadd.f32 %v6664, %v1667
      %v6793 = vadd.f32 %v6665, %v1667
      %v6794 = vadd.f32 %v6666, %v1667
      %v6795 = vadd.f32 %v6667, %v1667
      %v6796 = vadd.f32 %v6668, %v1667
      %v6797 = vadd.f32 %v6669, %v1667
      %v6798 = vadd.f32 %v6670, %v1667
      %v6799 = vadd.f32 %v6671, %v1667
      %v6800 = vadd.f32 %v6672, %v1667
      %v6801 = vadd.f32 %v6673, %v1667
      %v6802 = vadd.f32 %v6674, %v1667
      %v6803 = vadd.f32 %v6675, %v1667
      %v6804 = vadd.f32 %v6676, %v1667
      %v6805 = vadd.f32 %v6677, %v1667
      %v6806 = vadd.f32 %v6678, %v1667
      %v6807 = vadd.f32 %v6679, %v1667
      %v6808 = vadd.f32 %v6680, %v1667
      %v6809 = vadd.f32 %v6681, %v1667
      %v6810 = vadd.f32 %v6682, %v1667
      %v6811 = vadd.f32 %v6683, %v1667
      %v6812 = vadd.f32 %v6684, %v1667
      %v6813 = vadd.f32 %v6685, %v1667
      %v6814 = vadd.f32 %v6686, %v1667
      %v6815 = vadd.f32 %v6687, %v1667
      %v6816 = vadd.f32 %v6688, %v1667
      %v6817 = vadd.f32 %v6689, %v1667
      %v6818 = vadd.f32 %v6690, %v1667
      %v6819 = vadd.f32 %v6691, %v1667
      %v6820 = vadd.f32 %v6692, %v1667
      %v6821 = vadd.f32 %v6693, %v1667
      %v6822 = vadd.f32 %v6694, %v1667
      %v6823 = vadd.f32 %v6695, %v1667
      %v6824 = vadd.f32 %v6696, %v1667
      %v6825 = vadd.f32 %v6697, %v1667
      %v6826 = vadd.f32 %v6698, %v1667
      %v6827 = vadd.f32 %v6699, %v1667
      %v6828 = vadd.f32 %v6700, %v1667
      %v6829 = vadd.f32 %v6701, %v1667
      %v6830 = vadd.f32 %v6702, %v1667
      %v6831 = vadd.f32 %v6703, %v1667
      %v6832 = vadd.f32 %v6704, %v1667
      %v6833 = vadd.f32 %v6705, %v1667
      %v6834 = vadd.f32 %v6706, %v1667
      %v6835 = vadd.f32 %v6707, %v1667
      %v6836 = vadd.f32 %v6708, %v1667
      %v6837 = vadd.f32 %v6709, %v1667
      %v6838 = vadd.f32 %v6710, %v1667
      %v6839 = vadd.f32 %v6711, %v1667
      %v6840 = vadd.f32 %v6712, %v1667
      %v6841 = vadd.f32 %v6713, %v1667
      %v6842 = vadd.f32 %v6714, %v1667
      %v6843 = vadd.f32 %v6715, %v1667
      %v6844 = vadd.f32 %v6716, %v1667
      %v6845 = vadd.f32 %v6717, %v1667
      %v6846 = vadd.f32 %v6718, %v1667
      %v6847 = vadd.f32 %v6719, %v1667
      %v6848 = vadd.f32 %v6720, %v1667
      %v6849 = vadd.f32 %v6721, %v1667
      %v6850 = vadd.f32 %v6722, %v1667
      %v6851 = vadd.f32 %v6723, %v1667
      %v6852 = vadd.f32 %v6724, %v1667
      %v6853 = vadd.f32 %v6725, %v1667
      %v6854 = vadd.f32 %v6726, %v1667
      %v6855 = vadd.f32 %v6727, %v1667
      %v6856 = vadd.f32 %v6728, %v1667
      %v6857 = vadd.f32 %v6729, %v1667
      %v6858 = vmax.f32 %v5128, %v6730
      %v6859 = vmax.f32 %v5129, %v6731
      %v6860 = vmax.f32 %v5130, %v6732
      %v6861 = vmax.f32 %v5131, %v6733
      %v6862 = vmax.f32 %v5132, %v6734
      %v6863 = vmax.f32 %v5133, %v6735
      %v6864 = vmax.f32 %v5134, %v6736
      %v6865 = vmax.f32 %v5135, %v6737
      %v6866 = vmax.f32 %v5136, %v6738
      %v6867 = vmax.f32 %v5137, %v6739
      %v6868 = vmax.f32 %v5138, %v6740
      %v6869 = vmax.f32 %v5139, %v6741
      %v6870 = vmax.f32 %v5140, %v6742
      %v6871 = vmax.f32 %v5141, %v6743
      %v6872 = vmax.f32 %v5142, %v6744
      %v6873 = vmax.f32 %v5143, %v6745
      %v6874 = vmax.f32 %v5144, %v6746
      %v6875 = vmax.f32 %v5145, %v6747
      %v6876 = vmax.f32 %v5146, %v6748
      %v6877 = vmax.f32 %v5147, %v6749
      %v6878 = vmax.f32 %v5148, %v6750
      %v6879 = vmax.f32 %v5149, %v6751
      %v6880 = vmax.f32 %v5150, %v6752
      %v6881 = vmax.f32 %v5151, %v6753
      %v6882 = vmax.f32 %v5152, %v6754
      %v6883 = vmax.f32 %v5153, %v6755
      %v6884 = vmax.f32 %v5154, %v6756
      %v6885 = vmax.f32 %v5155, %v6757
      %v6886 = vmax.f32 %v5156, %v6758
      %v6887 = vmax.f32 %v5157, %v6759
      %v6888 = vmax.f32 %v5158, %v6760
      %v6889 = vmax.f32 %v5159, %v6761
      %v6890 = vmax.f32 %v5160, %v6762
      %v6891 = vmax.f32 %v5161, %v6763
      %v6892 = vmax.f32 %v5162, %v6764
      %v6893 = vmax.f32 %v5163, %v6765
      %v6894 = vmax.f32 %v5164, %v6766
      %v6895 = vmax.f32 %v5165, %v6767
      %v6896 = vmax.f32 %v5166, %v6768
      %v6897 = vmax.f32 %v5167, %v6769
      %v6898 = vmax.f32 %v5168, %v6770
      %v6899 = vmax.f32 %v5169, %v6771
      %v6900 = vmax.f32 %v5170, %v6772
      %v6901 = vmax.f32 %v5171, %v6773
      %v6902 = vmax.f32 %v5172, %v6774
      %v6903 = vmax.f32 %v5173, %v6775
      %v6904 = vmax.f32 %v5174, %v6776
      %v6905 = vmax.f32 %v5175, %v6777
      %v6906 = vmax.f32 %v5176, %v6778
      %v6907 = vmax.f32 %v5177, %v6779
      %v6908 = vmax.f32 %v5178, %v6780
      %v6909 = vmax.f32 %v5179, %v6781
      %v6910 = vmax.f32 %v5180, %v6782
      %v6911 = vmax.f32 %v5181, %v6783
      %v6912 = vmax.f32 %v5182, %v6784
      %v6913 = vmax.f32 %v5183, %v6785
      %v6914 = vmax.f32 %v5184, %v6786
      %v6915 = vmax.f32 %v5185, %v6787
      %v6916 = vmax.f32 %v5186, %v6788
      %v6917 = vmax.f32 %v5187, %v6789
      %v6918 = vmax.f32 %v5188, %v6790
      %v6919 = vmax.f32 %v5189, %v6791
      %v6920 = vmax.f32 %v5190, %v6792
      %v6921 = vmax.f32 %v5191, %v6793
      %v6922 = vmax.f32 %v5192, %v6794
      %v6923 = vmax.f32 %v5193, %v6795
      %v6924 = vmax.f32 %v5194, %v6796
      %v6925 = vmax.f32 %v5195, %v6797
      %v6926 = vmax.f32 %v5196, %v6798
      %v6927 = vmax.f32 %v5197, %v6799
      %v6928 = vmax.f32 %v5198, %v6800
      %v6929 = vmax.f32 %v5199, %v6801
      %v6930 = vmax.f32 %v5200, %v6802
      %v6931 = vmax.f32 %v5201, %v6803
      %v6932 = vmax.f32 %v5202, %v6804
      %v6933 = vmax.f32 %v5203, %v6805
      %v6934 = vmax.f32 %v5204, %v6806
      %v6935 = vmax.f32 %v5205, %v6807
      %v6936 = vmax.f32 %v5206, %v6808
      %v6937 = vmax.f32 %v5207, %v6809
      %v6938 = vmax.f32 %v5208, %v6810
      %v6939 = vmax.f32 %v5209, %v6811
      %v6940 = vmax.f32 %v5210, %v6812
      %v6941 = vmax.f32 %v5211, %v6813
      %v6942 = vmax.f32 %v5212, %v6814
      %v6943 = vmax.f32 %v5213, %v6815
      %v6944 = vmax.f32 %v5214, %v6816
      %v6945 = vmax.f32 %v5215, %v6817
      %v6946 = vmax.f32 %v5216, %v6818
      %v6947 = vmax.f32 %v5217, %v6819
      %v6948 = vmax.f32 %v5218, %v6820
      %v6949 = vmax.f32 %v5219, %v6821
      %v6950 = vmax.f32 %v5220, %v6822
      %v6951 = vmax.f32 %v5221, %v6823
      %v6952 = vmax.f32 %v5222, %v6824
      %v6953 = vmax.f32 %v5223, %v6825
      %v6954 = vmax.f32 %v5224, %v6826
      %v6955 = vmax.f32 %v5225, %v6827
      %v6956 = vmax.f32 %v5226, %v6828
      %v6957 = vmax.f32 %v5227, %v6829
      %v6958 = vmax.f32 %v5228, %v6830
      %v6959 = vmax.f32 %v5229, %v6831
      %v6960 = vmax.f32 %v5230, %v6832
      %v6961 = vmax.f32 %v5231, %v6833
      %v6962 = vmax.f32 %v5232, %v6834
      %v6963 = vmax.f32 %v5233, %v6835
      %v6964 = vmax.f32 %v5234, %v6836
      %v6965 = vmax.f32 %v5235, %v6837
      %v6966 = vmax.f32 %v5236, %v6838
      %v6967 = vmax.f32 %v5237, %v6839
      %v6968 = vmax.f32 %v5238, %v6840
      %v6969 = vmax.f32 %v5239, %v6841
      %v6970 = vmax.f32 %v5240, %v6842
      %v6971 = vmax.f32 %v5241, %v6843
      %v6972 = vmax.f32 %v5242, %v6844
      %v6973 = vmax.f32 %v5243, %v6845
      %v6974 = vmax.f32 %v5244, %v6846
      %v6975 = vmax.f32 %v5245, %v6847
      %v6976 = vmax.f32 %v5246, %v6848
      %v6977 = vmax.f32 %v5247, %v6849
      %v6978 = vmax.f32 %v5248, %v6850
      %v6979 = vmax.f32 %v5249, %v6851
      %v6980 = vmax.f32 %v5250, %v6852
      %v6981 = vmax.f32 %v5251, %v6853
      %v6982 = vmax.f32 %v5252, %v6854
      %v6983 = vmax.f32 %v5253, %v6855
      %v6984 = vmax.f32 %v5254, %v6856
      %v6985 = vmax.f32 %v5255, %v6857
      %vm6986 = vcmask 195584
      %6987 = vst.msk [vmem:[%s170] sm:$0xff] %vm6986, %v6858
      %6988 = vst.msk [vmem:[%s170 + $0x8] sm:$0xff] %vm6986, %v6859
      %6989 = vst.msk [vmem:[%s170 + $0x10] sm:$0xff] %vm6986, %v6860
      %6990 = vst.msk [vmem:[%s170 + $0x18] sm:$0xff] %vm6986, %v6861
      %6991 = vst.msk [vmem:[%s170 + $0x20] sm:$0xff] %vm6986, %v6862
      %6992 = vst.msk [vmem:[%s170 + $0x28] sm:$0xff] %vm6986, %v6863
      %6993 = vst.msk [vmem:[%s170 + $0x30] sm:$0xff] %vm6986, %v6864
      %6994 = vst.msk [vmem:[%s170 + $0x38] sm:$0xff] %vm6986, %v6865
      %6995 = vst.msk [vmem:[%s170 + $0x40] sm:$0xff] %vm6986, %v6866
      %6996 = vst.msk [vmem:[%s170 + $0x48] sm:$0xff] %vm6986, %v6867
      %6997 = vst.msk [vmem:[%s170 + $0x50] sm:$0xff] %vm6986, %v6868
      %6998 = vst.msk [vmem:[%s170 + $0x58] sm:$0xff] %vm6986, %v6869
      %6999 = vst.msk [vmem:[%s170 + $0x60] sm:$0xff] %vm6986, %v6870
      %7000 = vst.msk [vmem:[%s170 + $0x68] sm:$0xff] %vm6986, %v6871
      %7001 = vst.msk [vmem:[%s170 + $0x70] sm:$0xff] %vm6986, %v6872
      %7002 = vst.msk [vmem:[%s170 + $0x78] sm:$0xff] %vm6986, %v6873
      %7003 = vst.msk [vmem:[%s170 + $0x80] sm:$0xff] %vm6986, %v6874
      %7004 = vst.msk [vmem:[%s170 + $0x88] sm:$0xff] %vm6986, %v6875
      %7005 = vst.msk [vmem:[%s170 + $0x90] sm:$0xff] %vm6986, %v6876
      %7006 = vst.msk [vmem:[%s170 + $0x98] sm:$0xff] %vm6986, %v6877
      %7007 = vst.msk [vmem:[%s170 + $0xa0] sm:$0xff] %vm6986, %v6878
      %7008 = vst.msk [vmem:[%s170 + $0xa8] sm:$0xff] %vm6986, %v6879
      %7009 = vst.msk [vmem:[%s170 + $0xb0] sm:$0xff] %vm6986, %v6880
      %7010 = vst.msk [vmem:[%s170 + $0xb8] sm:$0xff] %vm6986, %v6881
      %7011 = vst.msk [vmem:[%s170 + $0xc0] sm:$0xff] %vm6986, %v6882
      %7012 = vst.msk [vmem:[%s170 + $0xc8] sm:$0xff] %vm6986, %v6883
      %7013 = vst.msk [vmem:[%s170 + $0xd0] sm:$0xff] %vm6986, %v6884
      %7014 = vst.msk [vmem:[%s170 + $0xd8] sm:$0xff] %vm6986, %v6885
      %7015 = vst.msk [vmem:[%s170 + $0xe0] sm:$0xff] %vm6986, %v6886
      %7016 = vst.msk [vmem:[%s170 + $0xe8] sm:$0xff] %vm6986, %v6887
      %7017 = vst.msk [vmem:[%s170 + $0xf0] sm:$0xff] %vm6986, %v6888
      %7018 = vst.msk [vmem:[%s170 + $0xf8] sm:$0xff] %vm6986, %v6889
      %7019 = vst.msk [vmem:[%s170 + $0x100] sm:$0xff] %vm6986, %v6890
      %7020 = vst.msk [vmem:[%s170 + $0x108] sm:$0xff] %vm6986, %v6891
      %7021 = vst.msk [vmem:[%s170 + $0x110] sm:$0xff] %vm6986, %v6892
      %7022 = vst.msk [vmem:[%s170 + $0x118] sm:$0xff] %vm6986, %v6893
      %7023 = vst.msk [vmem:[%s170 + $0x120] sm:$0xff] %vm6986, %v6894
      %7024 = vst.msk [vmem:[%s170 + $0x128] sm:$0xff] %vm6986, %v6895
      %7025 = vst.msk [vmem:[%s170 + $0x130] sm:$0xff] %vm6986, %v6896
      %7026 = vst.msk [vmem:[%s170 + $0x138] sm:$0xff] %vm6986, %v6897
      %7027 = vst.msk [vmem:[%s170 + $0x140] sm:$0xff] %vm6986, %v6898
      %7028 = vst.msk [vmem:[%s170 + $0x148] sm:$0xff] %vm6986, %v6899
      %7029 = vst.msk [vmem:[%s170 + $0x150] sm:$0xff] %vm6986, %v6900
      %7030 = vst.msk [vmem:[%s170 + $0x158] sm:$0xff] %vm6986, %v6901
      %7031 = vst.msk [vmem:[%s170 + $0x160] sm:$0xff] %vm6986, %v6902
      %7032 = vst.msk [vmem:[%s170 + $0x168] sm:$0xff] %vm6986, %v6903
      %7033 = vst.msk [vmem:[%s170 + $0x170] sm:$0xff] %vm6986, %v6904
      %7034 = vst.msk [vmem:[%s170 + $0x178] sm:$0xff] %vm6986, %v6905
      %7035 = vst.msk [vmem:[%s170 + $0x180] sm:$0xff] %vm6986, %v6906
      %7036 = vst.msk [vmem:[%s170 + $0x188] sm:$0xff] %vm6986, %v6907
      %7037 = vst.msk [vmem:[%s170 + $0x190] sm:$0xff] %vm6986, %v6908
      %7038 = vst.msk [vmem:[%s170 + $0x198] sm:$0xff] %vm6986, %v6909
      %7039 = vst.msk [vmem:[%s170 + $0x1a0] sm:$0xff] %vm6986, %v6910
      %7040 = vst.msk [vmem:[%s170 + $0x1a8] sm:$0xff] %vm6986, %v6911
      %7041 = vst.msk [vmem:[%s170 + $0x1b0] sm:$0xff] %vm6986, %v6912
      %7042 = vst.msk [vmem:[%s170 + $0x1b8] sm:$0xff] %vm6986, %v6913
      %7043 = vst.msk [vmem:[%s170 + $0x1c0] sm:$0xff] %vm6986, %v6914
      %7044 = vst.msk [vmem:[%s170 + $0x1c8] sm:$0xff] %vm6986, %v6915
      %7045 = vst.msk [vmem:[%s170 + $0x1d0] sm:$0xff] %vm6986, %v6916
      %7046 = vst.msk [vmem:[%s170 + $0x1d8] sm:$0xff] %vm6986, %v6917
      %7047 = vst.msk [vmem:[%s170 + $0x1e0] sm:$0xff] %vm6986, %v6918
      %7048 = vst.msk [vmem:[%s170 + $0x1e8] sm:$0xff] %vm6986, %v6919
      %7049 = vst.msk [vmem:[%s170 + $0x1f0] sm:$0xff] %vm6986, %v6920
      %7050 = vst.msk [vmem:[%s170 + $0x1f8] sm:$0xff] %vm6986, %v6921
      %7051 = vst.msk [vmem:[%s170 + $0x200] sm:$0xff] %vm6986, %v6922
      %7052 = vst.msk [vmem:[%s170 + $0x208] sm:$0xff] %vm6986, %v6923
      %7053 = vst.msk [vmem:[%s170 + $0x210] sm:$0xff] %vm6986, %v6924
      %7054 = vst.msk [vmem:[%s170 + $0x218] sm:$0xff] %vm6986, %v6925
      %7055 = vst.msk [vmem:[%s170 + $0x220] sm:$0xff] %vm6986, %v6926
      %7056 = vst.msk [vmem:[%s170 + $0x228] sm:$0xff] %vm6986, %v6927
      %7057 = vst.msk [vmem:[%s170 + $0x230] sm:$0xff] %vm6986, %v6928
      %7058 = vst.msk [vmem:[%s170 + $0x238] sm:$0xff] %vm6986, %v6929
      %7059 = vst.msk [vmem:[%s170 + $0x240] sm:$0xff] %vm6986, %v6930
      %7060 = vst.msk [vmem:[%s170 + $0x248] sm:$0xff] %vm6986, %v6931
      %7061 = vst.msk [vmem:[%s170 + $0x250] sm:$0xff] %vm6986, %v6932
      %7062 = vst.msk [vmem:[%s170 + $0x258] sm:$0xff] %vm6986, %v6933
      %7063 = vst.msk [vmem:[%s170 + $0x260] sm:$0xff] %vm6986, %v6934
      %7064 = vst.msk [vmem:[%s170 + $0x268] sm:$0xff] %vm6986, %v6935
      %7065 = vst.msk [vmem:[%s170 + $0x270] sm:$0xff] %vm6986, %v6936
      %7066 = vst.msk [vmem:[%s170 + $0x278] sm:$0xff] %vm6986, %v6937
      %7067 = vst.msk [vmem:[%s170 + $0x280] sm:$0xff] %vm6986, %v6938
      %7068 = vst.msk [vmem:[%s170 + $0x288] sm:$0xff] %vm6986, %v6939
      %7069 = vst.msk [vmem:[%s170 + $0x290] sm:$0xff] %vm6986, %v6940
      %7070 = vst.msk [vmem:[%s170 + $0x298] sm:$0xff] %vm6986, %v6941
      %7071 = vst.msk [vmem:[%s170 + $0x2a0] sm:$0xff] %vm6986, %v6942
      %7072 = vst.msk [vmem:[%s170 + $0x2a8] sm:$0xff] %vm6986, %v6943
      %7073 = vst.msk [vmem:[%s170 + $0x2b0] sm:$0xff] %vm6986, %v6944
      %7074 = vst.msk [vmem:[%s170 + $0x2b8] sm:$0xff] %vm6986, %v6945
      %7075 = vst.msk [vmem:[%s170 + $0x2c0] sm:$0xff] %vm6986, %v6946
      %7076 = vst.msk [vmem:[%s170 + $0x2c8] sm:$0xff] %vm6986, %v6947
      %7077 = vst.msk [vmem:[%s170 + $0x2d0] sm:$0xff] %vm6986, %v6948
      %7078 = vst.msk [vmem:[%s170 + $0x2d8] sm:$0xff] %vm6986, %v6949
      %7079 = vst.msk [vmem:[%s170 + $0x2e0] sm:$0xff] %vm6986, %v6950
      %7080 = vst.msk [vmem:[%s170 + $0x2e8] sm:$0xff] %vm6986, %v6951
      %7081 = vst.msk [vmem:[%s170 + $0x2f0] sm:$0xff] %vm6986, %v6952
      %7082 = vst.msk [vmem:[%s170 + $0x2f8] sm:$0xff] %vm6986, %v6953
      %7083 = vst.msk [vmem:[%s170 + $0x300] sm:$0xff] %vm6986, %v6954
      %7084 = vst.msk [vmem:[%s170 + $0x308] sm:$0xff] %vm6986, %v6955
      %7085 = vst.msk [vmem:[%s170 + $0x310] sm:$0xff] %vm6986, %v6956
      %7086 = vst.msk [vmem:[%s170 + $0x318] sm:$0xff] %vm6986, %v6957
      %7087 = vst.msk [vmem:[%s170 + $0x320] sm:$0xff] %vm6986, %v6958
      %7088 = vst.msk [vmem:[%s170 + $0x328] sm:$0xff] %vm6986, %v6959
      %7089 = vst.msk [vmem:[%s170 + $0x330] sm:$0xff] %vm6986, %v6960
      %7090 = vst.msk [vmem:[%s170 + $0x338] sm:$0xff] %vm6986, %v6961
      %7091 = vst.msk [vmem:[%s170 + $0x340] sm:$0xff] %vm6986, %v6962
      %7092 = vst.msk [vmem:[%s170 + $0x348] sm:$0xff] %vm6986, %v6963
      %7093 = vst.msk [vmem:[%s170 + $0x350] sm:$0xff] %vm6986, %v6964
      %7094 = vst.msk [vmem:[%s170 + $0x358] sm:$0xff] %vm6986, %v6965
      %7095 = vst.msk [vmem:[%s170 + $0x360] sm:$0xff] %vm6986, %v6966
      %7096 = vst.msk [vmem:[%s170 + $0x368] sm:$0xff] %vm6986, %v6967
      %7097 = vst.msk [vmem:[%s170 + $0x370] sm:$0xff] %vm6986, %v6968
      %7098 = vst.msk [vmem:[%s170 + $0x378] sm:$0xff] %vm6986, %v6969
      %7099 = vst.msk [vmem:[%s170 + $0x380] sm:$0xff] %vm6986, %v6970
      %7100 = vst.msk [vmem:[%s170 + $0x388] sm:$0xff] %vm6986, %v6971
      %7101 = vst.msk [vmem:[%s170 + $0x390] sm:$0xff] %vm6986, %v6972
      %7102 = vst.msk [vmem:[%s170 + $0x398] sm:$0xff] %vm6986, %v6973
      %7103 = vst.msk [vmem:[%s170 + $0x3a0] sm:$0xff] %vm6986, %v6974
      %7104 = vst.msk [vmem:[%s170 + $0x3a8] sm:$0xff] %vm6986, %v6975
      %7105 = vst.msk [vmem:[%s170 + $0x3b0] sm:$0xff] %vm6986, %v6976
      %7106 = vst.msk [vmem:[%s170 + $0x3b8] sm:$0xff] %vm6986, %v6977
      %7107 = vst.msk [vmem:[%s170 + $0x3c0] sm:$0xff] %vm6986, %v6978
      %7108 = vst.msk [vmem:[%s170 + $0x3c8] sm:$0xff] %vm6986, %v6979
      %7109 = vst.msk [vmem:[%s170 + $0x3d0] sm:$0xff] %vm6986, %v6980
      %7110 = vst.msk [vmem:[%s170 + $0x3d8] sm:$0xff] %vm6986, %v6981
      %7111 = vst.msk [vmem:[%s170 + $0x3e0] sm:$0xff] %vm6986, %v6982
      %7112 = vst.msk [vmem:[%s170 + $0x3e8] sm:$0xff] %vm6986, %v6983
      %7113 = vst.msk [vmem:[%s170 + $0x3f0] sm:$0xff] %vm6986, %v6984
      %7114 = vst.msk [vmem:[%s170 + $0x3f8] sm:$0xff] %vm6986, %v6985
      %p7115 = scmp.lt.s32.totalorder %s14, 1
      %s7116 = scalar_select %p7115, %s14, 1
      %s7117 = smul.addr %s7116, 128
      %s7118 = smul.addr %s7117, 8
      %s7119 = scalar_lea.vmem %s3, %s7118
      // Predicated region
      $region33: #{cnn2d_forward.4} parent=31 // pred_check
        %p7120 = pneg %p100
      $region34: #{cnn2d_forward.4} parent=31 // pred_check_branch
        %7122 = sbr.rel (%p7120) target = $region36
      $region35: #{cnn2d_forward.4} parent=31 // pred_region
        _
      $region36: #{cnn2d_forward.4} parent=31 // pred_fallthru
        _
    $region32: #{cnn2d_forward.4} parent=5 // pred_fallthru
      _
    %p7123 = scmp.le.s32.totalorder 2, %s9
    // Predicated region
    $region37: #{cnn2d_forward.4} parent=5 // pred_check
      %p7124 = pneg %p7123
    $region38: #{cnn2d_forward.4} parent=5 // pred_check_branch
      %7126 = sbr.rel (%p7124) target = $region40
    $region39: #{cnn2d_forward.4} parent=5 // pred_region
      %s7127 = ssub.s32 %s9, 2
      // Predicated region
      $region41: #{cnn2d_forward.4} parent=39 // pred_check
        %p7128 = pneg %p106
      $region42: #{cnn2d_forward.4} parent=39 // pred_check_branch
        %7130 = sbr.rel (%p7128) target = $region44
      $region43: #{cnn2d_forward.4} parent=39 // pred_region
        %p7131 = scmp.lt.s32.totalorder %s15, 1
        %s7132 = scalar_select %p7131, %s15, 1
        %s7133 = smul.addr %s7132, 128
        %s7134 = smul.addr %s7133, 8
        %s7135 = scalar_lea.vmem %s3, %s7134
      $region44: #{cnn2d_forward.4} parent=39 // pred_fallthru
        _
    $region40: #{cnn2d_forward.4} parent=5 // pred_fallthru
      _
  $region6: #{cnn2d_forward.4} parent=0 // loop_footer
    %s13 = sadd.s32 1, %s9
  $region7: #{cnn2d_forward.4} parent=0 // loop_footer_branch
    %8 = sbr.rel target = $region3
  $region8: #{cnn2d_forward.4} parent=0 // loop_exit
    _

// kernel: cnn2d_forward.5
$region0: #{cnn2d_forward.5}
  #allocation0 [shape = 'u32[]', space=smem, size = 0x4, offset = 0x4, fixed_abs, tag = 'smem constant byte address 0x4 - core index']
  #allocation1 [shape = 'u32[144,128]{1,0:T(1,128)}', space=vmem, size = 0x12000, scoped, tag = 'internal scratch']
  %s0 = inlined_call_operand.vmem [shape: f32[2,4,225,216], index: 0, kind: input, shape index: {}]
  %s1 = inlined_call_operand.vmem [shape: f32[216,32], index: 1, kind: input, shape index: {}]
  %s2 = inlined_call_operand.vmem [shape: f32[3,32], index: 2, kind: input, shape index: {}]
  %s3 = inlined_call_operand.vmem [shape: f32[2,225,32], index: 3, kind: output, shape index: {}]
  %s4 = sld [smem:[#allocation0]]
  $region45: #{cnn2d_forward.5} parent=0
    _
  %s6 = ssub.s32 1, %s4
  %s7 = scalar_select 0, %s6, %s4
  loop: start=0, step=1, limit=4
  $region2: #{cnn2d_forward.5} parent=0 // loop_pre_header
    _
  $region3: #{cnn2d_forward.5} parent=0 // loop_header
    %s9 = sphi 0, %s13
    %p10 = scmp.ge.s32.totalorder %s9, 4
    %s19 = sphi 0, %s21
    %s22 = sphi 0, %s19
    %s23 = sphi 0, %s22
    %s39 = sphi 0, %s23
    %s43 = sphi 0, %s43
    %s45 = sphi 0, %s43
    %s46 = sphi 0, %s45
    %s60 = sphi 0, %s46
    %s64 = sphi 0, %s64
    %s66 = sphi 0, %s64
    %s67 = sphi 0, %s66
    %s81 = sphi 0, %s67
    %s87 = sphi 0, %s89
    %s90 = sphi 0, %s87
    %s91 = sphi 0, %s90
    %s107 = sphi 0, %s91
  $region4: #{cnn2d_forward.5} parent=0 // loop_header_branch
    %12 = sbr.rel (%p10) target = $region8
  $region5: #{cnn2d_forward.5} parent=0 // loop_body
    %s14 = ssub.s32 %s9, 1
    %s15 = ssub.s32 %s9, 2
    %s16 = sadd.s32 %s9, 1
    %s17 = ssub.s32 %s9, %s16
    %p18 = scmp.eq.s32.totalorder %s17, 0
    %s20 = sadd.s32 %s19, 1
    %s21 = scalar_select %p18, %s19, %s20
    %p24 = pneg %p18
    %p25 = scmp.eq.s32.totalorder %s9, 1
    %p26 = por %p24, %p25
    %p27 = scmp.ne.s32.totalorder %s19, %s22
    %p28 = scmp.eq.s32.totalorder %s9, 0
    %p29 = por %p27, %p28
    %p30 = scmp.ne.s32.totalorder %s19, %s22
    %p31 = scmp.eq.s32.totalorder %s14, 1
    %p32 = por %p30, %p31
    %p33 = scmp.ne.s32.totalorder %s22, %s23
    %p34 = scmp.eq.s32.totalorder %s14, 0
    %p35 = por %p33, %p34
    %p36 = scmp.ne.s32.totalorder %s22, %s23
    %p37 = scmp.eq.s32.totalorder %s15, 1
    %p38 = por %p36, %p37
    %p40 = scmp.ne.s32.totalorder %s23, %s39
    %p41 = scmp.eq.s32.totalorder %s15, 0
    %p42 = por %p40, %p41
    %s44 = sadd.s32 %s43, 1
    %p47 = scmp.eq.s32.totalorder %s9, 1
    %p48 = scmp.ne.s32.totalorder %s43, %s45
    %p49 = scmp.eq.s32.totalorder %s9, 0
    %p50 = por %p48, %p49
    %p51 = scmp.ne.s32.totalorder %s43, %s45
    %p52 = scmp.eq.s32.totalorder %s14, 1
    %p53 = por %p51, %p52
    %p54 = scmp.ne.s32.totalorder %s45, %s46
    %p55 = scmp.eq.s32.totalorder %s14, 0
    %p56 = por %p54, %p55
    %p57 = scmp.ne.s32.totalorder %s45, %s46
    %p58 = scmp.eq.s32.totalorder %s15, 1
    %p59 = por %p57, %p58
    %p61 = scmp.ne.s32.totalorder %s46, %s60
    %p62 = scmp.eq.s32.totalorder %s15, 0
    %p63 = por %p61, %p62
    %s65 = sadd.s32 %s64, 1
    %p68 = scmp.eq.s32.totalorder %s9, 1
    %p69 = scmp.ne.s32.totalorder %s64, %s66
    %p70 = scmp.eq.s32.totalorder %s9, 0
    %p71 = por %p69, %p70
    %p72 = scmp.ne.s32.totalorder %s64, %s66
    %p73 = scmp.eq.s32.totalorder %s14, 1
    %p74 = por %p72, %p73
    %p75 = scmp.ne.s32.totalorder %s66, %s67
    %p76 = scmp.eq.s32.totalorder %s14, 0
    %p77 = por %p75, %p76
    %p78 = scmp.ne.s32.totalorder %s66, %s67
    %p79 = scmp.eq.s32.totalorder %s15, 1
    %p80 = por %p78, %p79
    %p82 = scmp.ne.s32.totalorder %s67, %s81
    %p83 = scmp.eq.s32.totalorder %s15, 0
    %p84 = por %p82, %p83
    %s85 = ssub.s32 %s9, %s16
    %p86 = scmp.eq.s32.totalorder %s85, 0
    %s88 = sadd.s32 %s87, 1
    %s89 = scalar_select %p86, %s87, %s88
    %p92 = pneg %p86
    %p93 = scmp.eq.s32.totalorder %s9, 1
    %p94 = por %p92, %p93
    %p95 = scmp.ne.s32.totalorder %s87, %s90
    %p96 = scmp.eq.s32.totalorder %s9, 0
    %p97 = por %p95, %p96
    %p98 = scmp.ne.s32.totalorder %s87, %s90
    %p99 = scmp.eq.s32.totalorder %s14, 1
    %p100 = por %p98, %p99
    %p101 = scmp.ne.s32.totalorder %s90, %s91
    %p102 = scmp.eq.s32.totalorder %s14, 0
    %p103 = por %p101, %p102
    %p104 = scmp.ne.s32.totalorder %s90, %s91
    %p105 = scmp.eq.s32.totalorder %s15, 1
    %p106 = por %p104, %p105
    %p108 = scmp.ne.s32.totalorder %s91, %s107
    %p109 = scmp.eq.s32.totalorder %s15, 0
    %p110 = por %p108, %p109
    %p111 = scmp.le.s32.totalorder 1, %s9
    %p112 = scmp.lt.s32.totalorder %s9, 3
    %p113 = pnand %p111, %p112
    %p114 = pneg %p113
    // Predicated region
    $region9: #{cnn2d_forward.5} parent=5 // pred_check
      _
    $region10: #{cnn2d_forward.5} parent=5 // pred_check_branch
      %116 = sbr.rel (%p113) target = $region12
    $region11: #{cnn2d_forward.5} parent=5 // pred_region
      %s117 = ssub.s32 %s9, 1
      // Predicated region
      $region13: #{cnn2d_forward.5} parent=11 // pred_check
        %p118 = pneg %p56
      $region14: #{cnn2d_forward.5} parent=11 // pred_check_branch
        %120 = sbr.rel (%p118) target = $region16
      $region15: #{cnn2d_forward.5} parent=11 // pred_region
        _
      $region16: #{cnn2d_forward.5} parent=11 // pred_fallthru
        _
      // Predicated region
      $region17: #{cnn2d_forward.5} parent=11 // pred_check
        %p121 = pneg %p77
      $region18: #{cnn2d_forward.5} parent=11 // pred_check_branch
        %123 = sbr.rel (%p121) target = $region20
      $region19: #{cnn2d_forward.5} parent=11 // pred_region
        _
      $region20: #{cnn2d_forward.5} parent=11 // pred_fallthru
        _
    $region12: #{cnn2d_forward.5} parent=5 // pred_fallthru
      _
    %p124 = scmp.lt.s32.totalorder %s9, 2
    // Predicated region
    $region21: #{cnn2d_forward.5} parent=5 // pred_check
      %p125 = pneg %p124
    $region22: #{cnn2d_forward.5} parent=5 // pred_check_branch
      %127 = sbr.rel (%p125) target = $region24
    $region23: #{cnn2d_forward.5} parent=5 // pred_region
      // Predicated region
      $region25: #{cnn2d_forward.5} parent=23 // pred_check
        %p128 = pneg %p29
      $region26: #{cnn2d_forward.5} parent=23 // pred_check_branch
        %130 = sbr.rel (%p128) target = $region28
      $region27: #{cnn2d_forward.5} parent=23 // pred_region
        %p131 = scmp.lt.s32.totalorder %s9, 1
        %s132 = scalar_select %p131, %s9, 1
        %s133 = smul.addr %s132, 232
        %s134 = smul.addr %s133, 8
        %s135 = scalar_lea.vmem %s0, %s134
      $region28: #{cnn2d_forward.5} parent=23 // pred_fallthru
        _
    $region24: #{cnn2d_forward.5} parent=5 // pred_fallthru
      _
    %p136 = scmp.le.s32.totalorder 1, %s9
    %p137 = scmp.lt.s32.totalorder %s9, 3
    %p138 = pnand %p136, %p137
    %p139 = pneg %p138
    // Predicated region
    $region29: #{cnn2d_forward.5} parent=5 // pred_check
      _
    $region30: #{cnn2d_forward.5} parent=5 // pred_check_branch
      %141 = sbr.rel (%p138) target = $region32
    $region31: #{cnn2d_forward.5} parent=5 // pred_region
      %s142 = ssub.s32 %s9, 1
      %p143 = scmp.lt.s32.totalorder %s14, 1
      %s144 = scalar_select %p143, %s14, 1
      %s145 = smul.addr %s144, 232
      %s146 = smul.addr %s145, 8
      %s147 = scalar_lea.vmem %s0, %s146
      %p148 = pneg %p35
      %p149 = pneg %p32
      %p150 = pneg %p56
      %p151 = pneg %p53
      %p152 = pneg %p77
      %p153 = pneg %p74
      %p154 = pneg %p103
      %p155 = pneg %p100
      %p156 = scmp.lt.s32.totalorder %s14, 1
      %s157 = scalar_select %p156, %s14, 1
      %s158 = smul.addr %s157, 29
      %s159 = smul.addr %s158, 8
      %s160 = scalar_lea.vmem %s3, %s159
      %p161 = scmp.lt.s32.totalorder %s14, 1
      %s162 = scalar_select %p161, %s14, 1
      %s163 = smul.addr %s162, 232
      %s164 = smul.addr %s163, 8
      %s165 = scalar_lea.vmem %s0, %s164
      %p166 = scmp.lt.s32.totalorder %s14, 1
      %s167 = scalar_select %p166, %s14, 1
      %s168 = smul.addr %s167, 29
      %s169 = smul.addr %s168, 8
      %s170 = scalar_lea.vmem %s3, %s169
      %v171 = vld [vmem:[%s1] sm:$0xff]
      %v172 = vld [vmem:[%s1 + $0x8] sm:$0xff]
      %v173 = vld [vmem:[%s1 + $0x10] sm:$0xff]
      %v174 = vld [vmem:[%s1 + $0x18] sm:$0xff]
      %v175 = vld [vmem:[%s1 + $0x20] sm:$0xff]
      %v176 = vld [vmem:[%s1 + $0x28] sm:$0xff]
      %v177 = vld [vmem:[%s1 + $0x30] sm:$0xff]
      %v178 = vld [vmem:[%s1 + $0x38] sm:$0xff]
      %v179 = vld [vmem:[%s1 + $0x40] sm:$0xff]
      %v180 = vld [vmem:[%s1 + $0x48] sm:$0xff]
      %v181 = vld [vmem:[%s1 + $0x50] sm:$0xff]
      %v182 = vld [vmem:[%s1 + $0x58] sm:$0xff]
      %v183 = vld [vmem:[%s1 + $0x60] sm:$0xff]
      %v184 = vld [vmem:[%s1 + $0x68] sm:$0xff]
      %v185 = vld [vmem:[%s1 + $0x70] sm:$0xff]
      %v186 = vld [vmem:[%s1 + $0x78] sm:$0xff]
      %v187 = vld [vmem:[%s1 + $0x80] sm:$0xff]
      %v188 = vld [vmem:[%s1 + $0x88] sm:$0xff]
      %v189 = vld [vmem:[%s1 + $0x90] sm:$0xff]
      %v190 = vld [vmem:[%s1 + $0x98] sm:$0xff]
      %v191 = vld [vmem:[%s1 + $0xa0] sm:$0xff]
      %v192 = vld [vmem:[%s1 + $0xa8] sm:$0xff]
      %v193 = vld [vmem:[%s1 + $0xb0] sm:$0xff]
      %v194 = vld [vmem:[%s1 + $0xb8] sm:$0xff]
      %v195 = vld [vmem:[%s1 + $0xc0] sm:$0xff]
      %v196 = vld [vmem:[%s1 + $0xc8] sm:$0xff]
      %v197 = vld [vmem:[%s1 + $0xd0] sm:$0xff]
      %v198 = vld [vmem:[%s2] sm:$0x1]
      %v199 = vld [vmem:[%s2 + $0x1] sm:$0x1]
      %v200 = vld [vmem:[%s2 + $0x2] sm:$0x1]
      %v201 = vld [vmem:[%s165] sm:$0xff]
      %v202 = vld [vmem:[%s165 + $0x8] sm:$0xff]
      %v203 = vld [vmem:[%s165 + $0x10] sm:$0xff]
      %v204 = vld [vmem:[%s165 + $0x18] sm:$0xff]
      %v205 = vld [vmem:[%s165 + $0x20] sm:$0xff]
      %v206 = vld [vmem:[%s165 + $0x28] sm:$0xff]
      %v207 = vld [vmem:[%s165 + $0x30] sm:$0xff]
      %v208 = vld [vmem:[%s165 + $0x38] sm:$0xff]
      %v209 = vld [vmem:[%s165 + $0x40] sm:$0xff]
      %v210 = vld [vmem:[%s165 + $0x48] sm:$0xff]
      %v211 = vld [vmem:[%s165 + $0x50] sm:$0xff]
      %v212 = vld [vmem:[%s165 + $0x58] sm:$0xff]
      %v213 = vld [vmem:[%s165 + $0x60] sm:$0xff]
      %v214 = vld [vmem:[%s165 + $0x68] sm:$0xff]
      %v215 = vld [vmem:[%s165 + $0x70] sm:$0xff]
      %v216 = vld [vmem:[%s165 + $0x78] sm:$0xff]
      %v217 = vld [vmem:[%s165 + $0x80] sm:$0xff]
      %v218 = vld [vmem:[%s165 + $0x88] sm:$0xff]
      %v219 = vld [vmem:[%s165 + $0x90] sm:$0xff]
      %v220 = vld [vmem:[%s165 + $0x98] sm:$0xff]
      %v221 = vld [vmem:[%s165 + $0xa0] sm:$0xff]
      %v222 = vld [vmem:[%s165 + $0xa8] sm:$0xff]
      %v223 = vld [vmem:[%s165 + $0xb0] sm:$0xff]
      %v224 = vld [vmem:[%s165 + $0xb8] sm:$0xff]
      %v225 = vld [vmem:[%s165 + $0xc0] sm:$0xff]
      %v226 = vld [vmem:[%s165 + $0xc8] sm:$0xff]
      %v227 = vld [vmem:[%s165 + $0xd0] sm:$0xff]
      %v228 = vld [vmem:[%s165 + $0xd8] sm:$0xff]
      %v229 = vld [vmem:[%s165 + $0xe0] sm:$0xff]
      %v230 = vld [vmem:[%s165 + $0xe8] sm:$0xff]
      %v231 = vld [vmem:[%s165 + $0xf0] sm:$0xff]
      %v232 = vld [vmem:[%s165 + $0xf8] sm:$0xff]
      %v233 = vld [vmem:[%s165 + $0x100] sm:$0xff]
      %v234 = vld [vmem:[%s165 + $0x108] sm:$0xff]
      %v235 = vld [vmem:[%s165 + $0x110] sm:$0xff]
      %v236 = vld [vmem:[%s165 + $0x118] sm:$0xff]
      %v237 = vld [vmem:[%s165 + $0x120] sm:$0xff]
      %v238 = vld [vmem:[%s165 + $0x128] sm:$0xff]
      %v239 = vld [vmem:[%s165 + $0x130] sm:$0xff]
      %v240 = vld [vmem:[%s165 + $0x138] sm:$0xff]
      %v241 = vld [vmem:[%s165 + $0x140] sm:$0xff]
      %v242 = vld [vmem:[%s165 + $0x148] sm:$0xff]
      %v243 = vld [vmem:[%s165 + $0x150] sm:$0xff]
      %v244 = vld [vmem:[%s165 + $0x158] sm:$0xff]
      %v245 = vld [vmem:[%s165 + $0x160] sm:$0xff]
      %v246 = vld [vmem:[%s165 + $0x168] sm:$0xff]
      %v247 = vld [vmem:[%s165 + $0x170] sm:$0xff]
      %v248 = vld [vmem:[%s165 + $0x178] sm:$0xff]
      %v249 = vld [vmem:[%s165 + $0x180] sm:$0xff]
      %v250 = vld [vmem:[%s165 + $0x188] sm:$0xff]
      %v251 = vld [vmem:[%s165 + $0x190] sm:$0xff]
      %v252 = vld [vmem:[%s165 + $0x198] sm:$0xff]
      %v253 = vld [vmem:[%s165 + $0x1a0] sm:$0xff]
      %v254 = vld [vmem:[%s165 + $0x1a8] sm:$0xff]
      %v255 = vld [vmem:[%s165 + $0x1b0] sm:$0xff]
      %v256 = vld [vmem:[%s165 + $0x1b8] sm:$0xff]
      %v257 = vld [vmem:[%s165 + $0x1c0] sm:$0x1]
      %v258 = vld [vmem:[%s165 + $0x1c8] sm:$0x1]
      %v259 = vlaneseq
      %v260 = vshrl.u32 %v259, 7
      %v261 = vsub.s32 0, %v260
      %v262 = vrot.slane %v198, %v261
      %vm263 = vcmask 719872
      %v265 = vsel %vm263, %v202, 0
      %v268 = vsel %vm263, %v204, 0
      %v271 = vsel %vm263, %v206, 0
      %v274 = vsel %vm263, %v208, 0
      %v277 = vsel %vm263, %v210, 0
      %v280 = vsel %vm263, %v212, 0
      %v283 = vsel %vm263, %v214, 0
      %v286 = vsel %vm263, %v216, 0
      %v289 = vsel %vm263, %v218, 0
      %v292 = vsel %vm263, %v220, 0
      %v295 = vsel %vm263, %v222, 0
      %v298 = vsel %vm263, %v224, 0
      %v301 = vsel %vm263, %v226, 0
      %v304 = vsel %vm263, %v228, 0
      %v307 = vsel %vm263, %v230, 0
      %v310 = vsel %vm263, %v232, 0
      %v313 = vsel %vm263, %v234, 0
      %v316 = vsel %vm263, %v236, 0
      %v319 = vsel %vm263, %v238, 0
      %v322 = vsel %vm263, %v240, 0
      %v325 = vsel %vm263, %v242, 0
      %v328 = vsel %vm263, %v244, 0
      %v331 = vsel %vm263, %v246, 0
      %v334 = vsel %vm263, %v248, 0
      %v337 = vsel %vm263, %v250, 0
      %v340 = vsel %vm263, %v252, 0
      %v343 = vsel %vm263, %v254, 0
      %v346 = vsel %vm263, %v256, 0
      %v349 = vsel %vm263, %v258, 0
      %351 = vmatprep.subr.mxu0 0.0
      %352 = vmatpush1.msra.mxu0 %v171
      %353 = vmatprep.subr.mxu0 0.0
      %354 = vmatpush1.msra.mxu0 %v172
      %355 = vmatprep.subr.mxu0 0.0
      %356 = vmatpush1.msra.mxu0 %v173
      %357 = vmatprep.subr.mxu0 0.0
      %358 = vmatpush1.msra.mxu0 %v174
      %359 = vmatprep.subr.mxu0 0.0
      %360 = vmatpush1.msra.mxu0 %v175
      %361 = vmatprep.subr.mxu0 0.0
      %362 = vmatpush1.msra.mxu0 %v176
      %363 = vmatprep.subr.mxu0 0.0
      %364 = vmatpush1.msra.mxu0 %v177
      %365 = vmatprep.subr.mxu0 0.0
      %366 = vmatpush1.msra.mxu0 %v178
      %367 = vmatprep.subr.mxu0 0.0
      %368 = vmatpush1.msra.mxu0 %v179
      %369 = vmatprep.subr.mxu0 0.0
      %370 = vmatpush1.msra.mxu0 %v180
      %371 = vmatprep.subr.mxu0 0.0
      %372 = vmatpush1.msra.mxu0 %v181
      %373 = vmatprep.subr.mxu0 0.0
      %374 = vmatpush1.msra.mxu0 %v182
      %375 = vmatprep.subr.mxu0 0.0
      %376 = vmatpush1.msra.mxu0 %v183
      %377 = vmatprep.subr.mxu0 0.0
      %378 = vmatpush1.msra.mxu0 %v184
      %379 = vmatprep.subr.mxu0 0.0
      %380 = vmatpush1.msra.mxu0 %v185
      %381 = vmatprep.subr.mxu0 0.0
      %382 = vmatpush1.msra.mxu0 %v186
      %383 = vmatprep.subr.mxu0 0.0
      %384 = vmatpush1.msra.mxu0 %v187
      %385 = vmatprep.subr.mxu0 0.0
      %386 = vmatpush1.msra.mxu0 %v188
      %387 = vmatprep.subr.mxu0 0.0
      %388 = vmatpush1.msra.mxu0 %v189
      %389 = vmatprep.subr.mxu0 0.0
      %390 = vmatpush1.msra.mxu0 %v190
      %391 = vmatprep.subr.mxu0 0.0
      %392 = vmatpush1.msra.mxu0 %v191
      %393 = vmatprep.subr.mxu0 0.0
      %394 = vmatpush1.msra.mxu0 %v192
      %395 = vmatprep.subr.mxu0 0.0
      %396 = vmatpush1.msra.mxu0 %v193
      %397 = vmatprep.subr.mxu0 0.0
      %398 = vmatpush1.msra.mxu0 %v194
      %399 = vmatprep.subr.mxu0 0.0
      %400 = vmatpush1.msra.mxu0 %v195
      %401 = vmatprep.subr.mxu0 0.0
      %402 = vmatpush1.msra.mxu0 %v196
      %403 = vmatprep.subr.mxu0 0.0
      %404 = vmatpush1.msra.mxu0 %v197
      %405 = vmatprep.subr.mxu0 0.0
      %406 = vmatpush1.msra.mxu0 0.0
      %407 = vmatprep.subr.mxu0 0.0
      %408 = vmatpush1.msra.mxu0 0.0
      %409 = vmatprep.subr.mxu0 0.0
      %410 = vmatpush1.msra.mxu0 0.0
      %411 = vmatprep.subr.mxu0 0.0
      %412 = vmatpush1.msra.mxu0 0.0
      %413 = vmatprep.subr.mxu0 0.0
      %414 = vmatpush1.msra.mxu0 0.0
      %415 = vmatprep.mubr.f32.mxu0 %v265
      %416 = vmatmul.mubr.f32.gmra.mrb[0].mxu0 %v201
      %v417 = vpop.f32.mrb[0].mxu0
      %v418 = vadd.f32 %v262, %v417
      %v419 = vpop.f32.mrb[0].mxu0
      %420 = vmatprep.mubr.f32.mxu0 %v268
      %421 = vmatmul.mubr.f32.gmra.mrb[0].mxu0 %v203
      %v422 = vpop.f32.mrb[0].mxu0
      %v423 = vadd.f32 %v262, %v422
      %v424 = vpop.f32.mrb[0].mxu0
      %425 = vmatprep.mubr.f32.mxu0 %v271
      %426 = vmatmul.mubr.f32.gmra.mrb[0].mxu0 %v205
      %v427 = vpop.f32.mrb[0].mxu0
      %v428 = vadd.f32 %v262, %v427
      %v429 = vpop.f32.mrb[0].mxu0
      %430 = vmatprep.mubr.f32.mxu0 %v274
      %431 = vmatmul.mubr.f32.gmra.mrb[0].mxu0 %v207
      %v432 = vpop.f32.mrb[0].mxu0
      %v433 = vadd.f32 %v262, %v432
      %v434 = vpop.f32.mrb[0].mxu0
      %435 = vmatprep.mubr.f32.mxu0 %v277
      %436 = vmatmul.mubr.f32.gmra.mrb[0].mxu0 %v209
      %v437 = vpop.f32.mrb[0].mxu0
      %v438 = vadd.f32 %v262, %v437
      %v439 = vpop.f32.mrb[0].mxu0
      %440 = vmatprep.mubr.f32.mxu0 %v280
      %441 = vmatmul.mubr.f32.gmra.mrb[0].mxu0 %v211
      %v442 = vpop.f32.mrb[0].mxu0
      %v443 = vadd.f32 %v262, %v442
      %v444 = vpop.f32.mrb[0].mxu0
      %445 = vmatprep.mubr.f32.mxu0 %v283
      %446 = vmatmul.mubr.f32.gmra.mrb[0].mxu0 %v213
      %v447 = vpop.f32.mrb[0].mxu0
      %v448 = vadd.f32 %v262, %v447
      %v449 = vpop.f32.mrb[0].mxu0
      %450 = vmatprep.mubr.f32.mxu0 %v286
      %451 = vmatmul.mubr.f32.gmra.mrb[0].mxu0 %v215
      %v452 = vpop.f32.mrb[0].mxu0
      %v453 = vadd.f32 %v262, %v452
      %v454 = vpop.f32.mrb[0].mxu0
      %455 = vmatprep.mubr.f32.mxu0 %v289
      %456 = vmatmul.mubr.f32.gmra.mrb[0].mxu0 %v217
      %v457 = vpop.f32.mrb[0].mxu0
      %v458 = vadd.f32 %v262, %v457
      %v459 = vpop.f32.mrb[0].mxu0
      %460 = vmatprep.mubr.f32.mxu0 %v292
      %461 = vmatmul.mubr.f32.gmra.mrb[0].mxu0 %v219
      %v462 = vpop.f32.mrb[0].mxu0
      %v463 = vadd.f32 %v262, %v462
      %v464 = vpop.f32.mrb[0].mxu0
      %465 = vmatprep.mubr.f32.mxu0 %v295
      %466 = vmatmul.mubr.f32.gmra.mrb[0].mxu0 %v221
      %v467 = vpop.f32.mrb[0].mxu0
      %v468 = vadd.f32 %v262, %v467
      %v469 = vpop.f32.mrb[0].mxu0
      %470 = vmatprep.mubr.f32.mxu0 %v298
      %471 = vmatmul.mubr.f32.gmra.mrb[0].mxu0 %v223
      %v472 = vpop.f32.mrb[0].mxu0
      %v473 = vadd.f32 %v262, %v472
      %v474 = vpop.f32.mrb[0].mxu0
      %475 = vmatprep.mubr.f32.mxu0 %v301
      %476 = vmatmul.mubr.f32.gmra.mrb[0].mxu0 %v225
      %v477 = vpop.f32.mrb[0].mxu0
      %v478 = vadd.f32 %v262, %v477
      %v479 = vpop.f32.mrb[0].mxu0
      %480 = vmatprep.mubr.f32.mxu0 %v304
      %481 = vmatmul.mubr.f32.gmra.mrb[0].mxu0 %v227
      %v482 = vpop.f32.mrb[0].mxu0
      %v483 = vadd.f32 %v262, %v482
      %v484 = vpop.f32.mrb[0].mxu0
      %485 = vmatprep.mubr.f32.mxu0 %v307
      %486 = vmatmul.mubr.f32.gmra.mrb[0].mxu0 %v229
      %v487 = vpop.f32.mrb[0].mxu0
      %v488 = vadd.f32 %v262, %v487
      %v489 = vpop.f32.mrb[0].mxu0
      %490 = vmatprep.mubr.f32.mxu0 %v310
      %491 = vmatmul.mubr.f32.gmra.mrb[0].mxu0 %v231
      %v492 = vpop.f32.mrb[0].mxu0
      %v493 = vadd.f32 %v262, %v492
      %v494 = vpop.f32.mrb[0].mxu0
      %495 = vmatprep.mubr.f32.mxu0 %v313
      %496 = vmatmul.mubr.f32.gmra.mrb[0].mxu0 %v233
      %v497 = vpop.f32.mrb[0].mxu0
      %v498 = vadd.f32 %v262, %v497
      %v499 = vpop.f32.mrb[0].mxu0
      %500 = vmatprep.mubr.f32.mxu0 %v316
      %501 = vmatmul.mubr.f32.gmra.mrb[0].mxu0 %v235
      %v502 = vpop.f32.mrb[0].mxu0
      %v503 = vadd.f32 %v262, %v502
      %v504 = vpop.f32.mrb[0].mxu0
      %505 = vmatprep.mubr.f32.mxu0 %v319
      %506 = vmatmul.mubr.f32.gmra.mrb[0].mxu0 %v237
      %v507 = vpop.f32.mrb[0].mxu0
      %v508 = vadd.f32 %v262, %v507
      %v509 = vpop.f32.mrb[0].mxu0
      %510 = vmatprep.mubr.f32.mxu0 %v322
      %511 = vmatmul.mubr.f32.gmra.mrb[0].mxu0 %v239
      %v512 = vpop.f32.mrb[0].mxu0
      %v513 = vadd.f32 %v262, %v512
      %v514 = vpop.f32.mrb[0].mxu0
      %515 = vmatprep.mubr.f32.mxu0 %v325
      %516 = vmatmul.mubr.f32.gmra.mrb[0].mxu0 %v241
      %v517 = vpop.f32.mrb[0].mxu0
      %v518 = vadd.f32 %v262, %v517
      %v519 = vpop.f32.mrb[0].mxu0
      %520 = vmatprep.mubr.f32.mxu0 %v328
      %521 = vmatmul.mubr.f32.gmra.mrb[0].mxu0 %v243
      %v522 = vpop.f32.mrb[0].mxu0
      %v523 = vadd.f32 %v262, %v522
      %v524 = vpop.f32.mrb[0].mxu0
      %525 = vmatprep.mubr.f32.mxu0 %v331
      %526 = vmatmul.mubr.f32.gmra.mrb[0].mxu0 %v245
      %v527 = vpop.f32.mrb[0].mxu0
      %v528 = vadd.f32 %v262, %v527
      %v529 = vpop.f32.mrb[0].mxu0
      %530 = vmatprep.mubr.f32.mxu0 %v334
      %531 = vmatmul.mubr.f32.gmra.mrb[0].mxu0 %v247
      %v532 = vpop.f32.mrb[0].mxu0
      %v533 = vadd.f32 %v262, %v532
      %v534 = vpop.f32.mrb[0].mxu0
      %535 = vmatprep.mubr.f32.mxu0 %v337
      %536 = vmatmul.mubr.f32.gmra.mrb[0].mxu0 %v249
      %v537 = vpop.f32.mrb[0].mxu0
      %v538 = vadd.f32 %v262, %v537
      %v539 = vpop.f32.mrb[0].mxu0
      %540 = vmatprep.mubr.f32.mxu0 %v340
      %541 = vmatmul.mubr.f32.gmra.mrb[0].mxu0 %v251
      %v542 = vpop.f32.mrb[0].mxu0
      %v543 = vadd.f32 %v262, %v542
      %v544 = vpop.f32.mrb[0].mxu0
      %545 = vmatprep.mubr.f32.mxu0 %v343
      %546 = vmatmul.mubr.f32.gmra.mrb[0].mxu0 %v253
      %v547 = vpop.f32.mrb[0].mxu0
      %v548 = vadd.f32 %v262, %v547
      %v549 = vpop.f32.mrb[0].mxu0
      %550 = vmatprep.mubr.f32.mxu0 %v346
      %551 = vmatmul.mubr.f32.gmra.mrb[0].mxu0 %v255
      %v552 = vpop.f32.mrb[0].mxu0
      %v553 = vadd.f32 %v262, %v552
      %v554 = vpop.f32.mrb[0].mxu0
      %555 = vmatprep.mubr.f32.mxu0 %v349
      %556 = vmatmul.mubr.f32.gmra.mrb[0].mxu0 %v257
      %v557 = vpop.f32.mrb[0].mxu0
      %v558 = vadd.f32 %v262, %v557
      %v559 = vpop.f32.mrb[0].mxu0
      %560 = vdwg.mxu0
      %v561 = vmax.f32 %v418, 0.0
      %v562 = vmax.f32 %v423, 0.0
      %v563 = vmax.f32 %v428, 0.0
      %v564 = vmax.f32 %v433, 0.0
      %v565 = vmax.f32 %v438, 0.0
      %v566 = vmax.f32 %v443, 0.0
      %v567 = vmax.f32 %v448, 0.0
      %v568 = vmax.f32 %v453, 0.0
      %v569 = vmax.f32 %v458, 0.0
      %v570 = vmax.f32 %v463, 0.0
      %v571 = vmax.f32 %v468, 0.0
      %v572 = vmax.f32 %v473, 0.0
      %v573 = vmax.f32 %v478, 0.0
      %v574 = vmax.f32 %v483, 0.0
      %v575 = vmax.f32 %v488, 0.0
      %v576 = vmax.f32 %v493, 0.0
      %v577 = vmax.f32 %v498, 0.0
      %v578 = vmax.f32 %v503, 0.0
      %v579 = vmax.f32 %v508, 0.0
      %v580 = vmax.f32 %v513, 0.0
      %v581 = vmax.f32 %v518, 0.0
      %v582 = vmax.f32 %v523, 0.0
      %v583 = vmax.f32 %v528, 0.0
      %v584 = vmax.f32 %v533, 0.0
      %v585 = vmax.f32 %v538, 0.0
      %v586 = vmax.f32 %v543, 0.0
      %v587 = vmax.f32 %v548, 0.0
      %v588 = vmax.f32 %v553, 0.0
      %v589 = vmax.f32 %v558, 0.0
      %v590 = vlaneseq
      %v591 = vshrl.u32 %v590, 7
      %v592 = vsub.s32 0, %v591
      %v593 = vrot.slane %v199, %v592
      %v594 = vmul.f32 %v561, %v593
      %v595 = vmul.f32 %v562, %v593
      %v596 = vmul.f32 %v563, %v593
      %v597 = vmul.f32 %v564, %v593
      %v598 = vmul.f32 %v565, %v593
      %v599 = vmul.f32 %v566, %v593
      %v600 = vmul.f32 %v567, %v593
      %v601 = vmul.f32 %v568, %v593
      %v602 = vmul.f32 %v569, %v593
      %v603 = vmul.f32 %v570, %v593
      %v604 = vmul.f32 %v571, %v593
      %v605 = vmul.f32 %v572, %v593
      %v606 = vmul.f32 %v573, %v593
      %v607 = vmul.f32 %v574, %v593
      %v608 = vmul.f32 %v575, %v593
      %v609 = vmul.f32 %v576, %v593
      %v610 = vmul.f32 %v577, %v593
      %v611 = vmul.f32 %v578, %v593
      %v612 = vmul.f32 %v579, %v593
      %v613 = vmul.f32 %v580, %v593
      %v614 = vmul.f32 %v581, %v593
      %v615 = vmul.f32 %v582, %v593
      %v616 = vmul.f32 %v583, %v593
      %v617 = vmul.f32 %v584, %v593
      %v618 = vmul.f32 %v585, %v593
      %v619 = vmul.f32 %v586, %v593
      %v620 = vmul.f32 %v587, %v593
      %v621 = vmul.f32 %v588, %v593
      %v622 = vmul.f32 %v589, %v593
      %v623 = vlaneseq
      %v624 = vshrl.u32 %v623, 7
      %v625 = vsub.s32 0, %v624
      %v626 = vrot.slane %v200, %v625
      %v627 = vadd.f32 %v594, %v626
      %v628 = vadd.f32 %v595, %v626
      %v629 = vadd.f32 %v596, %v626
      %v630 = vadd.f32 %v597, %v626
      %v631 = vadd.f32 %v598, %v626
      %v632 = vadd.f32 %v599, %v626
      %v633 = vadd.f32 %v600, %v626
      %v634 = vadd.f32 %v601, %v626
      %v635 = vadd.f32 %v602, %v626
      %v636 = vadd.f32 %v603, %v626
      %v637 = vadd.f32 %v604, %v626
      %v638 = vadd.f32 %v605, %v626
      %v639 = vadd.f32 %v606, %v626
      %v640 = vadd.f32 %v607, %v626
      %v641 = vadd.f32 %v608, %v626
      %v642 = vadd.f32 %v609, %v626
      %v643 = vadd.f32 %v610, %v626
      %v644 = vadd.f32 %v611, %v626
      %v645 = vadd.f32 %v612, %v626
      %v646 = vadd.f32 %v613, %v626
      %v647 = vadd.f32 %v614, %v626
      %v648 = vadd.f32 %v615, %v626
      %v649 = vadd.f32 %v616, %v626
      %v650 = vadd.f32 %v617, %v626
      %v651 = vadd.f32 %v618, %v626
      %v652 = vadd.f32 %v619, %v626
      %v653 = vadd.f32 %v620, %v626
      %v654 = vadd.f32 %v621, %v626
      %v655 = vadd.f32 %v622, %v626
      %s656 = scalar_lea.vmem %s165, 464
      %v657 = vld [vmem:[%s656] sm:$0xff]
      %v658 = vld [vmem:[%s656 + $0x8] sm:$0xff]
      %v659 = vld [vmem:[%s656 + $0x10] sm:$0xff]
      %v660 = vld [vmem:[%s656 + $0x18] sm:$0xff]
      %v661 = vld [vmem:[%s656 + $0x20] sm:$0xff]
      %v662 = vld [vmem:[%s656 + $0x28] sm:$0xff]
      %v663 = vld [vmem:[%s656 + $0x30] sm:$0xff]
      %v664 = vld [vmem:[%s656 + $0x38] sm:$0xff]
      %v665 = vld [vmem:[%s656 + $0x40] sm:$0xff]
      %v666 = vld [vmem:[%s656 + $0x48] sm:$0xff]
      %v667 = vld [vmem:[%s656 + $0x50] sm:$0xff]
      %v668 = vld [vmem:[%s656 + $0x58] sm:$0xff]
      %v669 = vld [vmem:[%s656 + $0x60] sm:$0xff]
      %v670 = vld [vmem:[%s656 + $0x68] sm:$0xff]
      %v671 = vld [vmem:[%s656 + $0x70] sm:$0xff]
      %v672 = vld [vmem:[%s656 + $0x78] sm:$0xff]
      %v673 = vld [vmem:[%s656 + $0x80] sm:$0xff]
      %v674 = vld [vmem:[%s656 + $0x88] sm:$0xff]
      %v675 = vld [vmem:[%s656 + $0x90] sm:$0xff]
      %v676 = vld [vmem:[%s656 + $0x98] sm:$0xff]
      %v677 = vld [vmem:[%s656 + $0xa0] sm:$0xff]
      %v678 = vld [vmem:[%s656 + $0xa8] sm:$0xff]
      %v679 = vld [vmem:[%s656 + $0xb0] sm:$0xff]
      %v680 = vld [vmem:[%s656 + $0xb8] sm:$0xff]
      %v681 = vld [vmem:[%s656 + $0xc0] sm:$0xff]
      %v682 = vld [vmem:[%s656 + $0xc8] sm:$0xff]
      %v683 = vld [vmem:[%s656 + $0xd0] sm:$0xff]
      %v684 = vld [vmem:[%s656 + $0xd8] sm:$0xff]
      %v685 = vld [vmem:[%s656 + $0xe0] sm:$0xff]
      %v686 = vld [vmem:[%s656 + $0xe8] sm:$0xff]
      %v687 = vld [vmem:[%s656 + $0xf0] sm:$0xff]
      %v688 = vld [vmem:[%s656 + $0xf8] sm:$0xff]
      %v689 = vld [vmem:[%s656 + $0x100] sm:$0xff]
      %v690 = vld [vmem:[%s656 + $0x108] sm:$0xff]
      %v691 = vld [vmem:[%s656 + $0x110] sm:$0xff]
      %v692 = vld [vmem:[%s656 + $0x118] sm:$0xff]
      %v693 = vld [vmem:[%s656 + $0x120] sm:$0xff]
      %v694 = vld [vmem:[%s656 + $0x128] sm:$0xff]
      %v695 = vld [vmem:[%s656 + $0x130] sm:$0xff]
      %v696 = vld [vmem:[%s656 + $0x138] sm:$0xff]
      %v697 = vld [vmem:[%s656 + $0x140] sm:$0xff]
      %v698 = vld [vmem:[%s656 + $0x148] sm:$0xff]
      %v699 = vld [vmem:[%s656 + $0x150] sm:$0xff]
      %v700 = vld [vmem:[%s656 + $0x158] sm:$0xff]
      %v701 = vld [vmem:[%s656 + $0x160] sm:$0xff]
      %v702 = vld [vmem:[%s656 + $0x168] sm:$0xff]
      %v703 = vld [vmem:[%s656 + $0x170] sm:$0xff]
      %v704 = vld [vmem:[%s656 + $0x178] sm:$0xff]
      %v705 = vld [vmem:[%s656 + $0x180] sm:$0xff]
      %v706 = vld [vmem:[%s656 + $0x188] sm:$0xff]
      %v707 = vld [vmem:[%s656 + $0x190] sm:$0xff]
      %v708 = vld [vmem:[%s656 + $0x198] sm:$0xff]
      %v709 = vld [vmem:[%s656 + $0x1a0] sm:$0xff]
      %v710 = vld [vmem:[%s656 + $0x1a8] sm:$0xff]
      %v711 = vld [vmem:[%s656 + $0x1b0] sm:$0xff]
      %v712 = vld [vmem:[%s656 + $0x1b8] sm:$0xff]
      %v713 = vld [vmem:[%s656 + $0x1c0] sm:$0x1]
      %v714 = vld [vmem:[%s656 + $0x1c8] sm:$0x1]
      %v716 = vsel %vm263, %v658, 0
      %v719 = vsel %vm263, %v660, 0
      %v722 = vsel %vm263, %v662, 0
      %v725 = vsel %vm263, %v664, 0
      %v728 = vsel %vm263, %v666, 0
      %v731 = vsel %vm263, %v668, 0
      %v734 = vsel %vm263, %v670, 0
      %v737 = vsel %vm263, %v672, 0
      %v740 = vsel %vm263, %v674, 0
      %v743 = vsel %vm263, %v676, 0
      %v746 = vsel %vm263, %v678, 0
      %v749 = vsel %vm263, %v680, 0
      %v752 = vsel %vm263, %v682, 0
      %v755 = vsel %vm263, %v684, 0
      %v758 = vsel %vm263, %v686, 0
      %v761 = vsel %vm263, %v688, 0
      %v764 = vsel %vm263, %v690, 0
      %v767 = vsel %vm263, %v692, 0
      %v770 = vsel %vm263, %v694, 0
      %v773 = vsel %vm263, %v696, 0
      %v776 = vsel %vm263, %v698, 0
      %v779 = vsel %vm263, %v700, 0
      %v782 = vsel %vm263, %v702, 0
      %v785 = vsel %vm263, %v704, 0
      %v788 = vsel %vm263, %v706, 0
      %v791 = vsel %vm263, %v708, 0
      %v794 = vsel %vm263, %v710, 0
      %v797 = vsel %vm263, %v712, 0
      %v800 = vsel %vm263, %v714, 0
      %802 = vmatprep.subr.mxu0 0.0
      %803 = vmatpush1.msra.mxu0 %v171
      %804 = vmatprep.subr.mxu0 0.0
      %805 = vmatpush1.msra.mxu0 %v172
      %806 = vmatprep.subr.mxu0 0.0
      %807 = vmatpush1.msra.mxu0 %v173
      %808 = vmatprep.subr.mxu0 0.0
      %809 = vmatpush1.msra.mxu0 %v174
      %810 = vmatprep.subr.mxu0 0.0
      %811 = vmatpush1.msra.mxu0 %v175
      %812 = vmatprep.subr.mxu0 0.0
      %813 = vmatpush1.msra.mxu0 %v176
      %814 = vmatprep.subr.mxu0 0.0
      %815 = vmatpush1.msra.mxu0 %v177
      %816 = vmatprep.subr.mxu0 0.0
      %817 = vmatpush1.msra.mxu0 %v178
      %818 = vmatprep.subr.mxu0 0.0
      %819 = vmatpush1.msra.mxu0 %v179
      %820 = vmatprep.subr.mxu0 0.0
      %821 = vmatpush1.msra.mxu0 %v180
      %822 = vmatprep.subr.mxu0 0.0
      %823 = vmatpush1.msra.mxu0 %v181
      %824 = vmatprep.subr.mxu0 0.0
      %825 = vmatpush1.msra.mxu0 %v182
      %826 = vmatprep.subr.mxu0 0.0
      %827 = vmatpush1.msra.mxu0 %v183
      %828 = vmatprep.subr.mxu0 0.0
      %829 = vmatpush1.msra.mxu0 %v184
      %830 = vmatprep.subr.mxu0 0.0
      %831 = vmatpush1.msra.mxu0 %v185
      %832 = vmatprep.subr.mxu0 0.0
      %833 = vmatpush1.msra.mxu0 %v186
      %834 = vmatprep.subr.mxu0 0.0
      %835 = vmatpush1.msra.mxu0 %v187
      %836 = vmatprep.subr.mxu0 0.0
      %837 = vmatpush1.msra.mxu0 %v188
      %838 = vmatprep.subr.mxu0 0.0
      %839 = vmatpush1.msra.mxu0 %v189
      %840 = vmatprep.subr.mxu0 0.0
      %841 = vmatpush1.msra.mxu0 %v190
      %842 = vmatprep.subr.mxu0 0.0
      %843 = vmatpush1.msra.mxu0 %v191
      %844 = vmatprep.subr.mxu0 0.0
      %845 = vmatpush1.msra.mxu0 %v192
      %846 = vmatprep.subr.mxu0 0.0
      %847 = vmatpush1.msra.mxu0 %v193
      %848 = vmatprep.subr.mxu0 0.0
      %849 = vmatpush1.msra.mxu0 %v194
      %850 = vmatprep.subr.mxu0 0.0
      %851 = vmatpush1.msra.mxu0 %v195
      %852 = vmatprep.subr.mxu0 0.0
      %853 = vmatpush1.msra.mxu0 %v196
      %854 = vmatprep.subr.mxu0 0.0
      %855 = vmatpush1.msra.mxu0 %v197
      %856 = vmatprep.subr.mxu0 0.0
      %857 = vmatpush1.msra.mxu0 0.0
      %858 = vmatprep.subr.mxu0 0.0
      %859 = vmatpush1.msra.mxu0 0.0
      %860 = vmatprep.subr.mxu0 0.0
      %861 = vmatpush1.msra.mxu0 0.0
      %862 = vmatprep.subr.mxu0 0.0
      %863 = vmatpush1.msra.mxu0 0.0
      %864 = vmatprep.subr.mxu0 0.0
      %865 = vmatpush1.msra.mxu0 0.0
      %866 = vmatprep.mubr.f32.mxu0 %v716
      %867 = vmatmul.mubr.f32.gmra.mrb[0].mxu0 %v657
      %v868 = vpop.f32.mrb[0].mxu0
      %v869 = vadd.f32 %v262, %v868
      %v870 = vpop.f32.mrb[0].mxu0
      %871 = vmatprep.mubr.f32.mxu0 %v719
      %872 = vmatmul.mubr.f32.gmra.mrb[0].mxu0 %v659
      %v873 = vpop.f32.mrb[0].mxu0
      %v874 = vadd.f32 %v262, %v873
      %v875 = vpop.f32.mrb[0].mxu0
      %876 = vmatprep.mubr.f32.mxu0 %v722
      %877 = vmatmul.mubr.f32.gmra.mrb[0].mxu0 %v661
      %v878 = vpop.f32.mrb[0].mxu0
      %v879 = vadd.f32 %v262, %v878
      %v880 = vpop.f32.mrb[0].mxu0
      %881 = vmatprep.mubr.f32.mxu0 %v725
      %882 = vmatmul.mubr.f32.gmra.mrb[0].mxu0 %v663
      %v883 = vpop.f32.mrb[0].mxu0
      %v884 = vadd.f32 %v262, %v883
      %v885 = vpop.f32.mrb[0].mxu0
      %886 = vmatprep.mubr.f32.mxu0 %v728
      %887 = vmatmul.mubr.f32.gmra.mrb[0].mxu0 %v665
      %v888 = vpop.f32.mrb[0].mxu0
      %v889 = vadd.f32 %v262, %v888
      %v890 = vpop.f32.mrb[0].mxu0
      %891 = vmatprep.mubr.f32.mxu0 %v731
      %892 = vmatmul.mubr.f32.gmra.mrb[0].mxu0 %v667
      %v893 = vpop.f32.mrb[0].mxu0
      %v894 = vadd.f32 %v262, %v893
      %v895 = vpop.f32.mrb[0].mxu0
      %896 = vmatprep.mubr.f32.mxu0 %v734
      %897 = vmatmul.mubr.f32.gmra.mrb[0].mxu0 %v669
      %v898 = vpop.f32.mrb[0].mxu0
      %v899 = vadd.f32 %v262, %v898
      %v900 = vpop.f32.mrb[0].mxu0
      %901 = vmatprep.mubr.f32.mxu0 %v737
      %902 = vmatmul.mubr.f32.gmra.mrb[0].mxu0 %v671
      %v903 = vpop.f32.mrb[0].mxu0
      %v904 = vadd.f32 %v262, %v903
      %v905 = vpop.f32.mrb[0].mxu0
      %906 = vmatprep.mubr.f32.mxu0 %v740
      %907 = vmatmul.mubr.f32.gmra.mrb[0].mxu0 %v673
      %v908 = vpop.f32.mrb[0].mxu0
      %v909 = vadd.f32 %v262, %v908
      %v910 = vpop.f32.mrb[0].mxu0
      %911 = vmatprep.mubr.f32.mxu0 %v743
      %912 = vmatmul.mubr.f32.gmra.mrb[0].mxu0 %v675
      %v913 = vpop.f32.mrb[0].mxu0
      %v914 = vadd.f32 %v262, %v913
      %v915 = vpop.f32.mrb[0].mxu0
      %916 = vmatprep.mubr.f32.mxu0 %v746
      %917 = vmatmul.mubr.f32.gmra.mrb[0].mxu0 %v677
      %v918 = vpop.f32.mrb[0].mxu0
      %v919 = vadd.f32 %v262, %v918
      %v920 = vpop.f32.mrb[0].mxu0
      %921 = vmatprep.mubr.f32.mxu0 %v749
      %922 = vmatmul.mubr.f32.gmra.mrb[0].mxu0 %v679
      %v923 = vpop.f32.mrb[0].mxu0
      %v924 = vadd.f32 %v262, %v923
      %v925 = vpop.f32.mrb[0].mxu0
      %926 = vmatprep.mubr.f32.mxu0 %v752
      %927 = vmatmul.mubr.f32.gmra.mrb[0].mxu0 %v681
      %v928 = vpop.f32.mrb[0].mxu0
      %v929 = vadd.f32 %v262, %v928
      %v930 = vpop.f32.mrb[0].mxu0
      %931 = vmatprep.mubr.f32.mxu0 %v755
      %932 = vmatmul.mubr.f32.gmra.mrb[0].mxu0 %v683
      %v933 = vpop.f32.mrb[0].mxu0
      %v934 = vadd.f32 %v262, %v933
      %v935 = vpop.f32.mrb[0].mxu0
      %936 = vmatprep.mubr.f32.mxu0 %v758
      %937 = vmatmul.mubr.f32.gmra.mrb[0].mxu0 %v685
      %v938 = vpop.f32.mrb[0].mxu0
      %v939 = vadd.f32 %v262, %v938
      %v940 = vpop.f32.mrb[0].mxu0
      %941 = vmatprep.mubr.f32.mxu0 %v761
      %942 = vmatmul.mubr.f32.gmra.mrb[0].mxu0 %v687
      %v943 = vpop.f32.mrb[0].mxu0
      %v944 = vadd.f32 %v262, %v943
      %v945 = vpop.f32.mrb[0].mxu0
      %946 = vmatprep.mubr.f32.mxu0 %v764
      %947 = vmatmul.mubr.f32.gmra.mrb[0].mxu0 %v689
      %v948 = vpop.f32.mrb[0].mxu0
      %v949 = vadd.f32 %v262, %v948
      %v950 = vpop.f32.mrb[0].mxu0
      %951 = vmatprep.mubr.f32.mxu0 %v767
      %952 = vmatmul.mubr.f32.gmra.mrb[0].mxu0 %v691
      %v953 = vpop.f32.mrb[0].mxu0
      %v954 = vadd.f32 %v262, %v953
      %v955 = vpop.f32.mrb[0].mxu0
      %956 = vmatprep.mubr.f32.mxu0 %v770
      %957 = vmatmul.mubr.f32.gmra.mrb[0].mxu0 %v693
      %v958 = vpop.f32.mrb[0].mxu0
      %v959 = vadd.f32 %v262, %v958
      %v960 = vpop.f32.mrb[0].mxu0
      %961 = vmatprep.mubr.f32.mxu0 %v773
      %962 = vmatmul.mubr.f32.gmra.mrb[0].mxu0 %v695
      %v963 = vpop.f32.mrb[0].mxu0
      %v964 = vadd.f32 %v262, %v963
      %v965 = vpop.f32.mrb[0].mxu0
      %966 = vmatprep.mubr.f32.mxu0 %v776
      %967 = vmatmul.mubr.f32.gmra.mrb[0].mxu0 %v697
      %v968 = vpop.f32.mrb[0].mxu0
      %v969 = vadd.f32 %v262, %v968
      %v970 = vpop.f32.mrb[0].mxu0
      %971 = vmatprep.mubr.f32.mxu0 %v779
      %972 = vmatmul.mubr.f32.gmra.mrb[0].mxu0 %v699
      %v973 = vpop.f32.mrb[0].mxu0
      %v974 = vadd.f32 %v262, %v973
      %v975 = vpop.f32.mrb[0].mxu0
      %976 = vmatprep.mubr.f32.mxu0 %v782
      %977 = vmatmul.mubr.f32.gmra.mrb[0].mxu0 %v701
      %v978 = vpop.f32.mrb[0].mxu0
      %v979 = vadd.f32 %v262, %v978
      %v980 = vpop.f32.mrb[0].mxu0
      %981 = vmatprep.mubr.f32.mxu0 %v785
      %982 = vmatmul.mubr.f32.gmra.mrb[0].mxu0 %v703
      %v983 = vpop.f32.mrb[0].mxu0
      %v984 = vadd.f32 %v262, %v983
      %v985 = vpop.f32.mrb[0].mxu0
      %986 = vmatprep.mubr.f32.mxu0 %v788
      %987 = vmatmul.mubr.f32.gmra.mrb[0].mxu0 %v705
      %v988 = vpop.f32.mrb[0].mxu0
      %v989 = vadd.f32 %v262, %v988
      %v990 = vpop.f32.mrb[0].mxu0
      %991 = vmatprep.mubr.f32.mxu0 %v791
      %992 = vmatmul.mubr.f32.gmra.mrb[0].mxu0 %v707
      %v993 = vpop.f32.mrb[0].mxu0
      %v994 = vadd.f32 %v262, %v993
      %v995 = vpop.f32.mrb[0].mxu0
      %996 = vmatprep.mubr.f32.mxu0 %v794
      %997 = vmatmul.mubr.f32.gmra.mrb[0].mxu0 %v709
      %v998 = vpop.f32.mrb[0].mxu0
      %v999 = vadd.f32 %v262, %v998
      %v1000 = vpop.f32.mrb[0].mxu0
      %1001 = vmatprep.mubr.f32.mxu0 %v797
      %1002 = vmatmul.mubr.f32.gmra.mrb[0].mxu0 %v711
      %v1003 = vpop.f32.mrb[0].mxu0
      %v1004 = vadd.f32 %v262, %v1003
      %v1005 = vpop.f32.mrb[0].mxu0
      %1006 = vmatprep.mubr.f32.mxu0 %v800
      %1007 = vmatmul.mubr.f32.gmra.mrb[0].mxu0 %v713
      %v1008 = vpop.f32.mrb[0].mxu0
      %v1009 = vadd.f32 %v262, %v1008
      %v1010 = vpop.f32.mrb[0].mxu0
      %1011 = vdwg.mxu0
      %v1012 = vmax.f32 %v869, 0.0
      %v1013 = vmax.f32 %v874, 0.0
      %v1014 = vmax.f32 %v879, 0.0
      %v1015 = vmax.f32 %v884, 0.0
      %v1016 = vmax.f32 %v889, 0.0
      %v1017 = vmax.f32 %v894, 0.0
      %v1018 = vmax.f32 %v899, 0.0
      %v1019 = vmax.f32 %v904, 0.0
      %v1020 = vmax.f32 %v909, 0.0
      %v1021 = vmax.f32 %v914, 0.0
      %v1022 = vmax.f32 %v919, 0.0
      %v1023 = vmax.f32 %v924, 0.0
      %v1024 = vmax.f32 %v929, 0.0
      %v1025 = vmax.f32 %v934, 0.0
      %v1026 = vmax.f32 %v939, 0.0
      %v1027 = vmax.f32 %v944, 0.0
      %v1028 = vmax.f32 %v949, 0.0
      %v1029 = vmax.f32 %v954, 0.0
      %v1030 = vmax.f32 %v959, 0.0
      %v1031 = vmax.f32 %v964, 0.0
      %v1032 = vmax.f32 %v969, 0.0
      %v1033 = vmax.f32 %v974, 0.0
      %v1034 = vmax.f32 %v979, 0.0
      %v1035 = vmax.f32 %v984, 0.0
      %v1036 = vmax.f32 %v989, 0.0
      %v1037 = vmax.f32 %v994, 0.0
      %v1038 = vmax.f32 %v999, 0.0
      %v1039 = vmax.f32 %v1004, 0.0
      %v1040 = vmax.f32 %v1009, 0.0
      %v1041 = vmul.f32 %v1012, %v593
      %v1042 = vmul.f32 %v1013, %v593
      %v1043 = vmul.f32 %v1014, %v593
      %v1044 = vmul.f32 %v1015, %v593
      %v1045 = vmul.f32 %v1016, %v593
      %v1046 = vmul.f32 %v1017, %v593
      %v1047 = vmul.f32 %v1018, %v593
      %v1048 = vmul.f32 %v1019, %v593
      %v1049 = vmul.f32 %v1020, %v593
      %v1050 = vmul.f32 %v1021, %v593
      %v1051 = vmul.f32 %v1022, %v593
      %v1052 = vmul.f32 %v1023, %v593
      %v1053 = vmul.f32 %v1024, %v593
      %v1054 = vmul.f32 %v1025, %v593
      %v1055 = vmul.f32 %v1026, %v593
      %v1056 = vmul.f32 %v1027, %v593
      %v1057 = vmul.f32 %v1028, %v593
      %v1058 = vmul.f32 %v1029, %v593
      %v1059 = vmul.f32 %v1030, %v593
      %v1060 = vmul.f32 %v1031, %v593
      %v1061 = vmul.f32 %v1032, %v593
      %v1062 = vmul.f32 %v1033, %v593
      %v1063 = vmul.f32 %v1034, %v593
      %v1064 = vmul.f32 %v1035, %v593
      %v1065 = vmul.f32 %v1036, %v593
      %v1066 = vmul.f32 %v1037, %v593
      %v1067 = vmul.f32 %v1038, %v593
      %v1068 = vmul.f32 %v1039, %v593
      %v1069 = vmul.f32 %v1040, %v593
      %v1070 = vadd.f32 %v1041, %v626
      %v1071 = vadd.f32 %v1042, %v626
      %v1072 = vadd.f32 %v1043, %v626
      %v1073 = vadd.f32 %v1044, %v626
      %v1074 = vadd.f32 %v1045, %v626
      %v1075 = vadd.f32 %v1046, %v626
      %v1076 = vadd.f32 %v1047, %v626
      %v1077 = vadd.f32 %v1048, %v626
      %v1078 = vadd.f32 %v1049, %v626
      %v1079 = vadd.f32 %v1050, %v626
      %v1080 = vadd.f32 %v1051, %v626
      %v1081 = vadd.f32 %v1052, %v626
      %v1082 = vadd.f32 %v1053, %v626
      %v1083 = vadd.f32 %v1054, %v626
      %v1084 = vadd.f32 %v1055, %v626
      %v1085 = vadd.f32 %v1056, %v626
      %v1086 = vadd.f32 %v1057, %v626
      %v1087 = vadd.f32 %v1058, %v626
      %v1088 = vadd.f32 %v1059, %v626
      %v1089 = vadd.f32 %v1060, %v626
      %v1090 = vadd.f32 %v1061, %v626
      %v1091 = vadd.f32 %v1062, %v626
      %v1092 = vadd.f32 %v1063, %v626
      %v1093 = vadd.f32 %v1064, %v626
      %v1094 = vadd.f32 %v1065, %v626
      %v1095 = vadd.f32 %v1066, %v626
      %v1096 = vadd.f32 %v1067, %v626
      %v1097 = vadd.f32 %v1068, %v626
      %v1098 = vadd.f32 %v1069, %v626
      %v1099 = vmax.f32 %v627, %v1070
      %v1100 = vmax.f32 %v628, %v1071
      %v1101 = vmax.f32 %v629, %v1072
      %v1102 = vmax.f32 %v630, %v1073
      %v1103 = vmax.f32 %v631, %v1074
      %v1104 = vmax.f32 %v632, %v1075
      %v1105 = vmax.f32 %v633, %v1076
      %v1106 = vmax.f32 %v634, %v1077
      %v1107 = vmax.f32 %v635, %v1078
      %v1108 = vmax.f32 %v636, %v1079
      %v1109 = vmax.f32 %v637, %v1080
      %v1110 = vmax.f32 %v638, %v1081
      %v1111 = vmax.f32 %v639, %v1082
      %v1112 = vmax.f32 %v640, %v1083
      %v1113 = vmax.f32 %v641, %v1084
      %v1114 = vmax.f32 %v642, %v1085
      %v1115 = vmax.f32 %v643, %v1086
      %v1116 = vmax.f32 %v644, %v1087
      %v1117 = vmax.f32 %v645, %v1088
      %v1118 = vmax.f32 %v646, %v1089
      %v1119 = vmax.f32 %v647, %v1090
      %v1120 = vmax.f32 %v648, %v1091
      %v1121 = vmax.f32 %v649, %v1092
      %v1122 = vmax.f32 %v650, %v1093
      %v1123 = vmax.f32 %v651, %v1094
      %v1124 = vmax.f32 %v652, %v1095
      %v1125 = vmax.f32 %v653, %v1096
      %v1126 = vmax.f32 %v654, %v1097
      %v1127 = vmax.f32 %v655, %v1098
      %s1128 = scalar_lea.vmem %s165, 928
      %v1129 = vld [vmem:[%s1128] sm:$0xff]
      %v1130 = vld [vmem:[%s1128 + $0x8] sm:$0xff]
      %v1131 = vld [vmem:[%s1128 + $0x10] sm:$0xff]
      %v1132 = vld [vmem:[%s1128 + $0x18] sm:$0xff]
      %v1133 = vld [vmem:[%s1128 + $0x20] sm:$0xff]
      %v1134 = vld [vmem:[%s1128 + $0x28] sm:$0xff]
      %v1135 = vld [vmem:[%s1128 + $0x30] sm:$0xff]
      %v1136 = vld [vmem:[%s1128 + $0x38] sm:$0xff]
      %v1137 = vld [vmem:[%s1128 + $0x40] sm:$0xff]
      %v1138 = vld [vmem:[%s1128 + $0x48] sm:$0xff]
      %v1139 = vld [vmem:[%s1128 + $0x50] sm:$0xff]
      %v1140 = vld [vmem:[%s1128 + $0x58] sm:$0xff]
      %v1141 = vld [vmem:[%s1128 + $0x60] sm:$0xff]
      %v1142 = vld [vmem:[%s1128 + $0x68] sm:$0xff]
      %v1143 = vld [vmem:[%s1128 + $0x70] sm:$0xff]
      %v1144 = vld [vmem:[%s1128 + $0x78] sm:$0xff]
      %v1145 = vld [vmem:[%s1128 + $0x80] sm:$0xff]
      %v1146 = vld [vmem:[%s1128 + $0x88] sm:$0xff]
      %v1147 = vld [vmem:[%s1128 + $0x90] sm:$0xff]
      %v1148 = vld [vmem:[%s1128 + $0x98] sm:$0xff]
      %v1149 = vld [vmem:[%s1128 + $0xa0] sm:$0xff]
      %v1150 = vld [vmem:[%s1128 + $0xa8] sm:$0xff]
      %v1151 = vld [vmem:[%s1128 + $0xb0] sm:$0xff]
      %v1152 = vld [vmem:[%s1128 + $0xb8] sm:$0xff]
      %v1153 = vld [vmem:[%s1128 + $0xc0] sm:$0xff]
      %v1154 = vld [vmem:[%s1128 + $0xc8] sm:$0xff]
      %v1155 = vld [vmem:[%s1128 + $0xd0] sm:$0xff]
      %v1156 = vld [vmem:[%s1128 + $0xd8] sm:$0xff]
      %v1157 = vld [vmem:[%s1128 + $0xe0] sm:$0xff]
      %v1158 = vld [vmem:[%s1128 + $0xe8] sm:$0xff]
      %v1159 = vld [vmem:[%s1128 + $0xf0] sm:$0xff]
      %v1160 = vld [vmem:[%s1128 + $0xf8] sm:$0xff]
      %v1161 = vld [vmem:[%s1128 + $0x100] sm:$0xff]
      %v1162 = vld [vmem:[%s1128 + $0x108] sm:$0xff]
      %v1163 = vld [vmem:[%s1128 + $0x110] sm:$0xff]
      %v1164 = vld [vmem:[%s1128 + $0x118] sm:$0xff]
      %v1165 = vld [vmem:[%s1128 + $0x120] sm:$0xff]
      %v1166 = vld [vmem:[%s1128 + $0x128] sm:$0xff]
      %v1167 = vld [vmem:[%s1128 + $0x130] sm:$0xff]
      %v1168 = vld [vmem:[%s1128 + $0x138] sm:$0xff]
      %v1169 = vld [vmem:[%s1128 + $0x140] sm:$0xff]
      %v1170 = vld [vmem:[%s1128 + $0x148] sm:$0xff]
      %v1171 = vld [vmem:[%s1128 + $0x150] sm:$0xff]
      %v1172 = vld [vmem:[%s1128 + $0x158] sm:$0xff]
      %v1173 = vld [vmem:[%s1128 + $0x160] sm:$0xff]
      %v1174 = vld [vmem:[%s1128 + $0x168] sm:$0xff]
      %v1175 = vld [vmem:[%s1128 + $0x170] sm:$0xff]
      %v1176 = vld [vmem:[%s1128 + $0x178] sm:$0xff]
      %v1177 = vld [vmem:[%s1128 + $0x180] sm:$0xff]
      %v1178 = vld [vmem:[%s1128 + $0x188] sm:$0xff]
      %v1179 = vld [vmem:[%s1128 + $0x190] sm:$0xff]
      %v1180 = vld [vmem:[%s1128 + $0x198] sm:$0xff]
      %v1181 = vld [vmem:[%s1128 + $0x1a0] sm:$0xff]
      %v1182 = vld [vmem:[%s1128 + $0x1a8] sm:$0xff]
      %v1183 = vld [vmem:[%s1128 + $0x1b0] sm:$0xff]
      %v1184 = vld [vmem:[%s1128 + $0x1b8] sm:$0xff]
      %v1185 = vld [vmem:[%s1128 + $0x1c0] sm:$0x1]
      %v1186 = vld [vmem:[%s1128 + $0x1c8] sm:$0x1]
      %v1188 = vsel %vm263, %v1130, 0
      %v1191 = vsel %vm263, %v1132, 0
      %v1194 = vsel %vm263, %v1134, 0
      %v1197 = vsel %vm263, %v1136, 0
      %v1200 = vsel %vm263, %v1138, 0
      %v1203 = vsel %vm263, %v1140, 0
      %v1206 = vsel %vm263, %v1142, 0
      %v1209 = vsel %vm263, %v1144, 0
      %v1212 = vsel %vm263, %v1146, 0
      %v1215 = vsel %vm263, %v1148, 0
      %v1218 = vsel %vm263, %v1150, 0
      %v1221 = vsel %vm263, %v1152, 0
      %v1224 = vsel %vm263, %v1154, 0
      %v1227 = vsel %vm263, %v1156, 0
      %v1230 = vsel %vm263, %v1158, 0
      %v1233 = vsel %vm263, %v1160, 0
      %v1236 = vsel %vm263, %v1162, 0
      %v1239 = vsel %vm263, %v1164, 0
      %v1242 = vsel %vm263, %v1166, 0
      %v1245 = vsel %vm263, %v1168, 0
      %v1248 = vsel %vm263, %v1170, 0
      %v1251 = vsel %vm263, %v1172, 0
      %v1254 = vsel %vm263, %v1174, 0
      %v1257 = vsel %vm263, %v1176, 0
      %v1260 = vsel %vm263, %v1178, 0
      %v1263 = vsel %vm263, %v1180, 0
      %v1266 = vsel %vm263, %v1182, 0
      %v1269 = vsel %vm263, %v1184, 0
      %v1272 = vsel %vm263, %v1186, 0
      %1274 = vmatprep.subr.mxu0 0.0
      %1275 = vmatpush1.msra.mxu0 %v171
      %1276 = vmatprep.subr.mxu0 0.0
      %1277 = vmatpush1.msra.mxu0 %v172
      %1278 = vmatprep.subr.mxu0 0.0
      %1279 = vmatpush1.msra.mxu0 %v173
      %1280 = vmatprep.subr.mxu0 0.0
      %1281 = vmatpush1.msra.mxu0 %v174
      %1282 = vmatprep.subr.mxu0 0.0
      %1283 = vmatpush1.msra.mxu0 %v175
      %1284 = vmatprep.subr.mxu0 0.0
      %1285 = vmatpush1.msra.mxu0 %v176
      %1286 = vmatprep.subr.mxu0 0.0
      %1287 = vmatpush1.msra.mxu0 %v177
      %1288 = vmatprep.subr.mxu0 0.0
      %1289 = vmatpush1.msra.mxu0 %v178
      %1290 = vmatprep.subr.mxu0 0.0
      %1291 = vmatpush1.msra.mxu0 %v179
      %1292 = vmatprep.subr.mxu0 0.0
      %1293 = vmatpush1.msra.mxu0 %v180
      %1294 = vmatprep.subr.mxu0 0.0
      %1295 = vmatpush1.msra.mxu0 %v181
      %1296 = vmatprep.subr.mxu0 0.0
      %1297 = vmatpush1.msra.mxu0 %v182
      %1298 = vmatprep.subr.mxu0 0.0
      %1299 = vmatpush1.msra.mxu0 %v183
      %1300 = vmatprep.subr.mxu0 0.0
      %1301 = vmatpush1.msra.mxu0 %v184
      %1302 = vmatprep.subr.mxu0 0.0
      %1303 = vmatpush1.msra.mxu0 %v185
      %1304 = vmatprep.subr.mxu0 0.0
      %1305 = vmatpush1.msra.mxu0 %v186
      %1306 = vmatprep.subr.mxu0 0.0
      %1307 = vmatpush1.msra.mxu0 %v187
      %1308 = vmatprep.subr.mxu0 0.0
      %1309 = vmatpush1.msra.mxu0 %v188
      %1310 = vmatprep.subr.mxu0 0.0
      %1311 = vmatpush1.msra.mxu0 %v189
      %1312 = vmatprep.subr.mxu0 0.0
      %1313 = vmatpush1.msra.mxu0 %v190
      %1314 = vmatprep.subr.mxu0 0.0
      %1315 = vmatpush1.msra.mxu0 %v191
      %1316 = vmatprep.subr.mxu0 0.0
      %1317 = vmatpush1.msra.mxu0 %v192
      %1318 = vmatprep.subr.mxu0 0.0
      %1319 = vmatpush1.msra.mxu0 %v193
      %1320 = vmatprep.subr.mxu0 0.0
      %1321 = vmatpush1.msra.mxu0 %v194
      %1322 = vmatprep.subr.mxu0 0.0
      %1323 = vmatpush1.msra.mxu0 %v195
      %1324 = vmatprep.subr.mxu0 0.0
      %1325 = vmatpush1.msra.mxu0 %v196
      %1326 = vmatprep.subr.mxu0 0.0
      %1327 = vmatpush1.msra.mxu0 %v197
      %1328 = vmatprep.subr.mxu0 0.0
      %1329 = vmatpush1.msra.mxu0 0.0
      %1330 = vmatprep.subr.mxu0 0.0
      %1331 = vmatpush1.msra.mxu0 0.0
      %1332 = vmatprep.subr.mxu0 0.0
      %1333 = vmatpush1.msra.mxu0 0.0
      %1334 = vmatprep.subr.mxu0 0.0
      %1335 = vmatpush1.msra.mxu0 0.0
      %1336 = vmatprep.subr.mxu0 0.0
      %1337 = vmatpush1.msra.mxu0 0.0
      %1338 = vmatprep.mubr.f32.mxu0 %v1188
      %1339 = vmatmul.mubr.f32.gmra.mrb[0].mxu0 %v1129
      %v1340 = vpop.f32.mrb[0].mxu0
      %v1341 = vadd.f32 %v262, %v1340
      %v1342 = vpop.f32.mrb[0].mxu0
      %1343 = vmatprep.mubr.f32.mxu0 %v1191
      %1344 = vmatmul.mubr.f32.gmra.mrb[0].mxu0 %v1131
      %v1345 = vpop.f32.mrb[0].mxu0
      %v1346 = vadd.f32 %v262, %v1345
      %v1347 = vpop.f32.mrb[0].mxu0
      %1348 = vmatprep.mubr.f32.mxu0 %v1194
      %1349 = vmatmul.mubr.f32.gmra.mrb[0].mxu0 %v1133
      %v1350 = vpop.f32.mrb[0].mxu0
      %v1351 = vadd.f32 %v262, %v1350
      %v1352 = vpop.f32.mrb[0].mxu0
      %1353 = vmatprep.mubr.f32.mxu0 %v1197
      %1354 = vmatmul.mubr.f32.gmra.mrb[0].mxu0 %v1135
      %v1355 = vpop.f32.mrb[0].mxu0
      %v1356 = vadd.f32 %v262, %v1355
      %v1357 = vpop.f32.mrb[0].mxu0
      %1358 = vmatprep.mubr.f32.mxu0 %v1200
      %1359 = vmatmul.mubr.f32.gmra.mrb[0].mxu0 %v1137
      %v1360 = vpop.f32.mrb[0].mxu0
      %v1361 = vadd.f32 %v262, %v1360
      %v1362 = vpop.f32.mrb[0].mxu0
      %1363 = vmatprep.mubr.f32.mxu0 %v1203
      %1364 = vmatmul.mubr.f32.gmra.mrb[0].mxu0 %v1139
      %v1365 = vpop.f32.mrb[0].mxu0
      %v1366 = vadd.f32 %v262, %v1365
      %v1367 = vpop.f32.mrb[0].mxu0
      %1368 = vmatprep.mubr.f32.mxu0 %v1206
      %1369 = vmatmul.mubr.f32.gmra.mrb[0].mxu0 %v1141
      %v1370 = vpop.f32.mrb[0].mxu0
      %v1371 = vadd.f32 %v262, %v1370
      %v1372 = vpop.f32.mrb[0].mxu0
      %1373 = vmatprep.mubr.f32.mxu0 %v1209
      %1374 = vmatmul.mubr.f32.gmra.mrb[0].mxu0 %v1143
      %v1375 = vpop.f32.mrb[0].mxu0
      %v1376 = vadd.f32 %v262, %v1375
      %v1377 = vpop.f32.mrb[0].mxu0
      %1378 = vmatprep.mubr.f32.mxu0 %v1212
      %1379 = vmatmul.mubr.f32.gmra.mrb[0].mxu0 %v1145
      %v1380 = vpop.f32.mrb[0].mxu0
      %v1381 = vadd.f32 %v262, %v1380
      %v1382 = vpop.f32.mrb[0].mxu0
      %1383 = vmatprep.mubr.f32.mxu0 %v1215
      %1384 = vmatmul.mubr.f32.gmra.mrb[0].mxu0 %v1147
      %v1385 = vpop.f32.mrb[0].mxu0
      %v1386 = vadd.f32 %v262, %v1385
      %v1387 = vpop.f32.mrb[0].mxu0
      %1388 = vmatprep.mubr.f32.mxu0 %v1218
      %1389 = vmatmul.mubr.f32.gmra.mrb[0].mxu0 %v1149
      %v1390 = vpop.f32.mrb[0].mxu0
      %v1391 = vadd.f32 %v262, %v1390
      %v1392 = vpop.f32.mrb[0].mxu0
      %1393 = vmatprep.mubr.f32.mxu0 %v1221
      %1394 = vmatmul.mubr.f32.gmra.mrb[0].mxu0 %v1151
      %v1395 = vpop.f32.mrb[0].mxu0
      %v1396 = vadd.f32 %v262, %v1395
      %v1397 = vpop.f32.mrb[0].mxu0
      %1398 = vmatprep.mubr.f32.mxu0 %v1224
      %1399 = vmatmul.mubr.f32.gmra.mrb[0].mxu0 %v1153
      %v1400 = vpop.f32.mrb[0].mxu0
      %v1401 = vadd.f32 %v262, %v1400
      %v1402 = vpop.f32.mrb[0].mxu0
      %1403 = vmatprep.mubr.f32.mxu0 %v1227
      %1404 = vmatmul.mubr.f32.gmra.mrb[0].mxu0 %v1155
      %v1405 = vpop.f32.mrb[0].mxu0
      %v1406 = vadd.f32 %v262, %v1405
      %v1407 = vpop.f32.mrb[0].mxu0
      %1408 = vmatprep.mubr.f32.mxu0 %v1230
      %1409 = vmatmul.mubr.f32.gmra.mrb[0].mxu0 %v1157
      %v1410 = vpop.f32.mrb[0].mxu0
      %v1411 = vadd.f32 %v262, %v1410
      %v1412 = vpop.f32.mrb[0].mxu0
      %1413 = vmatprep.mubr.f32.mxu0 %v1233
      %1414 = vmatmul.mubr.f32.gmra.mrb[0].mxu0 %v1159
      %v1415 = vpop.f32.mrb[0].mxu0
      %v1416 = vadd.f32 %v262, %v1415
      %v1417 = vpop.f32.mrb[0].mxu0
      %1418 = vmatprep.mubr.f32.mxu0 %v1236
      %1419 = vmatmul.mubr.f32.gmra.mrb[0].mxu0 %v1161
      %v1420 = vpop.f32.mrb[0].mxu0
      %v1421 = vadd.f32 %v262, %v1420
      %v1422 = vpop.f32.mrb[0].mxu0
      %1423 = vmatprep.mubr.f32.mxu0 %v1239
      %1424 = vmatmul.mubr.f32.gmra.mrb[0].mxu0 %v1163
      %v1425 = vpop.f32.mrb[0].mxu0
      %v1426 = vadd.f32 %v262, %v1425
      %v1427 = vpop.f32.mrb[0].mxu0
      %1428 = vmatprep.mubr.f32.mxu0 %v1242
      %1429 = vmatmul.mubr.f32.gmra.mrb[0].mxu0 %v1165
      %v1430 = vpop.f32.mrb[0].mxu0
      %v1431 = vadd.f32 %v262, %v1430
      %v1432 = vpop.f32.mrb[0].mxu0
      %1433 = vmatprep.mubr.f32.mxu0 %v1245
      %1434 = vmatmul.mubr.f32.gmra.mrb[0].mxu0 %v1167
      %v1435 = vpop.f32.mrb[0].mxu0
      %v1436 = vadd.f32 %v262, %v1435
      %v1437 = vpop.f32.mrb[0].mxu0
      %1438 = vmatprep.mubr.f32.mxu0 %v1248
      %1439 = vmatmul.mubr.f32.gmra.mrb[0].mxu0 %v1169
      %v1440 = vpop.f32.mrb[0].mxu0
      %v1441 = vadd.f32 %v262, %v1440
      %v1442 = vpop.f32.mrb[0].mxu0
      %1443 = vmatprep.mubr.f32.mxu0 %v1251
      %1444 = vmatmul.mubr.f32.gmra.mrb[0].mxu0 %v1171
      %v1445 = vpop.f32.mrb[0].mxu0
      %v1446 = vadd.f32 %v262, %v1445
      %v1447 = vpop.f32.mrb[0].mxu0
      %1448 = vmatprep.mubr.f32.mxu0 %v1254
      %1449 = vmatmul.mubr.f32.gmra.mrb[0].mxu0 %v1173
      %v1450 = vpop.f32.mrb[0].mxu0
      %v1451 = vadd.f32 %v262, %v1450
      %v1452 = vpop.f32.mrb[0].mxu0
      %1453 = vmatprep.mubr.f32.mxu0 %v1257
      %1454 = vmatmul.mubr.f32.gmra.mrb[0].mxu0 %v1175
      %v1455 = vpop.f32.mrb[0].mxu0
      %v1456 = vadd.f32 %v262, %v1455
      %v1457 = vpop.f32.mrb[0].mxu0
      %1458 = vmatprep.mubr.f32.mxu0 %v1260
      %1459 = vmatmul.mubr.f32.gmra.mrb[0].mxu0 %v1177
      %v1460 = vpop.f32.mrb[0].mxu0
      %v1461 = vadd.f32 %v262, %v1460
      %v1462 = vpop.f32.mrb[0].mxu0
      %1463 = vmatprep.mubr.f32.mxu0 %v1263
      %1464 = vmatmul.mubr.f32.gmra.mrb[0].mxu0 %v1179
      %v1465 = vpop.f32.mrb[0].mxu0
      %v1466 = vadd.f32 %v262, %v1465
      %v1467 = vpop.f32.mrb[0].mxu0
      %1468 = vmatprep.mubr.f32.mxu0 %v1266
      %1469 = vmatmul.mubr.f32.gmra.mrb[0].mxu0 %v1181
      %v1470 = vpop.f32.mrb[0].mxu0
      %v1471 = vadd.f32 %v262, %v1470
      %v1472 = vpop.f32.mrb[0].mxu0
      %1473 = vmatprep.mubr.f32.mxu0 %v1269
      %1474 = vmatmul.mubr.f32.gmra.mrb[0].mxu0 %v1183
      %v1475 = vpop.f32.mrb[0].mxu0
      %v1476 = vadd.f32 %v262, %v1475
      %v1477 = vpop.f32.mrb[0].mxu0
      %1478 = vmatprep.mubr.f32.mxu0 %v1272
      %1479 = vmatmul.mubr.f32.gmra.mrb[0].mxu0 %v1185
      %v1480 = vpop.f32.mrb[0].mxu0
      %v1481 = vadd.f32 %v262, %v1480
      %v1482 = vpop.f32.mrb[0].mxu0
      %1483 = vdwg.mxu0
      %v1484 = vmax.f32 %v1341, 0.0
      %v1485 = vmax.f32 %v1346, 0.0
      %v1486 = vmax.f32 %v1351, 0.0
      %v1487 = vmax.f32 %v1356, 0.0
      %v1488 = vmax.f32 %v1361, 0.0
      %v1489 = vmax.f32 %v1366, 0.0
      %v1490 = vmax.f32 %v1371, 0.0
      %v1491 = vmax.f32 %v1376, 0.0
      %v1492 = vmax.f32 %v1381, 0.0
      %v1493 = vmax.f32 %v1386, 0.0
      %v1494 = vmax.f32 %v1391, 0.0
      %v1495 = vmax.f32 %v1396, 0.0
      %v1496 = vmax.f32 %v1401, 0.0
      %v1497 = vmax.f32 %v1406, 0.0
      %v1498 = vmax.f32 %v1411, 0.0
      %v1499 = vmax.f32 %v1416, 0.0
      %v1500 = vmax.f32 %v1421, 0.0
      %v1501 = vmax.f32 %v1426, 0.0
      %v1502 = vmax.f32 %v1431, 0.0
      %v1503 = vmax.f32 %v1436, 0.0
      %v1504 = vmax.f32 %v1441, 0.0
      %v1505 = vmax.f32 %v1446, 0.0
      %v1506 = vmax.f32 %v1451, 0.0
      %v1507 = vmax.f32 %v1456, 0.0
      %v1508 = vmax.f32 %v1461, 0.0
      %v1509 = vmax.f32 %v1466, 0.0
      %v1510 = vmax.f32 %v1471, 0.0
      %v1511 = vmax.f32 %v1476, 0.0
      %v1512 = vmax.f32 %v1481, 0.0
      %v1513 = vmul.f32 %v1484, %v593
      %v1514 = vmul.f32 %v1485, %v593
      %v1515 = vmul.f32 %v1486, %v593
      %v1516 = vmul.f32 %v1487, %v593
      %v1517 = vmul.f32 %v1488, %v593
      %v1518 = vmul.f32 %v1489, %v593
      %v1519 = vmul.f32 %v1490, %v593
      %v1520 = vmul.f32 %v1491, %v593
      %v1521 = vmul.f32 %v1492, %v593
      %v1522 = vmul.f32 %v1493, %v593
      %v1523 = vmul.f32 %v1494, %v593
      %v1524 = vmul.f32 %v1495, %v593
      %v1525 = vmul.f32 %v1496, %v593
      %v1526 = vmul.f32 %v1497, %v593
      %v1527 = vmul.f32 %v1498, %v593
      %v1528 = vmul.f32 %v1499, %v593
      %v1529 = vmul.f32 %v1500, %v593
      %v1530 = vmul.f32 %v1501, %v593
      %v1531 = vmul.f32 %v1502, %v593
      %v1532 = vmul.f32 %v1503, %v593
      %v1533 = vmul.f32 %v1504, %v593
      %v1534 = vmul.f32 %v1505, %v593
      %v1535 = vmul.f32 %v1506, %v593
      %v1536 = vmul.f32 %v1507, %v593
      %v1537 = vmul.f32 %v1508, %v593
      %v1538 = vmul.f32 %v1509, %v593
      %v1539 = vmul.f32 %v1510, %v593
      %v1540 = vmul.f32 %v1511, %v593
      %v1541 = vmul.f32 %v1512, %v593
      %v1542 = vadd.f32 %v1513, %v626
      %v1543 = vadd.f32 %v1514, %v626
      %v1544 = vadd.f32 %v1515, %v626
      %v1545 = vadd.f32 %v1516, %v626
      %v1546 = vadd.f32 %v1517, %v626
      %v1547 = vadd.f32 %v1518, %v626
      %v1548 = vadd.f32 %v1519, %v626
      %v1549 = vadd.f32 %v1520, %v626
      %v1550 = vadd.f32 %v1521, %v626
      %v1551 = vadd.f32 %v1522, %v626
      %v1552 = vadd.f32 %v1523, %v626
      %v1553 = vadd.f32 %v1524, %v626
      %v1554 = vadd.f32 %v1525, %v626
      %v1555 = vadd.f32 %v1526, %v626
      %v1556 = vadd.f32 %v1527, %v626
      %v1557 = vadd.f32 %v1528, %v626
      %v1558 = vadd.f32 %v1529, %v626
      %v1559 = vadd.f32 %v1530, %v626
      %v1560 = vadd.f32 %v1531, %v626
      %v1561 = vadd.f32 %v1532, %v626
      %v1562 = vadd.f32 %v1533, %v626
      %v1563 = vadd.f32 %v1534, %v626
      %v1564 = vadd.f32 %v1535, %v626
      %v1565 = vadd.f32 %v1536, %v626
      %v1566 = vadd.f32 %v1537, %v626
      %v1567 = vadd.f32 %v1538, %v626
      %v1568 = vadd.f32 %v1539, %v626
      %v1569 = vadd.f32 %v1540, %v626
      %v1570 = vadd.f32 %v1541, %v626
      %v1571 = vmax.f32 %v1099, %v1542
      %v1572 = vmax.f32 %v1100, %v1543
      %v1573 = vmax.f32 %v1101, %v1544
      %v1574 = vmax.f32 %v1102, %v1545
      %v1575 = vmax.f32 %v1103, %v1546
      %v1576 = vmax.f32 %v1104, %v1547
      %v1577 = vmax.f32 %v1105, %v1548
      %v1578 = vmax.f32 %v1106, %v1549
      %v1579 = vmax.f32 %v1107, %v1550
      %v1580 = vmax.f32 %v1108, %v1551
      %v1581 = vmax.f32 %v1109, %v1552
      %v1582 = vmax.f32 %v1110, %v1553
      %v1583 = vmax.f32 %v1111, %v1554
      %v1584 = vmax.f32 %v1112, %v1555
      %v1585 = vmax.f32 %v1113, %v1556
      %v1586 = vmax.f32 %v1114, %v1557
      %v1587 = vmax.f32 %v1115, %v1558
      %v1588 = vmax.f32 %v1116, %v1559
      %v1589 = vmax.f32 %v1117, %v1560
      %v1590 = vmax.f32 %v1118, %v1561
      %v1591 = vmax.f32 %v1119, %v1562
      %v1592 = vmax.f32 %v1120, %v1563
      %v1593 = vmax.f32 %v1121, %v1564
      %v1594 = vmax.f32 %v1122, %v1565
      %v1595 = vmax.f32 %v1123, %v1566
      %v1596 = vmax.f32 %v1124, %v1567
      %v1597 = vmax.f32 %v1125, %v1568
      %v1598 = vmax.f32 %v1126, %v1569
      %v1599 = vmax.f32 %v1127, %v1570
      %s1600 = scalar_lea.vmem %s165, 1392
      %v1601 = vld [vmem:[%s1600] sm:$0xff]
      %v1602 = vld [vmem:[%s1600 + $0x8] sm:$0xff]
      %v1603 = vld [vmem:[%s1600 + $0x10] sm:$0xff]
      %v1604 = vld [vmem:[%s1600 + $0x18] sm:$0xff]
      %v1605 = vld [vmem:[%s1600 + $0x20] sm:$0xff]
      %v1606 = vld [vmem:[%s1600 + $0x28] sm:$0xff]
      %v1607 = vld [vmem:[%s1600 + $0x30] sm:$0xff]
      %v1608 = vld [vmem:[%s1600 + $0x38] sm:$0xff]
      %v1609 = vld [vmem:[%s1600 + $0x40] sm:$0xff]
      %v1610 = vld [vmem:[%s1600 + $0x48] sm:$0xff]
      %v1611 = vld [vmem:[%s1600 + $0x50] sm:$0xff]
      %v1612 = vld [vmem:[%s1600 + $0x58] sm:$0xff]
      %v1613 = vld [vmem:[%s1600 + $0x60] sm:$0xff]
      %v1614 = vld [vmem:[%s1600 + $0x68] sm:$0xff]
      %v1615 = vld [vmem:[%s1600 + $0x70] sm:$0xff]
      %v1616 = vld [vmem:[%s1600 + $0x78] sm:$0xff]
      %v1617 = vld [vmem:[%s1600 + $0x80] sm:$0xff]
      %v1618 = vld [vmem:[%s1600 + $0x88] sm:$0xff]
      %v1619 = vld [vmem:[%s1600 + $0x90] sm:$0xff]
      %v1620 = vld [vmem:[%s1600 + $0x98] sm:$0xff]
      %v1621 = vld [vmem:[%s1600 + $0xa0] sm:$0xff]
      %v1622 = vld [vmem:[%s1600 + $0xa8] sm:$0xff]
      %v1623 = vld [vmem:[%s1600 + $0xb0] sm:$0xff]
      %v1624 = vld [vmem:[%s1600 + $0xb8] sm:$0xff]
      %v1625 = vld [vmem:[%s1600 + $0xc0] sm:$0xff]
      %v1626 = vld [vmem:[%s1600 + $0xc8] sm:$0xff]
      %v1627 = vld [vmem:[%s1600 + $0xd0] sm:$0xff]
      %v1628 = vld [vmem:[%s1600 + $0xd8] sm:$0xff]
      %v1629 = vld [vmem:[%s1600 + $0xe0] sm:$0xff]
      %v1630 = vld [vmem:[%s1600 + $0xe8] sm:$0xff]
      %v1631 = vld [vmem:[%s1600 + $0xf0] sm:$0xff]
      %v1632 = vld [vmem:[%s1600 + $0xf8] sm:$0xff]
      %v1633 = vld [vmem:[%s1600 + $0x100] sm:$0xff]
      %v1634 = vld [vmem:[%s1600 + $0x108] sm:$0xff]
      %v1635 = vld [vmem:[%s1600 + $0x110] sm:$0xff]
      %v1636 = vld [vmem:[%s1600 + $0x118] sm:$0xff]
      %v1637 = vld [vmem:[%s1600 + $0x120] sm:$0xff]
      %v1638 = vld [vmem:[%s1600 + $0x128] sm:$0xff]
      %v1639 = vld [vmem:[%s1600 + $0x130] sm:$0xff]
      %v1640 = vld [vmem:[%s1600 + $0x138] sm:$0xff]
      %v1641 = vld [vmem:[%s1600 + $0x140] sm:$0xff]
      %v1642 = vld [vmem:[%s1600 + $0x148] sm:$0xff]
      %v1643 = vld [vmem:[%s1600 + $0x150] sm:$0xff]
      %v1644 = vld [vmem:[%s1600 + $0x158] sm:$0xff]
      %v1645 = vld [vmem:[%s1600 + $0x160] sm:$0xff]
      %v1646 = vld [vmem:[%s1600 + $0x168] sm:$0xff]
      %v1647 = vld [vmem:[%s1600 + $0x170] sm:$0xff]
      %v1648 = vld [vmem:[%s1600 + $0x178] sm:$0xff]
      %v1649 = vld [vmem:[%s1600 + $0x180] sm:$0xff]
      %v1650 = vld [vmem:[%s1600 + $0x188] sm:$0xff]
      %v1651 = vld [vmem:[%s1600 + $0x190] sm:$0xff]
      %v1652 = vld [vmem:[%s1600 + $0x198] sm:$0xff]
      %v1653 = vld [vmem:[%s1600 + $0x1a0] sm:$0xff]
      %v1654 = vld [vmem:[%s1600 + $0x1a8] sm:$0xff]
      %v1655 = vld [vmem:[%s1600 + $0x1b0] sm:$0xff]
      %v1656 = vld [vmem:[%s1600 + $0x1b8] sm:$0xff]
      %v1657 = vld [vmem:[%s1600 + $0x1c0] sm:$0x1]
      %v1658 = vld [vmem:[%s1600 + $0x1c8] sm:$0x1]
      %v1660 = vsel %vm263, %v1602, 0
      %v1663 = vsel %vm263, %v1604, 0
      %v1666 = vsel %vm263, %v1606, 0
      %v1669 = vsel %vm263, %v1608, 0
      %v1672 = vsel %vm263, %v1610, 0
      %v1675 = vsel %vm263, %v1612, 0
      %v1678 = vsel %vm263, %v1614, 0
      %v1681 = vsel %vm263, %v1616, 0
      %v1684 = vsel %vm263, %v1618, 0
      %v1687 = vsel %vm263, %v1620, 0
      %v1690 = vsel %vm263, %v1622, 0
      %v1693 = vsel %vm263, %v1624, 0
      %v1696 = vsel %vm263, %v1626, 0
      %v1699 = vsel %vm263, %v1628, 0
      %v1702 = vsel %vm263, %v1630, 0
      %v1705 = vsel %vm263, %v1632, 0
      %v1708 = vsel %vm263, %v1634, 0
      %v1711 = vsel %vm263, %v1636, 0
      %v1714 = vsel %vm263, %v1638, 0
      %v1717 = vsel %vm263, %v1640, 0
      %v1720 = vsel %vm263, %v1642, 0
      %v1723 = vsel %vm263, %v1644, 0
      %v1726 = vsel %vm263, %v1646, 0
      %v1729 = vsel %vm263, %v1648, 0
      %v1732 = vsel %vm263, %v1650, 0
      %v1735 = vsel %vm263, %v1652, 0
      %v1738 = vsel %vm263, %v1654, 0
      %v1741 = vsel %vm263, %v1656, 0
      %v1744 = vsel %vm263, %v1658, 0
      %1746 = vmatprep.subr.mxu0 0.0
      %1747 = vmatpush1.msra.mxu0 %v171
      %1748 = vmatprep.subr.mxu0 0.0
      %1749 = vmatpush1.msra.mxu0 %v172
      %1750 = vmatprep.subr.mxu0 0.0
      %1751 = vmatpush1.msra.mxu0 %v173
      %1752 = vmatprep.subr.mxu0 0.0
      %1753 = vmatpush1.msra.mxu0 %v174
      %1754 = vmatprep.subr.mxu0 0.0
      %1755 = vmatpush1.msra.mxu0 %v175
      %1756 = vmatprep.subr.mxu0 0.0
      %1757 = vmatpush1.msra.mxu0 %v176
      %1758 = vmatprep.subr.mxu0 0.0
      %1759 = vmatpush1.msra.mxu0 %v177
      %1760 = vmatprep.subr.mxu0 0.0
      %1761 = vmatpush1.msra.mxu0 %v178
      %1762 = vmatprep.subr.mxu0 0.0
      %1763 = vmatpush1.msra.mxu0 %v179
      %1764 = vmatprep.subr.mxu0 0.0
      %1765 = vmatpush1.msra.mxu0 %v180
      %1766 = vmatprep.subr.mxu0 0.0
      %1767 = vmatpush1.msra.mxu0 %v181
      %1768 = vmatprep.subr.mxu0 0.0
      %1769 = vmatpush1.msra.mxu0 %v182
      %1770 = vmatprep.subr.mxu0 0.0
      %1771 = vmatpush1.msra.mxu0 %v183
      %1772 = vmatprep.subr.mxu0 0.0
      %1773 = vmatpush1.msra.mxu0 %v184
      %1774 = vmatprep.subr.mxu0 0.0
      %1775 = vmatpush1.msra.mxu0 %v185
      %1776 = vmatprep.subr.mxu0 0.0
      %1777 = vmatpush1.msra.mxu0 %v186
      %1778 = vmatprep.subr.mxu0 0.0
      %1779 = vmatpush1.msra.mxu0 %v187
      %1780 = vmatprep.subr.mxu0 0.0
      %1781 = vmatpush1.msra.mxu0 %v188
      %1782 = vmatprep.subr.mxu0 0.0
      %1783 = vmatpush1.msra.mxu0 %v189
      %1784 = vmatprep.subr.mxu0 0.0
      %1785 = vmatpush1.msra.mxu0 %v190
      %1786 = vmatprep.subr.mxu0 0.0
      %1787 = vmatpush1.msra.mxu0 %v191
      %1788 = vmatprep.subr.mxu0 0.0
      %1789 = vmatpush1.msra.mxu0 %v192
      %1790 = vmatprep.subr.mxu0 0.0
      %1791 = vmatpush1.msra.mxu0 %v193
      %1792 = vmatprep.subr.mxu0 0.0
      %1793 = vmatpush1.msra.mxu0 %v194
      %1794 = vmatprep.subr.mxu0 0.0
      %1795 = vmatpush1.msra.mxu0 %v195
      %1796 = vmatprep.subr.mxu0 0.0
      %1797 = vmatpush1.msra.mxu0 %v196
      %1798 = vmatprep.subr.mxu0 0.0
      %1799 = vmatpush1.msra.mxu0 %v197
      %1800 = vmatprep.subr.mxu0 0.0
      %1801 = vmatpush1.msra.mxu0 0.0
      %1802 = vmatprep.subr.mxu0 0.0
      %1803 = vmatpush1.msra.mxu0 0.0
      %1804 = vmatprep.subr.mxu0 0.0
      %1805 = vmatpush1.msra.mxu0 0.0
      %1806 = vmatprep.subr.mxu0 0.0
      %1807 = vmatpush1.msra.mxu0 0.0
      %1808 = vmatprep.subr.mxu0 0.0
      %1809 = vmatpush1.msra.mxu0 0.0
      %1810 = vmatprep.mubr.f32.mxu0 %v1660
      %1811 = vmatmul.mubr.f32.gmra.mrb[0].mxu0 %v1601
      %v1812 = vpop.f32.mrb[0].mxu0
      %v1813 = vadd.f32 %v262, %v1812
      %v1814 = vpop.f32.mrb[0].mxu0
      %1815 = vmatprep.mubr.f32.mxu0 %v1663
      %1816 = vmatmul.mubr.f32.gmra.mrb[0].mxu0 %v1603
      %v1817 = vpop.f32.mrb[0].mxu0
      %v1818 = vadd.f32 %v262, %v1817
      %v1819 = vpop.f32.mrb[0].mxu0
      %1820 = vmatprep.mubr.f32.mxu0 %v1666
      %1821 = vmatmul.mubr.f32.gmra.mrb[0].mxu0 %v1605
      %v1822 = vpop.f32.mrb[0].mxu0
      %v1823 = vadd.f32 %v262, %v1822
      %v1824 = vpop.f32.mrb[0].mxu0
      %1825 = vmatprep.mubr.f32.mxu0 %v1669
      %1826 = vmatmul.mubr.f32.gmra.mrb[0].mxu0 %v1607
      %v1827 = vpop.f32.mrb[0].mxu0
      %v1828 = vadd.f32 %v262, %v1827
      %v1829 = vpop.f32.mrb[0].mxu0
      %1830 = vmatprep.mubr.f32.mxu0 %v1672
      %1831 = vmatmul.mubr.f32.gmra.mrb[0].mxu0 %v1609
      %v1832 = vpop.f32.mrb[0].mxu0
      %v1833 = vadd.f32 %v262, %v1832
      %v1834 = vpop.f32.mrb[0].mxu0
      %1835 = vmatprep.mubr.f32.mxu0 %v1675
      %1836 = vmatmul.mubr.f32.gmra.mrb[0].mxu0 %v1611
      %v1837 = vpop.f32.mrb[0].mxu0
      %v1838 = vadd.f32 %v262, %v1837
      %v1839 = vpop.f32.mrb[0].mxu0
      %1840 = vmatprep.mubr.f32.mxu0 %v1678
      %1841 = vmatmul.mubr.f32.gmra.mrb[0].mxu0 %v1613
      %v1842 = vpop.f32.mrb[0].mxu0
      %v1843 = vadd.f32 %v262, %v1842
      %v1844 = vpop.f32.mrb[0].mxu0
      %1845 = vmatprep.mubr.f32.mxu0 %v1681
      %1846 = vmatmul.mubr.f32.gmra.mrb[0].mxu0 %v1615
      %v1847 = vpop.f32.mrb[0].mxu0
      %v1848 = vadd.f32 %v262, %v1847
      %v1849 = vpop.f32.mrb[0].mxu0
      %1850 = vmatprep.mubr.f32.mxu0 %v1684
      %1851 = vmatmul.mubr.f32.gmra.mrb[0].mxu0 %v1617
      %v1852 = vpop.f32.mrb[0].mxu0
      %v1853 = vadd.f32 %v262, %v1852
      %v1854 = vpop.f32.mrb[0].mxu0
      %1855 = vmatprep.mubr.f32.mxu0 %v1687
      %1856 = vmatmul.mubr.f32.gmra.mrb[0].mxu0 %v1619
      %v1857 = vpop.f32.mrb[0].mxu0
      %v1858 = vadd.f32 %v262, %v1857
      %v1859 = vpop.f32.mrb[0].mxu0
      %1860 = vmatprep.mubr.f32.mxu0 %v1690
      %1861 = vmatmul.mubr.f32.gmra.mrb[0].mxu0 %v1621
      %v1862 = vpop.f32.mrb[0].mxu0
      %v1863 = vadd.f32 %v262, %v1862
      %v1864 = vpop.f32.mrb[0].mxu0
      %1865 = vmatprep.mubr.f32.mxu0 %v1693
      %1866 = vmatmul.mubr.f32.gmra.mrb[0].mxu0 %v1623
      %v1867 = vpop.f32.mrb[0].mxu0
      %v1868 = vadd.f32 %v262, %v1867
      %v1869 = vpop.f32.mrb[0].mxu0
      %1870 = vmatprep.mubr.f32.mxu0 %v1696
      %1871 = vmatmul.mubr.f32.gmra.mrb[0].mxu0 %v1625
      %v1872 = vpop.f32.mrb[0].mxu0
      %v1873 = vadd.f32 %v262, %v1872
      %v1874 = vpop.f32.mrb[0].mxu0
      %1875 = vmatprep.mubr.f32.mxu0 %v1699
      %1876 = vmatmul.mubr.f32.gmra.mrb[0].mxu0 %v1627
      %v1877 = vpop.f32.mrb[0].mxu0
      %v1878 = vadd.f32 %v262, %v1877
      %v1879 = vpop.f32.mrb[0].mxu0
      %1880 = vmatprep.mubr.f32.mxu0 %v1702
      %1881 = vmatmul.mubr.f32.gmra.mrb[0].mxu0 %v1629
      %v1882 = vpop.f32.mrb[0].mxu0
      %v1883 = vadd.f32 %v262, %v1882
      %v1884 = vpop.f32.mrb[0].mxu0
      %1885 = vmatprep.mubr.f32.mxu0 %v1705
      %1886 = vmatmul.mubr.f32.gmra.mrb[0].mxu0 %v1631
      %v1887 = vpop.f32.mrb[0].mxu0
      %v1888 = vadd.f32 %v262, %v1887
      %v1889 = vpop.f32.mrb[0].mxu0
      %1890 = vmatprep.mubr.f32.mxu0 %v1708
      %1891 = vmatmul.mubr.f32.gmra.mrb[0].mxu0 %v1633
      %v1892 = vpop.f32.mrb[0].mxu0
      %v1893 = vadd.f32 %v262, %v1892
      %v1894 = vpop.f32.mrb[0].mxu0
      %1895 = vmatprep.mubr.f32.mxu0 %v1711
      %1896 = vmatmul.mubr.f32.gmra.mrb[0].mxu0 %v1635
      %v1897 = vpop.f32.mrb[0].mxu0
      %v1898 = vadd.f32 %v262, %v1897
      %v1899 = vpop.f32.mrb[0].mxu0
      %1900 = vmatprep.mubr.f32.mxu0 %v1714
      %1901 = vmatmul.mubr.f32.gmra.mrb[0].mxu0 %v1637
      %v1902 = vpop.f32.mrb[0].mxu0
      %v1903 = vadd.f32 %v262, %v1902
      %v1904 = vpop.f32.mrb[0].mxu0
      %1905 = vmatprep.mubr.f32.mxu0 %v1717
      %1906 = vmatmul.mubr.f32.gmra.mrb[0].mxu0 %v1639
      %v1907 = vpop.f32.mrb[0].mxu0
      %v1908 = vadd.f32 %v262, %v1907
      %v1909 = vpop.f32.mrb[0].mxu0
      %1910 = vmatprep.mubr.f32.mxu0 %v1720
      %1911 = vmatmul.mubr.f32.gmra.mrb[0].mxu0 %v1641
      %v1912 = vpop.f32.mrb[0].mxu0
      %v1913 = vadd.f32 %v262, %v1912
      %v1914 = vpop.f32.mrb[0].mxu0
      %1915 = vmatprep.mubr.f32.mxu0 %v1723
      %1916 = vmatmul.mubr.f32.gmra.mrb[0].mxu0 %v1643
      %v1917 = vpop.f32.mrb[0].mxu0
      %v1918 = vadd.f32 %v262, %v1917
      %v1919 = vpop.f32.mrb[0].mxu0
      %1920 = vmatprep.mubr.f32.mxu0 %v1726
      %1921 = vmatmul.mubr.f32.gmra.mrb[0].mxu0 %v1645
      %v1922 = vpop.f32.mrb[0].mxu0
      %v1923 = vadd.f32 %v262, %v1922
      %v1924 = vpop.f32.mrb[0].mxu0
      %1925 = vmatprep.mubr.f32.mxu0 %v1729
      %1926 = vmatmul.mubr.f32.gmra.mrb[0].mxu0 %v1647
      %v1927 = vpop.f32.mrb[0].mxu0
      %v1928 = vadd.f32 %v262, %v1927
      %v1929 = vpop.f32.mrb[0].mxu0
      %1930 = vmatprep.mubr.f32.mxu0 %v1732
      %1931 = vmatmul.mubr.f32.gmra.mrb[0].mxu0 %v1649
      %v1932 = vpop.f32.mrb[0].mxu0
      %v1933 = vadd.f32 %v262, %v1932
      %v1934 = vpop.f32.mrb[0].mxu0
      %1935 = vmatprep.mubr.f32.mxu0 %v1735
      %1936 = vmatmul.mubr.f32.gmra.mrb[0].mxu0 %v1651
      %v1937 = vpop.f32.mrb[0].mxu0
      %v1938 = vadd.f32 %v262, %v1937
      %v1939 = vpop.f32.mrb[0].mxu0
      %1940 = vmatprep.mubr.f32.mxu0 %v1738
      %1941 = vmatmul.mubr.f32.gmra.mrb[0].mxu0 %v1653
      %v1942 = vpop.f32.mrb[0].mxu0
      %v1943 = vadd.f32 %v262, %v1942
      %v1944 = vpop.f32.mrb[0].mxu0
      %1945 = vmatprep.mubr.f32.mxu0 %v1741
      %1946 = vmatmul.mubr.f32.gmra.mrb[0].mxu0 %v1655
      %v1947 = vpop.f32.mrb[0].mxu0
      %v1948 = vadd.f32 %v262, %v1947
      %v1949 = vpop.f32.mrb[0].mxu0
      %1950 = vmatprep.mubr.f32.mxu0 %v1744
      %1951 = vmatmul.mubr.f32.gmra.mrb[0].mxu0 %v1657
      %v1952 = vpop.f32.mrb[0].mxu0
      %v1953 = vadd.f32 %v262, %v1952
      %v1954 = vpop.f32.mrb[0].mxu0
      %1955 = vdwg.mxu0
      %v1956 = vmax.f32 %v1813, 0.0
      %v1957 = vmax.f32 %v1818, 0.0
      %v1958 = vmax.f32 %v1823, 0.0
      %v1959 = vmax.f32 %v1828, 0.0
      %v1960 = vmax.f32 %v1833, 0.0
      %v1961 = vmax.f32 %v1838, 0.0
      %v1962 = vmax.f32 %v1843, 0.0
      %v1963 = vmax.f32 %v1848, 0.0
      %v1964 = vmax.f32 %v1853, 0.0
      %v1965 = vmax.f32 %v1858, 0.0
      %v1966 = vmax.f32 %v1863, 0.0
      %v1967 = vmax.f32 %v1868, 0.0
      %v1968 = vmax.f32 %v1873, 0.0
      %v1969 = vmax.f32 %v1878, 0.0
      %v1970 = vmax.f32 %v1883, 0.0
      %v1971 = vmax.f32 %v1888, 0.0
      %v1972 = vmax.f32 %v1893, 0.0
      %v1973 = vmax.f32 %v1898, 0.0
      %v1974 = vmax.f32 %v1903, 0.0
      %v1975 = vmax.f32 %v1908, 0.0
      %v1976 = vmax.f32 %v1913, 0.0
      %v1977 = vmax.f32 %v1918, 0.0
      %v1978 = vmax.f32 %v1923, 0.0
      %v1979 = vmax.f32 %v1928, 0.0
      %v1980 = vmax.f32 %v1933, 0.0
      %v1981 = vmax.f32 %v1938, 0.0
      %v1982 = vmax.f32 %v1943, 0.0
      %v1983 = vmax.f32 %v1948, 0.0
      %v1984 = vmax.f32 %v1953, 0.0
      %v1985 = vmul.f32 %v1956, %v593
      %v1986 = vmul.f32 %v1957, %v593
      %v1987 = vmul.f32 %v1958, %v593
      %v1988 = vmul.f32 %v1959, %v593
      %v1989 = vmul.f32 %v1960, %v593
      %v1990 = vmul.f32 %v1961, %v593
      %v1991 = vmul.f32 %v1962, %v593
      %v1992 = vmul.f32 %v1963, %v593
      %v1993 = vmul.f32 %v1964, %v593
      %v1994 = vmul.f32 %v1965, %v593
      %v1995 = vmul.f32 %v1966, %v593
      %v1996 = vmul.f32 %v1967, %v593
      %v1997 = vmul.f32 %v1968, %v593
      %v1998 = vmul.f32 %v1969, %v593
      %v1999 = vmul.f32 %v1970, %v593
      %v2000 = vmul.f32 %v1971, %v593
      %v2001 = vmul.f32 %v1972, %v593
      %v2002 = vmul.f32 %v1973, %v593
      %v2003 = vmul.f32 %v1974, %v593
      %v2004 = vmul.f32 %v1975, %v593
      %v2005 = vmul.f32 %v1976, %v593
      %v2006 = vmul.f32 %v1977, %v593
      %v2007 = vmul.f32 %v1978, %v593
      %v2008 = vmul.f32 %v1979, %v593
      %v2009 = vmul.f32 %v1980, %v593
      %v2010 = vmul.f32 %v1981, %v593
      %v2011 = vmul.f32 %v1982, %v593
      %v2012 = vmul.f32 %v1983, %v593
      %v2013 = vmul.f32 %v1984, %v593
      %v2014 = vadd.f32 %v1985, %v626
      %v2015 = vadd.f32 %v1986, %v626
      %v2016 = vadd.f32 %v1987, %v626
      %v2017 = vadd.f32 %v1988, %v626
      %v2018 = vadd.f32 %v1989, %v626
      %v2019 = vadd.f32 %v1990, %v626
      %v2020 = vadd.f32 %v1991, %v626
      %v2021 = vadd.f32 %v1992, %v626
      %v2022 = vadd.f32 %v1993, %v626
      %v2023 = vadd.f32 %v1994, %v626
      %v2024 = vadd.f32 %v1995, %v626
      %v2025 = vadd.f32 %v1996, %v626
      %v2026 = vadd.f32 %v1997, %v626
      %v2027 = vadd.f32 %v1998, %v626
      %v2028 = vadd.f32 %v1999, %v626
      %v2029 = vadd.f32 %v2000, %v626
      %v2030 = vadd.f32 %v2001, %v626
      %v2031 = vadd.f32 %v2002, %v626
      %v2032 = vadd.f32 %v2003, %v626
      %v2033 = vadd.f32 %v2004, %v626
      %v2034 = vadd.f32 %v2005, %v626
      %v2035 = vadd.f32 %v2006, %v626
      %v2036 = vadd.f32 %v2007, %v626
      %v2037 = vadd.f32 %v2008, %v626
      %v2038 = vadd.f32 %v2009, %v626
      %v2039 = vadd.f32 %v2010, %v626
      %v2040 = vadd.f32 %v2011, %v626
      %v2041 = vadd.f32 %v2012, %v626
      %v2042 = vadd.f32 %v2013, %v626
      %v2043 = vmax.f32 %v1571, %v2014
      %v2044 = vmax.f32 %v1572, %v2015
      %v2045 = vmax.f32 %v1573, %v2016
      %v2046 = vmax.f32 %v1574, %v2017
      %v2047 = vmax.f32 %v1575, %v2018
      %v2048 = vmax.f32 %v1576, %v2019
      %v2049 = vmax.f32 %v1577, %v2020
      %v2050 = vmax.f32 %v1578, %v2021
      %v2051 = vmax.f32 %v1579, %v2022
      %v2052 = vmax.f32 %v1580, %v2023
      %v2053 = vmax.f32 %v1581, %v2024
      %v2054 = vmax.f32 %v1582, %v2025
      %v2055 = vmax.f32 %v1583, %v2026
      %v2056 = vmax.f32 %v1584, %v2027
      %v2057 = vmax.f32 %v1585, %v2028
      %v2058 = vmax.f32 %v1586, %v2029
      %v2059 = vmax.f32 %v1587, %v2030
      %v2060 = vmax.f32 %v1588, %v2031
      %v2061 = vmax.f32 %v1589, %v2032
      %v2062 = vmax.f32 %v1590, %v2033
      %v2063 = vmax.f32 %v1591, %v2034
      %v2064 = vmax.f32 %v1592, %v2035
      %v2065 = vmax.f32 %v1593, %v2036
      %v2066 = vmax.f32 %v1594, %v2037
      %v2067 = vmax.f32 %v1595, %v2038
      %v2068 = vmax.f32 %v1596, %v2039
      %v2069 = vmax.f32 %v1597, %v2040
      %v2070 = vmax.f32 %v1598, %v2041
      %v2071 = vmax.f32 %v1599, %v2042
      %vm2072 = vcmask 261120
      %2073 = vst.msk [vmem:[%s170] sm:$0xff] %vm2072, %v2043
      %2074 = vst.msk [vmem:[%s170 + $0x8] sm:$0xff] %vm2072, %v2044
      %2075 = vst.msk [vmem:[%s170 + $0x10] sm:$0xff] %vm2072, %v2045
      %2076 = vst.msk [vmem:[%s170 + $0x18] sm:$0xff] %vm2072, %v2046
      %2077 = vst.msk [vmem:[%s170 + $0x20] sm:$0xff] %vm2072, %v2047
      %2078 = vst.msk [vmem:[%s170 + $0x28] sm:$0xff] %vm2072, %v2048
      %2079 = vst.msk [vmem:[%s170 + $0x30] sm:$0xff] %vm2072, %v2049
      %2080 = vst.msk [vmem:[%s170 + $0x38] sm:$0xff] %vm2072, %v2050
      %2081 = vst.msk [vmem:[%s170 + $0x40] sm:$0xff] %vm2072, %v2051
      %2082 = vst.msk [vmem:[%s170 + $0x48] sm:$0xff] %vm2072, %v2052
      %2083 = vst.msk [vmem:[%s170 + $0x50] sm:$0xff] %vm2072, %v2053
      %2084 = vst.msk [vmem:[%s170 + $0x58] sm:$0xff] %vm2072, %v2054
      %2085 = vst.msk [vmem:[%s170 + $0x60] sm:$0xff] %vm2072, %v2055
      %2086 = vst.msk [vmem:[%s170 + $0x68] sm:$0xff] %vm2072, %v2056
      %2087 = vst.msk [vmem:[%s170 + $0x70] sm:$0xff] %vm2072, %v2057
      %2088 = vst.msk [vmem:[%s170 + $0x78] sm:$0xff] %vm2072, %v2058
      %2089 = vst.msk [vmem:[%s170 + $0x80] sm:$0xff] %vm2072, %v2059
      %2090 = vst.msk [vmem:[%s170 + $0x88] sm:$0xff] %vm2072, %v2060
      %2091 = vst.msk [vmem:[%s170 + $0x90] sm:$0xff] %vm2072, %v2061
      %2092 = vst.msk [vmem:[%s170 + $0x98] sm:$0xff] %vm2072, %v2062
      %2093 = vst.msk [vmem:[%s170 + $0xa0] sm:$0xff] %vm2072, %v2063
      %2094 = vst.msk [vmem:[%s170 + $0xa8] sm:$0xff] %vm2072, %v2064
      %2095 = vst.msk [vmem:[%s170 + $0xb0] sm:$0xff] %vm2072, %v2065
      %2096 = vst.msk [vmem:[%s170 + $0xb8] sm:$0xff] %vm2072, %v2066
      %2097 = vst.msk [vmem:[%s170 + $0xc0] sm:$0xff] %vm2072, %v2067
      %2098 = vst.msk [vmem:[%s170 + $0xc8] sm:$0xff] %vm2072, %v2068
      %2099 = vst.msk [vmem:[%s170 + $0xd0] sm:$0xff] %vm2072, %v2069
      %2100 = vst.msk [vmem:[%s170 + $0xd8] sm:$0xff] %vm2072, %v2070
      %vm2101 = vcmask 253952
      %2102 = vst.msk [vmem:[%s170 + $0xe0] sm:$0x1] %vm2101, %v2071
      %p2103 = scmp.lt.s32.totalorder %s14, 1
      %s2104 = scalar_select %p2103, %s14, 1
      %s2105 = smul.addr %s2104, 29
      %s2106 = smul.addr %s2105, 8
      %s2107 = scalar_lea.vmem %s3, %s2106
      // Predicated region
      $region33: #{cnn2d_forward.5} parent=31 // pred_check
        %p2108 = pneg %p100
      $region34: #{cnn2d_forward.5} parent=31 // pred_check_branch
        %2110 = sbr.rel (%p2108) target = $region36
      $region35: #{cnn2d_forward.5} parent=31 // pred_region
        _
      $region36: #{cnn2d_forward.5} parent=31 // pred_fallthru
        _
    $region32: #{cnn2d_forward.5} parent=5 // pred_fallthru
      _
    %p2111 = scmp.le.s32.totalorder 2, %s9
    // Predicated region
    $region37: #{cnn2d_forward.5} parent=5 // pred_check
      %p2112 = pneg %p2111
    $region38: #{cnn2d_forward.5} parent=5 // pred_check_branch
      %2114 = sbr.rel (%p2112) target = $region40
    $region39: #{cnn2d_forward.5} parent=5 // pred_region
      %s2115 = ssub.s32 %s9, 2
      // Predicated region
      $region41: #{cnn2d_forward.5} parent=39 // pred_check
        %p2116 = pneg %p106
      $region42: #{cnn2d_forward.5} parent=39 // pred_check_branch
        %2118 = sbr.rel (%p2116) target = $region44
      $region43: #{cnn2d_forward.5} parent=39 // pred_region
        %p2119 = scmp.lt.s32.totalorder %s15, 1
        %s2120 = scalar_select %p2119, %s15, 1
        %s2121 = smul.addr %s2120, 29
        %s2122 = smul.addr %s2121, 8
        %s2123 = scalar_lea.vmem %s3, %s2122
      $region44: #{cnn2d_forward.5} parent=39 // pred_fallthru
        _
    $region40: #{cnn2d_forward.5} parent=5 // pred_fallthru
      _
  $region6: #{cnn2d_forward.5} parent=0 // loop_footer
    %s13 = sadd.s32 1, %s9
  $region7: #{cnn2d_forward.5} parent=0 // loop_footer_branch
    %8 = sbr.rel target = $region3
  $region8: #{cnn2d_forward.5} parent=0 // loop_exit
    _

// kernel: cnn2d_forward.6
$region0: #{cnn2d_forward.6}
  #allocation0 [shape = 'u32[]', space=smem, size = 0x4, offset = 0x4, fixed_abs, tag = 'smem constant byte address 0x4 - core index']
  #allocation1 [shape = 'u32[144,128]{1,0:T(1,128)}', space=vmem, size = 0x12000, scoped, tag = 'internal scratch']
  %s0 = inlined_call_operand.vmem [shape: f32[2,4,36,288], index: 0, kind: input, shape index: {}]
  %s1 = inlined_call_operand.vmem [shape: f32[288,48], index: 1, kind: input, shape index: {}]
  %s2 = inlined_call_operand.vmem [shape: f32[3,48], index: 2, kind: input, shape index: {}]
  %s3 = inlined_call_operand.vmem [shape: f32[2,36,48], index: 3, kind: output, shape index: {}]
  %s4 = sld [smem:[#allocation0]]
  $region45: #{cnn2d_forward.6} parent=0
    _
  %s6 = ssub.s32 1, %s4
  %s7 = scalar_select 0, %s6, %s4
  loop: start=0, step=1, limit=4
  $region2: #{cnn2d_forward.6} parent=0 // loop_pre_header
    _
  $region3: #{cnn2d_forward.6} parent=0 // loop_header
    %s9 = sphi 0, %s13
    %p10 = scmp.ge.s32.totalorder %s9, 4
    %s19 = sphi 0, %s21
    %s22 = sphi 0, %s19
    %s23 = sphi 0, %s22
    %s39 = sphi 0, %s23
    %s43 = sphi 0, %s43
    %s45 = sphi 0, %s43
    %s46 = sphi 0, %s45
    %s60 = sphi 0, %s46
    %s64 = sphi 0, %s64
    %s66 = sphi 0, %s64
    %s67 = sphi 0, %s66
    %s81 = sphi 0, %s67
    %s87 = sphi 0, %s89
    %s90 = sphi 0, %s87
    %s91 = sphi 0, %s90
    %s107 = sphi 0, %s91
  $region4: #{cnn2d_forward.6} parent=0 // loop_header_branch
    %12 = sbr.rel (%p10) target = $region8
  $region5: #{cnn2d_forward.6} parent=0 // loop_body
    %s14 = ssub.s32 %s9, 1
    %s15 = ssub.s32 %s9, 2
    %s16 = sadd.s32 %s9, 1
    %s17 = ssub.s32 %s9, %s16
    %p18 = scmp.eq.s32.totalorder %s17, 0
    %s20 = sadd.s32 %s19, 1
    %s21 = scalar_select %p18, %s19, %s20
    %p24 = pneg %p18
    %p25 = scmp.eq.s32.totalorder %s9, 1
    %p26 = por %p24, %p25
    %p27 = scmp.ne.s32.totalorder %s19, %s22
    %p28 = scmp.eq.s32.totalorder %s9, 0
    %p29 = por %p27, %p28
    %p30 = scmp.ne.s32.totalorder %s19, %s22
    %p31 = scmp.eq.s32.totalorder %s14, 1
    %p32 = por %p30, %p31
    %p33 = scmp.ne.s32.totalorder %s22, %s23
    %p34 = scmp.eq.s32.totalorder %s14, 0
    %p35 = por %p33, %p34
    %p36 = scmp.ne.s32.totalorder %s22, %s23
    %p37 = scmp.eq.s32.totalorder %s15, 1
    %p38 = por %p36, %p37
    %p40 = scmp.ne.s32.totalorder %s23, %s39
    %p41 = scmp.eq.s32.totalorder %s15, 0
    %p42 = por %p40, %p41
    %s44 = sadd.s32 %s43, 1
    %p47 = scmp.eq.s32.totalorder %s9, 1
    %p48 = scmp.ne.s32.totalorder %s43, %s45
    %p49 = scmp.eq.s32.totalorder %s9, 0
    %p50 = por %p48, %p49
    %p51 = scmp.ne.s32.totalorder %s43, %s45
    %p52 = scmp.eq.s32.totalorder %s14, 1
    %p53 = por %p51, %p52
    %p54 = scmp.ne.s32.totalorder %s45, %s46
    %p55 = scmp.eq.s32.totalorder %s14, 0
    %p56 = por %p54, %p55
    %p57 = scmp.ne.s32.totalorder %s45, %s46
    %p58 = scmp.eq.s32.totalorder %s15, 1
    %p59 = por %p57, %p58
    %p61 = scmp.ne.s32.totalorder %s46, %s60
    %p62 = scmp.eq.s32.totalorder %s15, 0
    %p63 = por %p61, %p62
    %s65 = sadd.s32 %s64, 1
    %p68 = scmp.eq.s32.totalorder %s9, 1
    %p69 = scmp.ne.s32.totalorder %s64, %s66
    %p70 = scmp.eq.s32.totalorder %s9, 0
    %p71 = por %p69, %p70
    %p72 = scmp.ne.s32.totalorder %s64, %s66
    %p73 = scmp.eq.s32.totalorder %s14, 1
    %p74 = por %p72, %p73
    %p75 = scmp.ne.s32.totalorder %s66, %s67
    %p76 = scmp.eq.s32.totalorder %s14, 0
    %p77 = por %p75, %p76
    %p78 = scmp.ne.s32.totalorder %s66, %s67
    %p79 = scmp.eq.s32.totalorder %s15, 1
    %p80 = por %p78, %p79
    %p82 = scmp.ne.s32.totalorder %s67, %s81
    %p83 = scmp.eq.s32.totalorder %s15, 0
    %p84 = por %p82, %p83
    %s85 = ssub.s32 %s9, %s16
    %p86 = scmp.eq.s32.totalorder %s85, 0
    %s88 = sadd.s32 %s87, 1
    %s89 = scalar_select %p86, %s87, %s88
    %p92 = pneg %p86
    %p93 = scmp.eq.s32.totalorder %s9, 1
    %p94 = por %p92, %p93
    %p95 = scmp.ne.s32.totalorder %s87, %s90
    %p96 = scmp.eq.s32.totalorder %s9, 0
    %p97 = por %p95, %p96
    %p98 = scmp.ne.s32.totalorder %s87, %s90
    %p99 = scmp.eq.s32.totalorder %s14, 1
    %p100 = por %p98, %p99
    %p101 = scmp.ne.s32.totalorder %s90, %s91
    %p102 = scmp.eq.s32.totalorder %s14, 0
    %p103 = por %p101, %p102
    %p104 = scmp.ne.s32.totalorder %s90, %s91
    %p105 = scmp.eq.s32.totalorder %s15, 1
    %p106 = por %p104, %p105
    %p108 = scmp.ne.s32.totalorder %s91, %s107
    %p109 = scmp.eq.s32.totalorder %s15, 0
    %p110 = por %p108, %p109
    %p111 = scmp.le.s32.totalorder 1, %s9
    %p112 = scmp.lt.s32.totalorder %s9, 3
    %p113 = pnand %p111, %p112
    %p114 = pneg %p113
    // Predicated region
    $region9: #{cnn2d_forward.6} parent=5 // pred_check
      _
    $region10: #{cnn2d_forward.6} parent=5 // pred_check_branch
      %116 = sbr.rel (%p113) target = $region12
    $region11: #{cnn2d_forward.6} parent=5 // pred_region
      %s117 = ssub.s32 %s9, 1
      // Predicated region
      $region13: #{cnn2d_forward.6} parent=11 // pred_check
        %p118 = pneg %p56
      $region14: #{cnn2d_forward.6} parent=11 // pred_check_branch
        %120 = sbr.rel (%p118) target = $region16
      $region15: #{cnn2d_forward.6} parent=11 // pred_region
        _
      $region16: #{cnn2d_forward.6} parent=11 // pred_fallthru
        _
      // Predicated region
      $region17: #{cnn2d_forward.6} parent=11 // pred_check
        %p121 = pneg %p77
      $region18: #{cnn2d_forward.6} parent=11 // pred_check_branch
        %123 = sbr.rel (%p121) target = $region20
      $region19: #{cnn2d_forward.6} parent=11 // pred_region
        _
      $region20: #{cnn2d_forward.6} parent=11 // pred_fallthru
        _
    $region12: #{cnn2d_forward.6} parent=5 // pred_fallthru
      _
    %p124 = scmp.lt.s32.totalorder %s9, 2
    // Predicated region
    $region21: #{cnn2d_forward.6} parent=5 // pred_check
      %p125 = pneg %p124
    $region22: #{cnn2d_forward.6} parent=5 // pred_check_branch
      %127 = sbr.rel (%p125) target = $region24
    $region23: #{cnn2d_forward.6} parent=5 // pred_region
      // Predicated region
      $region25: #{cnn2d_forward.6} parent=23 // pred_check
        %p128 = pneg %p29
      $region26: #{cnn2d_forward.6} parent=23 // pred_check_branch
        %130 = sbr.rel (%p128) target = $region28
      $region27: #{cnn2d_forward.6} parent=23 // pred_region
        %p131 = scmp.lt.s32.totalorder %s9, 1
        %s132 = scalar_select %p131, %s9, 1
        %s133 = smul.addr %s132, 60
        %s134 = smul.addr %s133, 8
        %s135 = scalar_lea.vmem %s0, %s134
      $region28: #{cnn2d_forward.6} parent=23 // pred_fallthru
        _
    $region24: #{cnn2d_forward.6} parent=5 // pred_fallthru
      _
    %p136 = scmp.le.s32.totalorder 1, %s9
    %p137 = scmp.lt.s32.totalorder %s9, 3
    %p138 = pnand %p136, %p137
    %p139 = pneg %p138
    // Predicated region
    $region29: #{cnn2d_forward.6} parent=5 // pred_check
      _
    $region30: #{cnn2d_forward.6} parent=5 // pred_check_branch
      %141 = sbr.rel (%p138) target = $region32
    $region31: #{cnn2d_forward.6} parent=5 // pred_region
      %s142 = ssub.s32 %s9, 1
      %p143 = scmp.lt.s32.totalorder %s14, 1
      %s144 = scalar_select %p143, %s14, 1
      %s145 = smul.addr %s144, 60
      %s146 = smul.addr %s145, 8
      %s147 = scalar_lea.vmem %s0, %s146
      %p148 = pneg %p35
      %p149 = pneg %p32
      %p150 = pneg %p56
      %p151 = pneg %p53
      %p152 = pneg %p77
      %p153 = pneg %p74
      %p154 = pneg %p103
      %p155 = pneg %p100
      %p156 = scmp.lt.s32.totalorder %s14, 1
      %s157 = scalar_select %p156, %s14, 1
      %s158 = smul.addr %s157, 5
      %s159 = smul.addr %s158, 8
      %s160 = scalar_lea.vmem %s3, %s159
      %p161 = scmp.lt.s32.totalorder %s14, 1
      %s162 = scalar_select %p161, %s14, 1
      %s163 = smul.addr %s162, 60
      %s164 = smul.addr %s163, 8
      %s165 = scalar_lea.vmem %s0, %s164
      %p166 = scmp.lt.s32.totalorder %s14, 1
      %s167 = scalar_select %p166, %s14, 1
      %s168 = smul.addr %s167, 5
      %s169 = smul.addr %s168, 8
      %s170 = scalar_lea.vmem %s3, %s169
      %v171 = vld [vmem:[%s1] sm:$0xff]
      %v172 = vld [vmem:[%s1 + $0x8] sm:$0xff]
      %v173 = vld [vmem:[%s1 + $0x10] sm:$0xff]
      %v174 = vld [vmem:[%s1 + $0x18] sm:$0xff]
      %v175 = vld [vmem:[%s1 + $0x20] sm:$0xff]
      %v176 = vld [vmem:[%s1 + $0x28] sm:$0xff]
      %v177 = vld [vmem:[%s1 + $0x30] sm:$0xff]
      %v178 = vld [vmem:[%s1 + $0x38] sm:$0xff]
      %v179 = vld [vmem:[%s1 + $0x40] sm:$0xff]
      %v180 = vld [vmem:[%s1 + $0x48] sm:$0xff]
      %v181 = vld [vmem:[%s1 + $0x50] sm:$0xff]
      %v182 = vld [vmem:[%s1 + $0x58] sm:$0xff]
      %v183 = vld [vmem:[%s1 + $0x60] sm:$0xff]
      %v184 = vld [vmem:[%s1 + $0x68] sm:$0xff]
      %v185 = vld [vmem:[%s1 + $0x70] sm:$0xff]
      %v186 = vld [vmem:[%s1 + $0x78] sm:$0xff]
      %v187 = vld [vmem:[%s1 + $0x80] sm:$0xff]
      %v188 = vld [vmem:[%s1 + $0x88] sm:$0xff]
      %v189 = vld [vmem:[%s1 + $0x90] sm:$0xff]
      %v190 = vld [vmem:[%s1 + $0x98] sm:$0xff]
      %v191 = vld [vmem:[%s1 + $0xa0] sm:$0xff]
      %v192 = vld [vmem:[%s1 + $0xa8] sm:$0xff]
      %v193 = vld [vmem:[%s1 + $0xb0] sm:$0xff]
      %v194 = vld [vmem:[%s1 + $0xb8] sm:$0xff]
      %v195 = vld [vmem:[%s1 + $0xc0] sm:$0xff]
      %v196 = vld [vmem:[%s1 + $0xc8] sm:$0xff]
      %v197 = vld [vmem:[%s1 + $0xd0] sm:$0xff]
      %v198 = vld [vmem:[%s1 + $0xd8] sm:$0xff]
      %v199 = vld [vmem:[%s1 + $0xe0] sm:$0xff]
      %v200 = vld [vmem:[%s1 + $0xe8] sm:$0xff]
      %v201 = vld [vmem:[%s1 + $0xf0] sm:$0xff]
      %v202 = vld [vmem:[%s1 + $0xf8] sm:$0xff]
      %v203 = vld [vmem:[%s1 + $0x100] sm:$0xff]
      %v204 = vld [vmem:[%s1 + $0x108] sm:$0xff]
      %v205 = vld [vmem:[%s1 + $0x110] sm:$0xff]
      %v206 = vld [vmem:[%s1 + $0x118] sm:$0xff]
      %v207 = vld [vmem:[%s2] sm:$0x1]
      %v208 = vld [vmem:[%s2 + $0x1] sm:$0x1]
      %v209 = vld [vmem:[%s2 + $0x2] sm:$0x1]
      %v210 = vld [vmem:[%s165] sm:$0xff]
      %v211 = vld [vmem:[%s165 + $0x8] sm:$0xff]
      %v212 = vld [vmem:[%s165 + $0x10] sm:$0xff]
      %v213 = vld [vmem:[%s165 + $0x18] sm:$0xff]
      %v214 = vld [vmem:[%s165 + $0x20] sm:$0xff]
      %v215 = vld [vmem:[%s165 + $0x28] sm:$0xff]
      %v216 = vld [vmem:[%s165 + $0x30] sm:$0xff]
      %v217 = vld [vmem:[%s165 + $0x38] sm:$0xff]
      %v218 = vld [vmem:[%s165 + $0x40] sm:$0xff]
      %v219 = vld [vmem:[%s165 + $0x48] sm:$0xff]
      %v220 = vld [vmem:[%s165 + $0x50] sm:$0xff]
      %v221 = vld [vmem:[%s165 + $0x58] sm:$0xff]
      %v222 = vld [vmem:[%s165 + $0x60] sm:$0xf]
      %v223 = vld [vmem:[%s165 + $0x68] sm:$0xf]
      %v224 = vld [vmem:[%s165 + $0x70] sm:$0xf]
      %v225 = vlaneseq
      %v226 = vshrl.u32 %v225, 7
      %v227 = vsub.s32 0, %v226
      %v228 = vrot.slane %v207, %v227
      %vm229 = vcmask 261120
      %v231 = vsel %vm229, %v212, 0
      %v234 = vsel %vm229, %v215, 0
      %v237 = vsel %vm229, %v218, 0
      %v240 = vsel %vm229, %v221, 0
      %v243 = vsel %vm229, %v224, 0
      %245 = vmatprep.subr.mxu0 0.0
      %246 = vmatpush1.msra.mxu0 %v171
      %247 = vmatprep.subr.mxu0 0.0
      %248 = vmatpush1.msra.mxu0 %v172
      %249 = vmatprep.subr.mxu0 0.0
      %250 = vmatpush1.msra.mxu0 %v173
      %251 = vmatprep.subr.mxu0 0.0
      %252 = vmatpush1.msra.mxu0 %v174
      %253 = vmatprep.subr.mxu0 0.0
      %254 = vmatpush1.msra.mxu0 %v175
      %255 = vmatprep.subr.mxu0 0.0
      %256 = vmatpush1.msra.mxu0 %v176
      %257 = vmatprep.subr.mxu0 0.0
      %258 = vmatpush1.msra.mxu0 %v177
      %259 = vmatprep.subr.mxu0 0.0
      %260 = vmatpush1.msra.mxu0 %v178
      %261 = vmatprep.subr.mxu0 0.0
      %262 = vmatpush1.msra.mxu0 %v179
      %263 = vmatprep.subr.mxu0 0.0
      %264 = vmatpush1.msra.mxu0 %v180
      %265 = vmatprep.subr.mxu0 0.0
      %266 = vmatpush1.msra.mxu0 %v181
      %267 = vmatprep.subr.mxu0 0.0
      %268 = vmatpush1.msra.mxu0 %v182
      %269 = vmatprep.subr.mxu0 0.0
      %270 = vmatpush1.msra.mxu0 %v183
      %271 = vmatprep.subr.mxu0 0.0
      %272 = vmatpush1.msra.mxu0 %v184
      %273 = vmatprep.subr.mxu0 0.0
      %274 = vmatpush1.msra.mxu0 %v185
      %275 = vmatprep.subr.mxu0 0.0
      %276 = vmatpush1.msra.mxu0 %v186
      %277 = vmatprep.subr.mxu0 0.0
      %278 = vmatpush1.msra.mxu0 %v187
      %279 = vmatprep.subr.mxu0 0.0
      %280 = vmatpush1.msra.mxu0 %v188
      %281 = vmatprep.subr.mxu0 0.0
      %282 = vmatpush1.msra.mxu0 %v189
      %283 = vmatprep.subr.mxu0 0.0
      %284 = vmatpush1.msra.mxu0 %v190
      %285 = vmatprep.subr.mxu0 0.0
      %286 = vmatpush1.msra.mxu0 %v191
      %287 = vmatprep.subr.mxu0 0.0
      %288 = vmatpush1.msra.mxu0 %v192
      %289 = vmatprep.subr.mxu0 0.0
      %290 = vmatpush1.msra.mxu0 %v193
      %291 = vmatprep.subr.mxu0 0.0
      %292 = vmatpush1.msra.mxu0 %v194
      %293 = vmatprep.subr.mxu0 0.0
      %294 = vmatpush1.msra.mxu0 %v195
      %295 = vmatprep.subr.mxu0 0.0
      %296 = vmatpush1.msra.mxu0 %v196
      %297 = vmatprep.subr.mxu0 0.0
      %298 = vmatpush1.msra.mxu0 %v197
      %299 = vmatprep.subr.mxu0 0.0
      %300 = vmatpush1.msra.mxu0 %v198
      %301 = vmatprep.subr.mxu0 0.0
      %302 = vmatpush1.msra.mxu0 %v199
      %303 = vmatprep.subr.mxu0 0.0
      %304 = vmatpush1.msra.mxu0 %v200
      %305 = vmatprep.subr.mxu0 0.0
      %306 = vmatpush1.msra.mxu0 %v201
      %307 = vmatprep.subr.mxu0 0.0
      %308 = vmatpush1.msra.mxu0 %v202
      %309 = vmatprep.mubr.f32.mxu0 %v211
      %310 = vmatmul.mubr.f32.gmra.mrb[0].mxu0 %v210
      %v311 = vpop.f32.mrb[0].mxu0
      %v312 = vadd.f32 %v228, %v311
      %v313 = vpop.f32.mrb[0].mxu0
      %314 = vmatprep.mubr.f32.mxu0 %v214
      %315 = vmatmul.mubr.f32.gmra.mrb[0].mxu0 %v213
      %v316 = vpop.f32.mrb[0].mxu0
      %v317 = vadd.f32 %v228, %v316
      %v318 = vpop.f32.mrb[0].mxu0
      %319 = vmatprep.mubr.f32.mxu0 %v217
      %320 = vmatmul.mubr.f32.gmra.mrb[0].mxu0 %v216
      %v321 = vpop.f32.mrb[0].mxu0
      %v322 = vadd.f32 %v228, %v321
      %v323 = vpop.f32.mrb[0].mxu0
      %324 = vmatprep.mubr.f32.mxu0 %v220
      %325 = vmatmul.mubr.f32.gmra.mrb[0].mxu0 %v219
      %v326 = vpop.f32.mrb[0].mxu0
      %v327 = vadd.f32 %v228, %v326
      %v328 = vpop.f32.mrb[0].mxu0
      %329 = vmatprep.mubr.f32.mxu0 %v223
      %330 = vmatmul.mubr.f32.gmra.mrb[0].mxu0 %v222
      %v331 = vpop.f32.mrb[0].mxu0
      %v332 = vadd.f32 %v228, %v331
      %v333 = vpop.f32.mrb[0].mxu0
      %334 = vdwg.mxu0
      %335 = vmatprep.subr.mxu0 0.0
      %336 = vmatpush1.msra.mxu0 %v203
      %337 = vmatprep.subr.mxu0 0.0
      %338 = vmatpush1.msra.mxu0 %v204
      %339 = vmatprep.subr.mxu0 0.0
      %340 = vmatpush1.msra.mxu0 %v205
      %341 = vmatprep.subr.mxu0 0.0
      %342 = vmatpush1.msra.mxu0 %v206
      %343 = vmatprep.subr.mxu0 0.0
      %344 = vmatpush1.msra.mxu0 0.0
      %345 = vmatprep.subr.mxu0 0.0
      %346 = vmatpush1.msra.mxu0 0.0
      %347 = vmatprep.subr.mxu0 0.0
      %348 = vmatpush1.msra.mxu0 0.0
      %349 = vmatprep.subr.mxu0 0.0
      %350 = vmatpush1.msra.mxu0 0.0
      %351 = vmatprep.subr.mxu0 0.0
      %352 = vmatpush1.msra.mxu0 0.0
      %353 = vmatprep.subr.mxu0 0.0
      %354 = vmatpush1.msra.mxu0 0.0
      %355 = vmatprep.subr.mxu0 0.0
      %356 = vmatpush1.msra.mxu0 0.0
      %357 = vmatprep.subr.mxu0 0.0
      %358 = vmatpush1.msra.mxu0 0.0
      %359 = vmatprep.subr.mxu0 0.0
      %360 = vmatpush1.msra.mxu0 0.0
      %361 = vmatprep.subr.mxu0 0.0
      %362 = vmatpush1.msra.mxu0 0.0
      %363 = vmatprep.subr.mxu0 0.0
      %364 = vmatpush1.msra.mxu0 0.0
      %365 = vmatprep.subr.mxu0 0.0
      %366 = vmatpush1.msra.mxu0 0.0
      %367 = vmatprep.subr.mxu0 0.0
      %368 = vmatpush1.msra.mxu0 0.0
      %369 = vmatprep.subr.mxu0 0.0
      %370 = vmatpush1.msra.mxu0 0.0
      %371 = vmatprep.subr.mxu0 0.0
      %372 = vmatpush1.msra.mxu0 0.0
      %373 = vmatprep.subr.mxu0 0.0
      %374 = vmatpush1.msra.mxu0 0.0
      %375 = vmatprep.subr.mxu0 0.0
      %376 = vmatpush1.msra.mxu0 0.0
      %377 = vmatprep.subr.mxu0 0.0
      %378 = vmatpush1.msra.mxu0 0.0
      %379 = vmatprep.subr.mxu0 0.0
      %380 = vmatpush1.msra.mxu0 0.0
      %381 = vmatprep.subr.mxu0 0.0
      %382 = vmatpush1.msra.mxu0 0.0
      %383 = vmatprep.subr.mxu0 0.0
      %384 = vmatpush1.msra.mxu0 0.0
      %385 = vmatprep.subr.mxu0 0.0
      %386 = vmatpush1.msra.mxu0 0.0
      %387 = vmatprep.subr.mxu0 0.0
      %388 = vmatpush1.msra.mxu0 0.0
      %389 = vmatprep.subr.mxu0 0.0
      %390 = vmatpush1.msra.mxu0 0.0
      %391 = vmatprep.subr.mxu0 0.0
      %392 = vmatpush1.msra.mxu0 0.0
      %393 = vmatprep.subr.mxu0 0.0
      %394 = vmatpush1.msra.mxu0 0.0
      %395 = vmatprep.subr.mxu0 0.0
      %396 = vmatpush1.msra.mxu0 0.0
      %397 = vmatprep.subr.mxu0 0.0
      %398 = vmatpush1.msra.mxu0 0.0
      %399 = vmatprep.mubr.f32.mxu0 0.0
      %400 = vmatmul.mubr.f32.gmra.mrb[0].mxu0 %v231
      %v401 = vpop.f32.mrb[0].mxu0
      %v402 = vadd.f32 %v312, %v401
      %v403 = vpop.f32.mrb[0].mxu0
      %404 = vmatprep.mubr.f32.mxu0 0.0
      %405 = vmatmul.mubr.f32.gmra.mrb[0].mxu0 %v234
      %v406 = vpop.f32.mrb[0].mxu0
      %v407 = vadd.f32 %v317, %v406
      %v408 = vpop.f32.mrb[0].mxu0
      %409 = vmatprep.mubr.f32.mxu0 0.0
      %410 = vmatmul.mubr.f32.gmra.mrb[0].mxu0 %v237
      %v411 = vpop.f32.mrb[0].mxu0
      %v412 = vadd.f32 %v322, %v411
      %v413 = vpop.f32.mrb[0].mxu0
      %414 = vmatprep.mubr.f32.mxu0 0.0
      %415 = vmatmul.mubr.f32.gmra.mrb[0].mxu0 %v240
      %v416 = vpop.f32.mrb[0].mxu0
      %v417 = vadd.f32 %v327, %v416
      %v418 = vpop.f32.mrb[0].mxu0
      %419 = vmatprep.mubr.f32.mxu0 0.0
      %420 = vmatmul.mubr.f32.gmra.mrb[0].mxu0 %v243
      %v421 = vpop.f32.mrb[0].mxu0
      %v422 = vadd.f32 %v332, %v421
      %v423 = vpop.f32.mrb[0].mxu0
      %424 = vdwg.mxu0
      %v425 = vmax.f32 %v402, 0.0
      %v426 = vmax.f32 %v407, 0.0
      %v427 = vmax.f32 %v412, 0.0
      %v428 = vmax.f32 %v417, 0.0
      %v429 = vmax.f32 %v422, 0.0
      %v430 = vlaneseq
      %v431 = vshrl.u32 %v430, 7
      %v432 = vsub.s32 0, %v431
      %v433 = vrot.slane %v208, %v432
      %v434 = vmul.f32 %v425, %v433
      %v435 = vmul.f32 %v426, %v433
      %v436 = vmul.f32 %v427, %v433
      %v437 = vmul.f32 %v428, %v433
      %v438 = vmul.f32 %v429, %v433
      %v439 = vlaneseq
      %v440 = vshrl.u32 %v439, 7
      %v441 = vsub.s32 0, %v440
      %v442 = vrot.slane %v209, %v441
      %v443 = vadd.f32 %v434, %v442
      %v444 = vadd.f32 %v435, %v442
      %v445 = vadd.f32 %v436, %v442
      %v446 = vadd.f32 %v437, %v442
      %v447 = vadd.f32 %v438, %v442
      %s448 = scalar_lea.vmem %s165, 120
      %v449 = vld [vmem:[%s448] sm:$0xff]
      %v450 = vld [vmem:[%s448 + $0x8] sm:$0xff]
      %v451 = vld [vmem:[%s448 + $0x10] sm:$0xff]
      %v452 = vld [vmem:[%s448 + $0x18] sm:$0xff]
      %v453 = vld [vmem:[%s448 + $0x20] sm:$0xff]
      %v454 = vld [vmem:[%s448 + $0x28] sm:$0xff]
      %v455 = vld [vmem:[%s448 + $0x30] sm:$0xff]
      %v456 = vld [vmem:[%s448 + $0x38] sm:$0xff]
      %v457 = vld [vmem:[%s448 + $0x40] sm:$0xff]
      %v458 = vld [vmem:[%s448 + $0x48] sm:$0xff]
      %v459 = vld [vmem:[%s448 + $0x50] sm:$0xff]
      %v460 = vld [vmem:[%s448 + $0x58] sm:$0xff]
      %v461 = vld [vmem:[%s448 + $0x60] sm:$0xf]
      %v462 = vld [vmem:[%s448 + $0x68] sm:$0xf]
      %v463 = vld [vmem:[%s448 + $0x70] sm:$0xf]
      %v465 = vsel %vm229, %v451, 0
      %v468 = vsel %vm229, %v454, 0
      %v471 = vsel %vm229, %v457, 0
      %v474 = vsel %vm229, %v460, 0
      %v477 = vsel %vm229, %v463, 0
      %479 = vmatprep.subr.mxu0 0.0
      %480 = vmatpush1.msra.mxu0 %v171
      %481 = vmatprep.subr.mxu0 0.0
      %482 = vmatpush1.msra.mxu0 %v172
      %483 = vmatprep.subr.mxu0 0.0
      %484 = vmatpush1.msra.mxu0 %v173
      %485 = vmatprep.subr.mxu0 0.0
      %486 = vmatpush1.msra.mxu0 %v174
      %487 = vmatprep.subr.mxu0 0.0
      %488 = vmatpush1.msra.mxu0 %v175
      %489 = vmatprep.subr.mxu0 0.0
      %490 = vmatpush1.msra.mxu0 %v176
      %491 = vmatprep.subr.mxu0 0.0
      %492 = vmatpush1.msra.mxu0 %v177
      %493 = vmatprep.subr.mxu0 0.0
      %494 = vmatpush1.msra.mxu0 %v178
      %495 = vmatprep.subr.mxu0 0.0
      %496 = vmatpush1.msra.mxu0 %v179
      %497 = vmatprep.subr.mxu0 0.0
      %498 = vmatpush1.msra.mxu0 %v180
      %499 = vmatprep.subr.mxu0 0.0
      %500 = vmatpush1.msra.mxu0 %v181
      %501 = vmatprep.subr.mxu0 0.0
      %502 = vmatpush1.msra.mxu0 %v182
      %503 = vmatprep.subr.mxu0 0.0
      %504 = vmatpush1.msra.mxu0 %v183
      %505 = vmatprep.subr.mxu0 0.0
      %506 = vmatpush1.msra.mxu0 %v184
      %507 = vmatprep.subr.mxu0 0.0
      %508 = vmatpush1.msra.mxu0 %v185
      %509 = vmatprep.subr.mxu0 0.0
      %510 = vmatpush1.msra.mxu0 %v186
      %511 = vmatprep.subr.mxu0 0.0
      %512 = vmatpush1.msra.mxu0 %v187
      %513 = vmatprep.subr.mxu0 0.0
      %514 = vmatpush1.msra.mxu0 %v188
      %515 = vmatprep.subr.mxu0 0.0
      %516 = vmatpush1.msra.mxu0 %v189
      %517 = vmatprep.subr.mxu0 0.0
      %518 = vmatpush1.msra.mxu0 %v190
      %519 = vmatprep.subr.mxu0 0.0
      %520 = vmatpush1.msra.mxu0 %v191
      %521 = vmatprep.subr.mxu0 0.0
      %522 = vmatpush1.msra.mxu0 %v192
      %523 = vmatprep.subr.mxu0 0.0
      %524 = vmatpush1.msra.mxu0 %v193
      %525 = vmatprep.subr.mxu0 0.0
      %526 = vmatpush1.msra.mxu0 %v194
      %527 = vmatprep.subr.mxu0 0.0
      %528 = vmatpush1.msra.mxu0 %v195
      %529 = vmatprep.subr.mxu0 0.0
      %530 = vmatpush1.msra.mxu0 %v196
      %531 = vmatprep.subr.mxu0 0.0
      %532 = vmatpush1.msra.mxu0 %v197
      %533 = vmatprep.subr.mxu0 0.0
      %534 = vmatpush1.msra.mxu0 %v198
      %535 = vmatprep.subr.mxu0 0.0
      %536 = vmatpush1.msra.mxu0 %v199
      %537 = vmatprep.subr.mxu0 0.0
      %538 = vmatpush1.msra.mxu0 %v200
      %539 = vmatprep.subr.mxu0 0.0
      %540 = vmatpush1.msra.mxu0 %v201
      %541 = vmatprep.subr.mxu0 0.0
      %542 = vmatpush1.msra.mxu0 %v202
      %543 = vmatprep.mubr.f32.mxu0 %v450
      %544 = vmatmul.mubr.f32.gmra.mrb[0].mxu0 %v449
      %v545 = vpop.f32.mrb[0].mxu0
      %v546 = vadd.f32 %v228, %v545
      %v547 = vpop.f32.mrb[0].mxu0
      %548 = vmatprep.mubr.f32.mxu0 %v453
      %549 = vmatmul.mubr.f32.gmra.mrb[0].mxu0 %v452
      %v550 = vpop.f32.mrb[0].mxu0
      %v551 = vadd.f32 %v228, %v550
      %v552 = vpop.f32.mrb[0].mxu0
      %553 = vmatprep.mubr.f32.mxu0 %v456
      %554 = vmatmul.mubr.f32.gmra.mrb[0].mxu0 %v455
      %v555 = vpop.f32.mrb[0].mxu0
      %v556 = vadd.f32 %v228, %v555
      %v557 = vpop.f32.mrb[0].mxu0
      %558 = vmatprep.mubr.f32.mxu0 %v459
      %559 = vmatmul.mubr.f32.gmra.mrb[0].mxu0 %v458
      %v560 = vpop.f32.mrb[0].mxu0
      %v561 = vadd.f32 %v228, %v560
      %v562 = vpop.f32.mrb[0].mxu0
      %563 = vmatprep.mubr.f32.mxu0 %v462
      %564 = vmatmul.mubr.f32.gmra.mrb[0].mxu0 %v461
      %v565 = vpop.f32.mrb[0].mxu0
      %v566 = vadd.f32 %v228, %v565
      %v567 = vpop.f32.mrb[0].mxu0
      %568 = vdwg.mxu0
      %569 = vmatprep.subr.mxu0 0.0
      %570 = vmatpush1.msra.mxu0 %v203
      %571 = vmatprep.subr.mxu0 0.0
      %572 = vmatpush1.msra.mxu0 %v204
      %573 = vmatprep.subr.mxu0 0.0
      %574 = vmatpush1.msra.mxu0 %v205
      %575 = vmatprep.subr.mxu0 0.0
      %576 = vmatpush1.msra.mxu0 %v206
      %577 = vmatprep.subr.mxu0 0.0
      %578 = vmatpush1.msra.mxu0 0.0
      %579 = vmatprep.subr.mxu0 0.0
      %580 = vmatpush1.msra.mxu0 0.0
      %581 = vmatprep.subr.mxu0 0.0
      %582 = vmatpush1.msra.mxu0 0.0
      %583 = vmatprep.subr.mxu0 0.0
      %584 = vmatpush1.msra.mxu0 0.0
      %585 = vmatprep.subr.mxu0 0.0
      %586 = vmatpush1.msra.mxu0 0.0
      %587 = vmatprep.subr.mxu0 0.0
      %588 = vmatpush1.msra.mxu0 0.0
      %589 = vmatprep.subr.mxu0 0.0
      %590 = vmatpush1.msra.mxu0 0.0
      %591 = vmatprep.subr.mxu0 0.0
      %592 = vmatpush1.msra.mxu0 0.0
      %593 = vmatprep.subr.mxu0 0.0
      %594 = vmatpush1.msra.mxu0 0.0
      %595 = vmatprep.subr.mxu0 0.0
      %596 = vmatpush1.msra.mxu0 0.0
      %597 = vmatprep.subr.mxu0 0.0
      %598 = vmatpush1.msra.mxu0 0.0
      %599 = vmatprep.subr.mxu0 0.0
      %600 = vmatpush1.msra.mxu0 0.0
      %601 = vmatprep.subr.mxu0 0.0
      %602 = vmatpush1.msra.mxu0 0.0
      %603 = vmatprep.subr.mxu0 0.0
      %604 = vmatpush1.msra.mxu0 0.0
      %605 = vmatprep.subr.mxu0 0.0
      %606 = vmatpush1.msra.mxu0 0.0
      %607 = vmatprep.subr.mxu0 0.0
      %608 = vmatpush1.msra.mxu0 0.0
      %609 = vmatprep.subr.mxu0 0.0
      %610 = vmatpush1.msra.mxu0 0.0
      %611 = vmatprep.subr.mxu0 0.0
      %612 = vmatpush1.msra.mxu0 0.0
      %613 = vmatprep.subr.mxu0 0.0
      %614 = vmatpush1.msra.mxu0 0.0
      %615 = vmatprep.subr.mxu0 0.0
      %616 = vmatpush1.msra.mxu0 0.0
      %617 = vmatprep.subr.mxu0 0.0
      %618 = vmatpush1.msra.mxu0 0.0
      %619 = vmatprep.subr.mxu0 0.0
      %620 = vmatpush1.msra.mxu0 0.0
      %621 = vmatprep.subr.mxu0 0.0
      %622 = vmatpush1.msra.mxu0 0.0
      %623 = vmatprep.subr.mxu0 0.0
      %624 = vmatpush1.msra.mxu0 0.0
      %625 = vmatprep.subr.mxu0 0.0
      %626 = vmatpush1.msra.mxu0 0.0
      %627 = vmatprep.subr.mxu0 0.0
      %628 = vmatpush1.msra.mxu0 0.0
      %629 = vmatprep.subr.mxu0 0.0
      %630 = vmatpush1.msra.mxu0 0.0
      %631 = vmatprep.subr.mxu0 0.0
      %632 = vmatpush1.msra.mxu0 0.0
      %633 = vmatprep.mubr.f32.mxu0 0.0
      %634 = vmatmul.mubr.f32.gmra.mrb[0].mxu0 %v465
      %v635 = vpop.f32.mrb[0].mxu0
      %v636 = vadd.f32 %v546, %v635
      %v637 = vpop.f32.mrb[0].mxu0
      %638 = vmatprep.mubr.f32.mxu0 0.0
      %639 = vmatmul.mubr.f32.gmra.mrb[0].mxu0 %v468
      %v640 = vpop.f32.mrb[0].mxu0
      %v641 = vadd.f32 %v551, %v640
      %v642 = vpop.f32.mrb[0].mxu0
      %643 = vmatprep.mubr.f32.mxu0 0.0
      %644 = vmatmul.mubr.f32.gmra.mrb[0].mxu0 %v471
      %v645 = vpop.f32.mrb[0].mxu0
      %v646 = vadd.f32 %v556, %v645
      %v647 = vpop.f32.mrb[0].mxu0
      %648 = vmatprep.mubr.f32.mxu0 0.0
      %649 = vmatmul.mubr.f32.gmra.mrb[0].mxu0 %v474
      %v650 = vpop.f32.mrb[0].mxu0
      %v651 = vadd.f32 %v561, %v650
      %v652 = vpop.f32.mrb[0].mxu0
      %653 = vmatprep.mubr.f32.mxu0 0.0
      %654 = vmatmul.mubr.f32.gmra.mrb[0].mxu0 %v477
      %v655 = vpop.f32.mrb[0].mxu0
      %v656 = vadd.f32 %v566, %v655
      %v657 = vpop.f32.mrb[0].mxu0
      %658 = vdwg.mxu0
      %v659 = vmax.f32 %v636, 0.0
      %v660 = vmax.f32 %v641, 0.0
      %v661 = vmax.f32 %v646, 0.0
      %v662 = vmax.f32 %v651, 0.0
      %v663 = vmax.f32 %v656, 0.0
      %v664 = vmul.f32 %v659, %v433
      %v665 = vmul.f32 %v660, %v433
      %v666 = vmul.f32 %v661, %v433
      %v667 = vmul.f32 %v662, %v433
      %v668 = vmul.f32 %v663, %v433
      %v669 = vadd.f32 %v664, %v442
      %v670 = vadd.f32 %v665, %v442
      %v671 = vadd.f32 %v666, %v442
      %v672 = vadd.f32 %v667, %v442
      %v673 = vadd.f32 %v668, %v442
      %v674 = vmax.f32 %v443, %v669
      %v675 = vmax.f32 %v444, %v670
      %v676 = vmax.f32 %v445, %v671
      %v677 = vmax.f32 %v446, %v672
      %v678 = vmax.f32 %v447, %v673
      %s679 = scalar_lea.vmem %s165, 240
      %v680 = vld [vmem:[%s679] sm:$0xff]
      %v681 = vld [vmem:[%s679 + $0x8] sm:$0xff]
      %v682 = vld [vmem:[%s679 + $0x10] sm:$0xff]
      %v683 = vld [vmem:[%s679 + $0x18] sm:$0xff]
      %v684 = vld [vmem:[%s679 + $0x20] sm:$0xff]
      %v685 = vld [vmem:[%s679 + $0x28] sm:$0xff]
      %v686 = vld [vmem:[%s679 + $0x30] sm:$0xff]
      %v687 = vld [vmem:[%s679 + $0x38] sm:$0xff]
      %v688 = vld [vmem:[%s679 + $0x40] sm:$0xff]
      %v689 = vld [vmem:[%s679 + $0x48] sm:$0xff]
      %v690 = vld [vmem:[%s679 + $0x50] sm:$0xff]
      %v691 = vld [vmem:[%s679 + $0x58] sm:$0xff]
      %v692 = vld [vmem:[%s679 + $0x60] sm:$0xf]
      %v693 = vld [vmem:[%s679 + $0x68] sm:$0xf]
      %v694 = vld [vmem:[%s679 + $0x70] sm:$0xf]
      %v696 = vsel %vm229, %v682, 0
      %v699 = vsel %vm229, %v685, 0
      %v702 = vsel %vm229, %v688, 0
      %v705 = vsel %vm229, %v691, 0
      %v708 = vsel %vm229, %v694, 0
      %710 = vmatprep.subr.mxu0 0.0
      %711 = vmatpush1.msra.mxu0 %v171
      %712 = vmatprep.subr.mxu0 0.0
      %713 = vmatpush1.msra.mxu0 %v172
      %714 = vmatprep.subr.mxu0 0.0
      %715 = vmatpush1.msra.mxu0 %v173
      %716 = vmatprep.subr.mxu0 0.0
      %717 = vmatpush1.msra.mxu0 %v174
      %718 = vmatprep.subr.mxu0 0.0
      %719 = vmatpush1.msra.mxu0 %v175
      %720 = vmatprep.subr.mxu0 0.0
      %721 = vmatpush1.msra.mxu0 %v176
      %722 = vmatprep.subr.mxu0 0.0
      %723 = vmatpush1.msra.mxu0 %v177
      %724 = vmatprep.subr.mxu0 0.0
      %725 = vmatpush1.msra.mxu0 %v178
      %726 = vmatprep.subr.mxu0 0.0
      %727 = vmatpush1.msra.mxu0 %v179
      %728 = vmatprep.subr.mxu0 0.0
      %729 = vmatpush1.msra.mxu0 %v180
      %730 = vmatprep.subr.mxu0 0.0
      %731 = vmatpush1.msra.mxu0 %v181
      %732 = vmatprep.subr.mxu0 0.0
      %733 = vmatpush1.msra.mxu0 %v182
      %734 = vmatprep.subr.mxu0 0.0
      %735 = vmatpush1.msra.mxu0 %v183
      %736 = vmatprep.subr.mxu0 0.0
      %737 = vmatpush1.msra.mxu0 %v184
      %738 = vmatprep.subr.mxu0 0.0
      %739 = vmatpush1.msra.mxu0 %v185
      %740 = vmatprep.subr.mxu0 0.0
      %741 = vmatpush1.msra.mxu0 %v186
      %742 = vmatprep.subr.mxu0 0.0
      %743 = vmatpush1.msra.mxu0 %v187
      %744 = vmatprep.subr.mxu0 0.0
      %745 = vmatpush1.msra.mxu0 %v188
      %746 = vmatprep.subr.mxu0 0.0
      %747 = vmatpush1.msra.mxu0 %v189
      %748 = vmatprep.subr.mxu0 0.0
      %749 = vmatpush1.msra.mxu0 %v190
      %750 = vmatprep.subr.mxu0 0.0
      %751 = vmatpush1.msra.mxu0 %v191
      %752 = vmatprep.subr.mxu0 0.0
      %753 = vmatpush1.msra.mxu0 %v192
      %754 = vmatprep.subr.mxu0 0.0
      %755 = vmatpush1.msra.mxu0 %v193
      %756 = vmatprep.subr.mxu0 0.0
      %757 = vmatpush1.msra.mxu0 %v194
      %758 = vmatprep.subr.mxu0 0.0
      %759 = vmatpush1.msra.mxu0 %v195
      %760 = vmatprep.subr.mxu0 0.0
      %761 = vmatpush1.msra.mxu0 %v196
      %762 = vmatprep.subr.mxu0 0.0
      %763 = vmatpush1.msra.mxu0 %v197
      %764 = vmatprep.subr.mxu0 0.0
      %765 = vmatpush1.msra.mxu0 %v198
      %766 = vmatprep.subr.mxu0 0.0
      %767 = vmatpush1.msra.mxu0 %v199
      %768 = vmatprep.subr.mxu0 0.0
      %769 = vmatpush1.msra.mxu0 %v200
      %770 = vmatprep.subr.mxu0 0.0
      %771 = vmatpush1.msra.mxu0 %v201
      %772 = vmatprep.subr.mxu0 0.0
      %773 = vmatpush1.msra.mxu0 %v202
      %774 = vmatprep.mubr.f32.mxu0 %v681
      %775 = vmatmul.mubr.f32.gmra.mrb[0].mxu0 %v680
      %v776 = vpop.f32.mrb[0].mxu0
      %v777 = vadd.f32 %v228, %v776
      %v778 = vpop.f32.mrb[0].mxu0
      %779 = vmatprep.mubr.f32.mxu0 %v684
      %780 = vmatmul.mubr.f32.gmra.mrb[0].mxu0 %v683
      %v781 = vpop.f32.mrb[0].mxu0
      %v782 = vadd.f32 %v228, %v781
      %v783 = vpop.f32.mrb[0].mxu0
      %784 = vmatprep.mubr.f32.mxu0 %v687
      %785 = vmatmul.mubr.f32.gmra.mrb[0].mxu0 %v686
      %v786 = vpop.f32.mrb[0].mxu0
      %v787 = vadd.f32 %v228, %v786
      %v788 = vpop.f32.mrb[0].mxu0
      %789 = vmatprep.mubr.f32.mxu0 %v690
      %790 = vmatmul.mubr.f32.gmra.mrb[0].mxu0 %v689
      %v791 = vpop.f32.mrb[0].mxu0
      %v792 = vadd.f32 %v228, %v791
      %v793 = vpop.f32.mrb[0].mxu0
      %794 = vmatprep.mubr.f32.mxu0 %v693
      %795 = vmatmul.mubr.f32.gmra.mrb[0].mxu0 %v692
      %v796 = vpop.f32.mrb[0].mxu0
      %v797 = vadd.f32 %v228, %v796
      %v798 = vpop.f32.mrb[0].mxu0
      %799 = vdwg.mxu0
      %800 = vmatprep.subr.mxu0 0.0
      %801 = vmatpush1.msra.mxu0 %v203
      %802 = vmatprep.subr.mxu0 0.0
      %803 = vmatpush1.msra.mxu0 %v204
      %804 = vmatprep.subr.mxu0 0.0
      %805 = vmatpush1.msra.mxu0 %v205
      %806 = vmatprep.subr.mxu0 0.0
      %807 = vmatpush1.msra.mxu0 %v206
      %808 = vmatprep.subr.mxu0 0.0
      %809 = vmatpush1.msra.mxu0 0.0
      %810 = vmatprep.subr.mxu0 0.0
      %811 = vmatpush1.msra.mxu0 0.0
      %812 = vmatprep.subr.mxu0 0.0
      %813 = vmatpush1.msra.mxu0 0.0
      %814 = vmatprep.subr.mxu0 0.0
      %815 = vmatpush1.msra.mxu0 0.0
      %816 = vmatprep.subr.mxu0 0.0
      %817 = vmatpush1.msra.mxu0 0.0
      %818 = vmatprep.subr.mxu0 0.0
      %819 = vmatpush1.msra.mxu0 0.0
      %820 = vmatprep.subr.mxu0 0.0
      %821 = vmatpush1.msra.mxu0 0.0
      %822 = vmatprep.subr.mxu0 0.0
      %823 = vmatpush1.msra.mxu0 0.0
      %824 = vmatprep.subr.mxu0 0.0
      %825 = vmatpush1.msra.mxu0 0.0
      %826 = vmatprep.subr.mxu0 0.0
      %827 = vmatpush1.msra.mxu0 0.0
      %828 = vmatprep.subr.mxu0 0.0
      %829 = vmatpush1.msra.mxu0 0.0
      %830 = vmatprep.subr.mxu0 0.0
      %831 = vmatpush1.msra.mxu0 0.0
      %832 = vmatprep.subr.mxu0 0.0
      %833 = vmatpush1.msra.mxu0 0.0
      %834 = vmatprep.subr.mxu0 0.0
      %835 = vmatpush1.msra.mxu0 0.0
      %836 = vmatprep.subr.mxu0 0.0
      %837 = vmatpush1.msra.mxu0 0.0
      %838 = vmatprep.subr.mxu0 0.0
      %839 = vmatpush1.msra.mxu0 0.0
      %840 = vmatprep.subr.mxu0 0.0
      %841 = vmatpush1.msra.mxu0 0.0
      %842 = vmatprep.subr.mxu0 0.0
      %843 = vmatpush1.msra.mxu0 0.0
      %844 = vmatprep.subr.mxu0 0.0
      %845 = vmatpush1.msra.mxu0 0.0
      %846 = vmatprep.subr.mxu0 0.0
      %847 = vmatpush1.msra.mxu0 0.0
      %848 = vmatprep.subr.mxu0 0.0
      %849 = vmatpush1.msra.mxu0 0.0
      %850 = vmatprep.subr.mxu0 0.0
      %851 = vmatpush1.msra.mxu0 0.0
      %852 = vmatprep.subr.mxu0 0.0
      %853 = vmatpush1.msra.mxu0 0.0
      %854 = vmatprep.subr.mxu0 0.0
      %855 = vmatpush1.msra.mxu0 0.0
      %856 = vmatprep.subr.mxu0 0.0
      %857 = vmatpush1.msra.mxu0 0.0
      %858 = vmatprep.subr.mxu0 0.0
      %859 = vmatpush1.msra.mxu0 0.0
      %860 = vmatprep.subr.mxu0 0.0
      %861 = vmatpush1.msra.mxu0 0.0
      %862 = vmatprep.subr.mxu0 0.0
      %863 = vmatpush1.msra.mxu0 0.0
      %864 = vmatprep.mubr.f32.mxu0 0.0
      %865 = vmatmul.mubr.f32.gmra.mrb[0].mxu0 %v696
      %v866 = vpop.f32.mrb[0].mxu0
      %v867 = vadd.f32 %v777, %v866
      %v868 = vpop.f32.mrb[0].mxu0
      %869 = vmatprep.mubr.f32.mxu0 0.0
      %870 = vmatmul.mubr.f32.gmra.mrb[0].mxu0 %v699
      %v871 = vpop.f32.mrb[0].mxu0
      %v872 = vadd.f32 %v782, %v871
      %v873 = vpop.f32.mrb[0].mxu0
      %874 = vmatprep.mubr.f32.mxu0 0.0
      %875 = vmatmul.mubr.f32.gmra.mrb[0].mxu0 %v702
      %v876 = vpop.f32.mrb[0].mxu0
      %v877 = vadd.f32 %v787, %v876
      %v878 = vpop.f32.mrb[0].mxu0
      %879 = vmatprep.mubr.f32.mxu0 0.0
      %880 = vmatmul.mubr.f32.gmra.mrb[0].mxu0 %v705
      %v881 = vpop.f32.mrb[0].mxu0
      %v882 = vadd.f32 %v792, %v881
      %v883 = vpop.f32.mrb[0].mxu0
      %884 = vmatprep.mubr.f32.mxu0 0.0
      %885 = vmatmul.mubr.f32.gmra.mrb[0].mxu0 %v708
      %v886 = vpop.f32.mrb[0].mxu0
      %v887 = vadd.f32 %v797, %v886
      %v888 = vpop.f32.mrb[0].mxu0
      %889 = vdwg.mxu0
      %v890 = vmax.f32 %v867, 0.0
      %v891 = vmax.f32 %v872, 0.0
      %v892 = vmax.f32 %v877, 0.0
      %v893 = vmax.f32 %v882, 0.0
      %v894 = vmax.f32 %v887, 0.0
      %v895 = vmul.f32 %v890, %v433
      %v896 = vmul.f32 %v891, %v433
      %v897 = vmul.f32 %v892, %v433
      %v898 = vmul.f32 %v893, %v433
      %v899 = vmul.f32 %v894, %v433
      %v900 = vadd.f32 %v895, %v442
      %v901 = vadd.f32 %v896, %v442
      %v902 = vadd.f32 %v897, %v442
      %v903 = vadd.f32 %v898, %v442
      %v904 = vadd.f32 %v899, %v442
      %v905 = vmax.f32 %v674, %v900
      %v906 = vmax.f32 %v675, %v901
      %v907 = vmax.f32 %v676, %v902
      %v908 = vmax.f32 %v677, %v903
      %v909 = vmax.f32 %v678, %v904
      %s910 = scalar_lea.vmem %s165, 360
      %v911 = vld [vmem:[%s910] sm:$0xff]
      %v912 = vld [vmem:[%s910 + $0x8] sm:$0xff]
      %v913 = vld [vmem:[%s910 + $0x10] sm:$0xff]
      %v914 = vld [vmem:[%s910 + $0x18] sm:$0xff]
      %v915 = vld [vmem:[%s910 + $0x20] sm:$0xff]
      %v916 = vld [vmem:[%s910 + $0x28] sm:$0xff]
      %v917 = vld [vmem:[%s910 + $0x30] sm:$0xff]
      %v918 = vld [vmem:[%s910 + $0x38] sm:$0xff]
      %v919 = vld [vmem:[%s910 + $0x40] sm:$0xff]
      %v920 = vld [vmem:[%s910 + $0x48] sm:$0xff]
      %v921 = vld [vmem:[%s910 + $0x50] sm:$0xff]
      %v922 = vld [vmem:[%s910 + $0x58] sm:$0xff]
      %v923 = vld [vmem:[%s910 + $0x60] sm:$0xf]
      %v924 = vld [vmem:[%s910 + $0x68] sm:$0xf]
      %v925 = vld [vmem:[%s910 + $0x70] sm:$0xf]
      %v927 = vsel %vm229, %v913, 0
      %v930 = vsel %vm229, %v916, 0
      %v933 = vsel %vm229, %v919, 0
      %v936 = vsel %vm229, %v922, 0
      %v939 = vsel %vm229, %v925, 0
      %941 = vmatprep.subr.mxu0 0.0
      %942 = vmatpush1.msra.mxu0 %v171
      %943 = vmatprep.subr.mxu0 0.0
      %944 = vmatpush1.msra.mxu0 %v172
      %945 = vmatprep.subr.mxu0 0.0
      %946 = vmatpush1.msra.mxu0 %v173
      %947 = vmatprep.subr.mxu0 0.0
      %948 = vmatpush1.msra.mxu0 %v174
      %949 = vmatprep.subr.mxu0 0.0
      %950 = vmatpush1.msra.mxu0 %v175
      %951 = vmatprep.subr.mxu0 0.0
      %952 = vmatpush1.msra.mxu0 %v176
      %953 = vmatprep.subr.mxu0 0.0
      %954 = vmatpush1.msra.mxu0 %v177
      %955 = vmatprep.subr.mxu0 0.0
      %956 = vmatpush1.msra.mxu0 %v178
      %957 = vmatprep.subr.mxu0 0.0
      %958 = vmatpush1.msra.mxu0 %v179
      %959 = vmatprep.subr.mxu0 0.0
      %960 = vmatpush1.msra.mxu0 %v180
      %961 = vmatprep.subr.mxu0 0.0
      %962 = vmatpush1.msra.mxu0 %v181
      %963 = vmatprep.subr.mxu0 0.0
      %964 = vmatpush1.msra.mxu0 %v182
      %965 = vmatprep.subr.mxu0 0.0
      %966 = vmatpush1.msra.mxu0 %v183
      %967 = vmatprep.subr.mxu0 0.0
      %968 = vmatpush1.msra.mxu0 %v184
      %969 = vmatprep.subr.mxu0 0.0
      %970 = vmatpush1.msra.mxu0 %v185
      %971 = vmatprep.subr.mxu0 0.0
      %972 = vmatpush1.msra.mxu0 %v186
      %973 = vmatprep.subr.mxu0 0.0
      %974 = vmatpush1.msra.mxu0 %v187
      %975 = vmatprep.subr.mxu0 0.0
      %976 = vmatpush1.msra.mxu0 %v188
      %977 = vmatprep.subr.mxu0 0.0
      %978 = vmatpush1.msra.mxu0 %v189
      %979 = vmatprep.subr.mxu0 0.0
      %980 = vmatpush1.msra.mxu0 %v190
      %981 = vmatprep.subr.mxu0 0.0
      %982 = vmatpush1.msra.mxu0 %v191
      %983 = vmatprep.subr.mxu0 0.0
      %984 = vmatpush1.msra.mxu0 %v192
      %985 = vmatprep.subr.mxu0 0.0
      %986 = vmatpush1.msra.mxu0 %v193
      %987 = vmatprep.subr.mxu0 0.0
      %988 = vmatpush1.msra.mxu0 %v194
      %989 = vmatprep.subr.mxu0 0.0
      %990 = vmatpush1.msra.mxu0 %v195
      %991 = vmatprep.subr.mxu0 0.0
      %992 = vmatpush1.msra.mxu0 %v196
      %993 = vmatprep.subr.mxu0 0.0
      %994 = vmatpush1.msra.mxu0 %v197
      %995 = vmatprep.subr.mxu0 0.0
      %996 = vmatpush1.msra.mxu0 %v198
      %997 = vmatprep.subr.mxu0 0.0
      %998 = vmatpush1.msra.mxu0 %v199
      %999 = vmatprep.subr.mxu0 0.0
      %1000 = vmatpush1.msra.mxu0 %v200
      %1001 = vmatprep.subr.mxu0 0.0
      %1002 = vmatpush1.msra.mxu0 %v201
      %1003 = vmatprep.subr.mxu0 0.0
      %1004 = vmatpush1.msra.mxu0 %v202
      %1005 = vmatprep.mubr.f32.mxu0 %v912
      %1006 = vmatmul.mubr.f32.gmra.mrb[0].mxu0 %v911
      %v1007 = vpop.f32.mrb[0].mxu0
      %v1008 = vadd.f32 %v228, %v1007
      %v1009 = vpop.f32.mrb[0].mxu0
      %1010 = vmatprep.mubr.f32.mxu0 %v915
      %1011 = vmatmul.mubr.f32.gmra.mrb[0].mxu0 %v914
      %v1012 = vpop.f32.mrb[0].mxu0
      %v1013 = vadd.f32 %v228, %v1012
      %v1014 = vpop.f32.mrb[0].mxu0
      %1015 = vmatprep.mubr.f32.mxu0 %v918
      %1016 = vmatmul.mubr.f32.gmra.mrb[0].mxu0 %v917
      %v1017 = vpop.f32.mrb[0].mxu0
      %v1018 = vadd.f32 %v228, %v1017
      %v1019 = vpop.f32.mrb[0].mxu0
      %1020 = vmatprep.mubr.f32.mxu0 %v921
      %1021 = vmatmul.mubr.f32.gmra.mrb[0].mxu0 %v920
      %v1022 = vpop.f32.mrb[0].mxu0
      %v1023 = vadd.f32 %v228, %v1022
      %v1024 = vpop.f32.mrb[0].mxu0
      %1025 = vmatprep.mubr.f32.mxu0 %v924
      %1026 = vmatmul.mubr.f32.gmra.mrb[0].mxu0 %v923
      %v1027 = vpop.f32.mrb[0].mxu0
      %v1028 = vadd.f32 %v228, %v1027
      %v1029 = vpop.f32.mrb[0].mxu0
      %1030 = vdwg.mxu0
      %1031 = vmatprep.subr.mxu0 0.0
      %1032 = vmatpush1.msra.mxu0 %v203
      %1033 = vmatprep.subr.mxu0 0.0
      %1034 = vmatpush1.msra.mxu0 %v204
      %1035 = vmatprep.subr.mxu0 0.0
      %1036 = vmatpush1.msra.mxu0 %v205
      %1037 = vmatprep.subr.mxu0 0.0
      %1038 = vmatpush1.msra.mxu0 %v206
      %1039 = vmatprep.subr.mxu0 0.0
      %1040 = vmatpush1.msra.mxu0 0.0
      %1041 = vmatprep.subr.mxu0 0.0
      %1042 = vmatpush1.msra.mxu0 0.0
      %1043 = vmatprep.subr.mxu0 0.0
      %1044 = vmatpush1.msra.mxu0 0.0
      %1045 = vmatprep.subr.mxu0 0.0
      %1046 = vmatpush1.msra.mxu0 0.0
      %1047 = vmatprep.subr.mxu0 0.0
      %1048 = vmatpush1.msra.mxu0 0.0
      %1049 = vmatprep.subr.mxu0 0.0
      %1050 = vmatpush1.msra.mxu0 0.0
      %1051 = vmatprep.subr.mxu0 0.0
      %1052 = vmatpush1.msra.mxu0 0.0
      %1053 = vmatprep.subr.mxu0 0.0
      %1054 = vmatpush1.msra.mxu0 0.0
      %1055 = vmatprep.subr.mxu0 0.0
      %1056 = vmatpush1.msra.mxu0 0.0
      %1057 = vmatprep.subr.mxu0 0.0
      %1058 = vmatpush1.msra.mxu0 0.0
      %1059 = vmatprep.subr.mxu0 0.0
      %1060 = vmatpush1.msra.mxu0 0.0
      %1061 = vmatprep.subr.mxu0 0.0
      %1062 = vmatpush1.msra.mxu0 0.0
      %1063 = vmatprep.subr.mxu0 0.0
      %1064 = vmatpush1.msra.mxu0 0.0
      %1065 = vmatprep.subr.mxu0 0.0
      %1066 = vmatpush1.msra.mxu0 0.0
      %1067 = vmatprep.subr.mxu0 0.0
      %1068 = vmatpush1.msra.mxu0 0.0
      %1069 = vmatprep.subr.mxu0 0.0
      %1070 = vmatpush1.msra.mxu0 0.0
      %1071 = vmatprep.subr.mxu0 0.0
      %1072 = vmatpush1.msra.mxu0 0.0
      %1073 = vmatprep.subr.mxu0 0.0
      %1074 = vmatpush1.msra.mxu0 0.0
      %1075 = vmatprep.subr.mxu0 0.0
      %1076 = vmatpush1.msra.mxu0 0.0
      %1077 = vmatprep.subr.mxu0 0.0
      %1078 = vmatpush1.msra.mxu0 0.0
      %1079 = vmatprep.subr.mxu0 0.0
      %1080 = vmatpush1.msra.mxu0 0.0
      %1081 = vmatprep.subr.mxu0 0.0
      %1082 = vmatpush1.msra.mxu0 0.0
      %1083 = vmatprep.subr.mxu0 0.0
      %1084 = vmatpush1.msra.mxu0 0.0
      %1085 = vmatprep.subr.mxu0 0.0
      %1086 = vmatpush1.msra.mxu0 0.0
      %1087 = vmatprep.subr.mxu0 0.0
      %1088 = vmatpush1.msra.mxu0 0.0
      %1089 = vmatprep.subr.mxu0 0.0
      %1090 = vmatpush1.msra.mxu0 0.0
      %1091 = vmatprep.subr.mxu0 0.0
      %1092 = vmatpush1.msra.mxu0 0.0
      %1093 = vmatprep.subr.mxu0 0.0
      %1094 = vmatpush1.msra.mxu0 0.0
      %1095 = vmatprep.mubr.f32.mxu0 0.0
      %1096 = vmatmul.mubr.f32.gmra.mrb[0].mxu0 %v927
      %v1097 = vpop.f32.mrb[0].mxu0
      %v1098 = vadd.f32 %v1008, %v1097
      %v1099 = vpop.f32.mrb[0].mxu0
      %1100 = vmatprep.mubr.f32.mxu0 0.0
      %1101 = vmatmul.mubr.f32.gmra.mrb[0].mxu0 %v930
      %v1102 = vpop.f32.mrb[0].mxu0
      %v1103 = vadd.f32 %v1013, %v1102
      %v1104 = vpop.f32.mrb[0].mxu0
      %1105 = vmatprep.mubr.f32.mxu0 0.0
      %1106 = vmatmul.mubr.f32.gmra.mrb[0].mxu0 %v933
      %v1107 = vpop.f32.mrb[0].mxu0
      %v1108 = vadd.f32 %v1018, %v1107
      %v1109 = vpop.f32.mrb[0].mxu0
      %1110 = vmatprep.mubr.f32.mxu0 0.0
      %1111 = vmatmul.mubr.f32.gmra.mrb[0].mxu0 %v936
      %v1112 = vpop.f32.mrb[0].mxu0
      %v1113 = vadd.f32 %v1023, %v1112
      %v1114 = vpop.f32.mrb[0].mxu0
      %1115 = vmatprep.mubr.f32.mxu0 0.0
      %1116 = vmatmul.mubr.f32.gmra.mrb[0].mxu0 %v939
      %v1117 = vpop.f32.mrb[0].mxu0
      %v1118 = vadd.f32 %v1028, %v1117
      %v1119 = vpop.f32.mrb[0].mxu0
      %1120 = vdwg.mxu0
      %v1121 = vmax.f32 %v1098, 0.0
      %v1122 = vmax.f32 %v1103, 0.0
      %v1123 = vmax.f32 %v1108, 0.0
      %v1124 = vmax.f32 %v1113, 0.0
      %v1125 = vmax.f32 %v1118, 0.0
      %v1126 = vmul.f32 %v1121, %v433
      %v1127 = vmul.f32 %v1122, %v433
      %v1128 = vmul.f32 %v1123, %v433
      %v1129 = vmul.f32 %v1124, %v433
      %v1130 = vmul.f32 %v1125, %v433
      %v1131 = vadd.f32 %v1126, %v442
      %v1132 = vadd.f32 %v1127, %v442
      %v1133 = vadd.f32 %v1128, %v442
      %v1134 = vadd.f32 %v1129, %v442
      %v1135 = vadd.f32 %v1130, %v442
      %v1136 = vmax.f32 %v905, %v1131
      %v1137 = vmax.f32 %v906, %v1132
      %v1138 = vmax.f32 %v907, %v1133
      %v1139 = vmax.f32 %v908, %v1134
      %v1140 = vmax.f32 %v909, %v1135
      %vm1141 = vcmask 392192
      %1142 = vst.msk [vmem:[%s170] sm:$0xff] %vm1141, %v1136
      %1143 = vst.msk [vmem:[%s170 + $0x8] sm:$0xff] %vm1141, %v1137
      %1144 = vst.msk [vmem:[%s170 + $0x10] sm:$0xff] %vm1141, %v1138
      %1145 = vst.msk [vmem:[%s170 + $0x18] sm:$0xff] %vm1141, %v1139
      %vm1146 = vcmask 388096
      %1147 = vst.msk [vmem:[%s170 + $0x20] sm:$0xf] %vm1146, %v1140
      %p1148 = scmp.lt.s32.totalorder %s14, 1
      %s1149 = scalar_select %p1148, %s14, 1
      %s1150 = smul.addr %s1149, 5
      %s1151 = smul.addr %s1150, 8
      %s1152 = scalar_lea.vmem %s3, %s1151
      // Predicated region
      $region33: #{cnn2d_forward.6} parent=31 // pred_check
        %p1153 = pneg %p100
      $region34: #{cnn2d_forward.6} parent=31 // pred_check_branch
        %1155 = sbr.rel (%p1153) target = $region36
      $region35: #{cnn2d_forward.6} parent=31 // pred_region
        _
      $region36: #{cnn2d_forward.6} parent=31 // pred_fallthru
        _
    $region32: #{cnn2d_forward.6} parent=5 // pred_fallthru
      _
    %p1156 = scmp.le.s32.totalorder 2, %s9
    // Predicated region
    $region37: #{cnn2d_forward.6} parent=5 // pred_check
      %p1157 = pneg %p1156
    $region38: #{cnn2d_forward.6} parent=5 // pred_check_branch
      %1159 = sbr.rel (%p1157) target = $region40
    $region39: #{cnn2d_forward.6} parent=5 // pred_region
      %s1160 = ssub.s32 %s9, 2
      // Predicated region
      $region41: #{cnn2d_forward.6} parent=39 // pred_check
        %p1161 = pneg %p106
      $region42: #{cnn2d_forward.6} parent=39 // pred_check_branch
        %1163 = sbr.rel (%p1161) target = $region44
      $region43: #{cnn2d_forward.6} parent=39 // pred_region
        %p1164 = scmp.lt.s32.totalorder %s15, 1
        %s1165 = scalar_select %p1164, %s15, 1
        %s1166 = smul.addr %s1165, 5
        %s1167 = smul.addr %s1166, 8
        %s1168 = scalar_lea.vmem %s3, %s1167
      $region44: #{cnn2d_forward.6} parent=39 // pred_fallthru
        _
    $region40: #{cnn2d_forward.6} parent=5 // pred_fallthru
      _
  $region6: #{cnn2d_forward.6} parent=0 // loop_footer
    %s13 = sadd.s32 1, %s9
  $region7: #{cnn2d_forward.6} parent=0 // loop_footer_branch
    %8 = sbr.rel target = $region3
  $region8: #{cnn2d_forward.6} parent=0 // loop_exit
    _

// kernel: cnn2d_forward.7
$region0: #{cnn2d_forward.7}
  #allocation0 [shape = 'u32[]', space=smem, size = 0x4, offset = 0x4, fixed_abs, tag = 'smem constant byte address 0x4 - core index']
  #allocation1 [shape = 'u32[144,128]{1,0:T(1,128)}', space=vmem, size = 0x12000, scoped, tag = 'internal scratch']
  %s0 = inlined_call_operand.vmem [shape: f32[8,1728], index: 0, kind: input, shape index: {}]
  %s1 = inlined_call_operand.vmem [shape: f32[1728,16], index: 1, kind: input, shape index: {}]
  %s2 = inlined_call_operand.vmem [shape: f32[1,16], index: 2, kind: input, shape index: {}]
  %s3 = inlined_call_operand.vmem [shape: f32[8,16], index: 3, kind: output, shape index: {}]
  %s4 = sld [smem:[#allocation0]]
  $region22: #{cnn2d_forward.7} parent=0
    _
  %s6 = ssub.s32 1, %s4
  %s7 = scalar_select 0, %s6, %s4
  // Predicated region
  $region2: #{cnn2d_forward.7} parent=0 // pred_check
    _
  $region3: #{cnn2d_forward.7} parent=0 // pred_check_branch
    %9 = sbr.rel (0) target = $region5
  $region4: #{cnn2d_forward.7} parent=0 // pred_region
    _
  $region5: #{cnn2d_forward.7} parent=0 // pred_fallthru
    _
  // Predicated region
  $region6: #{cnn2d_forward.7} parent=0 // pred_check
    _
  $region7: #{cnn2d_forward.7} parent=0 // pred_check_branch
    %11 = sbr.rel (0) target = $region9
  $region8: #{cnn2d_forward.7} parent=0 // pred_region
    _
  $region9: #{cnn2d_forward.7} parent=0 // pred_fallthru
    _
  // Predicated region
  $region10: #{cnn2d_forward.7} parent=0 // pred_check
    _
  $region11: #{cnn2d_forward.7} parent=0 // pred_check_branch
    %13 = sbr.rel (0) target = $region13
  $region12: #{cnn2d_forward.7} parent=0 // pred_region
    _
  $region13: #{cnn2d_forward.7} parent=0 // pred_fallthru
    _
  %v14 = vld [vmem:[%s0] sm:$0xff]
  %v15 = vld [vmem:[%s0 + $0x8] sm:$0xff]
  %v16 = vld [vmem:[%s0 + $0x10] sm:$0xff]
  %v17 = vld [vmem:[%s0 + $0x18] sm:$0xff]
  %v18 = vld [vmem:[%s0 + $0x20] sm:$0xff]
  %v19 = vld [vmem:[%s0 + $0x28] sm:$0xff]
  %v20 = vld [vmem:[%s0 + $0x30] sm:$0xff]
  %v21 = vld [vmem:[%s0 + $0x38] sm:$0xff]
  %v22 = vld [vmem:[%s0 + $0x40] sm:$0xff]
  %v23 = vld [vmem:[%s0 + $0x48] sm:$0xff]
  %v24 = vld [vmem:[%s0 + $0x50] sm:$0xff]
  %v25 = vld [vmem:[%s0 + $0x58] sm:$0xff]
  %v26 = vld [vmem:[%s0 + $0x60] sm:$0xff]
  %v27 = vld [vmem:[%s0 + $0x68] sm:$0xff]
  %v28 = vld [vmem:[%s1] sm:$0xff]
  %v29 = vld [vmem:[%s1 + $0x8] sm:$0xff]
  %v30 = vld [vmem:[%s1 + $0x10] sm:$0xff]
  %v31 = vld [vmem:[%s1 + $0x18] sm:$0xff]
  %v32 = vld [vmem:[%s1 + $0x20] sm:$0xff]
  %v33 = vld [vmem:[%s1 + $0x28] sm:$0xff]
  %v34 = vld [vmem:[%s1 + $0x30] sm:$0xff]
  %v35 = vld [vmem:[%s1 + $0x38] sm:$0xff]
  %v36 = vld [vmem:[%s1 + $0x40] sm:$0xff]
  %v37 = vld [vmem:[%s1 + $0x48] sm:$0xff]
  %v38 = vld [vmem:[%s1 + $0x50] sm:$0xff]
  %v39 = vld [vmem:[%s1 + $0x58] sm:$0xff]
  %v40 = vld [vmem:[%s1 + $0x60] sm:$0xff]
  %v41 = vld [vmem:[%s1 + $0x68] sm:$0xff]
  %v42 = vld [vmem:[%s1 + $0x70] sm:$0xff]
  %v43 = vld [vmem:[%s1 + $0x78] sm:$0xff]
  %v44 = vld [vmem:[%s1 + $0x80] sm:$0xff]
  %v45 = vld [vmem:[%s1 + $0x88] sm:$0xff]
  %v46 = vld [vmem:[%s1 + $0x90] sm:$0xff]
  %v47 = vld [vmem:[%s1 + $0x98] sm:$0xff]
  %v48 = vld [vmem:[%s1 + $0xa0] sm:$0xff]
  %v49 = vld [vmem:[%s1 + $0xa8] sm:$0xff]
  %v50 = vld [vmem:[%s1 + $0xb0] sm:$0xff]
  %v51 = vld [vmem:[%s1 + $0xb8] sm:$0xff]
  %v52 = vld [vmem:[%s1 + $0xc0] sm:$0xff]
  %v53 = vld [vmem:[%s1 + $0xc8] sm:$0xff]
  %v54 = vld [vmem:[%s1 + $0xd0] sm:$0xff]
  %v55 = vld [vmem:[%s1 + $0xd8] sm:$0xff]
  %v56 = vld [vmem:[%s1 + $0xe0] sm:$0xff]
  %v57 = vld [vmem:[%s1 + $0xe8] sm:$0xff]
  %v58 = vld [vmem:[%s1 + $0xf0] sm:$0xff]
  %v59 = vld [vmem:[%s1 + $0xf8] sm:$0xff]
  %v60 = vld [vmem:[%s1 + $0x100] sm:$0xff]
  %v61 = vld [vmem:[%s1 + $0x108] sm:$0xff]
  %v62 = vld [vmem:[%s1 + $0x110] sm:$0xff]
  %v63 = vld [vmem:[%s1 + $0x118] sm:$0xff]
  %v64 = vld [vmem:[%s1 + $0x120] sm:$0xff]
  %v65 = vld [vmem:[%s1 + $0x128] sm:$0xff]
  %v66 = vld [vmem:[%s1 + $0x130] sm:$0xff]
  %v67 = vld [vmem:[%s1 + $0x138] sm:$0xff]
  %v68 = vld [vmem:[%s1 + $0x140] sm:$0xff]
  %v69 = vld [vmem:[%s1 + $0x148] sm:$0xff]
  %v70 = vld [vmem:[%s1 + $0x150] sm:$0xff]
  %v71 = vld [vmem:[%s1 + $0x158] sm:$0xff]
  %v72 = vld [vmem:[%s1 + $0x160] sm:$0xff]
  %v73 = vld [vmem:[%s1 + $0x168] sm:$0xff]
  %v74 = vld [vmem:[%s1 + $0x170] sm:$0xff]
  %v75 = vld [vmem:[%s1 + $0x178] sm:$0xff]
  %v76 = vld [vmem:[%s1 + $0x180] sm:$0xff]
  %v77 = vld [vmem:[%s1 + $0x188] sm:$0xff]
  %v78 = vld [vmem:[%s1 + $0x190] sm:$0xff]
  %v79 = vld [vmem:[%s1 + $0x198] sm:$0xff]
  %v80 = vld [vmem:[%s1 + $0x1a0] sm:$0xff]
  %v81 = vld [vmem:[%s1 + $0x1a8] sm:$0xff]
  %v82 = vld [vmem:[%s1 + $0x1b0] sm:$0xff]
  %v83 = vld [vmem:[%s1 + $0x1b8] sm:$0xff]
  %v84 = vld [vmem:[%s1 + $0x1c0] sm:$0xff]
  %v85 = vld [vmem:[%s1 + $0x1c8] sm:$0xff]
  %v86 = vld [vmem:[%s1 + $0x1d0] sm:$0xff]
  %v87 = vld [vmem:[%s1 + $0x1d8] sm:$0xff]
  %v88 = vld [vmem:[%s1 + $0x1e0] sm:$0xff]
  %v89 = vld [vmem:[%s1 + $0x1e8] sm:$0xff]
  %v90 = vld [vmem:[%s1 + $0x1f0] sm:$0xff]
  %v91 = vld [vmem:[%s1 + $0x1f8] sm:$0xff]
  %v92 = vld [vmem:[%s1 + $0x200] sm:$0xff]
  %v93 = vld [vmem:[%s1 + $0x208] sm:$0xff]
  %v94 = vld [vmem:[%s1 + $0x210] sm:$0xff]
  %v95 = vld [vmem:[%s1 + $0x218] sm:$0xff]
  %v96 = vld [vmem:[%s1 + $0x220] sm:$0xff]
  %v97 = vld [vmem:[%s1 + $0x228] sm:$0xff]
  %v98 = vld [vmem:[%s1 + $0x230] sm:$0xff]
  %v99 = vld [vmem:[%s1 + $0x238] sm:$0xff]
  %v100 = vld [vmem:[%s1 + $0x240] sm:$0xff]
  %v101 = vld [vmem:[%s1 + $0x248] sm:$0xff]
  %v102 = vld [vmem:[%s1 + $0x250] sm:$0xff]
  %v103 = vld [vmem:[%s1 + $0x258] sm:$0xff]
  %v104 = vld [vmem:[%s1 + $0x260] sm:$0xff]
  %v105 = vld [vmem:[%s1 + $0x268] sm:$0xff]
  %v106 = vld [vmem:[%s1 + $0x270] sm:$0xff]
  %v107 = vld [vmem:[%s1 + $0x278] sm:$0xff]
  %v108 = vld [vmem:[%s1 + $0x280] sm:$0xff]
  %v109 = vld [vmem:[%s1 + $0x288] sm:$0xff]
  %v110 = vld [vmem:[%s1 + $0x290] sm:$0xff]
  %v111 = vld [vmem:[%s1 + $0x298] sm:$0xff]
  %v112 = vld [vmem:[%s1 + $0x2a0] sm:$0xff]
  %v113 = vld [vmem:[%s1 + $0x2a8] sm:$0xff]
  %v114 = vld [vmem:[%s1 + $0x2b0] sm:$0xff]
  %v115 = vld [vmem:[%s1 + $0x2b8] sm:$0xff]
  %v116 = vld [vmem:[%s1 + $0x2c0] sm:$0xff]
  %v117 = vld [vmem:[%s1 + $0x2c8] sm:$0xff]
  %v118 = vld [vmem:[%s1 + $0x2d0] sm:$0xff]
  %v119 = vld [vmem:[%s1 + $0x2d8] sm:$0xff]
  %v120 = vld [vmem:[%s1 + $0x2e0] sm:$0xff]
  %v121 = vld [vmem:[%s1 + $0x2e8] sm:$0xff]
  %v122 = vld [vmem:[%s1 + $0x2f0] sm:$0xff]
  %v123 = vld [vmem:[%s1 + $0x2f8] sm:$0xff]
  %v124 = vld [vmem:[%s1 + $0x300] sm:$0xff]
  %v125 = vld [vmem:[%s1 + $0x308] sm:$0xff]
  %v126 = vld [vmem:[%s1 + $0x310] sm:$0xff]
  %v127 = vld [vmem:[%s1 + $0x318] sm:$0xff]
  %v128 = vld [vmem:[%s1 + $0x320] sm:$0xff]
  %v129 = vld [vmem:[%s1 + $0x328] sm:$0xff]
  %v130 = vld [vmem:[%s1 + $0x330] sm:$0xff]
  %v131 = vld [vmem:[%s1 + $0x338] sm:$0xff]
  %v132 = vld [vmem:[%s1 + $0x340] sm:$0xff]
  %v133 = vld [vmem:[%s1 + $0x348] sm:$0xff]
  %v134 = vld [vmem:[%s1 + $0x350] sm:$0xff]
  %v135 = vld [vmem:[%s1 + $0x358] sm:$0xff]
  %v136 = vld [vmem:[%s1 + $0x360] sm:$0xff]
  %v137 = vld [vmem:[%s1 + $0x368] sm:$0xff]
  %v138 = vld [vmem:[%s1 + $0x370] sm:$0xff]
  %v139 = vld [vmem:[%s1 + $0x378] sm:$0xff]
  %v140 = vld [vmem:[%s1 + $0x380] sm:$0xff]
  %v141 = vld [vmem:[%s1 + $0x388] sm:$0xff]
  %v142 = vld [vmem:[%s1 + $0x390] sm:$0xff]
  %v143 = vld [vmem:[%s1 + $0x398] sm:$0xff]
  %v144 = vld [vmem:[%s1 + $0x3a0] sm:$0xff]
  %v145 = vld [vmem:[%s1 + $0x3a8] sm:$0xff]
  %v146 = vld [vmem:[%s1 + $0x3b0] sm:$0xff]
  %v147 = vld [vmem:[%s1 + $0x3b8] sm:$0xff]
  %v148 = vld [vmem:[%s1 + $0x3c0] sm:$0xff]
  %v149 = vld [vmem:[%s1 + $0x3c8] sm:$0xff]
  %v150 = vld [vmem:[%s1 + $0x3d0] sm:$0xff]
  %v151 = vld [vmem:[%s1 + $0x3d8] sm:$0xff]
  %v152 = vld [vmem:[%s1 + $0x3e0] sm:$0xff]
  %v153 = vld [vmem:[%s1 + $0x3e8] sm:$0xff]
  %v154 = vld [vmem:[%s1 + $0x3f0] sm:$0xff]
  %v155 = vld [vmem:[%s1 + $0x3f8] sm:$0xff]
  %v156 = vld [vmem:[%s1 + $0x400] sm:$0xff]
  %v157 = vld [vmem:[%s1 + $0x408] sm:$0xff]
  %v158 = vld [vmem:[%s1 + $0x410] sm:$0xff]
  %v159 = vld [vmem:[%s1 + $0x418] sm:$0xff]
  %v160 = vld [vmem:[%s1 + $0x420] sm:$0xff]
  %v161 = vld [vmem:[%s1 + $0x428] sm:$0xff]
  %v162 = vld [vmem:[%s1 + $0x430] sm:$0xff]
  %v163 = vld [vmem:[%s1 + $0x438] sm:$0xff]
  %v164 = vld [vmem:[%s1 + $0x440] sm:$0xff]
  %v165 = vld [vmem:[%s1 + $0x448] sm:$0xff]
  %v166 = vld [vmem:[%s1 + $0x450] sm:$0xff]
  %v167 = vld [vmem:[%s1 + $0x458] sm:$0xff]
  %v168 = vld [vmem:[%s1 + $0x460] sm:$0xff]
  %v169 = vld [vmem:[%s1 + $0x468] sm:$0xff]
  %v170 = vld [vmem:[%s1 + $0x470] sm:$0xff]
  %v171 = vld [vmem:[%s1 + $0x478] sm:$0xff]
  %v172 = vld [vmem:[%s1 + $0x480] sm:$0xff]
  %v173 = vld [vmem:[%s1 + $0x488] sm:$0xff]
  %v174 = vld [vmem:[%s1 + $0x490] sm:$0xff]
  %v175 = vld [vmem:[%s1 + $0x498] sm:$0xff]
  %v176 = vld [vmem:[%s1 + $0x4a0] sm:$0xff]
  %v177 = vld [vmem:[%s1 + $0x4a8] sm:$0xff]
  %v178 = vld [vmem:[%s1 + $0x4b0] sm:$0xff]
  %v179 = vld [vmem:[%s1 + $0x4b8] sm:$0xff]
  %v180 = vld [vmem:[%s1 + $0x4c0] sm:$0xff]
  %v181 = vld [vmem:[%s1 + $0x4c8] sm:$0xff]
  %v182 = vld [vmem:[%s1 + $0x4d0] sm:$0xff]
  %v183 = vld [vmem:[%s1 + $0x4d8] sm:$0xff]
  %v184 = vld [vmem:[%s1 + $0x4e0] sm:$0xff]
  %v185 = vld [vmem:[%s1 + $0x4e8] sm:$0xff]
  %v186 = vld [vmem:[%s1 + $0x4f0] sm:$0xff]
  %v187 = vld [vmem:[%s1 + $0x4f8] sm:$0xff]
  %v188 = vld [vmem:[%s1 + $0x500] sm:$0xff]
  %v189 = vld [vmem:[%s1 + $0x508] sm:$0xff]
  %v190 = vld [vmem:[%s1 + $0x510] sm:$0xff]
  %v191 = vld [vmem:[%s1 + $0x518] sm:$0xff]
  %v192 = vld [vmem:[%s1 + $0x520] sm:$0xff]
  %v193 = vld [vmem:[%s1 + $0x528] sm:$0xff]
  %v194 = vld [vmem:[%s1 + $0x530] sm:$0xff]
  %v195 = vld [vmem:[%s1 + $0x538] sm:$0xff]
  %v196 = vld [vmem:[%s1 + $0x540] sm:$0xff]
  %v197 = vld [vmem:[%s1 + $0x548] sm:$0xff]
  %v198 = vld [vmem:[%s1 + $0x550] sm:$0xff]
  %v199 = vld [vmem:[%s1 + $0x558] sm:$0xff]
  %v200 = vld [vmem:[%s1 + $0x560] sm:$0xff]
  %v201 = vld [vmem:[%s1 + $0x568] sm:$0xff]
  %v202 = vld [vmem:[%s1 + $0x570] sm:$0xff]
  %v203 = vld [vmem:[%s1 + $0x578] sm:$0xff]
  %v204 = vld [vmem:[%s1 + $0x580] sm:$0xff]
  %v205 = vld [vmem:[%s1 + $0x588] sm:$0xff]
  %v206 = vld [vmem:[%s1 + $0x590] sm:$0xff]
  %v207 = vld [vmem:[%s1 + $0x598] sm:$0xff]
  %v208 = vld [vmem:[%s1 + $0x5a0] sm:$0xff]
  %v209 = vld [vmem:[%s1 + $0x5a8] sm:$0xff]
  %v210 = vld [vmem:[%s1 + $0x5b0] sm:$0xff]
  %v211 = vld [vmem:[%s1 + $0x5b8] sm:$0xff]
  %v212 = vld [vmem:[%s1 + $0x5c0] sm:$0xff]
  %v213 = vld [vmem:[%s1 + $0x5c8] sm:$0xff]
  %v214 = vld [vmem:[%s1 + $0x5d0] sm:$0xff]
  %v215 = vld [vmem:[%s1 + $0x5d8] sm:$0xff]
  %v216 = vld [vmem:[%s1 + $0x5e0] sm:$0xff]
  %v217 = vld [vmem:[%s1 + $0x5e8] sm:$0xff]
  %v218 = vld [vmem:[%s1 + $0x5f0] sm:$0xff]
  %v219 = vld [vmem:[%s1 + $0x5f8] sm:$0xff]
  %v220 = vld [vmem:[%s1 + $0x600] sm:$0xff]
  %v221 = vld [vmem:[%s1 + $0x608] sm:$0xff]
  %v222 = vld [vmem:[%s1 + $0x610] sm:$0xff]
  %v223 = vld [vmem:[%s1 + $0x618] sm:$0xff]
  %v224 = vld [vmem:[%s1 + $0x620] sm:$0xff]
  %v225 = vld [vmem:[%s1 + $0x628] sm:$0xff]
  %v226 = vld [vmem:[%s1 + $0x630] sm:$0xff]
  %v227 = vld [vmem:[%s1 + $0x638] sm:$0xff]
  %v228 = vld [vmem:[%s1 + $0x640] sm:$0xff]
  %v229 = vld [vmem:[%s1 + $0x648] sm:$0xff]
  %v230 = vld [vmem:[%s1 + $0x650] sm:$0xff]
  %v231 = vld [vmem:[%s1 + $0x658] sm:$0xff]
  %v232 = vld [vmem:[%s1 + $0x660] sm:$0xff]
  %v233 = vld [vmem:[%s1 + $0x668] sm:$0xff]
  %v234 = vld [vmem:[%s1 + $0x670] sm:$0xff]
  %v235 = vld [vmem:[%s1 + $0x678] sm:$0xff]
  %v236 = vld [vmem:[%s1 + $0x680] sm:$0xff]
  %v237 = vld [vmem:[%s1 + $0x688] sm:$0xff]
  %v238 = vld [vmem:[%s1 + $0x690] sm:$0xff]
  %v239 = vld [vmem:[%s1 + $0x698] sm:$0xff]
  %v240 = vld [vmem:[%s1 + $0x6a0] sm:$0xff]
  %v241 = vld [vmem:[%s1 + $0x6a8] sm:$0xff]
  %v242 = vld [vmem:[%s1 + $0x6b0] sm:$0xff]
  %v243 = vld [vmem:[%s1 + $0x6b8] sm:$0xff]
  %v244 = vld [vmem:[%s2] sm:$0x1]
  %v246 = vlaneseq
  %v247 = vshrl.u32 %v246, 7
  %v248 = vsub.s32 0, %v247
  %v249 = vrot.slane %v244, %v248
  %vm251 = vcmask 523264
  %v253 = vsel %vm251, %v27, 0
  %255 = vmatprep.subr.mxu0 0.0
  %256 = vmatpush1.msra.mxu0 %v28
  %257 = vmatprep.subr.mxu0 0.0
  %258 = vmatpush1.msra.mxu0 %v29
  %259 = vmatprep.subr.mxu0 0.0
  %260 = vmatpush1.msra.mxu0 %v30
  %261 = vmatprep.subr.mxu0 0.0
  %262 = vmatpush1.msra.mxu0 %v31
  %263 = vmatprep.subr.mxu0 0.0
  %264 = vmatpush1.msra.mxu0 %v32
  %265 = vmatprep.subr.mxu0 0.0
  %266 = vmatpush1.msra.mxu0 %v33
  %267 = vmatprep.subr.mxu0 0.0
  %268 = vmatpush1.msra.mxu0 %v34
  %269 = vmatprep.subr.mxu0 0.0
  %270 = vmatpush1.msra.mxu0 %v35
  %271 = vmatprep.subr.mxu0 0.0
  %272 = vmatpush1.msra.mxu0 %v36
  %273 = vmatprep.subr.mxu0 0.0
  %274 = vmatpush1.msra.mxu0 %v37
  %275 = vmatprep.subr.mxu0 0.0
  %276 = vmatpush1.msra.mxu0 %v38
  %277 = vmatprep.subr.mxu0 0.0
  %278 = vmatpush1.msra.mxu0 %v39
  %279 = vmatprep.subr.mxu0 0.0
  %280 = vmatpush1.msra.mxu0 %v40
  %281 = vmatprep.subr.mxu0 0.0
  %282 = vmatpush1.msra.mxu0 %v41
  %283 = vmatprep.subr.mxu0 0.0
  %284 = vmatpush1.msra.mxu0 %v42
  %285 = vmatprep.subr.mxu0 0.0
  %286 = vmatpush1.msra.mxu0 %v43
  %287 = vmatprep.subr.mxu0 0.0
  %288 = vmatpush1.msra.mxu0 %v44
  %289 = vmatprep.subr.mxu0 0.0
  %290 = vmatpush1.msra.mxu0 %v45
  %291 = vmatprep.subr.mxu0 0.0
  %292 = vmatpush1.msra.mxu0 %v46
  %293 = vmatprep.subr.mxu0 0.0
  %294 = vmatpush1.msra.mxu0 %v47
  %295 = vmatprep.subr.mxu0 0.0
  %296 = vmatpush1.msra.mxu0 %v48
  %297 = vmatprep.subr.mxu0 0.0
  %298 = vmatpush1.msra.mxu0 %v49
  %299 = vmatprep.subr.mxu0 0.0
  %300 = vmatpush1.msra.mxu0 %v50
  %301 = vmatprep.subr.mxu0 0.0
  %302 = vmatpush1.msra.mxu0 %v51
  %303 = vmatprep.subr.mxu0 0.0
  %304 = vmatpush1.msra.mxu0 %v52
  %305 = vmatprep.subr.mxu0 0.0
  %306 = vmatpush1.msra.mxu0 %v53
  %307 = vmatprep.subr.mxu0 0.0
  %308 = vmatpush1.msra.mxu0 %v54
  %309 = vmatprep.subr.mxu0 0.0
  %310 = vmatpush1.msra.mxu0 %v55
  %311 = vmatprep.subr.mxu0 0.0
  %312 = vmatpush1.msra.mxu0 %v56
  %313 = vmatprep.subr.mxu0 0.0
  %314 = vmatpush1.msra.mxu0 %v57
  %315 = vmatprep.subr.mxu0 0.0
  %316 = vmatpush1.msra.mxu0 %v58
  %317 = vmatprep.subr.mxu0 0.0
  %318 = vmatpush1.msra.mxu0 %v59
  %319 = vmatprep.mubr.f32.mxu0 %v15
  %320 = vmatmul.mubr.f32.gmra.mrb[0].mxu0 %v14
  %v321 = vpop.f32.mrb[0].mxu0
  %v322 = vadd.f32 %v249, %v321
  %v323 = vpop.f32.mrb[0].mxu0
  %324 = vdwg.mxu0
  %325 = vmatprep.subr.mxu0 0.0
  %326 = vmatpush1.msra.mxu0 %v60
  %327 = vmatprep.subr.mxu0 0.0
  %328 = vmatpush1.msra.mxu0 %v61
  %329 = vmatprep.subr.mxu0 0.0
  %330 = vmatpush1.msra.mxu0 %v62
  %331 = vmatprep.subr.mxu0 0.0
  %332 = vmatpush1.msra.mxu0 %v63
  %333 = vmatprep.subr.mxu0 0.0
  %334 = vmatpush1.msra.mxu0 %v64
  %335 = vmatprep.subr.mxu0 0.0
  %336 = vmatpush1.msra.mxu0 %v65
  %337 = vmatprep.subr.mxu0 0.0
  %338 = vmatpush1.msra.mxu0 %v66
  %339 = vmatprep.subr.mxu0 0.0
  %340 = vmatpush1.msra.mxu0 %v67
  %341 = vmatprep.subr.mxu0 0.0
  %342 = vmatpush1.msra.mxu0 %v68
  %343 = vmatprep.subr.mxu0 0.0
  %344 = vmatpush1.msra.mxu0 %v69
  %345 = vmatprep.subr.mxu0 0.0
  %346 = vmatpush1.msra.mxu0 %v70
  %347 = vmatprep.subr.mxu0 0.0
  %348 = vmatpush1.msra.mxu0 %v71
  %349 = vmatprep.subr.mxu0 0.0
  %350 = vmatpush1.msra.mxu0 %v72
  %351 = vmatprep.subr.mxu0 0.0
  %352 = vmatpush1.msra.mxu0 %v73
  %353 = vmatprep.subr.mxu0 0.0
  %354 = vmatpush1.msra.mxu0 %v74
  %355 = vmatprep.subr.mxu0 0.0
  %356 = vmatpush1.msra.mxu0 %v75
  %357 = vmatprep.subr.mxu0 0.0
  %358 = vmatpush1.msra.mxu0 %v76
  %359 = vmatprep.subr.mxu0 0.0
  %360 = vmatpush1.msra.mxu0 %v77
  %361 = vmatprep.subr.mxu0 0.0
  %362 = vmatpush1.msra.mxu0 %v78
  %363 = vmatprep.subr.mxu0 0.0
  %364 = vmatpush1.msra.mxu0 %v79
  %365 = vmatprep.subr.mxu0 0.0
  %366 = vmatpush1.msra.mxu0 %v80
  %367 = vmatprep.subr.mxu0 0.0
  %368 = vmatpush1.msra.mxu0 %v81
  %369 = vmatprep.subr.mxu0 0.0
  %370 = vmatpush1.msra.mxu0 %v82
  %371 = vmatprep.subr.mxu0 0.0
  %372 = vmatpush1.msra.mxu0 %v83
  %373 = vmatprep.subr.mxu0 0.0
  %374 = vmatpush1.msra.mxu0 %v84
  %375 = vmatprep.subr.mxu0 0.0
  %376 = vmatpush1.msra.mxu0 %v85
  %377 = vmatprep.subr.mxu0 0.0
  %378 = vmatpush1.msra.mxu0 %v86
  %379 = vmatprep.subr.mxu0 0.0
  %380 = vmatpush1.msra.mxu0 %v87
  %381 = vmatprep.subr.mxu0 0.0
  %382 = vmatpush1.msra.mxu0 %v88
  %383 = vmatprep.subr.mxu0 0.0
  %384 = vmatpush1.msra.mxu0 %v89
  %385 = vmatprep.subr.mxu0 0.0
  %386 = vmatpush1.msra.mxu0 %v90
  %387 = vmatprep.subr.mxu0 0.0
  %388 = vmatpush1.msra.mxu0 %v91
  %389 = vmatprep.mubr.f32.mxu0 %v17
  %390 = vmatmul.mubr.f32.gmra.mrb[0].mxu0 %v16
  %v391 = vpop.f32.mrb[0].mxu0
  %v392 = vadd.f32 %v322, %v391
  %v393 = vpop.f32.mrb[0].mxu0
  %394 = vdwg.mxu0
  %395 = vmatprep.subr.mxu0 0.0
  %396 = vmatpush1.msra.mxu0 %v92
  %397 = vmatprep.subr.mxu0 0.0
  %398 = vmatpush1.msra.mxu0 %v93
  %399 = vmatprep.subr.mxu0 0.0
  %400 = vmatpush1.msra.mxu0 %v94
  %401 = vmatprep.subr.mxu0 0.0
  %402 = vmatpush1.msra.mxu0 %v95
  %403 = vmatprep.subr.mxu0 0.0
  %404 = vmatpush1.msra.mxu0 %v96
  %405 = vmatprep.subr.mxu0 0.0
  %406 = vmatpush1.msra.mxu0 %v97
  %407 = vmatprep.subr.mxu0 0.0
  %408 = vmatpush1.msra.mxu0 %v98
  %409 = vmatprep.subr.mxu0 0.0
  %410 = vmatpush1.msra.mxu0 %v99
  %411 = vmatprep.subr.mxu0 0.0
  %412 = vmatpush1.msra.mxu0 %v100
  %413 = vmatprep.subr.mxu0 0.0
  %414 = vmatpush1.msra.mxu0 %v101
  %415 = vmatprep.subr.mxu0 0.0
  %416 = vmatpush1.msra.mxu0 %v102
  %417 = vmatprep.subr.mxu0 0.0
  %418 = vmatpush1.msra.mxu0 %v103
  %419 = vmatprep.subr.mxu0 0.0
  %420 = vmatpush1.msra.mxu0 %v104
  %421 = vmatprep.subr.mxu0 0.0
  %422 = vmatpush1.msra.mxu0 %v105
  %423 = vmatprep.subr.mxu0 0.0
  %424 = vmatpush1.msra.mxu0 %v106
  %425 = vmatprep.subr.mxu0 0.0
  %426 = vmatpush1.msra.mxu0 %v107
  %427 = vmatprep.subr.mxu0 0.0
  %428 = vmatpush1.msra.mxu0 %v108
  %429 = vmatprep.subr.mxu0 0.0
  %430 = vmatpush1.msra.mxu0 %v109
  %431 = vmatprep.subr.mxu0 0.0
  %432 = vmatpush1.msra.mxu0 %v110
  %433 = vmatprep.subr.mxu0 0.0
  %434 = vmatpush1.msra.mxu0 %v111
  %435 = vmatprep.subr.mxu0 0.0
  %436 = vmatpush1.msra.mxu0 %v112
  %437 = vmatprep.subr.mxu0 0.0
  %438 = vmatpush1.msra.mxu0 %v113
  %439 = vmatprep.subr.mxu0 0.0
  %440 = vmatpush1.msra.mxu0 %v114
  %441 = vmatprep.subr.mxu0 0.0
  %442 = vmatpush1.msra.mxu0 %v115
  %443 = vmatprep.subr.mxu0 0.0
  %444 = vmatpush1.msra.mxu0 %v116
  %445 = vmatprep.subr.mxu0 0.0
  %446 = vmatpush1.msra.mxu0 %v117
  %447 = vmatprep.subr.mxu0 0.0
  %448 = vmatpush1.msra.mxu0 %v118
  %449 = vmatprep.subr.mxu0 0.0
  %450 = vmatpush1.msra.mxu0 %v119
  %451 = vmatprep.subr.mxu0 0.0
  %452 = vmatpush1.msra.mxu0 %v120
  %453 = vmatprep.subr.mxu0 0.0
  %454 = vmatpush1.msra.mxu0 %v121
  %455 = vmatprep.subr.mxu0 0.0
  %456 = vmatpush1.msra.mxu0 %v122
  %457 = vmatprep.subr.mxu0 0.0
  %458 = vmatpush1.msra.mxu0 %v123
  %459 = vmatprep.mubr.f32.mxu0 %v19
  %460 = vmatmul.mubr.f32.gmra.mrb[0].mxu0 %v18
  %v461 = vpop.f32.mrb[0].mxu0
  %v462 = vadd.f32 %v392, %v461
  %v463 = vpop.f32.mrb[0].mxu0
  %464 = vdwg.mxu0
  %465 = vmatprep.subr.mxu0 0.0
  %466 = vmatpush1.msra.mxu0 %v124
  %467 = vmatprep.subr.mxu0 0.0
  %468 = vmatpush1.msra.mxu0 %v125
  %469 = vmatprep.subr.mxu0 0.0
  %470 = vmatpush1.msra.mxu0 %v126
  %471 = vmatprep.subr.mxu0 0.0
  %472 = vmatpush1.msra.mxu0 %v127
  %473 = vmatprep.subr.mxu0 0.0
  %474 = vmatpush1.msra.mxu0 %v128
  %475 = vmatprep.subr.mxu0 0.0
  %476 = vmatpush1.msra.mxu0 %v129
  %477 = vmatprep.subr.mxu0 0.0
  %478 = vmatpush1.msra.mxu0 %v130
  %479 = vmatprep.subr.mxu0 0.0
  %480 = vmatpush1.msra.mxu0 %v131
  %481 = vmatprep.subr.mxu0 0.0
  %482 = vmatpush1.msra.mxu0 %v132
  %483 = vmatprep.subr.mxu0 0.0
  %484 = vmatpush1.msra.mxu0 %v133
  %485 = vmatprep.subr.mxu0 0.0
  %486 = vmatpush1.msra.mxu0 %v134
  %487 = vmatprep.subr.mxu0 0.0
  %488 = vmatpush1.msra.mxu0 %v135
  %489 = vmatprep.subr.mxu0 0.0
  %490 = vmatpush1.msra.mxu0 %v136
  %491 = vmatprep.subr.mxu0 0.0
  %492 = vmatpush1.msra.mxu0 %v137
  %493 = vmatprep.subr.mxu0 0.0
  %494 = vmatpush1.msra.mxu0 %v138
  %495 = vmatprep.subr.mxu0 0.0
  %496 = vmatpush1.msra.mxu0 %v139
  %497 = vmatprep.subr.mxu0 0.0
  %498 = vmatpush1.msra.mxu0 %v140
  %499 = vmatprep.subr.mxu0 0.0
  %500 = vmatpush1.msra.mxu0 %v141
  %501 = vmatprep.subr.mxu0 0.0
  %502 = vmatpush1.msra.mxu0 %v142
  %503 = vmatprep.subr.mxu0 0.0
  %504 = vmatpush1.msra.mxu0 %v143
  %505 = vmatprep.subr.mxu0 0.0
  %506 = vmatpush1.msra.mxu0 %v144
  %507 = vmatprep.subr.mxu0 0.0
  %508 = vmatpush1.msra.mxu0 %v145
  %509 = vmatprep.subr.mxu0 0.0
  %510 = vmatpush1.msra.mxu0 %v146
  %511 = vmatprep.subr.mxu0 0.0
  %512 = vmatpush1.msra.mxu0 %v147
  %513 = vmatprep.subr.mxu0 0.0
  %514 = vmatpush1.msra.mxu0 %v148
  %515 = vmatprep.subr.mxu0 0.0
  %516 = vmatpush1.msra.mxu0 %v149
  %517 = vmatprep.subr.mxu0 0.0
  %518 = vmatpush1.msra.mxu0 %v150
  %519 = vmatprep.subr.mxu0 0.0
  %520 = vmatpush1.msra.mxu0 %v151
  %521 = vmatprep.subr.mxu0 0.0
  %522 = vmatpush1.msra.mxu0 %v152
  %523 = vmatprep.subr.mxu0 0.0
  %524 = vmatpush1.msra.mxu0 %v153
  %525 = vmatprep.subr.mxu0 0.0
  %526 = vmatpush1.msra.mxu0 %v154
  %527 = vmatprep.subr.mxu0 0.0
  %528 = vmatpush1.msra.mxu0 %v155
  %529 = vmatprep.mubr.f32.mxu0 %v21
  %530 = vmatmul.mubr.f32.gmra.mrb[0].mxu0 %v20
  %v531 = vpop.f32.mrb[0].mxu0
  %v532 = vadd.f32 %v462, %v531
  %v533 = vpop.f32.mrb[0].mxu0
  %534 = vdwg.mxu0
  %535 = vmatprep.subr.mxu0 0.0
  %536 = vmatpush1.msra.mxu0 %v156
  %537 = vmatprep.subr.mxu0 0.0
  %538 = vmatpush1.msra.mxu0 %v157
  %539 = vmatprep.subr.mxu0 0.0
  %540 = vmatpush1.msra.mxu0 %v158
  %541 = vmatprep.subr.mxu0 0.0
  %542 = vmatpush1.msra.mxu0 %v159
  %543 = vmatprep.subr.mxu0 0.0
  %544 = vmatpush1.msra.mxu0 %v160
  %545 = vmatprep.subr.mxu0 0.0
  %546 = vmatpush1.msra.mxu0 %v161
  %547 = vmatprep.subr.mxu0 0.0
  %548 = vmatpush1.msra.mxu0 %v162
  %549 = vmatprep.subr.mxu0 0.0
  %550 = vmatpush1.msra.mxu0 %v163
  %551 = vmatprep.subr.mxu0 0.0
  %552 = vmatpush1.msra.mxu0 %v164
  %553 = vmatprep.subr.mxu0 0.0
  %554 = vmatpush1.msra.mxu0 %v165
  %555 = vmatprep.subr.mxu0 0.0
  %556 = vmatpush1.msra.mxu0 %v166
  %557 = vmatprep.subr.mxu0 0.0
  %558 = vmatpush1.msra.mxu0 %v167
  %559 = vmatprep.subr.mxu0 0.0
  %560 = vmatpush1.msra.mxu0 %v168
  %561 = vmatprep.subr.mxu0 0.0
  %562 = vmatpush1.msra.mxu0 %v169
  %563 = vmatprep.subr.mxu0 0.0
  %564 = vmatpush1.msra.mxu0 %v170
  %565 = vmatprep.subr.mxu0 0.0
  %566 = vmatpush1.msra.mxu0 %v171
  %567 = vmatprep.subr.mxu0 0.0
  %568 = vmatpush1.msra.mxu0 %v172
  %569 = vmatprep.subr.mxu0 0.0
  %570 = vmatpush1.msra.mxu0 %v173
  %571 = vmatprep.subr.mxu0 0.0
  %572 = vmatpush1.msra.mxu0 %v174
  %573 = vmatprep.subr.mxu0 0.0
  %574 = vmatpush1.msra.mxu0 %v175
  %575 = vmatprep.subr.mxu0 0.0
  %576 = vmatpush1.msra.mxu0 %v176
  %577 = vmatprep.subr.mxu0 0.0
  %578 = vmatpush1.msra.mxu0 %v177
  %579 = vmatprep.subr.mxu0 0.0
  %580 = vmatpush1.msra.mxu0 %v178
  %581 = vmatprep.subr.mxu0 0.0
  %582 = vmatpush1.msra.mxu0 %v179
  %583 = vmatprep.subr.mxu0 0.0
  %584 = vmatpush1.msra.mxu0 %v180
  %585 = vmatprep.subr.mxu0 0.0
  %586 = vmatpush1.msra.mxu0 %v181
  %587 = vmatprep.subr.mxu0 0.0
  %588 = vmatpush1.msra.mxu0 %v182
  %589 = vmatprep.subr.mxu0 0.0
  %590 = vmatpush1.msra.mxu0 %v183
  %591 = vmatprep.subr.mxu0 0.0
  %592 = vmatpush1.msra.mxu0 %v184
  %593 = vmatprep.subr.mxu0 0.0
  %594 = vmatpush1.msra.mxu0 %v185
  %595 = vmatprep.subr.mxu0 0.0
  %596 = vmatpush1.msra.mxu0 %v186
  %597 = vmatprep.subr.mxu0 0.0
  %598 = vmatpush1.msra.mxu0 %v187
  %599 = vmatprep.mubr.f32.mxu0 %v23
  %600 = vmatmul.mubr.f32.gmra.mrb[0].mxu0 %v22
  %v601 = vpop.f32.mrb[0].mxu0
  %v602 = vadd.f32 %v532, %v601
  %v603 = vpop.f32.mrb[0].mxu0
  %604 = vdwg.mxu0
  %605 = vmatprep.subr.mxu0 0.0
  %606 = vmatpush1.msra.mxu0 %v188
  %607 = vmatprep.subr.mxu0 0.0
  %608 = vmatpush1.msra.mxu0 %v189
  %609 = vmatprep.subr.mxu0 0.0
  %610 = vmatpush1.msra.mxu0 %v190
  %611 = vmatprep.subr.mxu0 0.0
  %612 = vmatpush1.msra.mxu0 %v191
  %613 = vmatprep.subr.mxu0 0.0
  %614 = vmatpush1.msra.mxu0 %v192
  %615 = vmatprep.subr.mxu0 0.0
  %616 = vmatpush1.msra.mxu0 %v193
  %617 = vmatprep.subr.mxu0 0.0
  %618 = vmatpush1.msra.mxu0 %v194
  %619 = vmatprep.subr.mxu0 0.0
  %620 = vmatpush1.msra.mxu0 %v195
  %621 = vmatprep.subr.mxu0 0.0
  %622 = vmatpush1.msra.mxu0 %v196
  %623 = vmatprep.subr.mxu0 0.0
  %624 = vmatpush1.msra.mxu0 %v197
  %625 = vmatprep.subr.mxu0 0.0
  %626 = vmatpush1.msra.mxu0 %v198
  %627 = vmatprep.subr.mxu0 0.0
  %628 = vmatpush1.msra.mxu0 %v199
  %629 = vmatprep.subr.mxu0 0.0
  %630 = vmatpush1.msra.mxu0 %v200
  %631 = vmatprep.subr.mxu0 0.0
  %632 = vmatpush1.msra.mxu0 %v201
  %633 = vmatprep.subr.mxu0 0.0
  %634 = vmatpush1.msra.mxu0 %v202
  %635 = vmatprep.subr.mxu0 0.0
  %636 = vmatpush1.msra.mxu0 %v203
  %637 = vmatprep.subr.mxu0 0.0
  %638 = vmatpush1.msra.mxu0 %v204
  %639 = vmatprep.subr.mxu0 0.0
  %640 = vmatpush1.msra.mxu0 %v205
  %641 = vmatprep.subr.mxu0 0.0
  %642 = vmatpush1.msra.mxu0 %v206
  %643 = vmatprep.subr.mxu0 0.0
  %644 = vmatpush1.msra.mxu0 %v207
  %645 = vmatprep.subr.mxu0 0.0
  %646 = vmatpush1.msra.mxu0 %v208
  %647 = vmatprep.subr.mxu0 0.0
  %648 = vmatpush1.msra.mxu0 %v209
  %649 = vmatprep.subr.mxu0 0.0
  %650 = vmatpush1.msra.mxu0 %v210
  %651 = vmatprep.subr.mxu0 0.0
  %652 = vmatpush1.msra.mxu0 %v211
  %653 = vmatprep.subr.mxu0 0.0
  %654 = vmatpush1.msra.mxu0 %v212
  %655 = vmatprep.subr.mxu0 0.0
  %656 = vmatpush1.msra.mxu0 %v213
  %657 = vmatprep.subr.mxu0 0.0
  %658 = vmatpush1.msra.mxu0 %v214
  %659 = vmatprep.subr.mxu0 0.0
  %660 = vmatpush1.msra.mxu0 %v215
  %661 = vmatprep.subr.mxu0 0.0
  %662 = vmatpush1.msra.mxu0 %v216
  %663 = vmatprep.subr.mxu0 0.0
  %664 = vmatpush1.msra.mxu0 %v217
  %665 = vmatprep.subr.mxu0 0.0
  %666 = vmatpush1.msra.mxu0 %v218
  %667 = vmatprep.subr.mxu0 0.0
  %668 = vmatpush1.msra.mxu0 %v219
  %669 = vmatprep.mubr.f32.mxu0 %v25
  %670 = vmatmul.mubr.f32.gmra.mrb[0].mxu0 %v24
  %v671 = vpop.f32.mrb[0].mxu0
  %v672 = vadd.f32 %v602, %v671
  %v673 = vpop.f32.mrb[0].mxu0
  %674 = vdwg.mxu0
  %675 = vmatprep.subr.mxu0 0.0
  %676 = vmatpush1.msra.mxu0 %v220
  %677 = vmatprep.subr.mxu0 0.0
  %678 = vmatpush1.msra.mxu0 %v221
  %679 = vmatprep.subr.mxu0 0.0
  %680 = vmatpush1.msra.mxu0 %v222
  %681 = vmatprep.subr.mxu0 0.0
  %682 = vmatpush1.msra.mxu0 %v223
  %683 = vmatprep.subr.mxu0 0.0
  %684 = vmatpush1.msra.mxu0 %v224
  %685 = vmatprep.subr.mxu0 0.0
  %686 = vmatpush1.msra.mxu0 %v225
  %687 = vmatprep.subr.mxu0 0.0
  %688 = vmatpush1.msra.mxu0 %v226
  %689 = vmatprep.subr.mxu0 0.0
  %690 = vmatpush1.msra.mxu0 %v227
  %691 = vmatprep.subr.mxu0 0.0
  %692 = vmatpush1.msra.mxu0 %v228
  %693 = vmatprep.subr.mxu0 0.0
  %694 = vmatpush1.msra.mxu0 %v229
  %695 = vmatprep.subr.mxu0 0.0
  %696 = vmatpush1.msra.mxu0 %v230
  %697 = vmatprep.subr.mxu0 0.0
  %698 = vmatpush1.msra.mxu0 %v231
  %699 = vmatprep.subr.mxu0 0.0
  %700 = vmatpush1.msra.mxu0 %v232
  %701 = vmatprep.subr.mxu0 0.0
  %702 = vmatpush1.msra.mxu0 %v233
  %703 = vmatprep.subr.mxu0 0.0
  %704 = vmatpush1.msra.mxu0 %v234
  %705 = vmatprep.subr.mxu0 0.0
  %706 = vmatpush1.msra.mxu0 %v235
  %707 = vmatprep.subr.mxu0 0.0
  %708 = vmatpush1.msra.mxu0 %v236
  %709 = vmatprep.subr.mxu0 0.0
  %710 = vmatpush1.msra.mxu0 %v237
  %711 = vmatprep.subr.mxu0 0.0
  %712 = vmatpush1.msra.mxu0 %v238
  %713 = vmatprep.subr.mxu0 0.0
  %714 = vmatpush1.msra.mxu0 %v239
  %715 = vmatprep.subr.mxu0 0.0
  %716 = vmatpush1.msra.mxu0 %v240
  %717 = vmatprep.subr.mxu0 0.0
  %718 = vmatpush1.msra.mxu0 %v241
  %719 = vmatprep.subr.mxu0 0.0
  %720 = vmatpush1.msra.mxu0 %v242
  %721 = vmatprep.subr.mxu0 0.0
  %722 = vmatpush1.msra.mxu0 %v243
  %723 = vmatprep.subr.mxu0 0.0
  %724 = vmatpush1.msra.mxu0 0.0
  %725 = vmatprep.subr.mxu0 0.0
  %726 = vmatpush1.msra.mxu0 0.0
  %727 = vmatprep.subr.mxu0 0.0
  %728 = vmatpush1.msra.mxu0 0.0
  %729 = vmatprep.subr.mxu0 0.0
  %730 = vmatpush1.msra.mxu0 0.0
  %731 = vmatprep.subr.mxu0 0.0
  %732 = vmatpush1.msra.mxu0 0.0
  %733 = vmatprep.subr.mxu0 0.0
  %734 = vmatpush1.msra.mxu0 0.0
  %735 = vmatprep.subr.mxu0 0.0
  %736 = vmatpush1.msra.mxu0 0.0
  %737 = vmatprep.subr.mxu0 0.0
  %738 = vmatpush1.msra.mxu0 0.0
  %739 = vmatprep.mubr.f32.mxu0 %v253
  %740 = vmatmul.mubr.f32.gmra.mrb[0].mxu0 %v26
  %v741 = vpop.f32.mrb[0].mxu0
  %v742 = vadd.f32 %v672, %v741
  %v743 = vpop.f32.mrb[0].mxu0
  %744 = vdwg.mxu0
  %vm745 = vcmask 130048
  %746 = vst.msk [vmem:[%s3] sm:$0xff] %vm745, %v742
  // Predicated region
  $region14: #{cnn2d_forward.7} parent=0 // pred_check
    _
  $region15: #{cnn2d_forward.7} parent=0 // pred_check_branch
    %748 = sbr.rel (0) target = $region17
  $region16: #{cnn2d_forward.7} parent=0 // pred_region
    _
  $region17: #{cnn2d_forward.7} parent=0 // pred_fallthru
    _
  // Predicated region
  $region18: #{cnn2d_forward.7} parent=0 // pred_check
    _
  $region19: #{cnn2d_forward.7} parent=0 // pred_check_branch
    %750 = sbr.rel (0) target = $region21
  $region20: #{cnn2d_forward.7} parent=0 // pred_region
    _
  $region21: #{cnn2d_forward.7} parent=0 // pred_fallthru
    _

</llo_original>
